<compile_context>
chip_gen: v7x
topology: tpu7x:2x2x1
jax: 0.10.0
libtpu: 0.0.40
codegen_flags: <defaults>
</compile_context>

<pallas_src>
import numpy as np
import jax
import jax.numpy as jnp
from jax import lax
from jax.experimental import pallas as pl
from jax.experimental.pallas import tpu as pltpu

NEG_SLOPE = 0.01  # PyTorch nn.LeakyReLU() default


def _round_up(x, m):
    return (x + m - 1) // m * m


def _conv_to_toeplitz(w, b, hin, win, stride):
    """Unroll a VALID conv (PyTorch cross-correlation, NCHW) into a dense
    (Cin*Hin*Win, Cout*OH*OW) matrix + per-feature bias. Both input and output
    feature orderings are NCHW-flat (channel-major), matching torch flatten."""
    w = np.asarray(w, dtype=np.float32)
    b = np.asarray(b, dtype=np.float32)
    cout, cin, kh_sz, kw_sz = w.shape
    oh = (hin - kh_sz) // stride + 1
    ow = (win - kw_sz) // stride + 1
    m = np.zeros((cin * hin * win, cout * oh * ow), dtype=np.float32)
    ohs = np.arange(oh)
    ows = np.arange(ow)
    out_sp = (ohs[:, None] * ow + ows[None, :]).ravel()            # (OH*OW,)
    ci_base = np.arange(cin)[:, None] * (hin * win)                # (Cin, 1)
    co_base = np.arange(cout)[:, None] * (oh * ow)                 # (Cout, 1)
    for kh in range(kh_sz):
        for kw in range(kw_sz):
            ih = stride * ohs + kh
            iw = stride * ows + kw
            in_sp = (ih[:, None] * win + iw[None, :]).ravel()      # (OH*OW,)
            rows = ci_base + in_sp[None, :]                        # (Cin, P)
            cols = co_base + out_sp[None, :]                       # (Cout, P)
            vals = w[:, :, kh, kw].T[:, :, None]                   # (Cin, Cout, 1)
            m[rows[:, None, :], cols[None, :, :]] = vals
    bias = np.repeat(b, oh * ow)                                   # channel-major
    return m, bias, (cout, oh, ow)


def _pad2d(a, rows, cols):
    a = np.asarray(a, dtype=np.float32)
    out = np.zeros((rows, cols), dtype=np.float32)
    out[: a.shape[0], : a.shape[1]] = a
    return out


def _conv3_band_weights(w3, b3):
    """Row-band-blocked conv3 weights.

    conv3's input (conv2's activation) is laid out H-major: feature index
    = ih*144 + ci*6 + iw (ih<6, ci<24, iw<6), lane-padded 864 -> 896.  Output
    row `oh` (of 4) only reads input rows oh..oh+2, i.e. a contiguous
    432-feature band that sits fully inside the 128-aligned 512-wide lane
    window starting at 128*oh (offset 16*oh inside the window).

    Returns (4, 512, 384) band matrices (unused rows zero) and a (384,) bias,
    with band-output ordering (co, ow)."""
    w3 = np.asarray(w3, dtype=np.float32)                          # (96, 24, 3, 3)
    b3 = np.asarray(b3, dtype=np.float32)
    cout, cin, kh_sz, kw_sz = w3.shape
    w_in, w_out, h_out = 6, 4, 4
    base = np.zeros((kh_sz * cin * w_in, cout * w_out), dtype=np.float32)  # (432, 384)
    co_idx = np.arange(cout)
    for r in range(kh_sz):
        for ci in range(cin):
            for iw in range(w_in):
                row = r * (cin * w_in) + ci * w_in + iw
                for ow in range(w_out):
                    k = iw - ow
                    if 0 <= k < kw_sz:
                        base[row, co_idx * w_out + ow] = w3[:, ci, r, k]
    bands = np.zeros((h_out, 512, cout * w_out), dtype=np.float32)
    for oh in range(h_out):
        d = 144 * oh - 128 * oh                                    # = 16*oh
        bands[oh, d:d + base.shape[0], :] = base
    bias = np.repeat(b3, w_out)                                    # (co, ow) order
    return bands, bias


def pack_pr_cnn_params(w1, b1, w2, b2, w3, b3, wfc, bfc):
    """One-time packing of PyTorch-layout params into padded, lane-dense,
    VMEM-resident matmul operands (bf16 weights, f32 biases)."""
    # conv1: dense Toeplitz, NCHW-flat in (1,28,28) -> NCHW-flat out (6,8,8)
    m1, bias1, (c1, oh1, ow1) = _conv_to_toeplitz(w1, b1, 28, 28, 3)    # (784, 384)
    # conv2: dense Toeplitz, NCHW-flat in -> H-major out (ih, ci, iw); pad 864->896
    m2, bias2, (c2, oh2, ow2) = _conv_to_toeplitz(w2, b2, oh1, ow1, 1)  # (384, 864)
    f2 = c2 * oh2 * ow2
    perm2 = np.zeros(f2, dtype=np.int64)
    for co in range(c2):
        for oh in range(oh2):
            for ow in range(ow2):
                perm2[oh * (c2 * ow2) + co * ow2 + ow] = co * (oh2 * ow2) + oh * ow2 + ow
    m2h = m2[:, perm2]
    bias2h = bias2[perm2]
    f2p = _round_up(f2, 128)                                            # 896
    m2p = _pad2d(m2h, m2h.shape[0], f2p)
    b2p = _pad2d(bias2h[None, :], 1, f2p)

    # conv3: 4 row-band matmuls of (512, 384) each
    w3b, bias3 = _conv3_band_weights(w3, b3)                            # (4,512,384), (384,)

    # fc: permute rows from torch's flatten order (co, oh, ow) to the kernel's
    # band-concat order (oh, co, ow); pad 10 -> 128 output lanes.
    wfc = np.asarray(wfc, dtype=np.float32)
    bfc = np.asarray(bfc, dtype=np.float32)
    c3, oh3, ow3 = 96, 4, 4
    nout = int(wfc.shape[0])
    noutp = _round_up(nout, 128)                                        # 10 -> 128
    perm_fc = np.zeros(c3 * oh3 * ow3, dtype=np.int64)
    for oh in range(oh3):
        for co in range(c3):
            for ow in range(ow3):
                perm_fc[oh * (c3 * ow3) + co * ow3 + ow] = co * (oh3 * ow3) + oh * ow3 + ow
    mfc = _pad2d(wfc.T[perm_fc, :], c3 * oh3 * ow3, noutp)              # (1536, 128)
    bfcp = _pad2d(bfc[None, :], 1, noutp)

    bf16 = lambda a: jnp.asarray(a, dtype=jnp.bfloat16)
    f32 = lambda a: jnp.asarray(a, dtype=jnp.float32)
    return dict(
        m1=bf16(m1), b1=f32(bias1[None, :]),
        m2=bf16(m2p), b2=f32(b2p),
        w3=bf16(w3b), b3=f32(bias3[None, :]),
        mfc=bf16(mfc), bfc=f32(bfcp),
        f_in=int(m1.shape[0]), nout=nout, noutp=noutp,
    )


def _pr_cnn_kernel(x_ref, m1_ref, b1_ref, m2_ref, b2_ref, w3_ref, b3_ref,
                   mfc_ref, bfc_ref, o_ref):
    def leaky_bf16(h):                       # f32 epilogue: 1 vmul + 1 vmax + cast
        return jnp.maximum(h, NEG_SLOPE * h).astype(jnp.bfloat16)

    x = x_ref[...].astype(jnp.bfloat16)                              # (BB, 784)
    h1 = jnp.dot(x, m1_ref[...], preferred_element_type=jnp.float32) + b1_ref[...]
    h1 = leaky_bf16(h1)                                              # conv1 -> (BB, 384)
    h2 = jnp.dot(h1, m2_ref[...], preferred_element_type=jnp.float32) + b2_ref[...]
    h2 = leaky_bf16(h2)                                              # conv2 -> (BB, 896) H-major

    # conv3 as 4 row-band matmuls over 128-aligned lane windows of h2.
    bands = []
    for oh in range(4):                                              # static unroll
        win = h2[:, 128 * oh: 128 * oh + 512]                        # aligned lane slice
        hb = jnp.dot(win, w3_ref[oh], preferred_element_type=jnp.float32) + b3_ref[...]
        bands.append(leaky_bf16(hb))                                 # (BB, 384)
    h3 = jnp.concatenate(bands, axis=-1)                             # (BB, 1536), (oh,co,ow)

    o_ref[...] = jnp.dot(h3, mfc_ref[...],
                         preferred_element_type=jnp.float32) + bfc_ref[...]


def _pick_batch_block(b, max_bb):
    """Pick the batch tile: big M (MXU fullness, amortized per-step overhead),
    minimal batch-padding waste, and >= 2 grid steps when possible (v7x 2-TC)."""
    cands = [c for c in (1024, 512, 256, 128, 64, 32, 16, 8) if c <= max_bb]
    if not cands:
        cands = [8]
    best, best_cost = cands[-1], None
    for c in cands:
        padded = _round_up(b, c)
        steps = padded // c
        cost = padded + 64 * steps           # padded MXU rows + per-step overhead (rows-equiv)
        if best_cost is None or cost < best_cost:
            best, best_cost = c, cost
    bb = best
    if _round_up(b, bb) // bb == 1 and bb >= 16:
        bb //= 2                             # keep both v7x TensorCores busy
    return bb


def pr_cnn_forward(x, packed, *, batch_block=512):
    """x: (B, 1, 28, 28) float -> logits (B, 10)."""
    b = x.shape[0]
    f_in = packed["f_in"]                    # 784
    nout, noutp = packed["nout"], packed["noutp"]

    x2d = x.reshape(b, -1).astype(jnp.float32)        # free reshape; no pad/cast HBM pass
    assert x2d.shape[1] == f_in

    bb = _pick_batch_block(b, batch_block)
    b_pad = _round_up(b, bb)
    if b_pad != b:                                    # only pad awkward batch sizes
        x2d = jnp.pad(x2d, ((0, b_pad - b), (0, 0)))
    grid = (b_pad // bb,)

    def resident(shape):                              # VMEM-resident, single-buffered
        nd = len(shape)
        return pl.BlockSpec(tuple(shape), lambda i: (0,) * nd,
                            pipeline_mode=pl.Buffered(1))

    out = pl.pallas_call(
        _pr_cnn_kernel,
        out_shape=jax.ShapeDtypeStruct((b_pad, noutp), jnp.float32),
        grid=grid,
        in_specs=[
            pl.BlockSpec((bb, f_in), lambda i: (i, 0)),             # streamed f32 input
            resident(packed["m1"].shape), resident(packed["b1"].shape),
            resident(packed["m2"].shape), resident(packed["b2"].shape),
            resident(packed["w3"].shape), resident(packed["b3"].shape),
            resident(packed["mfc"].shape), resident(packed["bfc"].shape),
        ],
        out_specs=pl.BlockSpec((bb, noutp), lambda i: (i, 0)),      # lane-dense (128)
        compiler_params=pltpu.CompilerParams(
            dimension_semantics=("parallel",),
            vmem_limit_bytes=48 * 1024 * 1024,
        ),
    )(x2d, packed["m1"], packed["b1"], packed["m2"], packed["b2"],
      packed["w3"], packed["b3"], packed["mfc"], packed["bfc"])

    return out[:b, :nout]


def _reference_forward(x, w1, b1, w2, b2, w3, b3, wfc, bfc):
    """Plain-JAX reference mimicking the kernel's bf16-operand / f32-accumulate
    precision. Used only to validate the Pallas path."""
    hp = lax.Precision.HIGHEST
    r = lambda a: a.astype(jnp.bfloat16).astype(jnp.float32)

    def conv(h, w, b, stride):
        y = lax.conv_general_dilated(
            r(h), r(w), window_strides=(stride, stride), padding="VALID",
            dimension_numbers=("NCHW", "OIHW", "NCHW"), precision=hp)
        y = y + b[None, :, None, None]
        return jnp.maximum(y, NEG_SLOPE * y)

    h = conv(x.astype(jnp.float32), w1, b1, 3)
    h = conv(h, w2, b2, 1)
    h = conv(h, w3, b3, 1)
    h = r(h.reshape(h.shape[0], -1))               # torch Flatten (channel-major)
    return jnp.dot(h, r(wfc).T, precision=hp) + bfc[None, :]


if __name__ == "__main__":
    key = jax.random.PRNGKey(0)
    (k_x, k_w1, k_b1, k_w2, k_b2, k_w3, k_b3, k_wf, k_bf) = jax.random.split(key, 9)

    def uinit(k, shape, fan_in):
        bound = 1.0 / float(np.sqrt(fan_in))
        return jax.random.uniform(k, shape, jnp.float32, -bound, bound)

    batch = 32                                     # small example batch
    x = jax.random.normal(k_x, (batch, 1, 28, 28), dtype=jnp.float32)
    w1, b1 = uinit(k_w1, (6, 1, 5, 5), 25), uinit(k_b1, (6,), 25)
    w2, b2 = uinit(k_w2, (24, 6, 3, 3), 54), uinit(k_b2, (24,), 54)
    w3, b3 = uinit(k_w3, (96, 24, 3, 3), 216), uinit(k_b3, (96,), 216)
    wfc, bfc = uinit(k_wf, (10, 1536), 1536), uinit(k_bf, (10,), 1536)

    packed = pack_pr_cnn_params(w1, b1, w2, b2, w3, b3, wfc, bfc)
    out = pr_cnn_forward(x, packed)                # adaptive bb -> 16, grid of 2
    out = jax.block_until_ready(out)
    assert out.shape == (batch, 10)

    ref = _reference_forward(x, w1, b1, w2, b2, w3, b3, wfc, bfc)
    np.testing.assert_allclose(np.asarray(out), np.asarray(ref),
                               atol=2e-3, rtol=2e-3)
    print("KERNEL_OK")
</pallas_src>

<mosaic_0001>
module attributes {stable_mosaic.version = 11 : i64} {
  func.func @_pr_cnn_kernel(%arg0: i32, %arg1: memref<16x784xf32, #tpu.memory_space<vmem>>, %arg2: memref<784x384xbf16, #tpu.memory_space<vmem>>, %arg3: memref<1x384xf32, #tpu.memory_space<vmem>>, %arg4: memref<384x896xbf16, #tpu.memory_space<vmem>>, %arg5: memref<1x896xf32, #tpu.memory_space<vmem>>, %arg6: memref<4x512x384xbf16, #tpu.memory_space<vmem>>, %arg7: memref<1x384xf32, #tpu.memory_space<vmem>>, %arg8: memref<1536x128xbf16, #tpu.memory_space<vmem>>, %arg9: memref<1x128xf32, #tpu.memory_space<vmem>>, %arg10: memref<16x128xf32, #tpu.memory_space<vmem>>) attributes {dimension_semantics = [#tpu.dimension_semantics<parallel>], iteration_bounds = array<i64: 2>, scalar_prefetch = 0 : i64, scratch_operands = 0 : i64, tpu.core_type = #tpu.core_type<tc>, window_params = [{transform_indices = @transform_0, window_bounds = array<i64: 16, 784>}, {pipeline_mode = #tpu.pipeline_mode<synchronous>, transform_indices = @transform_1, window_bounds = array<i64: 784, 384>}, {pipeline_mode = #tpu.pipeline_mode<synchronous>, transform_indices = @transform_2, window_bounds = array<i64: 1, 384>}, {pipeline_mode = #tpu.pipeline_mode<synchronous>, transform_indices = @transform_3, window_bounds = array<i64: 384, 896>}, {pipeline_mode = #tpu.pipeline_mode<synchronous>, transform_indices = @transform_4, window_bounds = array<i64: 1, 896>}, {pipeline_mode = #tpu.pipeline_mode<synchronous>, transform_indices = @transform_5, window_bounds = array<i64: 4, 512, 384>}, {pipeline_mode = #tpu.pipeline_mode<synchronous>, transform_indices = @transform_6, window_bounds = array<i64: 1, 384>}, {pipeline_mode = #tpu.pipeline_mode<synchronous>, transform_indices = @transform_7, window_bounds = array<i64: 1536, 128>}, {pipeline_mode = #tpu.pipeline_mode<synchronous>, transform_indices = @transform_8, window_bounds = array<i64: 1, 128>}, {transform_indices = @transform_9, window_bounds = array<i64: 16, 128>}]} {
    %c0 = arith.constant 0 : index
    %c0_0 = arith.constant 0 : index
    %0 = vector.load %arg1[%c0, %c0_0] : memref<16x784xf32, #tpu.memory_space<vmem>>, vector<16x784xf32>
    %1 = arith.truncf %0 : vector<16x784xf32> to vector<16x784xbf16>
    %c0_1 = arith.constant 0 : index
    %c0_2 = arith.constant 0 : index
    %2 = vector.load %arg2[%c0_1, %c0_2] : memref<784x384xbf16, #tpu.memory_space<vmem>>, vector<784x384xbf16>
    %cst = arith.constant dense<0.000000e+00> : vector<16x384xf32>
    %3 = tpu.matmul %1, %2, %cst {dimension_numbers = #tpu.dot_dimension_numbers<[1], [0], [0], [1], [0, 0, 1, 1], [], []>} : vector<16x784xbf16>, vector<784x384xbf16>, vector<16x384xf32> -> vector<16x384xf32>
    %c0_3 = arith.constant 0 : index
    %c0_4 = arith.constant 0 : index
    %4 = vector.load %arg3[%c0_3, %c0_4] : memref<1x384xf32, #tpu.memory_space<vmem>>, vector<1x384xf32>
    %5 = vector.broadcast %4 : vector<1x384xf32> to vector<16x384xf32>
    %6 = arith.addf %3, %5 : vector<16x384xf32>
    %cst_5 = arith.constant 0.00999999977 : f32
    %7 = vector.broadcast %cst_5 : f32 to vector<16x384xf32>
    %8 = arith.mulf %7, %6 : vector<16x384xf32>
    %9 = arith.maximumf %6, %8 : vector<16x384xf32>
    %10 = arith.truncf %9 : vector<16x384xf32> to vector<16x384xbf16>
    %c0_6 = arith.constant 0 : index
    %c0_7 = arith.constant 0 : index
    %11 = vector.load %arg4[%c0_6, %c0_7] : memref<384x896xbf16, #tpu.memory_space<vmem>>, vector<384x896xbf16>
    %cst_8 = arith.constant dense<0.000000e+00> : vector<16x896xf32>
    %12 = tpu.matmul %10, %11, %cst_8 {dimension_numbers = #tpu.dot_dimension_numbers<[1], [0], [0], [1], [0, 0, 1, 1], [], []>} : vector<16x384xbf16>, vector<384x896xbf16>, vector<16x896xf32> -> vector<16x896xf32>
    %c0_9 = arith.constant 0 : index
    %c0_10 = arith.constant 0 : index
    %13 = vector.load %arg5[%c0_9, %c0_10] : memref<1x896xf32, #tpu.memory_space<vmem>>, vector<1x896xf32>
    %14 = vector.broadcast %13 : vector<1x896xf32> to vector<16x896xf32>
    %15 = arith.addf %12, %14 : vector<16x896xf32>
    %cst_11 = arith.constant 0.00999999977 : f32
    %16 = vector.broadcast %cst_11 : f32 to vector<16x896xf32>
    %17 = arith.mulf %16, %15 : vector<16x896xf32>
    %18 = arith.maximumf %15, %17 : vector<16x896xf32>
    %19 = arith.truncf %18 : vector<16x896xf32> to vector<16x896xbf16>
    %20 = vector.extract_strided_slice %19 {offsets = [0, 0], sizes = [16, 512], strides = [1, 1]} : vector<16x896xbf16> to vector<16x512xbf16>
    %c0_12 = arith.constant 0 : index
    %c0_13 = arith.constant 0 : index
    %c0_14 = arith.constant 0 : index
    %21 = vector.load %arg6[%c0_12, %c0_13, %c0_14] : memref<4x512x384xbf16, #tpu.memory_space<vmem>>, vector<1x512x384xbf16>
    %22 = vector.shape_cast %21 : vector<1x512x384xbf16> to vector<512x384xbf16>
    %cst_15 = arith.constant dense<0.000000e+00> : vector<16x384xf32>
    %23 = tpu.matmul %20, %22, %cst_15 {dimension_numbers = #tpu.dot_dimension_numbers<[1], [0], [0], [1], [0, 0, 1, 1], [], []>} : vector<16x512xbf16>, vector<512x384xbf16>, vector<16x384xf32> -> vector<16x384xf32>
    %c0_16 = arith.constant 0 : index
    %c0_17 = arith.constant 0 : index
    %24 = vector.load %arg7[%c0_16, %c0_17] : memref<1x384xf32, #tpu.memory_space<vmem>>, vector<1x384xf32>
    %25 = vector.broadcast %24 : vector<1x384xf32> to vector<16x384xf32>
    %26 = arith.addf %23, %25 : vector<16x384xf32>
    %cst_18 = arith.constant 0.00999999977 : f32
    %27 = vector.broadcast %cst_18 : f32 to vector<16x384xf32>
    %28 = arith.mulf %27, %26 : vector<16x384xf32>
    %29 = arith.maximumf %26, %28 : vector<16x384xf32>
    %30 = arith.truncf %29 : vector<16x384xf32> to vector<16x384xbf16>
    %31 = vector.extract_strided_slice %19 {offsets = [0, 128], sizes = [16, 512], strides = [1, 1]} : vector<16x896xbf16> to vector<16x512xbf16>
    %c1 = arith.constant 1 : index
    %c0_19 = arith.constant 0 : index
    %c0_20 = arith.constant 0 : index
    %32 = vector.load %arg6[%c1, %c0_19, %c0_20] : memref<4x512x384xbf16, #tpu.memory_space<vmem>>, vector<1x512x384xbf16>
    %33 = vector.shape_cast %32 : vector<1x512x384xbf16> to vector<512x384xbf16>
    %cst_21 = arith.constant dense<0.000000e+00> : vector<16x384xf32>
    %34 = tpu.matmul %31, %33, %cst_21 {dimension_numbers = #tpu.dot_dimension_numbers<[1], [0], [0], [1], [0, 0, 1, 1], [], []>} : vector<16x512xbf16>, vector<512x384xbf16>, vector<16x384xf32> -> vector<16x384xf32>
    %c0_22 = arith.constant 0 : index
    %c0_23 = arith.constant 0 : index
    %35 = vector.load %arg7[%c0_22, %c0_23] : memref<1x384xf32, #tpu.memory_space<vmem>>, vector<1x384xf32>
    %36 = vector.broadcast %35 : vector<1x384xf32> to vector<16x384xf32>
    %37 = arith.addf %34, %36 : vector<16x384xf32>
    %cst_24 = arith.constant 0.00999999977 : f32
    %38 = vector.broadcast %cst_24 : f32 to vector<16x384xf32>
    %39 = arith.mulf %38, %37 : vector<16x384xf32>
    %40 = arith.maximumf %37, %39 : vector<16x384xf32>
    %41 = arith.truncf %40 : vector<16x384xf32> to vector<16x384xbf16>
    %42 = vector.extract_strided_slice %19 {offsets = [0, 256], sizes = [16, 512], strides = [1, 1]} : vector<16x896xbf16> to vector<16x512xbf16>
    %c2 = arith.constant 2 : index
    %c0_25 = arith.constant 0 : index
    %c0_26 = arith.constant 0 : index
    %43 = vector.load %arg6[%c2, %c0_25, %c0_26] : memref<4x512x384xbf16, #tpu.memory_space<vmem>>, vector<1x512x384xbf16>
    %44 = vector.shape_cast %43 : vector<1x512x384xbf16> to vector<512x384xbf16>
    %cst_27 = arith.constant dense<0.000000e+00> : vector<16x384xf32>
    %45 = tpu.matmul %42, %44, %cst_27 {dimension_numbers = #tpu.dot_dimension_numbers<[1], [0], [0], [1], [0, 0, 1, 1], [], []>} : vector<16x512xbf16>, vector<512x384xbf16>, vector<16x384xf32> -> vector<16x384xf32>
    %c0_28 = arith.constant 0 : index
    %c0_29 = arith.constant 0 : index
    %46 = vector.load %arg7[%c0_28, %c0_29] : memref<1x384xf32, #tpu.memory_space<vmem>>, vector<1x384xf32>
    %47 = vector.broadcast %46 : vector<1x384xf32> to vector<16x384xf32>
    %48 = arith.addf %45, %47 : vector<16x384xf32>
    %cst_30 = arith.constant 0.00999999977 : f32
    %49 = vector.broadcast %cst_30 : f32 to vector<16x384xf32>
    %50 = arith.mulf %49, %48 : vector<16x384xf32>
    %51 = arith.maximumf %48, %50 : vector<16x384xf32>
    %52 = arith.truncf %51 : vector<16x384xf32> to vector<16x384xbf16>
    %53 = vector.extract_strided_slice %19 {offsets = [0, 384], sizes = [16, 512], strides = [1, 1]} : vector<16x896xbf16> to vector<16x512xbf16>
    %c3 = arith.constant 3 : index
    %c0_31 = arith.constant 0 : index
    %c0_32 = arith.constant 0 : index
    %54 = vector.load %arg6[%c3, %c0_31, %c0_32] : memref<4x512x384xbf16, #tpu.memory_space<vmem>>, vector<1x512x384xbf16>
    %55 = vector.shape_cast %54 : vector<1x512x384xbf16> to vector<512x384xbf16>
    %cst_33 = arith.constant dense<0.000000e+00> : vector<16x384xf32>
    %56 = tpu.matmul %53, %55, %cst_33 {dimension_numbers = #tpu.dot_dimension_numbers<[1], [0], [0], [1], [0, 0, 1, 1], [], []>} : vector<16x512xbf16>, vector<512x384xbf16>, vector<16x384xf32> -> vector<16x384xf32>
    %c0_34 = arith.constant 0 : index
    %c0_35 = arith.constant 0 : index
    %57 = vector.load %arg7[%c0_34, %c0_35] : memref<1x384xf32, #tpu.memory_space<vmem>>, vector<1x384xf32>
    %58 = vector.broadcast %57 : vector<1x384xf32> to vector<16x384xf32>
    %59 = arith.addf %56, %58 : vector<16x384xf32>
    %cst_36 = arith.constant 0.00999999977 : f32
    %60 = vector.broadcast %cst_36 : f32 to vector<16x384xf32>
    %61 = arith.mulf %60, %59 : vector<16x384xf32>
    %62 = arith.maximumf %59, %61 : vector<16x384xf32>
    %63 = arith.truncf %62 : vector<16x384xf32> to vector<16x384xbf16>
    %64 = tpu.concatenate %30, %41, %52, %63 in 1 : vector<16x384xbf16>, vector<16x384xbf16>, vector<16x384xbf16>, vector<16x384xbf16> -> vector<16x1536xbf16>
    %c0_37 = arith.constant 0 : index
    %c0_38 = arith.constant 0 : index
    %65 = vector.load %arg8[%c0_37, %c0_38] : memref<1536x128xbf16, #tpu.memory_space<vmem>>, vector<1536x128xbf16>
    %cst_39 = arith.constant dense<0.000000e+00> : vector<16x128xf32>
    %66 = tpu.matmul %64, %65, %cst_39 {dimension_numbers = #tpu.dot_dimension_numbers<[1], [0], [0], [1], [0, 0, 1, 1], [], []>} : vector<16x1536xbf16>, vector<1536x128xbf16>, vector<16x128xf32> -> vector<16x128xf32>
    %c0_40 = arith.constant 0 : index
    %c0_41 = arith.constant 0 : index
    %67 = vector.load %arg9[%c0_40, %c0_41] : memref<1x128xf32, #tpu.memory_space<vmem>>, vector<1x128xf32>
    %68 = vector.broadcast %67 : vector<1x128xf32> to vector<16x128xf32>
    %69 = arith.addf %66, %68 : vector<16x128xf32>
    %c0_42 = arith.constant 0 : index
    %c0_43 = arith.constant 0 : index
    %70 = vector.load %arg10[%c0_42, %c0_43] : memref<16x128xf32, #tpu.memory_space<vmem>>, vector<16x128xf32>
    tpu.vector_store %arg10[%c0_42, %c0_43], %69 {strides = array<i32>} : memref<16x128xf32, #tpu.memory_space<vmem>>, vector<16x128xf32>,
    return
  }
  func.func @transform_0(%arg0: i32) -> (i32, i32) {
    %c0_i32 = arith.constant 0 : i32
    %c0_i32_0 = arith.constant 0 : i32
    return %arg0, %c0_i32 : i32, i32
  }
  func.func @transform_1(%arg0: i32) -> (i32, i32) {
    %c0_i32 = arith.constant 0 : i32
    %c0_i32_0 = arith.constant 0 : i32
    %c0_i32_1 = arith.constant 0 : i32
    return %c0_i32, %c0_i32_0 : i32, i32
  }
  func.func @transform_2(%arg0: i32) -> (i32, i32) {
    %c0_i32 = arith.constant 0 : i32
    %c0_i32_0 = arith.constant 0 : i32
    %c0_i32_1 = arith.constant 0 : i32
    return %c0_i32, %c0_i32_0 : i32, i32
  }
  func.func @transform_3(%arg0: i32) -> (i32, i32) {
    %c0_i32 = arith.constant 0 : i32
    %c0_i32_0 = arith.constant 0 : i32
    %c0_i32_1 = arith.constant 0 : i32
    return %c0_i32, %c0_i32_0 : i32, i32
  }
  func.func @transform_4(%arg0: i32) -> (i32, i32) {
    %c0_i32 = arith.constant 0 : i32
    %c0_i32_0 = arith.constant 0 : i32
    %c0_i32_1 = arith.constant 0 : i32
    return %c0_i32, %c0_i32_0 : i32, i32
  }
  func.func @transform_5(%arg0: i32) -> (i32, i32, i32) {
    %c0_i32 = arith.constant 0 : i32
    %c0_i32_0 = arith.constant 0 : i32
    %c0_i32_1 = arith.constant 0 : i32
    %c0_i32_2 = arith.constant 0 : i32
    return %c0_i32, %c0_i32_0, %c0_i32_1 : i32, i32, i32
  }
  func.func @transform_6(%arg0: i32) -> (i32, i32) {
    %c0_i32 = arith.constant 0 : i32
    %c0_i32_0 = arith.constant 0 : i32
    %c0_i32_1 = arith.constant 0 : i32
    return %c0_i32, %c0_i32_0 : i32, i32
  }
  func.func @transform_7(%arg0: i32) -> (i32, i32) {
    %c0_i32 = arith.constant 0 : i32
    %c0_i32_0 = arith.constant 0 : i32
    %c0_i32_1 = arith.constant 0 : i32
    return %c0_i32, %c0_i32_0 : i32, i32
  }
  func.func @transform_8(%arg0: i32) -> (i32, i32) {
    %c0_i32 = arith.constant 0 : i32
    %c0_i32_0 = arith.constant 0 : i32
    %c0_i32_1 = arith.constant 0 : i32
    return %c0_i32, %c0_i32_0 : i32, i32
  }
  func.func @transform_9(%arg0: i32) -> (i32, i32) {
    %c0_i32 = arith.constant 0 : i32
    %c0_i32_0 = arith.constant 0 : i32
    return %arg0, %c0_i32 : i32, i32
  }
}

</mosaic_0001>

<llo_original>
// kernel: tpu_custom_call.1
$region0: #{tpu_custom_call.1}
  #allocation0 [shape = 'u32[]', space=smem, size = 0x4, offset = 0x4, fixed_abs, tag = 'smem constant byte address 0x4 - core index']
  #allocation1 [shape = 'u32[144,128]{1,0:T(1,128)}', space=vmem, size = 0x12000, scoped, tag = 'internal scratch']
  %s0 = inlined_call_operand.hbm [shape: f32[32,784], index: 0, kind: input, shape index: {}]
  %s1 = inlined_call_operand.hbm [shape: bf16[784,384], index: 1, kind: input, shape index: {}]
  %s2 = inlined_call_operand.hbm [shape: f32[1,384], index: 2, kind: input, shape index: {}]
  %s3 = inlined_call_operand.hbm [shape: bf16[384,896], index: 3, kind: input, shape index: {}]
  %s4 = inlined_call_operand.hbm [shape: f32[1,896], index: 4, kind: input, shape index: {}]
  %s5 = inlined_call_operand.hbm [shape: bf16[4,512,384], index: 5, kind: input, shape index: {}]
  %s6 = inlined_call_operand.hbm [shape: f32[1,384], index: 6, kind: input, shape index: {}]
  %s7 = inlined_call_operand.hbm [shape: bf16[1536,128], index: 7, kind: input, shape index: {}]
  %s8 = inlined_call_operand.hbm [shape: f32[1,128], index: 8, kind: input, shape index: {}]
  %s9 = inlined_call_operand.hbm [shape: f32[32,128], index: 9, kind: output, shape index: {}]
  %s10 = sld [smem:[#allocation0]]
  $region105: #{tpu_custom_call.1} parent=0
    _
  %s12 = ssub.s32 1, %s10
  %s13 = scalar_select 0, %s12, %s10
  $region1: #{tpu_custom_call.1} parent=0
    #allocation2 [shape = 'u8[114688]{0}', space=vmem, size = 0x1c000, scoped, tag = 'input window, operand 0']
    #allocation3 [shape = 's32[2]{0}', space=sflag, size = 0x8, scoped, tag = 'scoped memory for tpu_custom_call.1']
    #allocation4 [shape = 's32[2]{0}', space=sflag, size = 0x8, scoped, tag = 'scoped memory for tpu_custom_call.1']
    #allocation5 [shape = 'u8[602112]{0}', space=vmem, size = 0x93000, scoped, tag = 'input window, operand 1, single buffered']
    #allocation6 [shape = 's32[1]{0}', space=sflag, size = 0x4, scoped, tag = 'scoped memory for tpu_custom_call.1']
    #allocation7 [shape = 'u8[1536]{0}', space=vmem, size = 0x800, scoped, tag = 'input window, operand 2, single buffered']
    #allocation8 [shape = 'u8[688128]{0}', space=vmem, size = 0xa8000, scoped, tag = 'input window, operand 3, single buffered']
    #allocation9 [shape = 's32[1]{0}', space=sflag, size = 0x4, scoped, tag = 'scoped memory for tpu_custom_call.1']
    #allocation10 [shape = 'u8[3584]{0}', space=vmem, size = 0x1000, scoped, tag = 'input window, operand 4, single buffered']
    #allocation11 [shape = 'u8[1572864]{0}', space=vmem, size = 0x180000, scoped, tag = 'input window, operand 5, single buffered']
    #allocation12 [shape = 's32[1]{0}', space=sflag, size = 0x4, scoped, tag = 'scoped memory for tpu_custom_call.1']
    #allocation13 [shape = 'u8[1536]{0}', space=vmem, size = 0x800, scoped, tag = 'input window, operand 6, single buffered']
    #allocation14 [shape = 'u8[393216]{0}', space=vmem, size = 0x60000, scoped, tag = 'input window, operand 7, single buffered']
    #allocation15 [shape = 's32[1]{0}', space=sflag, size = 0x4, scoped, tag = 'scoped memory for tpu_custom_call.1']
    #allocation16 [shape = 'u8[512]{0}', space=vmem, size = 0x400, scoped, tag = 'input window, operand 8, single buffered']
    #allocation17 [shape = 'u8[16384]{0}', space=vmem, size = 0x4000, scoped, tag = 'output window, operand 0']
    %14 = vsyncpa [#allocation3], 0
    %s15 = scalar_lea.sflag [#allocation3], 1
    %16 = vsyncpa %s15, 0
    %17 = vsyncpa [#allocation6], 0
    %18 = vsyncpa [#allocation9], 0
    %19 = vsyncpa [#allocation12], 0
    %20 = vsyncpa [#allocation15], 0
    %21 = vsyncpa [#allocation4], 0
    %s22 = scalar_lea.sflag [#allocation4], 1
    %23 = vsyncpa %s22, 0
    loop: start=0, step=1, limit=4
    $region2: #{tpu_custom_call.1} parent=1 // loop_pre_header
      _
    $region3: #{tpu_custom_call.1} parent=1 // loop_header
      %s25 = sphi 0, %s29
      %p26 = scmp.ge.s32.totalorder %s25, 4
      %s35 = sphi 0, %s37
      %s38 = sphi 0, %s35
      %s39 = sphi 0, %s38
      %s55 = sphi 0, %s39
      %s59 = sphi 0, %s59
      %s61 = sphi 0, %s59
      %s62 = sphi 0, %s61
      %s76 = sphi 0, %s62
      %s80 = sphi 0, %s80
      %s82 = sphi 0, %s80
      %s83 = sphi 0, %s82
      %s97 = sphi 0, %s83
      %s101 = sphi 0, %s101
      %s103 = sphi 0, %s101
      %s104 = sphi 0, %s103
      %s118 = sphi 0, %s104
      %s122 = sphi 0, %s122
      %s124 = sphi 0, %s122
      %s125 = sphi 0, %s124
      %s139 = sphi 0, %s125
      %s143 = sphi 0, %s143
      %s145 = sphi 0, %s143
      %s146 = sphi 0, %s145
      %s160 = sphi 0, %s146
      %s164 = sphi 0, %s164
      %s166 = sphi 0, %s164
      %s167 = sphi 0, %s166
      %s181 = sphi 0, %s167
      %s185 = sphi 0, %s185
      %s187 = sphi 0, %s185
      %s188 = sphi 0, %s187
      %s202 = sphi 0, %s188
      %s206 = sphi 0, %s206
      %s208 = sphi 0, %s206
      %s209 = sphi 0, %s208
      %s223 = sphi 0, %s209
      %s229 = sphi 0, %s231
      %s232 = sphi 0, %s229
      %s233 = sphi 0, %s232
      %s249 = sphi 0, %s233
    $region4: #{tpu_custom_call.1} parent=1 // loop_header_branch
      %28 = sbr.rel (%p26) target = $region8
    $region5: #{tpu_custom_call.1} parent=1 // loop_body
      %s30 = ssub.s32 %s25, 1
      %s31 = ssub.s32 %s25, 2
      %s32 = sadd.s32 %s25, 1
      %s33 = ssub.s32 %s25, %s32
      %p34 = scmp.eq.s32.totalorder %s33, 0
      %s36 = sadd.s32 %s35, 1
      %s37 = scalar_select %p34, %s35, %s36
      %p40 = pneg %p34
      %p41 = scmp.eq.s32.totalorder %s25, 1
      %p42 = por %p40, %p41
      %p43 = scmp.ne.s32.totalorder %s35, %s38
      %p44 = scmp.eq.s32.totalorder %s25, 0
      %p45 = por %p43, %p44
      %p46 = scmp.ne.s32.totalorder %s35, %s38
      %p47 = scmp.eq.s32.totalorder %s30, 1
      %p48 = por %p46, %p47
      %p49 = scmp.ne.s32.totalorder %s38, %s39
      %p50 = scmp.eq.s32.totalorder %s30, 0
      %p51 = por %p49, %p50
      %p52 = scmp.ne.s32.totalorder %s38, %s39
      %p53 = scmp.eq.s32.totalorder %s31, 1
      %p54 = por %p52, %p53
      %p56 = scmp.ne.s32.totalorder %s39, %s55
      %p57 = scmp.eq.s32.totalorder %s31, 0
      %p58 = por %p56, %p57
      %s60 = sadd.s32 %s59, 1
      %p63 = scmp.eq.s32.totalorder %s25, 1
      %p64 = scmp.ne.s32.totalorder %s59, %s61
      %p65 = scmp.eq.s32.totalorder %s25, 0
      %p66 = por %p64, %p65
      %p67 = scmp.ne.s32.totalorder %s59, %s61
      %p68 = scmp.eq.s32.totalorder %s30, 1
      %p69 = por %p67, %p68
      %p70 = scmp.ne.s32.totalorder %s61, %s62
      %p71 = scmp.eq.s32.totalorder %s30, 0
      %p72 = por %p70, %p71
      %p73 = scmp.ne.s32.totalorder %s61, %s62
      %p74 = scmp.eq.s32.totalorder %s31, 1
      %p75 = por %p73, %p74
      %p77 = scmp.ne.s32.totalorder %s62, %s76
      %p78 = scmp.eq.s32.totalorder %s31, 0
      %p79 = por %p77, %p78
      %s81 = sadd.s32 %s80, 1
      %p84 = scmp.eq.s32.totalorder %s25, 1
      %p85 = scmp.ne.s32.totalorder %s80, %s82
      %p86 = scmp.eq.s32.totalorder %s25, 0
      %p87 = por %p85, %p86
      %p88 = scmp.ne.s32.totalorder %s80, %s82
      %p89 = scmp.eq.s32.totalorder %s30, 1
      %p90 = por %p88, %p89
      %p91 = scmp.ne.s32.totalorder %s82, %s83
      %p92 = scmp.eq.s32.totalorder %s30, 0
      %p93 = por %p91, %p92
      %p94 = scmp.ne.s32.totalorder %s82, %s83
      %p95 = scmp.eq.s32.totalorder %s31, 1
      %p96 = por %p94, %p95
      %p98 = scmp.ne.s32.totalorder %s83, %s97
      %p99 = scmp.eq.s32.totalorder %s31, 0
      %p100 = por %p98, %p99
      %s102 = sadd.s32 %s101, 1
      %p105 = scmp.eq.s32.totalorder %s25, 1
      %p106 = scmp.ne.s32.totalorder %s101, %s103
      %p107 = scmp.eq.s32.totalorder %s25, 0
      %p108 = por %p106, %p107
      %p109 = scmp.ne.s32.totalorder %s101, %s103
      %p110 = scmp.eq.s32.totalorder %s30, 1
      %p111 = por %p109, %p110
      %p112 = scmp.ne.s32.totalorder %s103, %s104
      %p113 = scmp.eq.s32.totalorder %s30, 0
      %p114 = por %p112, %p113
      %p115 = scmp.ne.s32.totalorder %s103, %s104
      %p116 = scmp.eq.s32.totalorder %s31, 1
      %p117 = por %p115, %p116
      %p119 = scmp.ne.s32.totalorder %s104, %s118
      %p120 = scmp.eq.s32.totalorder %s31, 0
      %p121 = por %p119, %p120
      %s123 = sadd.s32 %s122, 1
      %p126 = scmp.eq.s32.totalorder %s25, 1
      %p127 = scmp.ne.s32.totalorder %s122, %s124
      %p128 = scmp.eq.s32.totalorder %s25, 0
      %p129 = por %p127, %p128
      %p130 = scmp.ne.s32.totalorder %s122, %s124
      %p131 = scmp.eq.s32.totalorder %s30, 1
      %p132 = por %p130, %p131
      %p133 = scmp.ne.s32.totalorder %s124, %s125
      %p134 = scmp.eq.s32.totalorder %s30, 0
      %p135 = por %p133, %p134
      %p136 = scmp.ne.s32.totalorder %s124, %s125
      %p137 = scmp.eq.s32.totalorder %s31, 1
      %p138 = por %p136, %p137
      %p140 = scmp.ne.s32.totalorder %s125, %s139
      %p141 = scmp.eq.s32.totalorder %s31, 0
      %p142 = por %p140, %p141
      %s144 = sadd.s32 %s143, 1
      %p147 = scmp.eq.s32.totalorder %s25, 1
      %p148 = scmp.ne.s32.totalorder %s143, %s145
      %p149 = scmp.eq.s32.totalorder %s25, 0
      %p150 = por %p148, %p149
      %p151 = scmp.ne.s32.totalorder %s143, %s145
      %p152 = scmp.eq.s32.totalorder %s30, 1
      %p153 = por %p151, %p152
      %p154 = scmp.ne.s32.totalorder %s145, %s146
      %p155 = scmp.eq.s32.totalorder %s30, 0
      %p156 = por %p154, %p155
      %p157 = scmp.ne.s32.totalorder %s145, %s146
      %p158 = scmp.eq.s32.totalorder %s31, 1
      %p159 = por %p157, %p158
      %p161 = scmp.ne.s32.totalorder %s146, %s160
      %p162 = scmp.eq.s32.totalorder %s31, 0
      %p163 = por %p161, %p162
      %s165 = sadd.s32 %s164, 1
      %p168 = scmp.eq.s32.totalorder %s25, 1
      %p169 = scmp.ne.s32.totalorder %s164, %s166
      %p170 = scmp.eq.s32.totalorder %s25, 0
      %p171 = por %p169, %p170
      %p172 = scmp.ne.s32.totalorder %s164, %s166
      %p173 = scmp.eq.s32.totalorder %s30, 1
      %p174 = por %p172, %p173
      %p175 = scmp.ne.s32.totalorder %s166, %s167
      %p176 = scmp.eq.s32.totalorder %s30, 0
      %p177 = por %p175, %p176
      %p178 = scmp.ne.s32.totalorder %s166, %s167
      %p179 = scmp.eq.s32.totalorder %s31, 1
      %p180 = por %p178, %p179
      %p182 = scmp.ne.s32.totalorder %s167, %s181
      %p183 = scmp.eq.s32.totalorder %s31, 0
      %p184 = por %p182, %p183
      %s186 = sadd.s32 %s185, 1
      %p189 = scmp.eq.s32.totalorder %s25, 1
      %p190 = scmp.ne.s32.totalorder %s185, %s187
      %p191 = scmp.eq.s32.totalorder %s25, 0
      %p192 = por %p190, %p191
      %p193 = scmp.ne.s32.totalorder %s185, %s187
      %p194 = scmp.eq.s32.totalorder %s30, 1
      %p195 = por %p193, %p194
      %p196 = scmp.ne.s32.totalorder %s187, %s188
      %p197 = scmp.eq.s32.totalorder %s30, 0
      %p198 = por %p196, %p197
      %p199 = scmp.ne.s32.totalorder %s187, %s188
      %p200 = scmp.eq.s32.totalorder %s31, 1
      %p201 = por %p199, %p200
      %p203 = scmp.ne.s32.totalorder %s188, %s202
      %p204 = scmp.eq.s32.totalorder %s31, 0
      %p205 = por %p203, %p204
      %s207 = sadd.s32 %s206, 1
      %p210 = scmp.eq.s32.totalorder %s25, 1
      %p211 = scmp.ne.s32.totalorder %s206, %s208
      %p212 = scmp.eq.s32.totalorder %s25, 0
      %p213 = por %p211, %p212
      %p214 = scmp.ne.s32.totalorder %s206, %s208
      %p215 = scmp.eq.s32.totalorder %s30, 1
      %p216 = por %p214, %p215
      %p217 = scmp.ne.s32.totalorder %s208, %s209
      %p218 = scmp.eq.s32.totalorder %s30, 0
      %p219 = por %p217, %p218
      %p220 = scmp.ne.s32.totalorder %s208, %s209
      %p221 = scmp.eq.s32.totalorder %s31, 1
      %p222 = por %p220, %p221
      %p224 = scmp.ne.s32.totalorder %s209, %s223
      %p225 = scmp.eq.s32.totalorder %s31, 0
      %p226 = por %p224, %p225
      %s227 = ssub.s32 %s25, %s32
      %p228 = scmp.eq.s32.totalorder %s227, 0
      %s230 = sadd.s32 %s229, 1
      %s231 = scalar_select %p228, %s229, %s230
      %p234 = pneg %p228
      %p235 = scmp.eq.s32.totalorder %s25, 1
      %p236 = por %p234, %p235
      %p237 = scmp.ne.s32.totalorder %s229, %s232
      %p238 = scmp.eq.s32.totalorder %s25, 0
      %p239 = por %p237, %p238
      %p240 = scmp.ne.s32.totalorder %s229, %s232
      %p241 = scmp.eq.s32.totalorder %s30, 1
      %p242 = por %p240, %p241
      %p243 = scmp.ne.s32.totalorder %s232, %s233
      %p244 = scmp.eq.s32.totalorder %s30, 0
      %p245 = por %p243, %p244
      %p246 = scmp.ne.s32.totalorder %s232, %s233
      %p247 = scmp.eq.s32.totalorder %s31, 1
      %p248 = por %p246, %p247
      %p250 = scmp.ne.s32.totalorder %s233, %s249
      %p251 = scmp.eq.s32.totalorder %s31, 0
      %p252 = por %p250, %p251
      %p253 = scmp.le.s32.totalorder 1, %s25
      %p254 = scmp.lt.s32.totalorder %s25, 3
      %p255 = pnand %p253, %p254
      %p256 = pneg %p255
      // Predicated region
      $region9: #{tpu_custom_call.1} parent=5 // pred_check
        _
      $region10: #{tpu_custom_call.1} parent=5 // pred_check_branch
        %258 = sbr.rel (%p255) target = $region12
      $region11: #{tpu_custom_call.1} parent=5 // pred_region
        %s259 = ssub.s32 %s25, 1
        // Predicated region
        $region13: #{tpu_custom_call.1} parent=11 // pred_check
          %p260 = pneg %p72
        $region14: #{tpu_custom_call.1} parent=11 // pred_check_branch
          %262 = sbr.rel (%p260) target = $region16
        $region15: #{tpu_custom_call.1} parent=11 // pred_region
          %s264 = ssub.s32 18816, 18816
          %265 = vsyncadd [#allocation6], %s264
          %s266 = sshll.u32 [#allocation5], 4
          %s267 = int_to_ptr.vmem [resolvable:$true] %s266
          %272 = dma.hbm_to_vmem [thread:$0]  %s1, 18816, %s267, [#allocation6], 192, 192, 12
        $region16: #{tpu_custom_call.1} parent=11 // pred_fallthru
          _
        // Predicated region
        $region17: #{tpu_custom_call.1} parent=11 // pred_check
          %p273 = pneg %p93
        $region18: #{tpu_custom_call.1} parent=11 // pred_check_branch
          %275 = sbr.rel (%p273) target = $region20
        $region19: #{tpu_custom_call.1} parent=11 // pred_region
          %s277 = ssub.s32 48, 48
          %278 = vsyncadd [#allocation6], %s277
          %s280 = sshll.u32 [#allocation7], 4
          %s281 = int_to_ptr.vmem [resolvable:$true] %s280
          %283 = dma.hbm_to_vmem [thread:$0]  %s2, 48, %s281, [#allocation6]
        $region20: #{tpu_custom_call.1} parent=11 // pred_fallthru
          _
        // Predicated region
        $region21: #{tpu_custom_call.1} parent=11 // pred_check
          %p284 = pneg %p114
        $region22: #{tpu_custom_call.1} parent=11 // pred_check_branch
          %286 = sbr.rel (%p284) target = $region24
        $region23: #{tpu_custom_call.1} parent=11 // pred_region
          %s288 = ssub.s32 21504, 21504
          %289 = vsyncadd [#allocation9], %s288
          %s290 = sshll.u32 [#allocation8], 4
          %s291 = int_to_ptr.vmem [resolvable:$true] %s290
          %296 = dma.hbm_to_vmem [thread:$0]  %s3, 21504, %s291, [#allocation9], 448, 448, 28
        $region24: #{tpu_custom_call.1} parent=11 // pred_fallthru
          _
        // Predicated region
        $region25: #{tpu_custom_call.1} parent=11 // pred_check
          %p297 = pneg %p135
        $region26: #{tpu_custom_call.1} parent=11 // pred_check_branch
          %299 = sbr.rel (%p297) target = $region28
        $region27: #{tpu_custom_call.1} parent=11 // pred_region
          %s301 = ssub.s32 112, 112
          %302 = vsyncadd [#allocation9], %s301
          %s304 = sshll.u32 [#allocation10], 4
          %s305 = int_to_ptr.vmem [resolvable:$true] %s304
          %307 = dma.hbm_to_vmem [thread:$0]  %s4, 112, %s305, [#allocation9]
        $region28: #{tpu_custom_call.1} parent=11 // pred_fallthru
          _
        // Predicated region
        $region29: #{tpu_custom_call.1} parent=11 // pred_check
          %p308 = pneg %p156
        $region30: #{tpu_custom_call.1} parent=11 // pred_check_branch
          %310 = sbr.rel (%p308) target = $region32
        $region31: #{tpu_custom_call.1} parent=11 // pred_region
          %s312 = ssub.s32 49152, 49152
          %313 = vsyncadd [#allocation12], %s312
          %s314 = sshll.u32 [#allocation11], 4
          %s315 = int_to_ptr.vmem [resolvable:$true] %s314
          %320 = dma.hbm_to_vmem [thread:$0]  %s5, 49152, %s315, [#allocation12], 192, 192, 12
        $region32: #{tpu_custom_call.1} parent=11 // pred_fallthru
          _
        // Predicated region
        $region33: #{tpu_custom_call.1} parent=11 // pred_check
          %p321 = pneg %p177
        $region34: #{tpu_custom_call.1} parent=11 // pred_check_branch
          %323 = sbr.rel (%p321) target = $region36
        $region35: #{tpu_custom_call.1} parent=11 // pred_region
          %s325 = ssub.s32 48, 48
          %326 = vsyncadd [#allocation12], %s325
          %s328 = sshll.u32 [#allocation13], 4
          %s329 = int_to_ptr.vmem [resolvable:$true] %s328
          %331 = dma.hbm_to_vmem [thread:$0]  %s6, 48, %s329, [#allocation12]
        $region36: #{tpu_custom_call.1} parent=11 // pred_fallthru
          _
        // Predicated region
        $region37: #{tpu_custom_call.1} parent=11 // pred_check
          %p332 = pneg %p198
        $region38: #{tpu_custom_call.1} parent=11 // pred_check_branch
          %334 = sbr.rel (%p332) target = $region40
        $region39: #{tpu_custom_call.1} parent=11 // pred_region
          %s336 = ssub.s32 12288, 12288
          %337 = vsyncadd [#allocation15], %s336
          %s338 = sshll.u32 [#allocation14], 4
          %s339 = int_to_ptr.vmem [resolvable:$true] %s338
          %344 = dma.hbm_to_vmem [thread:$0]  %s7, 12288, %s339, [#allocation15], 64, 64, 4
        $region40: #{tpu_custom_call.1} parent=11 // pred_fallthru
          _
        // Predicated region
        $region41: #{tpu_custom_call.1} parent=11 // pred_check
          %p345 = pneg %p219
        $region42: #{tpu_custom_call.1} parent=11 // pred_check_branch
          %347 = sbr.rel (%p345) target = $region44
        $region43: #{tpu_custom_call.1} parent=11 // pred_region
          %s349 = ssub.s32 16, 16
          %350 = vsyncadd [#allocation15], %s349
          %s352 = sshll.u32 [#allocation16], 4
          %s353 = int_to_ptr.vmem [resolvable:$true] %s352
          %355 = dma.hbm_to_vmem [thread:$0]  %s8, 16, %s353, [#allocation15]
        $region44: #{tpu_custom_call.1} parent=11 // pred_fallthru
          _
      $region12: #{tpu_custom_call.1} parent=5 // pred_fallthru
        _
      %p356 = scmp.lt.s32.totalorder %s25, 2
      // Predicated region
      $region45: #{tpu_custom_call.1} parent=5 // pred_check
        %p357 = pneg %p356
      $region46: #{tpu_custom_call.1} parent=5 // pred_check_branch
        %359 = sbr.rel (%p357) target = $region48
      $region47: #{tpu_custom_call.1} parent=5 // pred_region
        // Predicated region
        $region49: #{tpu_custom_call.1} parent=47 // pred_check
          %p360 = pneg %p45
        $region50: #{tpu_custom_call.1} parent=47 // pred_check_branch
          %362 = sbr.rel (%p360) target = $region52
        $region51: #{tpu_custom_call.1} parent=47 // pred_region
          %s363 = sand.u32 %s35, 1
          %s364 = scalar_lea.sflag [#allocation3], %s363
          %s365 = sand.u32 %s35, 1
          %s366 = smul.addr %s365, 112
          %s367 = scalar_lea.vmem [#allocation2], %s366
          %s368 = smul.u32 2, %s25
          %s370 = ssub.s32 1792, 1792
          %371 = vsyncadd %s364, %s370
          %s372 = smul.addr %s368, 7
          %s373 = smul.addr %s372, 128
          %s374 = scalar_lea.hbm %s0, %s373
          %s375 = sshll.u32 %s367, 4
          %s376 = int_to_ptr.vmem [resolvable:$true] %s375
          %381 = dma.hbm_to_vmem [thread:$0]  %s374, 1792, %s376, %s364, 896, 896, 56
        $region52: #{tpu_custom_call.1} parent=47 // pred_fallthru
          _
      $region48: #{tpu_custom_call.1} parent=5 // pred_fallthru
        _
      %p382 = scmp.le.s32.totalorder 1, %s25
      %p383 = scmp.lt.s32.totalorder %s25, 3
      %p384 = pnand %p382, %p383
      %p385 = pneg %p384
      // Predicated region
      $region53: #{tpu_custom_call.1} parent=5 // pred_check
        _
      $region54: #{tpu_custom_call.1} parent=5 // pred_check_branch
        %387 = sbr.rel (%p384) target = $region56
      $region55: #{tpu_custom_call.1} parent=5 // pred_region
        %s388 = ssub.s32 %s25, 1
        %s389 = sand.u32 %s38, 1
        %s390 = scalar_lea.sflag [#allocation3], %s389
        %s391 = sand.u32 %s38, 1
        %s392 = smul.addr %s391, 112
        %s393 = scalar_lea.vmem [#allocation2], %s392
        // Predicated region
        $region57: #{tpu_custom_call.1} parent=55 // pred_check
          %p394 = pneg %p51
        $region58: #{tpu_custom_call.1} parent=55 // pred_check_branch
          %396 = sbr.rel (%p394) target = $region60
        $region59: #{tpu_custom_call.1} parent=55 // pred_region
          %397 = dma.done %s390, 1792
        $region60: #{tpu_custom_call.1} parent=55 // pred_fallthru
          _
        // Predicated region
        $region61: #{tpu_custom_call.1} parent=55 // pred_check
          %p398 = pneg %p72
        $region62: #{tpu_custom_call.1} parent=55 // pred_check_branch
          %400 = sbr.rel (%p398) target = $region64
        $region63: #{tpu_custom_call.1} parent=55 // pred_region
          %401 = dma.done [#allocation6], 18816
        $region64: #{tpu_custom_call.1} parent=55 // pred_fallthru
          _
        // Predicated region
        $region65: #{tpu_custom_call.1} parent=55 // pred_check
          %p402 = pneg %p93
        $region66: #{tpu_custom_call.1} parent=55 // pred_check_branch
          %404 = sbr.rel (%p402) target = $region68
        $region67: #{tpu_custom_call.1} parent=55 // pred_region
          %405 = dma.done [#allocation6], 48
        $region68: #{tpu_custom_call.1} parent=55 // pred_fallthru
          _
        // Predicated region
        $region69: #{tpu_custom_call.1} parent=55 // pred_check
          %p406 = pneg %p114
        $region70: #{tpu_custom_call.1} parent=55 // pred_check_branch
          %408 = sbr.rel (%p406) target = $region72
        $region71: #{tpu_custom_call.1} parent=55 // pred_region
          %409 = dma.done [#allocation9], 21504
        $region72: #{tpu_custom_call.1} parent=55 // pred_fallthru
          _
        // Predicated region
        $region73: #{tpu_custom_call.1} parent=55 // pred_check
          %p410 = pneg %p135
        $region74: #{tpu_custom_call.1} parent=55 // pred_check_branch
          %412 = sbr.rel (%p410) target = $region76
        $region75: #{tpu_custom_call.1} parent=55 // pred_region
          %413 = dma.done [#allocation9], 112
        $region76: #{tpu_custom_call.1} parent=55 // pred_fallthru
          _
        // Predicated region
        $region77: #{tpu_custom_call.1} parent=55 // pred_check
          %p414 = pneg %p156
        $region78: #{tpu_custom_call.1} parent=55 // pred_check_branch
          %416 = sbr.rel (%p414) target = $region80
        $region79: #{tpu_custom_call.1} parent=55 // pred_region
          %417 = dma.done [#allocation12], 49152
        $region80: #{tpu_custom_call.1} parent=55 // pred_fallthru
          _
        // Predicated region
        $region81: #{tpu_custom_call.1} parent=55 // pred_check
          %p418 = pneg %p177
        $region82: #{tpu_custom_call.1} parent=55 // pred_check_branch
          %420 = sbr.rel (%p418) target = $region84
        $region83: #{tpu_custom_call.1} parent=55 // pred_region
          %421 = dma.done [#allocation12], 48
        $region84: #{tpu_custom_call.1} parent=55 // pred_fallthru
          _
        // Predicated region
        $region85: #{tpu_custom_call.1} parent=55 // pred_check
          %p422 = pneg %p198
        $region86: #{tpu_custom_call.1} parent=55 // pred_check_branch
          %424 = sbr.rel (%p422) target = $region88
        $region87: #{tpu_custom_call.1} parent=55 // pred_region
          %425 = dma.done [#allocation15], 12288
        $region88: #{tpu_custom_call.1} parent=55 // pred_fallthru
          _
        // Predicated region
        $region89: #{tpu_custom_call.1} parent=55 // pred_check
          %p426 = pneg %p219
        $region90: #{tpu_custom_call.1} parent=55 // pred_check_branch
          %428 = sbr.rel (%p426) target = $region92
        $region91: #{tpu_custom_call.1} parent=55 // pred_region
          %429 = dma.done [#allocation15], 16
        $region92: #{tpu_custom_call.1} parent=55 // pred_fallthru
          _
        %s430 = sand.u32 %s38, 1
        %s431 = scalar_lea.sflag [#allocation3], %s430
        %s432 = sand.u32 %s38, 1
        %s433 = smul.addr %s432, 112
        %s434 = scalar_lea.vmem [#allocation2], %s433
        %p435 = pneg %p51
        %p436 = pneg %p48
        %p437 = pneg %p72
        %p438 = pneg %p69
        %p439 = pneg %p93
        %p440 = pneg %p90
        %p441 = pneg %p114
        %p442 = pneg %p111
        %p443 = pneg %p135
        %p444 = pneg %p132
        %p445 = pneg %p156
        %p446 = pneg %p153
        %p447 = pneg %p177
        %p448 = pneg %p174
        %p449 = pneg %p198
        %p450 = pneg %p195
        %p451 = pneg %p219
        %p452 = pneg %p216
        %p453 = pneg %p245
        %p454 = pneg %p242
        %s455 = sand.u32 %s232, 1
        %s456 = scalar_lea.sflag [#allocation4], %s455
        %s457 = sand.u32 %s232, 1
        %s458 = smul.addr %s457, 16
        %s459 = scalar_lea.vmem [#allocation17], %s458
        %s460 = smul.u32 2, %s30
        %s461 = smul.u32 2, %s30
        %v463 = vld [vmem:[%s393] sm:$0xff]
        %v464 = vld [vmem:[%s393 + $0x8] sm:$0xff]
        %v465 = vld [vmem:[%s393 + $0x10] sm:$0xff]
        %v466 = vld [vmem:[%s393 + $0x18] sm:$0xff]
        %v467 = vld [vmem:[%s393 + $0x20] sm:$0xff]
        %v468 = vld [vmem:[%s393 + $0x28] sm:$0xff]
        %v469 = vld [vmem:[%s393 + $0x30] sm:$0xff]
        %v470 = vld [vmem:[%s393 + $0x38] sm:$0xff]
        %v471 = vld [vmem:[%s393 + $0x40] sm:$0xff]
        %v472 = vld [vmem:[%s393 + $0x48] sm:$0xff]
        %v473 = vld [vmem:[%s393 + $0x50] sm:$0xff]
        %v474 = vld [vmem:[%s393 + $0x58] sm:$0xff]
        %v475 = vld [vmem:[%s393 + $0x60] sm:$0xff]
        %v476 = vld [vmem:[%s393 + $0x68] sm:$0xff]
        %v477 = vpack.c.bf16 %v470, %v463
        %v478 = vpack.c.bf16 %v471, %v464
        %v479 = vpack.c.bf16 %v472, %v465
        %v480 = vpack.c.bf16 %v473, %v466
        %v481 = vpack.c.bf16 %v474, %v467
        %v482 = vpack.c.bf16 %v475, %v468
        %v483 = vpack.c.bf16 %v476, %v469
        %v484 = vld [vmem:[#allocation5] sm:$0xff]
        %v485 = vld [vmem:[#allocation5 + $0x8] sm:$0xf]
        %v486 = vld [vmem:[#allocation5 + $0xc] sm:$0xff]
        %v487 = vld [vmem:[#allocation5 + $0x14] sm:$0xf]
        %v488 = vld [vmem:[#allocation5 + $0x18] sm:$0xff]
        %v489 = vld [vmem:[#allocation5 + $0x20] sm:$0xf]
        %v490 = vld [vmem:[#allocation5 + $0x24] sm:$0xff]
        %v491 = vld [vmem:[#allocation5 + $0x2c] sm:$0xf]
        %v492 = vld [vmem:[#allocation5 + $0x30] sm:$0xff]
        %v493 = vld [vmem:[#allocation5 + $0x38] sm:$0xf]
        %v494 = vld [vmem:[#allocation5 + $0x3c] sm:$0xff]
        %v495 = vld [vmem:[#allocation5 + $0x44] sm:$0xf]
        %v496 = vld [vmem:[#allocation5 + $0x48] sm:$0xff]
        %v497 = vld [vmem:[#allocation5 + $0x50] sm:$0xf]
        %v498 = vld [vmem:[#allocation5 + $0x54] sm:$0xff]
        %v499 = vld [vmem:[#allocation5 + $0x5c] sm:$0xf]
        %v500 = vld [vmem:[#allocation5 + $0x60] sm:$0xff]
        %v501 = vld [vmem:[#allocation5 + $0x68] sm:$0xf]
        %v502 = vld [vmem:[#allocation5 + $0x6c] sm:$0xff]
        %v503 = vld [vmem:[#allocation5 + $0x74] sm:$0xf]
        %v504 = vld [vmem:[#allocation5 + $0x78] sm:$0xff]
        %v505 = vld [vmem:[#allocation5 + $0x80] sm:$0xf]
        %v506 = vld [vmem:[#allocation5 + $0x84] sm:$0xff]
        %v507 = vld [vmem:[#allocation5 + $0x8c] sm:$0xf]
        %v508 = vld [vmem:[#allocation5 + $0x90] sm:$0xff]
        %v509 = vld [vmem:[#allocation5 + $0x98] sm:$0xf]
        %v510 = vld [vmem:[#allocation5 + $0x9c] sm:$0xff]
        %v511 = vld [vmem:[#allocation5 + $0xa4] sm:$0xf]
        %v512 = vld [vmem:[#allocation5 + $0xa8] sm:$0xff]
        %v513 = vld [vmem:[#allocation5 + $0xb0] sm:$0xf]
        %v514 = vld [vmem:[#allocation5 + $0xb4] sm:$0xff]
        %v515 = vld [vmem:[#allocation5 + $0xbc] sm:$0xf]
        %v516 = vld [vmem:[#allocation5 + $0xc0] sm:$0xff]
        %v517 = vld [vmem:[#allocation5 + $0xc8] sm:$0xf]
        %v518 = vld [vmem:[#allocation5 + $0xcc] sm:$0xff]
        %v519 = vld [vmem:[#allocation5 + $0xd4] sm:$0xf]
        %v520 = vld [vmem:[#allocation5 + $0xd8] sm:$0xff]
        %v521 = vld [vmem:[#allocation5 + $0xe0] sm:$0xf]
        %v522 = vld [vmem:[#allocation5 + $0xe4] sm:$0xff]
        %v523 = vld [vmem:[#allocation5 + $0xec] sm:$0xf]
        %v524 = vld [vmem:[#allocation5 + $0xf0] sm:$0xff]
        %v525 = vld [vmem:[#allocation5 + $0xf8] sm:$0xf]
        %v526 = vld [vmem:[#allocation5 + $0xfc] sm:$0xff]
        %v527 = vld [vmem:[#allocation5 + $0x104] sm:$0xf]
        %v528 = vld [vmem:[#allocation5 + $0x108] sm:$0xff]
        %v529 = vld [vmem:[#allocation5 + $0x110] sm:$0xf]
        %v530 = vld [vmem:[#allocation5 + $0x114] sm:$0xff]
        %v531 = vld [vmem:[#allocation5 + $0x11c] sm:$0xf]
        %v532 = vld [vmem:[#allocation5 + $0x120] sm:$0xff]
        %v533 = vld [vmem:[#allocation5 + $0x128] sm:$0xf]
        %v534 = vld [vmem:[#allocation5 + $0x12c] sm:$0xff]
        %v535 = vld [vmem:[#allocation5 + $0x134] sm:$0xf]
        %v536 = vld [vmem:[#allocation5 + $0x138] sm:$0xff]
        %v537 = vld [vmem:[#allocation5 + $0x140] sm:$0xf]
        %v538 = vld [vmem:[#allocation5 + $0x144] sm:$0xff]
        %v539 = vld [vmem:[#allocation5 + $0x14c] sm:$0xf]
        %v540 = vld [vmem:[#allocation5 + $0x150] sm:$0xff]
        %v541 = vld [vmem:[#allocation5 + $0x158] sm:$0xf]
        %v542 = vld [vmem:[#allocation5 + $0x15c] sm:$0xff]
        %v543 = vld [vmem:[#allocation5 + $0x164] sm:$0xf]
        %v544 = vld [vmem:[#allocation5 + $0x168] sm:$0xff]
        %v545 = vld [vmem:[#allocation5 + $0x170] sm:$0xf]
        %v546 = vld [vmem:[#allocation5 + $0x174] sm:$0xff]
        %v547 = vld [vmem:[#allocation5 + $0x17c] sm:$0xf]
        %v548 = vld [vmem:[#allocation5 + $0x180] sm:$0xff]
        %v549 = vld [vmem:[#allocation5 + $0x188] sm:$0xf]
        %v550 = vld [vmem:[#allocation5 + $0x18c] sm:$0xff]
        %v551 = vld [vmem:[#allocation5 + $0x194] sm:$0xf]
        %v552 = vld [vmem:[#allocation5 + $0x198] sm:$0xff]
        %v553 = vld [vmem:[#allocation5 + $0x1a0] sm:$0xf]
        %v554 = vld [vmem:[#allocation5 + $0x1a4] sm:$0xff]
        %v555 = vld [vmem:[#allocation5 + $0x1ac] sm:$0xf]
        %v556 = vld [vmem:[#allocation5 + $0x1b0] sm:$0xff]
        %v557 = vld [vmem:[#allocation5 + $0x1b8] sm:$0xf]
        %v558 = vld [vmem:[#allocation5 + $0x1bc] sm:$0xff]
        %v559 = vld [vmem:[#allocation5 + $0x1c4] sm:$0xf]
        %v560 = vld [vmem:[#allocation5 + $0x1c8] sm:$0xff]
        %v561 = vld [vmem:[#allocation5 + $0x1d0] sm:$0xf]
        %v562 = vld [vmem:[#allocation5 + $0x1d4] sm:$0xff]
        %v563 = vld [vmem:[#allocation5 + $0x1dc] sm:$0xf]
        %v564 = vld [vmem:[#allocation5 + $0x1e0] sm:$0xff]
        %v565 = vld [vmem:[#allocation5 + $0x1e8] sm:$0xf]
        %v566 = vld [vmem:[#allocation5 + $0x1ec] sm:$0xff]
        %v567 = vld [vmem:[#allocation5 + $0x1f4] sm:$0xf]
        %v568 = vld [vmem:[#allocation5 + $0x1f8] sm:$0xff]
        %v569 = vld [vmem:[#allocation5 + $0x200] sm:$0xf]
        %v570 = vld [vmem:[#allocation5 + $0x204] sm:$0xff]
        %v571 = vld [vmem:[#allocation5 + $0x20c] sm:$0xf]
        %v572 = vld [vmem:[#allocation5 + $0x210] sm:$0xff]
        %v573 = vld [vmem:[#allocation5 + $0x218] sm:$0xf]
        %v574 = vld [vmem:[#allocation5 + $0x21c] sm:$0xff]
        %v575 = vld [vmem:[#allocation5 + $0x224] sm:$0xf]
        %v576 = vld [vmem:[#allocation5 + $0x228] sm:$0xff]
        %v577 = vld [vmem:[#allocation5 + $0x230] sm:$0xf]
        %v578 = vld [vmem:[#allocation5 + $0x234] sm:$0xff]
        %v579 = vld [vmem:[#allocation5 + $0x23c] sm:$0xf]
        %v580 = vld [vmem:[#allocation5 + $0x240] sm:$0xff]
        %v581 = vld [vmem:[#allocation5 + $0x248] sm:$0xf]
        %v582 = vld [vmem:[#allocation5 + $0x24c] sm:$0xff]
        %v583 = vld [vmem:[#allocation5 + $0x254] sm:$0xf]
        %v584 = vld [vmem:[#allocation5 + $0x258] sm:$0xff]
        %v585 = vld [vmem:[#allocation5 + $0x260] sm:$0xf]
        %v586 = vld [vmem:[#allocation5 + $0x264] sm:$0xff]
        %v587 = vld [vmem:[#allocation5 + $0x26c] sm:$0xf]
        %v588 = vld [vmem:[#allocation5 + $0x270] sm:$0xff]
        %v589 = vld [vmem:[#allocation5 + $0x278] sm:$0xf]
        %v590 = vld [vmem:[#allocation5 + $0x27c] sm:$0xff]
        %v591 = vld [vmem:[#allocation5 + $0x284] sm:$0xf]
        %v592 = vld [vmem:[#allocation5 + $0x288] sm:$0xff]
        %v593 = vld [vmem:[#allocation5 + $0x290] sm:$0xf]
        %v594 = vld [vmem:[#allocation5 + $0x294] sm:$0xff]
        %v595 = vld [vmem:[#allocation5 + $0x29c] sm:$0xf]
        %v596 = vld [vmem:[#allocation5 + $0x2a0] sm:$0xff]
        %v597 = vld [vmem:[#allocation5 + $0x2a8] sm:$0xf]
        %v598 = vld [vmem:[#allocation5 + $0x2ac] sm:$0xff]
        %v599 = vld [vmem:[#allocation5 + $0x2b4] sm:$0xf]
        %v600 = vld [vmem:[#allocation5 + $0x2b8] sm:$0xff]
        %v601 = vld [vmem:[#allocation5 + $0x2c0] sm:$0xf]
        %v602 = vld [vmem:[#allocation5 + $0x2c4] sm:$0xff]
        %v603 = vld [vmem:[#allocation5 + $0x2cc] sm:$0xf]
        %v604 = vld [vmem:[#allocation5 + $0x2d0] sm:$0xff]
        %v605 = vld [vmem:[#allocation5 + $0x2d8] sm:$0xf]
        %v606 = vld [vmem:[#allocation5 + $0x2dc] sm:$0xff]
        %v607 = vld [vmem:[#allocation5 + $0x2e4] sm:$0xf]
        %v608 = vld [vmem:[#allocation5 + $0x2e8] sm:$0xff]
        %v609 = vld [vmem:[#allocation5 + $0x2f0] sm:$0xf]
        %v610 = vld [vmem:[#allocation5 + $0x2f4] sm:$0xff]
        %v611 = vld [vmem:[#allocation5 + $0x2fc] sm:$0xf]
        %v612 = vld [vmem:[#allocation5 + $0x300] sm:$0xff]
        %v613 = vld [vmem:[#allocation5 + $0x308] sm:$0xf]
        %v614 = vld [vmem:[#allocation5 + $0x30c] sm:$0xff]
        %v615 = vld [vmem:[#allocation5 + $0x314] sm:$0xf]
        %v616 = vld [vmem:[#allocation5 + $0x318] sm:$0xff]
        %v617 = vld [vmem:[#allocation5 + $0x320] sm:$0xf]
        %v618 = vld [vmem:[#allocation5 + $0x324] sm:$0xff]
        %v619 = vld [vmem:[#allocation5 + $0x32c] sm:$0xf]
        %v620 = vld [vmem:[#allocation5 + $0x330] sm:$0xff]
        %v621 = vld [vmem:[#allocation5 + $0x338] sm:$0xf]
        %v622 = vld [vmem:[#allocation5 + $0x33c] sm:$0xff]
        %v623 = vld [vmem:[#allocation5 + $0x344] sm:$0xf]
        %v624 = vld [vmem:[#allocation5 + $0x348] sm:$0xff]
        %v625 = vld [vmem:[#allocation5 + $0x350] sm:$0xf]
        %v626 = vld [vmem:[#allocation5 + $0x354] sm:$0xff]
        %v627 = vld [vmem:[#allocation5 + $0x35c] sm:$0xf]
        %v628 = vld [vmem:[#allocation5 + $0x360] sm:$0xff]
        %v629 = vld [vmem:[#allocation5 + $0x368] sm:$0xf]
        %v630 = vld [vmem:[#allocation5 + $0x36c] sm:$0xff]
        %v631 = vld [vmem:[#allocation5 + $0x374] sm:$0xf]
        %v632 = vld [vmem:[#allocation5 + $0x378] sm:$0xff]
        %v633 = vld [vmem:[#allocation5 + $0x380] sm:$0xf]
        %v634 = vld [vmem:[#allocation5 + $0x384] sm:$0xff]
        %v635 = vld [vmem:[#allocation5 + $0x38c] sm:$0xf]
        %v636 = vld [vmem:[#allocation5 + $0x390] sm:$0xff]
        %v637 = vld [vmem:[#allocation5 + $0x398] sm:$0xf]
        %v638 = vld [vmem:[#allocation5 + $0x39c] sm:$0xff]
        %v639 = vld [vmem:[#allocation5 + $0x3a4] sm:$0xf]
        %v640 = vld [vmem:[#allocation5 + $0x3a8] sm:$0xff]
        %v641 = vld [vmem:[#allocation5 + $0x3b0] sm:$0xf]
        %v642 = vld [vmem:[#allocation5 + $0x3b4] sm:$0xff]
        %v643 = vld [vmem:[#allocation5 + $0x3bc] sm:$0xf]
        %v644 = vld [vmem:[#allocation5 + $0x3c0] sm:$0xff]
        %v645 = vld [vmem:[#allocation5 + $0x3c8] sm:$0xf]
        %v646 = vld [vmem:[#allocation5 + $0x3cc] sm:$0xff]
        %v647 = vld [vmem:[#allocation5 + $0x3d4] sm:$0xf]
        %v648 = vld [vmem:[#allocation5 + $0x3d8] sm:$0xff]
        %v649 = vld [vmem:[#allocation5 + $0x3e0] sm:$0xf]
        %v650 = vld [vmem:[#allocation5 + $0x3e4] sm:$0xff]
        %v651 = vld [vmem:[#allocation5 + $0x3ec] sm:$0xf]
        %v652 = vld [vmem:[#allocation5 + $0x3f0] sm:$0xff]
        %v653 = vld [vmem:[#allocation5 + $0x3f8] sm:$0xf]
        %v654 = vld [vmem:[#allocation5 + $0x3fc] sm:$0xff]
        %v655 = vld [vmem:[#allocation5 + $0x404] sm:$0xf]
        %v656 = vld [vmem:[#allocation5 + $0x408] sm:$0xff]
        %v657 = vld [vmem:[#allocation5 + $0x410] sm:$0xf]
        %v658 = vld [vmem:[#allocation5 + $0x414] sm:$0xff]
        %v659 = vld [vmem:[#allocation5 + $0x41c] sm:$0xf]
        %v660 = vld [vmem:[#allocation5 + $0x420] sm:$0xff]
        %v661 = vld [vmem:[#allocation5 + $0x428] sm:$0xf]
        %v662 = vld [vmem:[#allocation5 + $0x42c] sm:$0xff]
        %v663 = vld [vmem:[#allocation5 + $0x434] sm:$0xf]
        %v664 = vld [vmem:[#allocation5 + $0x438] sm:$0xff]
        %v665 = vld [vmem:[#allocation5 + $0x440] sm:$0xf]
        %v666 = vld [vmem:[#allocation5 + $0x444] sm:$0xff]
        %v667 = vld [vmem:[#allocation5 + $0x44c] sm:$0xf]
        %v668 = vld [vmem:[#allocation5 + $0x450] sm:$0xff]
        %v669 = vld [vmem:[#allocation5 + $0x458] sm:$0xf]
        %v670 = vld [vmem:[#allocation5 + $0x45c] sm:$0xff]
        %v671 = vld [vmem:[#allocation5 + $0x464] sm:$0xf]
        %v672 = vld [vmem:[#allocation5 + $0x468] sm:$0xff]
        %v673 = vld [vmem:[#allocation5 + $0x470] sm:$0xf]
        %v674 = vld [vmem:[#allocation5 + $0x474] sm:$0xff]
        %v675 = vld [vmem:[#allocation5 + $0x47c] sm:$0xf]
        %v676 = vld [vmem:[#allocation5 + $0x480] sm:$0xff]
        %v677 = vld [vmem:[#allocation5 + $0x488] sm:$0xf]
        %v678 = vld [vmem:[#allocation5 + $0x48c] sm:$0xff]
        %v679 = vld [vmem:[#allocation5 + $0x494] sm:$0xf]
        %v680 = vld [vmem:[#allocation7] sm:$0x7]
        %v682 = vlaneseq
        %v683 = vshrl.u32 %v682, 7
        %v684 = vsub.s32 0, %v683
        %v685 = vrot.slane %v680, %v684
        %v686 = vlaneseq
        %v687 = vshrl.u32 %v686, 7
        %v688 = vsub.s32 1, %v687
        %v689 = vrot.slane %v680, %v688
        %v690 = vlaneseq
        %v691 = vshrl.u32 %v690, 7
        %v692 = vsub.s32 2, %v691
        %v693 = vrot.slane %v680, %v692
        %v893 = vunpack.c.l.b16 %v484
        %v894 = vunpack.c.h.b16 %v484
        %v895 = vunpack.c.l.b16 %v485
        %v896 = vunpack.c.l.b16 %v486
        %v897 = vunpack.c.h.b16 %v486
        %v898 = vunpack.c.l.b16 %v487
        %v899 = vunpack.c.l.b16 %v488
        %v900 = vunpack.c.h.b16 %v488
        %v901 = vunpack.c.l.b16 %v489
        %v902 = vunpack.c.l.b16 %v490
        %v903 = vunpack.c.h.b16 %v490
        %v904 = vunpack.c.l.b16 %v491
        %v905 = vunpack.c.l.b16 %v492
        %v906 = vunpack.c.h.b16 %v492
        %v907 = vunpack.c.l.b16 %v493
        %v908 = vunpack.c.l.b16 %v494
        %v909 = vunpack.c.h.b16 %v494
        %v910 = vunpack.c.l.b16 %v495
        %v911 = vunpack.c.l.b16 %v496
        %v912 = vunpack.c.h.b16 %v496
        %v913 = vunpack.c.l.b16 %v497
        %v914 = vunpack.c.l.b16 %v498
        %v915 = vunpack.c.h.b16 %v498
        %v916 = vunpack.c.l.b16 %v499
        %v917 = vunpack.c.l.b16 %v500
        %v918 = vunpack.c.h.b16 %v500
        %v919 = vunpack.c.l.b16 %v501
        %v920 = vunpack.c.l.b16 %v502
        %v921 = vunpack.c.h.b16 %v502
        %v922 = vunpack.c.l.b16 %v503
        %v923 = vunpack.c.l.b16 %v504
        %v924 = vunpack.c.h.b16 %v504
        %v925 = vunpack.c.l.b16 %v505
        %v926 = vunpack.c.l.b16 %v506
        %v927 = vunpack.c.h.b16 %v506
        %v928 = vunpack.c.l.b16 %v507
        %v929 = vunpack.c.l.b16 %v508
        %v930 = vunpack.c.h.b16 %v508
        %v931 = vunpack.c.l.b16 %v509
        %v932 = vunpack.c.l.b16 %v510
        %v933 = vunpack.c.h.b16 %v510
        %v934 = vunpack.c.l.b16 %v511
        %v935 = vunpack.c.l.b16 %v512
        %v936 = vunpack.c.h.b16 %v512
        %v937 = vunpack.c.l.b16 %v513
        %v938 = vunpack.c.l.b16 %v514
        %v939 = vunpack.c.h.b16 %v514
        %v940 = vunpack.c.l.b16 %v515
        %v941 = vunpack.c.l.b16 %v516
        %v942 = vunpack.c.h.b16 %v516
        %v943 = vunpack.c.l.b16 %v517
        %v944 = vunpack.c.l.b16 %v518
        %v945 = vunpack.c.h.b16 %v518
        %v946 = vunpack.c.l.b16 %v519
        %v947 = vunpack.c.l.b16 %v520
        %v948 = vunpack.c.h.b16 %v520
        %v949 = vunpack.c.l.b16 %v521
        %v950 = vunpack.c.l.b16 %v522
        %v951 = vunpack.c.h.b16 %v522
        %v952 = vunpack.c.l.b16 %v523
        %v953 = vunpack.c.l.b16 %v524
        %v954 = vunpack.c.h.b16 %v524
        %v955 = vunpack.c.l.b16 %v525
        %v956 = vunpack.c.l.b16 %v526
        %v957 = vunpack.c.h.b16 %v526
        %v958 = vunpack.c.l.b16 %v527
        %v959 = vunpack.c.l.b16 %v528
        %v960 = vunpack.c.h.b16 %v528
        %v961 = vunpack.c.l.b16 %v529
        %v962 = vunpack.c.l.b16 %v530
        %v963 = vunpack.c.h.b16 %v530
        %v964 = vunpack.c.l.b16 %v531
        %v965 = vunpack.c.l.b16 %v532
        %v966 = vunpack.c.h.b16 %v532
        %v967 = vunpack.c.l.b16 %v533
        %v968 = vunpack.c.l.b16 %v534
        %v969 = vunpack.c.h.b16 %v534
        %v970 = vunpack.c.l.b16 %v535
        %v971 = vunpack.c.l.b16 %v536
        %v972 = vunpack.c.h.b16 %v536
        %v973 = vunpack.c.l.b16 %v537
        %v974 = vunpack.c.l.b16 %v538
        %v975 = vunpack.c.h.b16 %v538
        %v976 = vunpack.c.l.b16 %v539
        %v977 = vunpack.c.l.b16 %v540
        %v978 = vunpack.c.h.b16 %v540
        %v979 = vunpack.c.l.b16 %v541
        %v980 = vunpack.c.l.b16 %v542
        %v981 = vunpack.c.h.b16 %v542
        %v982 = vunpack.c.l.b16 %v543
        %v983 = vunpack.c.l.b16 %v544
        %v984 = vunpack.c.h.b16 %v544
        %v985 = vunpack.c.l.b16 %v545
        %v986 = vunpack.c.l.b16 %v546
        %v987 = vunpack.c.h.b16 %v546
        %v988 = vunpack.c.l.b16 %v547
        %v989 = vunpack.c.l.b16 %v548
        %v990 = vunpack.c.h.b16 %v548
        %v991 = vunpack.c.l.b16 %v549
        %v992 = vunpack.c.l.b16 %v550
        %v993 = vunpack.c.h.b16 %v550
        %v994 = vunpack.c.l.b16 %v551
        %v995 = vunpack.c.l.b16 %v552
        %v996 = vunpack.c.h.b16 %v552
        %v997 = vunpack.c.l.b16 %v553
        %v998 = vunpack.c.l.b16 %v554
        %v999 = vunpack.c.h.b16 %v554
        %v1000 = vunpack.c.l.b16 %v555
        %v1001 = vunpack.c.l.b16 %v556
        %v1002 = vunpack.c.h.b16 %v556
        %v1003 = vunpack.c.l.b16 %v557
        %v1004 = vunpack.c.l.b16 %v558
        %v1005 = vunpack.c.h.b16 %v558
        %v1006 = vunpack.c.l.b16 %v559
        %v1007 = vunpack.c.l.b16 %v560
        %v1008 = vunpack.c.h.b16 %v560
        %v1009 = vunpack.c.l.b16 %v561
        %v1010 = vunpack.c.l.b16 %v562
        %v1011 = vunpack.c.h.b16 %v562
        %v1012 = vunpack.c.l.b16 %v563
        %v1013 = vunpack.c.l.b16 %v564
        %v1014 = vunpack.c.h.b16 %v564
        %v1015 = vunpack.c.l.b16 %v565
        %v1016 = vunpack.c.l.b16 %v566
        %v1017 = vunpack.c.h.b16 %v566
        %v1018 = vunpack.c.l.b16 %v567
        %v1019 = vunpack.c.l.b16 %v568
        %v1020 = vunpack.c.h.b16 %v568
        %v1021 = vunpack.c.l.b16 %v569
        %v1022 = vunpack.c.l.b16 %v570
        %v1023 = vunpack.c.h.b16 %v570
        %v1024 = vunpack.c.l.b16 %v571
        %v1025 = vunpack.c.l.b16 %v572
        %v1026 = vunpack.c.h.b16 %v572
        %v1027 = vunpack.c.l.b16 %v573
        %v1028 = vunpack.c.l.b16 %v574
        %v1029 = vunpack.c.h.b16 %v574
        %v1030 = vunpack.c.l.b16 %v575
        %v1031 = vunpack.c.l.b16 %v576
        %v1032 = vunpack.c.h.b16 %v576
        %v1033 = vunpack.c.l.b16 %v577
        %v1034 = vunpack.c.l.b16 %v578
        %v1035 = vunpack.c.h.b16 %v578
        %v1036 = vunpack.c.l.b16 %v579
        %v1037 = vunpack.c.l.b16 %v580
        %v1038 = vunpack.c.h.b16 %v580
        %v1039 = vunpack.c.l.b16 %v581
        %v1040 = vunpack.c.l.b16 %v582
        %v1041 = vunpack.c.h.b16 %v582
        %v1042 = vunpack.c.l.b16 %v583
        %v1043 = vunpack.c.l.b16 %v584
        %v1044 = vunpack.c.h.b16 %v584
        %v1045 = vunpack.c.l.b16 %v585
        %v1046 = vunpack.c.l.b16 %v586
        %v1047 = vunpack.c.h.b16 %v586
        %v1048 = vunpack.c.l.b16 %v587
        %v1049 = vunpack.c.l.b16 %v588
        %v1050 = vunpack.c.h.b16 %v588
        %v1051 = vunpack.c.l.b16 %v589
        %v1052 = vunpack.c.l.b16 %v590
        %v1053 = vunpack.c.h.b16 %v590
        %v1054 = vunpack.c.l.b16 %v591
        %v1055 = vunpack.c.l.b16 %v592
        %v1056 = vunpack.c.h.b16 %v592
        %v1057 = vunpack.c.l.b16 %v593
        %v1058 = vunpack.c.l.b16 %v594
        %v1059 = vunpack.c.h.b16 %v594
        %v1060 = vunpack.c.l.b16 %v595
        %v1061 = vunpack.c.l.b16 %v596
        %v1062 = vunpack.c.h.b16 %v596
        %v1063 = vunpack.c.l.b16 %v597
        %v1064 = vunpack.c.l.b16 %v598
        %v1065 = vunpack.c.h.b16 %v598
        %v1066 = vunpack.c.l.b16 %v599
        %v1067 = vunpack.c.l.b16 %v600
        %v1068 = vunpack.c.h.b16 %v600
        %v1069 = vunpack.c.l.b16 %v601
        %v1070 = vunpack.c.l.b16 %v602
        %v1071 = vunpack.c.h.b16 %v602
        %v1072 = vunpack.c.l.b16 %v603
        %v1073 = vunpack.c.l.b16 %v604
        %v1074 = vunpack.c.h.b16 %v604
        %v1075 = vunpack.c.l.b16 %v605
        %v1076 = vunpack.c.l.b16 %v606
        %v1077 = vunpack.c.h.b16 %v606
        %v1078 = vunpack.c.l.b16 %v607
        %v1079 = vunpack.c.l.b16 %v608
        %v1080 = vunpack.c.h.b16 %v608
        %v1081 = vunpack.c.l.b16 %v609
        %v1082 = vunpack.c.l.b16 %v610
        %v1083 = vunpack.c.h.b16 %v610
        %v1084 = vunpack.c.l.b16 %v611
        %v1085 = vunpack.c.l.b16 %v612
        %v1086 = vunpack.c.h.b16 %v612
        %v1087 = vunpack.c.l.b16 %v613
        %v1088 = vunpack.c.l.b16 %v614
        %v1089 = vunpack.c.h.b16 %v614
        %v1090 = vunpack.c.l.b16 %v615
        %v1091 = vunpack.c.l.b16 %v616
        %v1092 = vunpack.c.h.b16 %v616
        %v1093 = vunpack.c.l.b16 %v617
        %v1094 = vunpack.c.l.b16 %v618
        %v1095 = vunpack.c.h.b16 %v618
        %v1096 = vunpack.c.l.b16 %v619
        %v1097 = vunpack.c.l.b16 %v620
        %v1098 = vunpack.c.h.b16 %v620
        %v1099 = vunpack.c.l.b16 %v621
        %v1100 = vunpack.c.l.b16 %v622
        %v1101 = vunpack.c.h.b16 %v622
        %v1102 = vunpack.c.l.b16 %v623
        %v1103 = vunpack.c.l.b16 %v624
        %v1104 = vunpack.c.h.b16 %v624
        %v1105 = vunpack.c.l.b16 %v625
        %v1106 = vunpack.c.l.b16 %v626
        %v1107 = vunpack.c.h.b16 %v626
        %v1108 = vunpack.c.l.b16 %v627
        %v1109 = vunpack.c.l.b16 %v628
        %v1110 = vunpack.c.h.b16 %v628
        %v1111 = vunpack.c.l.b16 %v629
        %v1112 = vunpack.c.l.b16 %v630
        %v1113 = vunpack.c.h.b16 %v630
        %v1114 = vunpack.c.l.b16 %v631
        %v1115 = vunpack.c.l.b16 %v632
        %v1116 = vunpack.c.h.b16 %v632
        %v1117 = vunpack.c.l.b16 %v633
        %v1118 = vunpack.c.l.b16 %v634
        %v1119 = vunpack.c.h.b16 %v634
        %v1120 = vunpack.c.l.b16 %v635
        %v1121 = vunpack.c.l.b16 %v636
        %v1122 = vunpack.c.h.b16 %v636
        %v1123 = vunpack.c.l.b16 %v637
        %v1124 = vunpack.c.l.b16 %v638
        %v1125 = vunpack.c.h.b16 %v638
        %v1126 = vunpack.c.l.b16 %v639
        %v1127 = vunpack.c.l.b16 %v640
        %v1128 = vunpack.c.h.b16 %v640
        %v1129 = vunpack.c.l.b16 %v641
        %v1130 = vunpack.c.l.b16 %v642
        %v1131 = vunpack.c.h.b16 %v642
        %v1132 = vunpack.c.l.b16 %v643
        %v1133 = vunpack.c.l.b16 %v644
        %v1134 = vunpack.c.h.b16 %v644
        %v1135 = vunpack.c.l.b16 %v645
        %v1136 = vunpack.c.l.b16 %v646
        %v1137 = vunpack.c.h.b16 %v646
        %v1138 = vunpack.c.l.b16 %v647
        %v1139 = vunpack.c.l.b16 %v648
        %v1140 = vunpack.c.h.b16 %v648
        %v1141 = vunpack.c.l.b16 %v649
        %v1142 = vunpack.c.l.b16 %v650
        %v1143 = vunpack.c.h.b16 %v650
        %v1144 = vunpack.c.l.b16 %v651
        %v1145 = vunpack.c.l.b16 %v652
        %v1146 = vunpack.c.h.b16 %v652
        %v1147 = vunpack.c.l.b16 %v653
        %v1148 = vunpack.c.l.b16 %v654
        %v1149 = vunpack.c.h.b16 %v654
        %v1150 = vunpack.c.l.b16 %v655
        %v1151 = vunpack.c.l.b16 %v656
        %v1152 = vunpack.c.h.b16 %v656
        %v1153 = vunpack.c.l.b16 %v657
        %v1154 = vunpack.c.l.b16 %v658
        %v1155 = vunpack.c.h.b16 %v658
        %v1156 = vunpack.c.l.b16 %v659
        %v1157 = vunpack.c.l.b16 %v660
        %v1158 = vunpack.c.h.b16 %v660
        %v1159 = vunpack.c.l.b16 %v661
        %v1160 = vunpack.c.l.b16 %v662
        %v1161 = vunpack.c.h.b16 %v662
        %v1162 = vunpack.c.l.b16 %v663
        %v1163 = vunpack.c.l.b16 %v664
        %v1164 = vunpack.c.h.b16 %v664
        %v1165 = vunpack.c.l.b16 %v665
        %v1166 = vunpack.c.l.b16 %v666
        %v1167 = vunpack.c.h.b16 %v666
        %v1168 = vunpack.c.l.b16 %v667
        %v1169 = vunpack.c.l.b16 %v668
        %v1170 = vunpack.c.h.b16 %v668
        %v1171 = vunpack.c.l.b16 %v669
        %v1172 = vunpack.c.l.b16 %v670
        %v1173 = vunpack.c.h.b16 %v670
        %v1174 = vunpack.c.l.b16 %v671
        %v1175 = vunpack.c.l.b16 %v672
        %v1176 = vunpack.c.h.b16 %v672
        %v1177 = vunpack.c.l.b16 %v673
        %v1178 = vunpack.c.l.b16 %v674
        %v1179 = vunpack.c.h.b16 %v674
        %v1180 = vunpack.c.l.b16 %v675
        %v1181 = vunpack.c.l.b16 %v676
        %v1182 = vunpack.c.h.b16 %v676
        %v1183 = vunpack.c.l.b16 %v677
        %v1184 = vunpack.c.l.b16 %v678
        %v1185 = vunpack.c.h.b16 %v678
        %v1186 = vunpack.c.l.b16 %v679
        %v1187 = vpack.c.b16 %v896, %v893
        %v1188 = vpack.c.b16 %v897, %v894
        %v1189 = vpack.c.b16 %v898, %v895
        %v1190 = vpack.c.b16 %v902, %v899
        %v1191 = vpack.c.b16 %v903, %v900
        %v1192 = vpack.c.b16 %v904, %v901
        %v1193 = vpack.c.b16 %v908, %v905
        %v1194 = vpack.c.b16 %v909, %v906
        %v1195 = vpack.c.b16 %v910, %v907
        %v1196 = vpack.c.b16 %v914, %v911
        %v1197 = vpack.c.b16 %v915, %v912
        %v1198 = vpack.c.b16 %v916, %v913
        %v1199 = vpack.c.b16 %v920, %v917
        %v1200 = vpack.c.b16 %v921, %v918
        %v1201 = vpack.c.b16 %v922, %v919
        %v1202 = vpack.c.b16 %v926, %v923
        %v1203 = vpack.c.b16 %v927, %v924
        %v1204 = vpack.c.b16 %v928, %v925
        %v1205 = vpack.c.b16 %v932, %v929
        %v1206 = vpack.c.b16 %v933, %v930
        %v1207 = vpack.c.b16 %v934, %v931
        %v1208 = vpack.c.b16 %v938, %v935
        %v1209 = vpack.c.b16 %v939, %v936
        %v1210 = vpack.c.b16 %v940, %v937
        %v1211 = vpack.c.b16 %v944, %v941
        %v1212 = vpack.c.b16 %v945, %v942
        %v1213 = vpack.c.b16 %v946, %v943
        %v1214 = vpack.c.b16 %v950, %v947
        %v1215 = vpack.c.b16 %v951, %v948
        %v1216 = vpack.c.b16 %v952, %v949
        %v1217 = vpack.c.b16 %v956, %v953
        %v1218 = vpack.c.b16 %v957, %v954
        %v1219 = vpack.c.b16 %v958, %v955
        %v1220 = vpack.c.b16 %v962, %v959
        %v1221 = vpack.c.b16 %v963, %v960
        %v1222 = vpack.c.b16 %v964, %v961
        %v1223 = vpack.c.b16 %v968, %v965
        %v1224 = vpack.c.b16 %v969, %v966
        %v1225 = vpack.c.b16 %v970, %v967
        %v1226 = vpack.c.b16 %v974, %v971
        %v1227 = vpack.c.b16 %v975, %v972
        %v1228 = vpack.c.b16 %v976, %v973
        %v1229 = vpack.c.b16 %v980, %v977
        %v1230 = vpack.c.b16 %v981, %v978
        %v1231 = vpack.c.b16 %v982, %v979
        %v1232 = vpack.c.b16 %v986, %v983
        %v1233 = vpack.c.b16 %v987, %v984
        %v1234 = vpack.c.b16 %v988, %v985
        %v1235 = vpack.c.b16 %v992, %v989
        %v1236 = vpack.c.b16 %v993, %v990
        %v1237 = vpack.c.b16 %v994, %v991
        %v1238 = vpack.c.b16 %v998, %v995
        %v1239 = vpack.c.b16 %v999, %v996
        %v1240 = vpack.c.b16 %v1000, %v997
        %v1241 = vpack.c.b16 %v1004, %v1001
        %v1242 = vpack.c.b16 %v1005, %v1002
        %v1243 = vpack.c.b16 %v1006, %v1003
        %v1244 = vpack.c.b16 %v1010, %v1007
        %v1245 = vpack.c.b16 %v1011, %v1008
        %v1246 = vpack.c.b16 %v1012, %v1009
        %v1247 = vpack.c.b16 %v1016, %v1013
        %v1248 = vpack.c.b16 %v1017, %v1014
        %v1249 = vpack.c.b16 %v1018, %v1015
        %v1250 = vpack.c.b16 %v1022, %v1019
        %v1251 = vpack.c.b16 %v1023, %v1020
        %v1252 = vpack.c.b16 %v1024, %v1021
        %v1253 = vpack.c.b16 %v1028, %v1025
        %v1254 = vpack.c.b16 %v1029, %v1026
        %v1255 = vpack.c.b16 %v1030, %v1027
        %v1256 = vpack.c.b16 %v1034, %v1031
        %v1257 = vpack.c.b16 %v1035, %v1032
        %v1258 = vpack.c.b16 %v1036, %v1033
        %v1259 = vpack.c.b16 %v1040, %v1037
        %v1260 = vpack.c.b16 %v1041, %v1038
        %v1261 = vpack.c.b16 %v1042, %v1039
        %v1262 = vpack.c.b16 %v1046, %v1043
        %v1263 = vpack.c.b16 %v1047, %v1044
        %v1264 = vpack.c.b16 %v1048, %v1045
        %v1265 = vpack.c.b16 %v1052, %v1049
        %v1266 = vpack.c.b16 %v1053, %v1050
        %v1267 = vpack.c.b16 %v1054, %v1051
        %v1268 = vpack.c.b16 %v1058, %v1055
        %v1269 = vpack.c.b16 %v1059, %v1056
        %v1270 = vpack.c.b16 %v1060, %v1057
        %v1271 = vpack.c.b16 %v1064, %v1061
        %v1272 = vpack.c.b16 %v1065, %v1062
        %v1273 = vpack.c.b16 %v1066, %v1063
        %v1274 = vpack.c.b16 %v1070, %v1067
        %v1275 = vpack.c.b16 %v1071, %v1068
        %v1276 = vpack.c.b16 %v1072, %v1069
        %v1277 = vpack.c.b16 %v1076, %v1073
        %v1278 = vpack.c.b16 %v1077, %v1074
        %v1279 = vpack.c.b16 %v1078, %v1075
        %v1280 = vpack.c.b16 %v1082, %v1079
        %v1281 = vpack.c.b16 %v1083, %v1080
        %v1282 = vpack.c.b16 %v1084, %v1081
        %v1283 = vpack.c.b16 %v1088, %v1085
        %v1284 = vpack.c.b16 %v1089, %v1086
        %v1285 = vpack.c.b16 %v1090, %v1087
        %v1286 = vpack.c.b16 %v1094, %v1091
        %v1287 = vpack.c.b16 %v1095, %v1092
        %v1288 = vpack.c.b16 %v1096, %v1093
        %v1289 = vpack.c.b16 %v1100, %v1097
        %v1290 = vpack.c.b16 %v1101, %v1098
        %v1291 = vpack.c.b16 %v1102, %v1099
        %v1292 = vpack.c.b16 %v1106, %v1103
        %v1293 = vpack.c.b16 %v1107, %v1104
        %v1294 = vpack.c.b16 %v1108, %v1105
        %v1295 = vpack.c.b16 %v1112, %v1109
        %v1296 = vpack.c.b16 %v1113, %v1110
        %v1297 = vpack.c.b16 %v1114, %v1111
        %v1298 = vpack.c.b16 %v1118, %v1115
        %v1299 = vpack.c.b16 %v1119, %v1116
        %v1300 = vpack.c.b16 %v1120, %v1117
        %v1301 = vpack.c.b16 %v1124, %v1121
        %v1302 = vpack.c.b16 %v1125, %v1122
        %v1303 = vpack.c.b16 %v1126, %v1123
        %v1304 = vpack.c.b16 %v1130, %v1127
        %v1305 = vpack.c.b16 %v1131, %v1128
        %v1306 = vpack.c.b16 %v1132, %v1129
        %v1307 = vpack.c.b16 %v1136, %v1133
        %v1308 = vpack.c.b16 %v1137, %v1134
        %v1309 = vpack.c.b16 %v1138, %v1135
        %v1310 = vpack.c.b16 %v1142, %v1139
        %v1311 = vpack.c.b16 %v1143, %v1140
        %v1312 = vpack.c.b16 %v1144, %v1141
        %v1313 = vpack.c.b16 %v1148, %v1145
        %v1314 = vpack.c.b16 %v1149, %v1146
        %v1315 = vpack.c.b16 %v1150, %v1147
        %v1316 = vpack.c.b16 %v1154, %v1151
        %v1317 = vpack.c.b16 %v1155, %v1152
        %v1318 = vpack.c.b16 %v1156, %v1153
        %v1319 = vpack.c.b16 %v1160, %v1157
        %v1320 = vpack.c.b16 %v1161, %v1158
        %v1321 = vpack.c.b16 %v1162, %v1159
        %v1322 = vpack.c.b16 %v1166, %v1163
        %v1323 = vpack.c.b16 %v1167, %v1164
        %v1324 = vpack.c.b16 %v1168, %v1165
        %v1325 = vpack.c.b16 %v1172, %v1169
        %v1326 = vpack.c.b16 %v1173, %v1170
        %v1327 = vpack.c.b16 %v1174, %v1171
        %v1328 = vpack.c.b16 %v1178, %v1175
        %v1329 = vpack.c.b16 %v1179, %v1176
        %v1330 = vpack.c.b16 %v1180, %v1177
        %v1331 = vpack.c.b16 %v1184, %v1181
        %v1332 = vpack.c.b16 %v1185, %v1182
        %v1333 = vpack.c.b16 %v1186, %v1183
        %vm1481 = vcmask 130048
        %v1483 = vsel %vm1481, %v483, 0
        %1485 = vmatprep.subr.bf16.mxu0 %v1188
        %1486 = vmatpush1.bf16.msra.mxu0 %v1187
        %1487 = vmatprep.subr.bf16.mxu0 %v1191
        %1488 = vmatpush1.bf16.msra.mxu0 %v1190
        %1489 = vmatprep.subr.bf16.mxu0 %v1194
        %1490 = vmatpush1.bf16.msra.mxu0 %v1193
        %1491 = vmatprep.subr.bf16.mxu0 %v1197
        %1492 = vmatpush1.bf16.msra.mxu0 %v1196
        %1493 = vmatprep.subr.bf16.mxu0 %v1200
        %1494 = vmatpush1.bf16.msra.mxu0 %v1199
        %1495 = vmatprep.subr.bf16.mxu0 %v1203
        %1496 = vmatpush1.bf16.msra.mxu0 %v1202
        %1497 = vmatprep.subr.bf16.mxu0 %v1206
        %1498 = vmatpush1.bf16.msra.mxu0 %v1205
        %1499 = vmatprep.subr.bf16.mxu0 %v1209
        %1500 = vmatpush1.bf16.msra.mxu0 %v1208
        %1501 = vmatprep.subr.bf16.mxu0 %v1212
        %1502 = vmatpush1.bf16.msra.mxu0 %v1211
        %1503 = vmatprep.subr.bf16.mxu0 %v1215
        %1504 = vmatpush1.bf16.msra.mxu0 %v1214
        %1505 = vmatprep.subr.bf16.mxu0 %v1218
        %1506 = vmatpush1.bf16.msra.mxu0 %v1217
        %1507 = vmatprep.subr.bf16.mxu0 %v1221
        %1508 = vmatpush1.bf16.msra.mxu0 %v1220
        %1509 = vmatprep.subr.bf16.mxu0 %v1224
        %1510 = vmatpush1.bf16.msra.mxu0 %v1223
        %1511 = vmatprep.subr.bf16.mxu0 %v1227
        %1512 = vmatpush1.bf16.msra.mxu0 %v1226
        %1513 = vmatprep.subr.bf16.mxu0 %v1230
        %1514 = vmatpush1.bf16.msra.mxu0 %v1229
        %1515 = vmatprep.subr.bf16.mxu0 %v1233
        %1516 = vmatpush1.bf16.msra.mxu0 %v1232
        %1517 = vmatprep.mubr.bf16.mxu0 %v478
        %1518 = vmatmul.mubr.bf16.gmra.mrb[0].mxu0 %v477
        %v1519 = vpop.f32.mrb[0].mxu0
        %v1520 = vadd.f32 %v685, %v1519
        %v1521 = vpop.f32.mrb[0].mxu0
        %v1522 = vadd.f32 %v689, %v1521
        %v1523 = vpop.f32.mrb[0].mxu0
        %v1524 = vadd.f32 %v685, %v1523
        %v1525 = vpop.f32.mrb[0].mxu0
        %v1526 = vadd.f32 %v689, %v1525
        %1527 = vdwg.mxu0
        %1528 = vmatprep.subr.bf16.mxu0 %v1236
        %1529 = vmatpush1.bf16.msra.mxu0 %v1235
        %1530 = vmatprep.subr.bf16.mxu0 %v1239
        %1531 = vmatpush1.bf16.msra.mxu0 %v1238
        %1532 = vmatprep.subr.bf16.mxu0 %v1242
        %1533 = vmatpush1.bf16.msra.mxu0 %v1241
        %1534 = vmatprep.subr.bf16.mxu0 %v1245
        %1535 = vmatpush1.bf16.msra.mxu0 %v1244
        %1536 = vmatprep.subr.bf16.mxu0 %v1248
        %1537 = vmatpush1.bf16.msra.mxu0 %v1247
        %1538 = vmatprep.subr.bf16.mxu0 %v1251
        %1539 = vmatpush1.bf16.msra.mxu0 %v1250
        %1540 = vmatprep.subr.bf16.mxu0 %v1254
        %1541 = vmatpush1.bf16.msra.mxu0 %v1253
        %1542 = vmatprep.subr.bf16.mxu0 %v1257
        %1543 = vmatpush1.bf16.msra.mxu0 %v1256
        %1544 = vmatprep.subr.bf16.mxu0 %v1260
        %1545 = vmatpush1.bf16.msra.mxu0 %v1259
        %1546 = vmatprep.subr.bf16.mxu0 %v1263
        %1547 = vmatpush1.bf16.msra.mxu0 %v1262
        %1548 = vmatprep.subr.bf16.mxu0 %v1266
        %1549 = vmatpush1.bf16.msra.mxu0 %v1265
        %1550 = vmatprep.subr.bf16.mxu0 %v1269
        %1551 = vmatpush1.bf16.msra.mxu0 %v1268
        %1552 = vmatprep.subr.bf16.mxu0 %v1272
        %1553 = vmatpush1.bf16.msra.mxu0 %v1271
        %1554 = vmatprep.subr.bf16.mxu0 %v1275
        %1555 = vmatpush1.bf16.msra.mxu0 %v1274
        %1556 = vmatprep.subr.bf16.mxu0 %v1278
        %1557 = vmatpush1.bf16.msra.mxu0 %v1277
        %1558 = vmatprep.subr.bf16.mxu0 %v1281
        %1559 = vmatpush1.bf16.msra.mxu0 %v1280
        %1560 = vmatprep.mubr.bf16.mxu0 %v480
        %1561 = vmatmul.mubr.bf16.gmra.mrb[0].mxu0 %v479
        %v1562 = vpop.f32.mrb[0].mxu0
        %v1563 = vadd.f32 %v1520, %v1562
        %v1564 = vpop.f32.mrb[0].mxu0
        %v1565 = vadd.f32 %v1522, %v1564
        %v1566 = vpop.f32.mrb[0].mxu0
        %v1567 = vadd.f32 %v1524, %v1566
        %v1568 = vpop.f32.mrb[0].mxu0
        %v1569 = vadd.f32 %v1526, %v1568
        %1570 = vdwg.mxu0
        %1571 = vmatprep.subr.bf16.mxu0 %v1284
        %1572 = vmatpush1.bf16.msra.mxu0 %v1283
        %1573 = vmatprep.subr.bf16.mxu0 %v1287
        %1574 = vmatpush1.bf16.msra.mxu0 %v1286
        %1575 = vmatprep.subr.bf16.mxu0 %v1290
        %1576 = vmatpush1.bf16.msra.mxu0 %v1289
        %1577 = vmatprep.subr.bf16.mxu0 %v1293
        %1578 = vmatpush1.bf16.msra.mxu0 %v1292
        %1579 = vmatprep.subr.bf16.mxu0 %v1296
        %1580 = vmatpush1.bf16.msra.mxu0 %v1295
        %1581 = vmatprep.subr.bf16.mxu0 %v1299
        %1582 = vmatpush1.bf16.msra.mxu0 %v1298
        %1583 = vmatprep.subr.bf16.mxu0 %v1302
        %1584 = vmatpush1.bf16.msra.mxu0 %v1301
        %1585 = vmatprep.subr.bf16.mxu0 %v1305
        %1586 = vmatpush1.bf16.msra.mxu0 %v1304
        %1587 = vmatprep.subr.bf16.mxu0 %v1308
        %1588 = vmatpush1.bf16.msra.mxu0 %v1307
        %1589 = vmatprep.subr.bf16.mxu0 %v1311
        %1590 = vmatpush1.bf16.msra.mxu0 %v1310
        %1591 = vmatprep.subr.bf16.mxu0 %v1314
        %1592 = vmatpush1.bf16.msra.mxu0 %v1313
        %1593 = vmatprep.subr.bf16.mxu0 %v1317
        %1594 = vmatpush1.bf16.msra.mxu0 %v1316
        %1595 = vmatprep.subr.bf16.mxu0 %v1320
        %1596 = vmatpush1.bf16.msra.mxu0 %v1319
        %1597 = vmatprep.subr.bf16.mxu0 %v1323
        %1598 = vmatpush1.bf16.msra.mxu0 %v1322
        %1599 = vmatprep.subr.bf16.mxu0 %v1326
        %1600 = vmatpush1.bf16.msra.mxu0 %v1325
        %1601 = vmatprep.subr.bf16.mxu0 %v1329
        %1602 = vmatpush1.bf16.msra.mxu0 %v1328
        %1603 = vmatprep.mubr.bf16.mxu0 %v482
        %1604 = vmatmul.mubr.bf16.gmra.mrb[0].mxu0 %v481
        %v1605 = vpop.f32.mrb[0].mxu0
        %v1606 = vadd.f32 %v1563, %v1605
        %v1607 = vpop.f32.mrb[0].mxu0
        %v1608 = vadd.f32 %v1565, %v1607
        %v1609 = vpop.f32.mrb[0].mxu0
        %v1610 = vadd.f32 %v1567, %v1609
        %v1611 = vpop.f32.mrb[0].mxu0
        %v1612 = vadd.f32 %v1569, %v1611
        %1613 = vdwg.mxu0
        %1614 = vmatprep.subr.bf16.mxu0 %v1332
        %1615 = vmatpush1.bf16.msra.mxu0 %v1331
        %1616 = vmatprep.subr.bf16.mxu0 0
        %1617 = vmatpush1.bf16.msra.mxu0 0
        %1618 = vmatprep.subr.bf16.mxu0 0
        %1619 = vmatpush1.bf16.msra.mxu0 0
        %1620 = vmatprep.subr.bf16.mxu0 0
        %1621 = vmatpush1.bf16.msra.mxu0 0
        %1622 = vmatprep.subr.bf16.mxu0 0
        %1623 = vmatpush1.bf16.msra.mxu0 0
        %1624 = vmatprep.subr.bf16.mxu0 0
        %1625 = vmatpush1.bf16.msra.mxu0 0
        %1626 = vmatprep.subr.bf16.mxu0 0
        %1627 = vmatpush1.bf16.msra.mxu0 0
        %1628 = vmatprep.subr.bf16.mxu0 0
        %1629 = vmatpush1.bf16.msra.mxu0 0
        %1630 = vmatprep.subr.bf16.mxu0 0
        %1631 = vmatpush1.bf16.msra.mxu0 0
        %1632 = vmatprep.subr.bf16.mxu0 0
        %1633 = vmatpush1.bf16.msra.mxu0 0
        %1634 = vmatprep.subr.bf16.mxu0 0
        %1635 = vmatpush1.bf16.msra.mxu0 0
        %1636 = vmatprep.subr.bf16.mxu0 0
        %1637 = vmatpush1.bf16.msra.mxu0 0
        %1638 = vmatprep.subr.bf16.mxu0 0
        %1639 = vmatpush1.bf16.msra.mxu0 0
        %1640 = vmatprep.subr.bf16.mxu0 0
        %1641 = vmatpush1.bf16.msra.mxu0 0
        %1642 = vmatprep.subr.bf16.mxu0 0
        %1643 = vmatpush1.bf16.msra.mxu0 0
        %1644 = vmatprep.subr.bf16.mxu0 0
        %1645 = vmatpush1.bf16.msra.mxu0 0
        %1646 = vmatprep.mubr.bf16.mxu0 0
        %1647 = vmatmul.mubr.bf16.gmra.mrb[0].mxu0 %v1483
        %v1648 = vpop.f32.mrb[0].mxu0
        %v1649 = vadd.f32 %v1606, %v1648
        %v1650 = vpop.f32.mrb[0].mxu0
        %v1651 = vadd.f32 %v1608, %v1650
        %v1652 = vpop.f32.mrb[0].mxu0
        %v1653 = vadd.f32 %v1610, %v1652
        %v1654 = vpop.f32.mrb[0].mxu0
        %v1655 = vadd.f32 %v1612, %v1654
        %1656 = vdwg.mxu0
        %1657 = vmatprep.subr.bf16.mxu0 0
        %1658 = vmatpush1.bf16.msra.mxu0 %v1189
        %1659 = vmatprep.subr.bf16.mxu0 0
        %1660 = vmatpush1.bf16.msra.mxu0 %v1192
        %1661 = vmatprep.subr.bf16.mxu0 0
        %1662 = vmatpush1.bf16.msra.mxu0 %v1195
        %1663 = vmatprep.subr.bf16.mxu0 0
        %1664 = vmatpush1.bf16.msra.mxu0 %v1198
        %1665 = vmatprep.subr.bf16.mxu0 0
        %1666 = vmatpush1.bf16.msra.mxu0 %v1201
        %1667 = vmatprep.subr.bf16.mxu0 0
        %1668 = vmatpush1.bf16.msra.mxu0 %v1204
        %1669 = vmatprep.subr.bf16.mxu0 0
        %1670 = vmatpush1.bf16.msra.mxu0 %v1207
        %1671 = vmatprep.subr.bf16.mxu0 0
        %1672 = vmatpush1.bf16.msra.mxu0 %v1210
        %1673 = vmatprep.subr.bf16.mxu0 0
        %1674 = vmatpush1.bf16.msra.mxu0 %v1213
        %1675 = vmatprep.subr.bf16.mxu0 0
        %1676 = vmatpush1.bf16.msra.mxu0 %v1216
        %1677 = vmatprep.subr.bf16.mxu0 0
        %1678 = vmatpush1.bf16.msra.mxu0 %v1219
        %1679 = vmatprep.subr.bf16.mxu0 0
        %1680 = vmatpush1.bf16.msra.mxu0 %v1222
        %1681 = vmatprep.subr.bf16.mxu0 0
        %1682 = vmatpush1.bf16.msra.mxu0 %v1225
        %1683 = vmatprep.subr.bf16.mxu0 0
        %1684 = vmatpush1.bf16.msra.mxu0 %v1228
        %1685 = vmatprep.subr.bf16.mxu0 0
        %1686 = vmatpush1.bf16.msra.mxu0 %v1231
        %1687 = vmatprep.subr.bf16.mxu0 0
        %1688 = vmatpush1.bf16.msra.mxu0 %v1234
        %1689 = vmatprep.mubr.bf16.mxu0 %v478
        %1690 = vmatmul.mubr.bf16.gmra.mrb[0].mxu0 %v477
        %v1691 = vpop.f32.mrb[0].mxu0
        %v1692 = vadd.f32 %v693, %v1691
        %v1693 = vpop.f32.mrb[0].mxu0
        %v1694 = vpop.f32.mrb[0].mxu0
        %v1695 = vadd.f32 %v693, %v1694
        %v1696 = vpop.f32.mrb[0].mxu0
        %1697 = vdwg.mxu0
        %1698 = vmatprep.subr.bf16.mxu0 0
        %1699 = vmatpush1.bf16.msra.mxu0 %v1237
        %1700 = vmatprep.subr.bf16.mxu0 0
        %1701 = vmatpush1.bf16.msra.mxu0 %v1240
        %1702 = vmatprep.subr.bf16.mxu0 0
        %1703 = vmatpush1.bf16.msra.mxu0 %v1243
        %1704 = vmatprep.subr.bf16.mxu0 0
        %1705 = vmatpush1.bf16.msra.mxu0 %v1246
        %1706 = vmatprep.subr.bf16.mxu0 0
        %1707 = vmatpush1.bf16.msra.mxu0 %v1249
        %1708 = vmatprep.subr.bf16.mxu0 0
        %1709 = vmatpush1.bf16.msra.mxu0 %v1252
        %1710 = vmatprep.subr.bf16.mxu0 0
        %1711 = vmatpush1.bf16.msra.mxu0 %v1255
        %1712 = vmatprep.subr.bf16.mxu0 0
        %1713 = vmatpush1.bf16.msra.mxu0 %v1258
        %1714 = vmatprep.subr.bf16.mxu0 0
        %1715 = vmatpush1.bf16.msra.mxu0 %v1261
        %1716 = vmatprep.subr.bf16.mxu0 0
        %1717 = vmatpush1.bf16.msra.mxu0 %v1264
        %1718 = vmatprep.subr.bf16.mxu0 0
        %1719 = vmatpush1.bf16.msra.mxu0 %v1267
        %1720 = vmatprep.subr.bf16.mxu0 0
        %1721 = vmatpush1.bf16.msra.mxu0 %v1270
        %1722 = vmatprep.subr.bf16.mxu0 0
        %1723 = vmatpush1.bf16.msra.mxu0 %v1273
        %1724 = vmatprep.subr.bf16.mxu0 0
        %1725 = vmatpush1.bf16.msra.mxu0 %v1276
        %1726 = vmatprep.subr.bf16.mxu0 0
        %1727 = vmatpush1.bf16.msra.mxu0 %v1279
        %1728 = vmatprep.subr.bf16.mxu0 0
        %1729 = vmatpush1.bf16.msra.mxu0 %v1282
        %1730 = vmatprep.mubr.bf16.mxu0 %v480
        %1731 = vmatmul.mubr.bf16.gmra.mrb[0].mxu0 %v479
        %v1732 = vpop.f32.mrb[0].mxu0
        %v1733 = vadd.f32 %v1692, %v1732
        %v1734 = vpop.f32.mrb[0].mxu0
        %v1735 = vpop.f32.mrb[0].mxu0
        %v1736 = vadd.f32 %v1695, %v1735
        %v1737 = vpop.f32.mrb[0].mxu0
        %1738 = vdwg.mxu0
        %1739 = vmatprep.subr.bf16.mxu0 0
        %1740 = vmatpush1.bf16.msra.mxu0 %v1285
        %1741 = vmatprep.subr.bf16.mxu0 0
        %1742 = vmatpush1.bf16.msra.mxu0 %v1288
        %1743 = vmatprep.subr.bf16.mxu0 0
        %1744 = vmatpush1.bf16.msra.mxu0 %v1291
        %1745 = vmatprep.subr.bf16.mxu0 0
        %1746 = vmatpush1.bf16.msra.mxu0 %v1294
        %1747 = vmatprep.subr.bf16.mxu0 0
        %1748 = vmatpush1.bf16.msra.mxu0 %v1297
        %1749 = vmatprep.subr.bf16.mxu0 0
        %1750 = vmatpush1.bf16.msra.mxu0 %v1300
        %1751 = vmatprep.subr.bf16.mxu0 0
        %1752 = vmatpush1.bf16.msra.mxu0 %v1303
        %1753 = vmatprep.subr.bf16.mxu0 0
        %1754 = vmatpush1.bf16.msra.mxu0 %v1306
        %1755 = vmatprep.subr.bf16.mxu0 0
        %1756 = vmatpush1.bf16.msra.mxu0 %v1309
        %1757 = vmatprep.subr.bf16.mxu0 0
        %1758 = vmatpush1.bf16.msra.mxu0 %v1312
        %1759 = vmatprep.subr.bf16.mxu0 0
        %1760 = vmatpush1.bf16.msra.mxu0 %v1315
        %1761 = vmatprep.subr.bf16.mxu0 0
        %1762 = vmatpush1.bf16.msra.mxu0 %v1318
        %1763 = vmatprep.subr.bf16.mxu0 0
        %1764 = vmatpush1.bf16.msra.mxu0 %v1321
        %1765 = vmatprep.subr.bf16.mxu0 0
        %1766 = vmatpush1.bf16.msra.mxu0 %v1324
        %1767 = vmatprep.subr.bf16.mxu0 0
        %1768 = vmatpush1.bf16.msra.mxu0 %v1327
        %1769 = vmatprep.subr.bf16.mxu0 0
        %1770 = vmatpush1.bf16.msra.mxu0 %v1330
        %1771 = vmatprep.mubr.bf16.mxu0 %v482
        %1772 = vmatmul.mubr.bf16.gmra.mrb[0].mxu0 %v481
        %v1773 = vpop.f32.mrb[0].mxu0
        %v1774 = vadd.f32 %v1733, %v1773
        %v1775 = vpop.f32.mrb[0].mxu0
        %v1776 = vpop.f32.mrb[0].mxu0
        %v1777 = vadd.f32 %v1736, %v1776
        %v1778 = vpop.f32.mrb[0].mxu0
        %1779 = vdwg.mxu0
        %1780 = vmatprep.subr.bf16.mxu0 0
        %1781 = vmatpush1.bf16.msra.mxu0 %v1333
        %1782 = vmatprep.subr.bf16.mxu0 0
        %1783 = vmatpush1.bf16.msra.mxu0 0
        %1784 = vmatprep.subr.bf16.mxu0 0
        %1785 = vmatpush1.bf16.msra.mxu0 0
        %1786 = vmatprep.subr.bf16.mxu0 0
        %1787 = vmatpush1.bf16.msra.mxu0 0
        %1788 = vmatprep.subr.bf16.mxu0 0
        %1789 = vmatpush1.bf16.msra.mxu0 0
        %1790 = vmatprep.subr.bf16.mxu0 0
        %1791 = vmatpush1.bf16.msra.mxu0 0
        %1792 = vmatprep.subr.bf16.mxu0 0
        %1793 = vmatpush1.bf16.msra.mxu0 0
        %1794 = vmatprep.subr.bf16.mxu0 0
        %1795 = vmatpush1.bf16.msra.mxu0 0
        %1796 = vmatprep.subr.bf16.mxu0 0
        %1797 = vmatpush1.bf16.msra.mxu0 0
        %1798 = vmatprep.subr.bf16.mxu0 0
        %1799 = vmatpush1.bf16.msra.mxu0 0
        %1800 = vmatprep.subr.bf16.mxu0 0
        %1801 = vmatpush1.bf16.msra.mxu0 0
        %1802 = vmatprep.subr.bf16.mxu0 0
        %1803 = vmatpush1.bf16.msra.mxu0 0
        %1804 = vmatprep.subr.bf16.mxu0 0
        %1805 = vmatpush1.bf16.msra.mxu0 0
        %1806 = vmatprep.subr.bf16.mxu0 0
        %1807 = vmatpush1.bf16.msra.mxu0 0
        %1808 = vmatprep.subr.bf16.mxu0 0
        %1809 = vmatpush1.bf16.msra.mxu0 0
        %1810 = vmatprep.subr.bf16.mxu0 0
        %1811 = vmatpush1.bf16.msra.mxu0 0
        %1812 = vmatprep.mubr.bf16.mxu0 0
        %1813 = vmatmul.mubr.bf16.gmra.mrb[0].mxu0 %v1483
        %v1814 = vpop.f32.mrb[0].mxu0
        %v1815 = vadd.f32 %v1774, %v1814
        %v1816 = vpop.f32.mrb[0].mxu0
        %v1817 = vpop.f32.mrb[0].mxu0
        %v1818 = vadd.f32 %v1777, %v1817
        %v1819 = vpop.f32.mrb[0].mxu0
        %1820 = vdwg.mxu0
        %v1821 = vmul.f32 %v1649, 0.01
        %v1822 = vmul.f32 %v1651, 0.01
        %v1823 = vmul.f32 %v1815, 0.01
        %v1824 = vmul.f32 %v1653, 0.01
        %v1825 = vmul.f32 %v1655, 0.01
        %v1826 = vmul.f32 %v1818, 0.01
        %v1827 = vmax.f32 %v1649, %v1821
        %v1828 = vmax.f32 %v1651, %v1822
        %v1829 = vmax.f32 %v1815, %v1823
        %v1830 = vmax.f32 %v1653, %v1824
        %v1831 = vmax.f32 %v1655, %v1825
        %v1832 = vmax.f32 %v1818, %v1826
        %v1833 = vpack.c.bf16 %v1830, %v1827
        %v1834 = vpack.c.bf16 %v1831, %v1828
        %v1835 = vpack.c.bf16 %v1832, %v1829
        %v1836 = vld [vmem:[#allocation8] sm:$0xff]
        %v1837 = vld [vmem:[#allocation8 + $0x8] sm:$0xff]
        %v1838 = vld [vmem:[#allocation8 + $0x10] sm:$0xff]
        %v1839 = vld [vmem:[#allocation8 + $0x18] sm:$0xf]
        %v1840 = vld [vmem:[#allocation8 + $0x1c] sm:$0xff]
        %v1841 = vld [vmem:[#allocation8 + $0x24] sm:$0xff]
        %v1842 = vld [vmem:[#allocation8 + $0x2c] sm:$0xff]
        %v1843 = vld [vmem:[#allocation8 + $0x34] sm:$0xf]
        %v1844 = vld [vmem:[#allocation8 + $0x38] sm:$0xff]
        %v1845 = vld [vmem:[#allocation8 + $0x40] sm:$0xff]
        %v1846 = vld [vmem:[#allocation8 + $0x48] sm:$0xff]
        %v1847 = vld [vmem:[#allocation8 + $0x50] sm:$0xf]
        %v1848 = vld [vmem:[#allocation8 + $0x54] sm:$0xff]
        %v1849 = vld [vmem:[#allocation8 + $0x5c] sm:$0xff]
        %v1850 = vld [vmem:[#allocation8 + $0x64] sm:$0xff]
        %v1851 = vld [vmem:[#allocation8 + $0x6c] sm:$0xf]
        %v1852 = vld [vmem:[#allocation8 + $0x70] sm:$0xff]
        %v1853 = vld [vmem:[#allocation8 + $0x78] sm:$0xff]
        %v1854 = vld [vmem:[#allocation8 + $0x80] sm:$0xff]
        %v1855 = vld [vmem:[#allocation8 + $0x88] sm:$0xf]
        %v1856 = vld [vmem:[#allocation8 + $0x8c] sm:$0xff]
        %v1857 = vld [vmem:[#allocation8 + $0x94] sm:$0xff]
        %v1858 = vld [vmem:[#allocation8 + $0x9c] sm:$0xff]
        %v1859 = vld [vmem:[#allocation8 + $0xa4] sm:$0xf]
        %v1860 = vld [vmem:[#allocation8 + $0xa8] sm:$0xff]
        %v1861 = vld [vmem:[#allocation8 + $0xb0] sm:$0xff]
        %v1862 = vld [vmem:[#allocation8 + $0xb8] sm:$0xff]
        %v1863 = vld [vmem:[#allocation8 + $0xc0] sm:$0xf]
        %v1864 = vld [vmem:[#allocation8 + $0xc4] sm:$0xff]
        %v1865 = vld [vmem:[#allocation8 + $0xcc] sm:$0xff]
        %v1866 = vld [vmem:[#allocation8 + $0xd4] sm:$0xff]
        %v1867 = vld [vmem:[#allocation8 + $0xdc] sm:$0xf]
        %v1868 = vld [vmem:[#allocation8 + $0xe0] sm:$0xff]
        %v1869 = vld [vmem:[#allocation8 + $0xe8] sm:$0xff]
        %v1870 = vld [vmem:[#allocation8 + $0xf0] sm:$0xff]
        %v1871 = vld [vmem:[#allocation8 + $0xf8] sm:$0xf]
        %v1872 = vld [vmem:[#allocation8 + $0xfc] sm:$0xff]
        %v1873 = vld [vmem:[#allocation8 + $0x104] sm:$0xff]
        %v1874 = vld [vmem:[#allocation8 + $0x10c] sm:$0xff]
        %v1875 = vld [vmem:[#allocation8 + $0x114] sm:$0xf]
        %v1876 = vld [vmem:[#allocation8 + $0x118] sm:$0xff]
        %v1877 = vld [vmem:[#allocation8 + $0x120] sm:$0xff]
        %v1878 = vld [vmem:[#allocation8 + $0x128] sm:$0xff]
        %v1879 = vld [vmem:[#allocation8 + $0x130] sm:$0xf]
        %v1880 = vld [vmem:[#allocation8 + $0x134] sm:$0xff]
        %v1881 = vld [vmem:[#allocation8 + $0x13c] sm:$0xff]
        %v1882 = vld [vmem:[#allocation8 + $0x144] sm:$0xff]
        %v1883 = vld [vmem:[#allocation8 + $0x14c] sm:$0xf]
        %v1884 = vld [vmem:[#allocation8 + $0x150] sm:$0xff]
        %v1885 = vld [vmem:[#allocation8 + $0x158] sm:$0xff]
        %v1886 = vld [vmem:[#allocation8 + $0x160] sm:$0xff]
        %v1887 = vld [vmem:[#allocation8 + $0x168] sm:$0xf]
        %v1888 = vld [vmem:[#allocation8 + $0x16c] sm:$0xff]
        %v1889 = vld [vmem:[#allocation8 + $0x174] sm:$0xff]
        %v1890 = vld [vmem:[#allocation8 + $0x17c] sm:$0xff]
        %v1891 = vld [vmem:[#allocation8 + $0x184] sm:$0xf]
        %v1892 = vld [vmem:[#allocation8 + $0x188] sm:$0xff]
        %v1893 = vld [vmem:[#allocation8 + $0x190] sm:$0xff]
        %v1894 = vld [vmem:[#allocation8 + $0x198] sm:$0xff]
        %v1895 = vld [vmem:[#allocation8 + $0x1a0] sm:$0xf]
        %v1896 = vld [vmem:[#allocation8 + $0x1a4] sm:$0xff]
        %v1897 = vld [vmem:[#allocation8 + $0x1ac] sm:$0xff]
        %v1898 = vld [vmem:[#allocation8 + $0x1b4] sm:$0xff]
        %v1899 = vld [vmem:[#allocation8 + $0x1bc] sm:$0xf]
        %v1900 = vld [vmem:[#allocation8 + $0x1c0] sm:$0xff]
        %v1901 = vld [vmem:[#allocation8 + $0x1c8] sm:$0xff]
        %v1902 = vld [vmem:[#allocation8 + $0x1d0] sm:$0xff]
        %v1903 = vld [vmem:[#allocation8 + $0x1d8] sm:$0xf]
        %v1904 = vld [vmem:[#allocation8 + $0x1dc] sm:$0xff]
        %v1905 = vld [vmem:[#allocation8 + $0x1e4] sm:$0xff]
        %v1906 = vld [vmem:[#allocation8 + $0x1ec] sm:$0xff]
        %v1907 = vld [vmem:[#allocation8 + $0x1f4] sm:$0xf]
        %v1908 = vld [vmem:[#allocation8 + $0x1f8] sm:$0xff]
        %v1909 = vld [vmem:[#allocation8 + $0x200] sm:$0xff]
        %v1910 = vld [vmem:[#allocation8 + $0x208] sm:$0xff]
        %v1911 = vld [vmem:[#allocation8 + $0x210] sm:$0xf]
        %v1912 = vld [vmem:[#allocation8 + $0x214] sm:$0xff]
        %v1913 = vld [vmem:[#allocation8 + $0x21c] sm:$0xff]
        %v1914 = vld [vmem:[#allocation8 + $0x224] sm:$0xff]
        %v1915 = vld [vmem:[#allocation8 + $0x22c] sm:$0xf]
        %v1916 = vld [vmem:[#allocation8 + $0x230] sm:$0xff]
        %v1917 = vld [vmem:[#allocation8 + $0x238] sm:$0xff]
        %v1918 = vld [vmem:[#allocation8 + $0x240] sm:$0xff]
        %v1919 = vld [vmem:[#allocation8 + $0x248] sm:$0xf]
        %v1920 = vld [vmem:[#allocation8 + $0x24c] sm:$0xff]
        %v1921 = vld [vmem:[#allocation8 + $0x254] sm:$0xff]
        %v1922 = vld [vmem:[#allocation8 + $0x25c] sm:$0xff]
        %v1923 = vld [vmem:[#allocation8 + $0x264] sm:$0xf]
        %v1924 = vld [vmem:[#allocation8 + $0x268] sm:$0xff]
        %v1925 = vld [vmem:[#allocation8 + $0x270] sm:$0xff]
        %v1926 = vld [vmem:[#allocation8 + $0x278] sm:$0xff]
        %v1927 = vld [vmem:[#allocation8 + $0x280] sm:$0xf]
        %v1928 = vld [vmem:[#allocation8 + $0x284] sm:$0xff]
        %v1929 = vld [vmem:[#allocation8 + $0x28c] sm:$0xff]
        %v1930 = vld [vmem:[#allocation8 + $0x294] sm:$0xff]
        %v1931 = vld [vmem:[#allocation8 + $0x29c] sm:$0xf]
        %v1932 = vld [vmem:[#allocation8 + $0x2a0] sm:$0xff]
        %v1933 = vld [vmem:[#allocation8 + $0x2a8] sm:$0xff]
        %v1934 = vld [vmem:[#allocation8 + $0x2b0] sm:$0xff]
        %v1935 = vld [vmem:[#allocation8 + $0x2b8] sm:$0xf]
        %v1936 = vld [vmem:[#allocation8 + $0x2bc] sm:$0xff]
        %v1937 = vld [vmem:[#allocation8 + $0x2c4] sm:$0xff]
        %v1938 = vld [vmem:[#allocation8 + $0x2cc] sm:$0xff]
        %v1939 = vld [vmem:[#allocation8 + $0x2d4] sm:$0xf]
        %v1940 = vld [vmem:[#allocation8 + $0x2d8] sm:$0xff]
        %v1941 = vld [vmem:[#allocation8 + $0x2e0] sm:$0xff]
        %v1942 = vld [vmem:[#allocation8 + $0x2e8] sm:$0xff]
        %v1943 = vld [vmem:[#allocation8 + $0x2f0] sm:$0xf]
        %v1944 = vld [vmem:[#allocation8 + $0x2f4] sm:$0xff]
        %v1945 = vld [vmem:[#allocation8 + $0x2fc] sm:$0xff]
        %v1946 = vld [vmem:[#allocation8 + $0x304] sm:$0xff]
        %v1947 = vld [vmem:[#allocation8 + $0x30c] sm:$0xf]
        %v1948 = vld [vmem:[#allocation8 + $0x310] sm:$0xff]
        %v1949 = vld [vmem:[#allocation8 + $0x318] sm:$0xff]
        %v1950 = vld [vmem:[#allocation8 + $0x320] sm:$0xff]
        %v1951 = vld [vmem:[#allocation8 + $0x328] sm:$0xf]
        %v1952 = vld [vmem:[#allocation8 + $0x32c] sm:$0xff]
        %v1953 = vld [vmem:[#allocation8 + $0x334] sm:$0xff]
        %v1954 = vld [vmem:[#allocation8 + $0x33c] sm:$0xff]
        %v1955 = vld [vmem:[#allocation8 + $0x344] sm:$0xf]
        %v1956 = vld [vmem:[#allocation8 + $0x348] sm:$0xff]
        %v1957 = vld [vmem:[#allocation8 + $0x350] sm:$0xff]
        %v1958 = vld [vmem:[#allocation8 + $0x358] sm:$0xff]
        %v1959 = vld [vmem:[#allocation8 + $0x360] sm:$0xf]
        %v1960 = vld [vmem:[#allocation8 + $0x364] sm:$0xff]
        %v1961 = vld [vmem:[#allocation8 + $0x36c] sm:$0xff]
        %v1962 = vld [vmem:[#allocation8 + $0x374] sm:$0xff]
        %v1963 = vld [vmem:[#allocation8 + $0x37c] sm:$0xf]
        %v1964 = vld [vmem:[#allocation8 + $0x380] sm:$0xff]
        %v1965 = vld [vmem:[#allocation8 + $0x388] sm:$0xff]
        %v1966 = vld [vmem:[#allocation8 + $0x390] sm:$0xff]
        %v1967 = vld [vmem:[#allocation8 + $0x398] sm:$0xf]
        %v1968 = vld [vmem:[#allocation8 + $0x39c] sm:$0xff]
        %v1969 = vld [vmem:[#allocation8 + $0x3a4] sm:$0xff]
        %v1970 = vld [vmem:[#allocation8 + $0x3ac] sm:$0xff]
        %v1971 = vld [vmem:[#allocation8 + $0x3b4] sm:$0xf]
        %v1972 = vld [vmem:[#allocation8 + $0x3b8] sm:$0xff]
        %v1973 = vld [vmem:[#allocation8 + $0x3c0] sm:$0xff]
        %v1974 = vld [vmem:[#allocation8 + $0x3c8] sm:$0xff]
        %v1975 = vld [vmem:[#allocation8 + $0x3d0] sm:$0xf]
        %v1976 = vld [vmem:[#allocation8 + $0x3d4] sm:$0xff]
        %v1977 = vld [vmem:[#allocation8 + $0x3dc] sm:$0xff]
        %v1978 = vld [vmem:[#allocation8 + $0x3e4] sm:$0xff]
        %v1979 = vld [vmem:[#allocation8 + $0x3ec] sm:$0xf]
        %v1980 = vld [vmem:[#allocation8 + $0x3f0] sm:$0xff]
        %v1981 = vld [vmem:[#allocation8 + $0x3f8] sm:$0xff]
        %v1982 = vld [vmem:[#allocation8 + $0x400] sm:$0xff]
        %v1983 = vld [vmem:[#allocation8 + $0x408] sm:$0xf]
        %v1984 = vld [vmem:[#allocation8 + $0x40c] sm:$0xff]
        %v1985 = vld [vmem:[#allocation8 + $0x414] sm:$0xff]
        %v1986 = vld [vmem:[#allocation8 + $0x41c] sm:$0xff]
        %v1987 = vld [vmem:[#allocation8 + $0x424] sm:$0xf]
        %v1988 = vld [vmem:[#allocation8 + $0x428] sm:$0xff]
        %v1989 = vld [vmem:[#allocation8 + $0x430] sm:$0xff]
        %v1990 = vld [vmem:[#allocation8 + $0x438] sm:$0xff]
        %v1991 = vld [vmem:[#allocation8 + $0x440] sm:$0xf]
        %v1992 = vld [vmem:[#allocation8 + $0x444] sm:$0xff]
        %v1993 = vld [vmem:[#allocation8 + $0x44c] sm:$0xff]
        %v1994 = vld [vmem:[#allocation8 + $0x454] sm:$0xff]
        %v1995 = vld [vmem:[#allocation8 + $0x45c] sm:$0xf]
        %v1996 = vld [vmem:[#allocation8 + $0x460] sm:$0xff]
        %v1997 = vld [vmem:[#allocation8 + $0x468] sm:$0xff]
        %v1998 = vld [vmem:[#allocation8 + $0x470] sm:$0xff]
        %v1999 = vld [vmem:[#allocation8 + $0x478] sm:$0xf]
        %v2000 = vld [vmem:[#allocation8 + $0x47c] sm:$0xff]
        %v2001 = vld [vmem:[#allocation8 + $0x484] sm:$0xff]
        %v2002 = vld [vmem:[#allocation8 + $0x48c] sm:$0xff]
        %v2003 = vld [vmem:[#allocation8 + $0x494] sm:$0xf]
        %v2004 = vld [vmem:[#allocation8 + $0x498] sm:$0xff]
        %v2005 = vld [vmem:[#allocation8 + $0x4a0] sm:$0xff]
        %v2006 = vld [vmem:[#allocation8 + $0x4a8] sm:$0xff]
        %v2007 = vld [vmem:[#allocation8 + $0x4b0] sm:$0xf]
        %v2008 = vld [vmem:[#allocation8 + $0x4b4] sm:$0xff]
        %v2009 = vld [vmem:[#allocation8 + $0x4bc] sm:$0xff]
        %v2010 = vld [vmem:[#allocation8 + $0x4c4] sm:$0xff]
        %v2011 = vld [vmem:[#allocation8 + $0x4cc] sm:$0xf]
        %v2012 = vld [vmem:[#allocation8 + $0x4d0] sm:$0xff]
        %v2013 = vld [vmem:[#allocation8 + $0x4d8] sm:$0xff]
        %v2014 = vld [vmem:[#allocation8 + $0x4e0] sm:$0xff]
        %v2015 = vld [vmem:[#allocation8 + $0x4e8] sm:$0xf]
        %v2016 = vld [vmem:[#allocation8 + $0x4ec] sm:$0xff]
        %v2017 = vld [vmem:[#allocation8 + $0x4f4] sm:$0xff]
        %v2018 = vld [vmem:[#allocation8 + $0x4fc] sm:$0xff]
        %v2019 = vld [vmem:[#allocation8 + $0x504] sm:$0xf]
        %v2020 = vld [vmem:[#allocation8 + $0x508] sm:$0xff]
        %v2021 = vld [vmem:[#allocation8 + $0x510] sm:$0xff]
        %v2022 = vld [vmem:[#allocation8 + $0x518] sm:$0xff]
        %v2023 = vld [vmem:[#allocation8 + $0x520] sm:$0xf]
        %v2024 = vld [vmem:[#allocation8 + $0x524] sm:$0xff]
        %v2025 = vld [vmem:[#allocation8 + $0x52c] sm:$0xff]
        %v2026 = vld [vmem:[#allocation8 + $0x534] sm:$0xff]
        %v2027 = vld [vmem:[#allocation8 + $0x53c] sm:$0xf]
        %v2028 = vld [vmem:[#allocation10] sm:$0xff]
        %v2030 = vlaneseq
        %v2031 = vshrl.u32 %v2030, 7
        %v2032 = vsub.s32 0, %v2031
        %v2033 = vrot.slane %v2028, %v2032
        %v2034 = vlaneseq
        %v2035 = vshrl.u32 %v2034, 7
        %v2036 = vsub.s32 1, %v2035
        %v2037 = vrot.slane %v2028, %v2036
        %v2038 = vlaneseq
        %v2039 = vshrl.u32 %v2038, 7
        %v2040 = vsub.s32 2, %v2039
        %v2041 = vrot.slane %v2028, %v2040
        %v2042 = vlaneseq
        %v2043 = vshrl.u32 %v2042, 7
        %v2044 = vsub.s32 3, %v2043
        %v2045 = vrot.slane %v2028, %v2044
        %v2046 = vlaneseq
        %v2047 = vshrl.u32 %v2046, 7
        %v2048 = vsub.s32 4, %v2047
        %v2049 = vrot.slane %v2028, %v2048
        %v2050 = vlaneseq
        %v2051 = vshrl.u32 %v2050, 7
        %v2052 = vsub.s32 5, %v2051
        %v2053 = vrot.slane %v2028, %v2052
        %v2054 = vlaneseq
        %v2055 = vshrl.u32 %v2054, 7
        %v2056 = vsub.s32 6, %v2055
        %v2057 = vrot.slane %v2028, %v2056
        %v2257 = vunpack.c.l.b16 %v1836
        %v2258 = vunpack.c.h.b16 %v1836
        %v2259 = vunpack.c.l.b16 %v1837
        %v2260 = vunpack.c.h.b16 %v1837
        %v2261 = vunpack.c.l.b16 %v1838
        %v2262 = vunpack.c.h.b16 %v1838
        %v2263 = vunpack.c.l.b16 %v1839
        %v2264 = vunpack.c.l.b16 %v1840
        %v2265 = vunpack.c.h.b16 %v1840
        %v2266 = vunpack.c.l.b16 %v1841
        %v2267 = vunpack.c.h.b16 %v1841
        %v2268 = vunpack.c.l.b16 %v1842
        %v2269 = vunpack.c.h.b16 %v1842
        %v2270 = vunpack.c.l.b16 %v1843
        %v2271 = vunpack.c.l.b16 %v1844
        %v2272 = vunpack.c.h.b16 %v1844
        %v2273 = vunpack.c.l.b16 %v1845
        %v2274 = vunpack.c.h.b16 %v1845
        %v2275 = vunpack.c.l.b16 %v1846
        %v2276 = vunpack.c.h.b16 %v1846
        %v2277 = vunpack.c.l.b16 %v1847
        %v2278 = vunpack.c.l.b16 %v1848
        %v2279 = vunpack.c.h.b16 %v1848
        %v2280 = vunpack.c.l.b16 %v1849
        %v2281 = vunpack.c.h.b16 %v1849
        %v2282 = vunpack.c.l.b16 %v1850
        %v2283 = vunpack.c.h.b16 %v1850
        %v2284 = vunpack.c.l.b16 %v1851
        %v2285 = vunpack.c.l.b16 %v1852
        %v2286 = vunpack.c.h.b16 %v1852
        %v2287 = vunpack.c.l.b16 %v1853
        %v2288 = vunpack.c.h.b16 %v1853
        %v2289 = vunpack.c.l.b16 %v1854
        %v2290 = vunpack.c.h.b16 %v1854
        %v2291 = vunpack.c.l.b16 %v1855
        %v2292 = vunpack.c.l.b16 %v1856
        %v2293 = vunpack.c.h.b16 %v1856
        %v2294 = vunpack.c.l.b16 %v1857
        %v2295 = vunpack.c.h.b16 %v1857
        %v2296 = vunpack.c.l.b16 %v1858
        %v2297 = vunpack.c.h.b16 %v1858
        %v2298 = vunpack.c.l.b16 %v1859
        %v2299 = vunpack.c.l.b16 %v1860
        %v2300 = vunpack.c.h.b16 %v1860
        %v2301 = vunpack.c.l.b16 %v1861
        %v2302 = vunpack.c.h.b16 %v1861
        %v2303 = vunpack.c.l.b16 %v1862
        %v2304 = vunpack.c.h.b16 %v1862
        %v2305 = vunpack.c.l.b16 %v1863
        %v2306 = vunpack.c.l.b16 %v1864
        %v2307 = vunpack.c.h.b16 %v1864
        %v2308 = vunpack.c.l.b16 %v1865
        %v2309 = vunpack.c.h.b16 %v1865
        %v2310 = vunpack.c.l.b16 %v1866
        %v2311 = vunpack.c.h.b16 %v1866
        %v2312 = vunpack.c.l.b16 %v1867
        %v2313 = vunpack.c.l.b16 %v1868
        %v2314 = vunpack.c.h.b16 %v1868
        %v2315 = vunpack.c.l.b16 %v1869
        %v2316 = vunpack.c.h.b16 %v1869
        %v2317 = vunpack.c.l.b16 %v1870
        %v2318 = vunpack.c.h.b16 %v1870
        %v2319 = vunpack.c.l.b16 %v1871
        %v2320 = vunpack.c.l.b16 %v1872
        %v2321 = vunpack.c.h.b16 %v1872
        %v2322 = vunpack.c.l.b16 %v1873
        %v2323 = vunpack.c.h.b16 %v1873
        %v2324 = vunpack.c.l.b16 %v1874
        %v2325 = vunpack.c.h.b16 %v1874
        %v2326 = vunpack.c.l.b16 %v1875
        %v2327 = vunpack.c.l.b16 %v1876
        %v2328 = vunpack.c.h.b16 %v1876
        %v2329 = vunpack.c.l.b16 %v1877
        %v2330 = vunpack.c.h.b16 %v1877
        %v2331 = vunpack.c.l.b16 %v1878
        %v2332 = vunpack.c.h.b16 %v1878
        %v2333 = vunpack.c.l.b16 %v1879
        %v2334 = vunpack.c.l.b16 %v1880
        %v2335 = vunpack.c.h.b16 %v1880
        %v2336 = vunpack.c.l.b16 %v1881
        %v2337 = vunpack.c.h.b16 %v1881
        %v2338 = vunpack.c.l.b16 %v1882
        %v2339 = vunpack.c.h.b16 %v1882
        %v2340 = vunpack.c.l.b16 %v1883
        %v2341 = vunpack.c.l.b16 %v1884
        %v2342 = vunpack.c.h.b16 %v1884
        %v2343 = vunpack.c.l.b16 %v1885
        %v2344 = vunpack.c.h.b16 %v1885
        %v2345 = vunpack.c.l.b16 %v1886
        %v2346 = vunpack.c.h.b16 %v1886
        %v2347 = vunpack.c.l.b16 %v1887
        %v2348 = vunpack.c.l.b16 %v1888
        %v2349 = vunpack.c.h.b16 %v1888
        %v2350 = vunpack.c.l.b16 %v1889
        %v2351 = vunpack.c.h.b16 %v1889
        %v2352 = vunpack.c.l.b16 %v1890
        %v2353 = vunpack.c.h.b16 %v1890
        %v2354 = vunpack.c.l.b16 %v1891
        %v2355 = vunpack.c.l.b16 %v1892
        %v2356 = vunpack.c.h.b16 %v1892
        %v2357 = vunpack.c.l.b16 %v1893
        %v2358 = vunpack.c.h.b16 %v1893
        %v2359 = vunpack.c.l.b16 %v1894
        %v2360 = vunpack.c.h.b16 %v1894
        %v2361 = vunpack.c.l.b16 %v1895
        %v2362 = vunpack.c.l.b16 %v1896
        %v2363 = vunpack.c.h.b16 %v1896
        %v2364 = vunpack.c.l.b16 %v1897
        %v2365 = vunpack.c.h.b16 %v1897
        %v2366 = vunpack.c.l.b16 %v1898
        %v2367 = vunpack.c.h.b16 %v1898
        %v2368 = vunpack.c.l.b16 %v1899
        %v2369 = vunpack.c.l.b16 %v1900
        %v2370 = vunpack.c.h.b16 %v1900
        %v2371 = vunpack.c.l.b16 %v1901
        %v2372 = vunpack.c.h.b16 %v1901
        %v2373 = vunpack.c.l.b16 %v1902
        %v2374 = vunpack.c.h.b16 %v1902
        %v2375 = vunpack.c.l.b16 %v1903
        %v2376 = vunpack.c.l.b16 %v1904
        %v2377 = vunpack.c.h.b16 %v1904
        %v2378 = vunpack.c.l.b16 %v1905
        %v2379 = vunpack.c.h.b16 %v1905
        %v2380 = vunpack.c.l.b16 %v1906
        %v2381 = vunpack.c.h.b16 %v1906
        %v2382 = vunpack.c.l.b16 %v1907
        %v2383 = vunpack.c.l.b16 %v1908
        %v2384 = vunpack.c.h.b16 %v1908
        %v2385 = vunpack.c.l.b16 %v1909
        %v2386 = vunpack.c.h.b16 %v1909
        %v2387 = vunpack.c.l.b16 %v1910
        %v2388 = vunpack.c.h.b16 %v1910
        %v2389 = vunpack.c.l.b16 %v1911
        %v2390 = vunpack.c.l.b16 %v1912
        %v2391 = vunpack.c.h.b16 %v1912
        %v2392 = vunpack.c.l.b16 %v1913
        %v2393 = vunpack.c.h.b16 %v1913
        %v2394 = vunpack.c.l.b16 %v1914
        %v2395 = vunpack.c.h.b16 %v1914
        %v2396 = vunpack.c.l.b16 %v1915
        %v2397 = vunpack.c.l.b16 %v1916
        %v2398 = vunpack.c.h.b16 %v1916
        %v2399 = vunpack.c.l.b16 %v1917
        %v2400 = vunpack.c.h.b16 %v1917
        %v2401 = vunpack.c.l.b16 %v1918
        %v2402 = vunpack.c.h.b16 %v1918
        %v2403 = vunpack.c.l.b16 %v1919
        %v2404 = vunpack.c.l.b16 %v1920
        %v2405 = vunpack.c.h.b16 %v1920
        %v2406 = vunpack.c.l.b16 %v1921
        %v2407 = vunpack.c.h.b16 %v1921
        %v2408 = vunpack.c.l.b16 %v1922
        %v2409 = vunpack.c.h.b16 %v1922
        %v2410 = vunpack.c.l.b16 %v1923
        %v2411 = vunpack.c.l.b16 %v1924
        %v2412 = vunpack.c.h.b16 %v1924
        %v2413 = vunpack.c.l.b16 %v1925
        %v2414 = vunpack.c.h.b16 %v1925
        %v2415 = vunpack.c.l.b16 %v1926
        %v2416 = vunpack.c.h.b16 %v1926
        %v2417 = vunpack.c.l.b16 %v1927
        %v2418 = vunpack.c.l.b16 %v1928
        %v2419 = vunpack.c.h.b16 %v1928
        %v2420 = vunpack.c.l.b16 %v1929
        %v2421 = vunpack.c.h.b16 %v1929
        %v2422 = vunpack.c.l.b16 %v1930
        %v2423 = vunpack.c.h.b16 %v1930
        %v2424 = vunpack.c.l.b16 %v1931
        %v2425 = vunpack.c.l.b16 %v1932
        %v2426 = vunpack.c.h.b16 %v1932
        %v2427 = vunpack.c.l.b16 %v1933
        %v2428 = vunpack.c.h.b16 %v1933
        %v2429 = vunpack.c.l.b16 %v1934
        %v2430 = vunpack.c.h.b16 %v1934
        %v2431 = vunpack.c.l.b16 %v1935
        %v2432 = vunpack.c.l.b16 %v1936
        %v2433 = vunpack.c.h.b16 %v1936
        %v2434 = vunpack.c.l.b16 %v1937
        %v2435 = vunpack.c.h.b16 %v1937
        %v2436 = vunpack.c.l.b16 %v1938
        %v2437 = vunpack.c.h.b16 %v1938
        %v2438 = vunpack.c.l.b16 %v1939
        %v2439 = vunpack.c.l.b16 %v1940
        %v2440 = vunpack.c.h.b16 %v1940
        %v2441 = vunpack.c.l.b16 %v1941
        %v2442 = vunpack.c.h.b16 %v1941
        %v2443 = vunpack.c.l.b16 %v1942
        %v2444 = vunpack.c.h.b16 %v1942
        %v2445 = vunpack.c.l.b16 %v1943
        %v2446 = vunpack.c.l.b16 %v1944
        %v2447 = vunpack.c.h.b16 %v1944
        %v2448 = vunpack.c.l.b16 %v1945
        %v2449 = vunpack.c.h.b16 %v1945
        %v2450 = vunpack.c.l.b16 %v1946
        %v2451 = vunpack.c.h.b16 %v1946
        %v2452 = vunpack.c.l.b16 %v1947
        %v2453 = vunpack.c.l.b16 %v1948
        %v2454 = vunpack.c.h.b16 %v1948
        %v2455 = vunpack.c.l.b16 %v1949
        %v2456 = vunpack.c.h.b16 %v1949
        %v2457 = vunpack.c.l.b16 %v1950
        %v2458 = vunpack.c.h.b16 %v1950
        %v2459 = vunpack.c.l.b16 %v1951
        %v2460 = vunpack.c.l.b16 %v1952
        %v2461 = vunpack.c.h.b16 %v1952
        %v2462 = vunpack.c.l.b16 %v1953
        %v2463 = vunpack.c.h.b16 %v1953
        %v2464 = vunpack.c.l.b16 %v1954
        %v2465 = vunpack.c.h.b16 %v1954
        %v2466 = vunpack.c.l.b16 %v1955
        %v2467 = vunpack.c.l.b16 %v1956
        %v2468 = vunpack.c.h.b16 %v1956
        %v2469 = vunpack.c.l.b16 %v1957
        %v2470 = vunpack.c.h.b16 %v1957
        %v2471 = vunpack.c.l.b16 %v1958
        %v2472 = vunpack.c.h.b16 %v1958
        %v2473 = vunpack.c.l.b16 %v1959
        %v2474 = vunpack.c.l.b16 %v1960
        %v2475 = vunpack.c.h.b16 %v1960
        %v2476 = vunpack.c.l.b16 %v1961
        %v2477 = vunpack.c.h.b16 %v1961
        %v2478 = vunpack.c.l.b16 %v1962
        %v2479 = vunpack.c.h.b16 %v1962
        %v2480 = vunpack.c.l.b16 %v1963
        %v2481 = vunpack.c.l.b16 %v1964
        %v2482 = vunpack.c.h.b16 %v1964
        %v2483 = vunpack.c.l.b16 %v1965
        %v2484 = vunpack.c.h.b16 %v1965
        %v2485 = vunpack.c.l.b16 %v1966
        %v2486 = vunpack.c.h.b16 %v1966
        %v2487 = vunpack.c.l.b16 %v1967
        %v2488 = vunpack.c.l.b16 %v1968
        %v2489 = vunpack.c.h.b16 %v1968
        %v2490 = vunpack.c.l.b16 %v1969
        %v2491 = vunpack.c.h.b16 %v1969
        %v2492 = vunpack.c.l.b16 %v1970
        %v2493 = vunpack.c.h.b16 %v1970
        %v2494 = vunpack.c.l.b16 %v1971
        %v2495 = vunpack.c.l.b16 %v1972
        %v2496 = vunpack.c.h.b16 %v1972
        %v2497 = vunpack.c.l.b16 %v1973
        %v2498 = vunpack.c.h.b16 %v1973
        %v2499 = vunpack.c.l.b16 %v1974
        %v2500 = vunpack.c.h.b16 %v1974
        %v2501 = vunpack.c.l.b16 %v1975
        %v2502 = vunpack.c.l.b16 %v1976
        %v2503 = vunpack.c.h.b16 %v1976
        %v2504 = vunpack.c.l.b16 %v1977
        %v2505 = vunpack.c.h.b16 %v1977
        %v2506 = vunpack.c.l.b16 %v1978
        %v2507 = vunpack.c.h.b16 %v1978
        %v2508 = vunpack.c.l.b16 %v1979
        %v2509 = vunpack.c.l.b16 %v1980
        %v2510 = vunpack.c.h.b16 %v1980
        %v2511 = vunpack.c.l.b16 %v1981
        %v2512 = vunpack.c.h.b16 %v1981
        %v2513 = vunpack.c.l.b16 %v1982
        %v2514 = vunpack.c.h.b16 %v1982
        %v2515 = vunpack.c.l.b16 %v1983
        %v2516 = vunpack.c.l.b16 %v1984
        %v2517 = vunpack.c.h.b16 %v1984
        %v2518 = vunpack.c.l.b16 %v1985
        %v2519 = vunpack.c.h.b16 %v1985
        %v2520 = vunpack.c.l.b16 %v1986
        %v2521 = vunpack.c.h.b16 %v1986
        %v2522 = vunpack.c.l.b16 %v1987
        %v2523 = vunpack.c.l.b16 %v1988
        %v2524 = vunpack.c.h.b16 %v1988
        %v2525 = vunpack.c.l.b16 %v1989
        %v2526 = vunpack.c.h.b16 %v1989
        %v2527 = vunpack.c.l.b16 %v1990
        %v2528 = vunpack.c.h.b16 %v1990
        %v2529 = vunpack.c.l.b16 %v1991
        %v2530 = vunpack.c.l.b16 %v1992
        %v2531 = vunpack.c.h.b16 %v1992
        %v2532 = vunpack.c.l.b16 %v1993
        %v2533 = vunpack.c.h.b16 %v1993
        %v2534 = vunpack.c.l.b16 %v1994
        %v2535 = vunpack.c.h.b16 %v1994
        %v2536 = vunpack.c.l.b16 %v1995
        %v2537 = vunpack.c.l.b16 %v1996
        %v2538 = vunpack.c.h.b16 %v1996
        %v2539 = vunpack.c.l.b16 %v1997
        %v2540 = vunpack.c.h.b16 %v1997
        %v2541 = vunpack.c.l.b16 %v1998
        %v2542 = vunpack.c.h.b16 %v1998
        %v2543 = vunpack.c.l.b16 %v1999
        %v2544 = vunpack.c.l.b16 %v2000
        %v2545 = vunpack.c.h.b16 %v2000
        %v2546 = vunpack.c.l.b16 %v2001
        %v2547 = vunpack.c.h.b16 %v2001
        %v2548 = vunpack.c.l.b16 %v2002
        %v2549 = vunpack.c.h.b16 %v2002
        %v2550 = vunpack.c.l.b16 %v2003
        %v2551 = vunpack.c.l.b16 %v2004
        %v2552 = vunpack.c.h.b16 %v2004
        %v2553 = vunpack.c.l.b16 %v2005
        %v2554 = vunpack.c.h.b16 %v2005
        %v2555 = vunpack.c.l.b16 %v2006
        %v2556 = vunpack.c.h.b16 %v2006
        %v2557 = vunpack.c.l.b16 %v2007
        %v2558 = vunpack.c.l.b16 %v2008
        %v2559 = vunpack.c.h.b16 %v2008
        %v2560 = vunpack.c.l.b16 %v2009
        %v2561 = vunpack.c.h.b16 %v2009
        %v2562 = vunpack.c.l.b16 %v2010
        %v2563 = vunpack.c.h.b16 %v2010
        %v2564 = vunpack.c.l.b16 %v2011
        %v2565 = vunpack.c.l.b16 %v2012
        %v2566 = vunpack.c.h.b16 %v2012
        %v2567 = vunpack.c.l.b16 %v2013
        %v2568 = vunpack.c.h.b16 %v2013
        %v2569 = vunpack.c.l.b16 %v2014
        %v2570 = vunpack.c.h.b16 %v2014
        %v2571 = vunpack.c.l.b16 %v2015
        %v2572 = vunpack.c.l.b16 %v2016
        %v2573 = vunpack.c.h.b16 %v2016
        %v2574 = vunpack.c.l.b16 %v2017
        %v2575 = vunpack.c.h.b16 %v2017
        %v2576 = vunpack.c.l.b16 %v2018
        %v2577 = vunpack.c.h.b16 %v2018
        %v2578 = vunpack.c.l.b16 %v2019
        %v2579 = vunpack.c.l.b16 %v2020
        %v2580 = vunpack.c.h.b16 %v2020
        %v2581 = vunpack.c.l.b16 %v2021
        %v2582 = vunpack.c.h.b16 %v2021
        %v2583 = vunpack.c.l.b16 %v2022
        %v2584 = vunpack.c.h.b16 %v2022
        %v2585 = vunpack.c.l.b16 %v2023
        %v2586 = vunpack.c.l.b16 %v2024
        %v2587 = vunpack.c.h.b16 %v2024
        %v2588 = vunpack.c.l.b16 %v2025
        %v2589 = vunpack.c.h.b16 %v2025
        %v2590 = vunpack.c.l.b16 %v2026
        %v2591 = vunpack.c.h.b16 %v2026
        %v2592 = vunpack.c.l.b16 %v2027
        %v2593 = vpack.c.b16 %v2264, %v2257
        %v2594 = vpack.c.b16 %v2265, %v2258
        %v2595 = vpack.c.b16 %v2266, %v2259
        %v2596 = vpack.c.b16 %v2267, %v2260
        %v2597 = vpack.c.b16 %v2268, %v2261
        %v2598 = vpack.c.b16 %v2269, %v2262
        %v2599 = vpack.c.b16 %v2270, %v2263
        %v2600 = vpack.c.b16 %v2278, %v2271
        %v2601 = vpack.c.b16 %v2279, %v2272
        %v2602 = vpack.c.b16 %v2280, %v2273
        %v2603 = vpack.c.b16 %v2281, %v2274
        %v2604 = vpack.c.b16 %v2282, %v2275
        %v2605 = vpack.c.b16 %v2283, %v2276
        %v2606 = vpack.c.b16 %v2284, %v2277
        %v2607 = vpack.c.b16 %v2292, %v2285
        %v2608 = vpack.c.b16 %v2293, %v2286
        %v2609 = vpack.c.b16 %v2294, %v2287
        %v2610 = vpack.c.b16 %v2295, %v2288
        %v2611 = vpack.c.b16 %v2296, %v2289
        %v2612 = vpack.c.b16 %v2297, %v2290
        %v2613 = vpack.c.b16 %v2298, %v2291
        %v2614 = vpack.c.b16 %v2306, %v2299
        %v2615 = vpack.c.b16 %v2307, %v2300
        %v2616 = vpack.c.b16 %v2308, %v2301
        %v2617 = vpack.c.b16 %v2309, %v2302
        %v2618 = vpack.c.b16 %v2310, %v2303
        %v2619 = vpack.c.b16 %v2311, %v2304
        %v2620 = vpack.c.b16 %v2312, %v2305
        %v2621 = vpack.c.b16 %v2320, %v2313
        %v2622 = vpack.c.b16 %v2321, %v2314
        %v2623 = vpack.c.b16 %v2322, %v2315
        %v2624 = vpack.c.b16 %v2323, %v2316
        %v2625 = vpack.c.b16 %v2324, %v2317
        %v2626 = vpack.c.b16 %v2325, %v2318
        %v2627 = vpack.c.b16 %v2326, %v2319
        %v2628 = vpack.c.b16 %v2334, %v2327
        %v2629 = vpack.c.b16 %v2335, %v2328
        %v2630 = vpack.c.b16 %v2336, %v2329
        %v2631 = vpack.c.b16 %v2337, %v2330
        %v2632 = vpack.c.b16 %v2338, %v2331
        %v2633 = vpack.c.b16 %v2339, %v2332
        %v2634 = vpack.c.b16 %v2340, %v2333
        %v2635 = vpack.c.b16 %v2348, %v2341
        %v2636 = vpack.c.b16 %v2349, %v2342
        %v2637 = vpack.c.b16 %v2350, %v2343
        %v2638 = vpack.c.b16 %v2351, %v2344
        %v2639 = vpack.c.b16 %v2352, %v2345
        %v2640 = vpack.c.b16 %v2353, %v2346
        %v2641 = vpack.c.b16 %v2354, %v2347
        %v2642 = vpack.c.b16 %v2362, %v2355
        %v2643 = vpack.c.b16 %v2363, %v2356
        %v2644 = vpack.c.b16 %v2364, %v2357
        %v2645 = vpack.c.b16 %v2365, %v2358
        %v2646 = vpack.c.b16 %v2366, %v2359
        %v2647 = vpack.c.b16 %v2367, %v2360
        %v2648 = vpack.c.b16 %v2368, %v2361
        %v2649 = vpack.c.b16 %v2376, %v2369
        %v2650 = vpack.c.b16 %v2377, %v2370
        %v2651 = vpack.c.b16 %v2378, %v2371
        %v2652 = vpack.c.b16 %v2379, %v2372
        %v2653 = vpack.c.b16 %v2380, %v2373
        %v2654 = vpack.c.b16 %v2381, %v2374
        %v2655 = vpack.c.b16 %v2382, %v2375
        %v2656 = vpack.c.b16 %v2390, %v2383
        %v2657 = vpack.c.b16 %v2391, %v2384
        %v2658 = vpack.c.b16 %v2392, %v2385
        %v2659 = vpack.c.b16 %v2393, %v2386
        %v2660 = vpack.c.b16 %v2394, %v2387
        %v2661 = vpack.c.b16 %v2395, %v2388
        %v2662 = vpack.c.b16 %v2396, %v2389
        %v2663 = vpack.c.b16 %v2404, %v2397
        %v2664 = vpack.c.b16 %v2405, %v2398
        %v2665 = vpack.c.b16 %v2406, %v2399
        %v2666 = vpack.c.b16 %v2407, %v2400
        %v2667 = vpack.c.b16 %v2408, %v2401
        %v2668 = vpack.c.b16 %v2409, %v2402
        %v2669 = vpack.c.b16 %v2410, %v2403
        %v2670 = vpack.c.b16 %v2418, %v2411
        %v2671 = vpack.c.b16 %v2419, %v2412
        %v2672 = vpack.c.b16 %v2420, %v2413
        %v2673 = vpack.c.b16 %v2421, %v2414
        %v2674 = vpack.c.b16 %v2422, %v2415
        %v2675 = vpack.c.b16 %v2423, %v2416
        %v2676 = vpack.c.b16 %v2424, %v2417
        %v2677 = vpack.c.b16 %v2432, %v2425
        %v2678 = vpack.c.b16 %v2433, %v2426
        %v2679 = vpack.c.b16 %v2434, %v2427
        %v2680 = vpack.c.b16 %v2435, %v2428
        %v2681 = vpack.c.b16 %v2436, %v2429
        %v2682 = vpack.c.b16 %v2437, %v2430
        %v2683 = vpack.c.b16 %v2438, %v2431
        %v2684 = vpack.c.b16 %v2446, %v2439
        %v2685 = vpack.c.b16 %v2447, %v2440
        %v2686 = vpack.c.b16 %v2448, %v2441
        %v2687 = vpack.c.b16 %v2449, %v2442
        %v2688 = vpack.c.b16 %v2450, %v2443
        %v2689 = vpack.c.b16 %v2451, %v2444
        %v2690 = vpack.c.b16 %v2452, %v2445
        %v2691 = vpack.c.b16 %v2460, %v2453
        %v2692 = vpack.c.b16 %v2461, %v2454
        %v2693 = vpack.c.b16 %v2462, %v2455
        %v2694 = vpack.c.b16 %v2463, %v2456
        %v2695 = vpack.c.b16 %v2464, %v2457
        %v2696 = vpack.c.b16 %v2465, %v2458
        %v2697 = vpack.c.b16 %v2466, %v2459
        %v2698 = vpack.c.b16 %v2474, %v2467
        %v2699 = vpack.c.b16 %v2475, %v2468
        %v2700 = vpack.c.b16 %v2476, %v2469
        %v2701 = vpack.c.b16 %v2477, %v2470
        %v2702 = vpack.c.b16 %v2478, %v2471
        %v2703 = vpack.c.b16 %v2479, %v2472
        %v2704 = vpack.c.b16 %v2480, %v2473
        %v2705 = vpack.c.b16 %v2488, %v2481
        %v2706 = vpack.c.b16 %v2489, %v2482
        %v2707 = vpack.c.b16 %v2490, %v2483
        %v2708 = vpack.c.b16 %v2491, %v2484
        %v2709 = vpack.c.b16 %v2492, %v2485
        %v2710 = vpack.c.b16 %v2493, %v2486
        %v2711 = vpack.c.b16 %v2494, %v2487
        %v2712 = vpack.c.b16 %v2502, %v2495
        %v2713 = vpack.c.b16 %v2503, %v2496
        %v2714 = vpack.c.b16 %v2504, %v2497
        %v2715 = vpack.c.b16 %v2505, %v2498
        %v2716 = vpack.c.b16 %v2506, %v2499
        %v2717 = vpack.c.b16 %v2507, %v2500
        %v2718 = vpack.c.b16 %v2508, %v2501
        %v2719 = vpack.c.b16 %v2516, %v2509
        %v2720 = vpack.c.b16 %v2517, %v2510
        %v2721 = vpack.c.b16 %v2518, %v2511
        %v2722 = vpack.c.b16 %v2519, %v2512
        %v2723 = vpack.c.b16 %v2520, %v2513
        %v2724 = vpack.c.b16 %v2521, %v2514
        %v2725 = vpack.c.b16 %v2522, %v2515
        %v2726 = vpack.c.b16 %v2530, %v2523
        %v2727 = vpack.c.b16 %v2531, %v2524
        %v2728 = vpack.c.b16 %v2532, %v2525
        %v2729 = vpack.c.b16 %v2533, %v2526
        %v2730 = vpack.c.b16 %v2534, %v2527
        %v2731 = vpack.c.b16 %v2535, %v2528
        %v2732 = vpack.c.b16 %v2536, %v2529
        %v2733 = vpack.c.b16 %v2544, %v2537
        %v2734 = vpack.c.b16 %v2545, %v2538
        %v2735 = vpack.c.b16 %v2546, %v2539
        %v2736 = vpack.c.b16 %v2547, %v2540
        %v2737 = vpack.c.b16 %v2548, %v2541
        %v2738 = vpack.c.b16 %v2549, %v2542
        %v2739 = vpack.c.b16 %v2550, %v2543
        %v2740 = vpack.c.b16 %v2558, %v2551
        %v2741 = vpack.c.b16 %v2559, %v2552
        %v2742 = vpack.c.b16 %v2560, %v2553
        %v2743 = vpack.c.b16 %v2561, %v2554
        %v2744 = vpack.c.b16 %v2562, %v2555
        %v2745 = vpack.c.b16 %v2563, %v2556
        %v2746 = vpack.c.b16 %v2564, %v2557
        %v2747 = vpack.c.b16 %v2572, %v2565
        %v2748 = vpack.c.b16 %v2573, %v2566
        %v2749 = vpack.c.b16 %v2574, %v2567
        %v2750 = vpack.c.b16 %v2575, %v2568
        %v2751 = vpack.c.b16 %v2576, %v2569
        %v2752 = vpack.c.b16 %v2577, %v2570
        %v2753 = vpack.c.b16 %v2578, %v2571
        %v2754 = vpack.c.b16 %v2586, %v2579
        %v2755 = vpack.c.b16 %v2587, %v2580
        %v2756 = vpack.c.b16 %v2588, %v2581
        %v2757 = vpack.c.b16 %v2589, %v2582
        %v2758 = vpack.c.b16 %v2590, %v2583
        %v2759 = vpack.c.b16 %v2591, %v2584
        %v2760 = vpack.c.b16 %v2592, %v2585
        %2929 = vmatprep.subr.bf16.mxu0 %v2594
        %2930 = vmatpush1.bf16.msra.mxu0 %v2593
        %2931 = vmatprep.subr.bf16.mxu0 %v2601
        %2932 = vmatpush1.bf16.msra.mxu0 %v2600
        %2933 = vmatprep.subr.bf16.mxu0 %v2608
        %2934 = vmatpush1.bf16.msra.mxu0 %v2607
        %2935 = vmatprep.subr.bf16.mxu0 %v2615
        %2936 = vmatpush1.bf16.msra.mxu0 %v2614
        %2937 = vmatprep.subr.bf16.mxu0 %v2622
        %2938 = vmatpush1.bf16.msra.mxu0 %v2621
        %2939 = vmatprep.subr.bf16.mxu0 %v2629
        %2940 = vmatpush1.bf16.msra.mxu0 %v2628
        %2941 = vmatprep.subr.bf16.mxu0 %v2636
        %2942 = vmatpush1.bf16.msra.mxu0 %v2635
        %2943 = vmatprep.subr.bf16.mxu0 %v2643
        %2944 = vmatpush1.bf16.msra.mxu0 %v2642
        %2945 = vmatprep.subr.bf16.mxu0 %v2650
        %2946 = vmatpush1.bf16.msra.mxu0 %v2649
        %2947 = vmatprep.subr.bf16.mxu0 %v2657
        %2948 = vmatpush1.bf16.msra.mxu0 %v2656
        %2949 = vmatprep.subr.bf16.mxu0 %v2664
        %2950 = vmatpush1.bf16.msra.mxu0 %v2663
        %2951 = vmatprep.subr.bf16.mxu0 %v2671
        %2952 = vmatpush1.bf16.msra.mxu0 %v2670
        %2953 = vmatprep.subr.bf16.mxu0 %v2678
        %2954 = vmatpush1.bf16.msra.mxu0 %v2677
        %2955 = vmatprep.subr.bf16.mxu0 %v2685
        %2956 = vmatpush1.bf16.msra.mxu0 %v2684
        %2957 = vmatprep.subr.bf16.mxu0 %v2692
        %2958 = vmatpush1.bf16.msra.mxu0 %v2691
        %2959 = vmatprep.subr.bf16.mxu0 %v2699
        %2960 = vmatpush1.bf16.msra.mxu0 %v2698
        %2961 = vmatprep.mubr.bf16.mxu0 %v1834
        %2962 = vmatmul.mubr.bf16.gmra.mrb[0].mxu0 %v1833
        %v2963 = vpop.f32.mrb[0].mxu0
        %v2964 = vadd.f32 %v2033, %v2963
        %v2965 = vpop.f32.mrb[0].mxu0
        %v2966 = vadd.f32 %v2037, %v2965
        %v2967 = vpop.f32.mrb[0].mxu0
        %v2968 = vadd.f32 %v2033, %v2967
        %v2969 = vpop.f32.mrb[0].mxu0
        %v2970 = vadd.f32 %v2037, %v2969
        %2971 = vdwg.mxu0
        %2972 = vmatprep.subr.bf16.mxu0 %v2706
        %2973 = vmatpush1.bf16.msra.mxu0 %v2705
        %2974 = vmatprep.subr.bf16.mxu0 %v2713
        %2975 = vmatpush1.bf16.msra.mxu0 %v2712
        %2976 = vmatprep.subr.bf16.mxu0 %v2720
        %2977 = vmatpush1.bf16.msra.mxu0 %v2719
        %2978 = vmatprep.subr.bf16.mxu0 %v2727
        %2979 = vmatpush1.bf16.msra.mxu0 %v2726
        %2980 = vmatprep.subr.bf16.mxu0 %v2734
        %2981 = vmatpush1.bf16.msra.mxu0 %v2733
        %2982 = vmatprep.subr.bf16.mxu0 %v2741
        %2983 = vmatpush1.bf16.msra.mxu0 %v2740
        %2984 = vmatprep.subr.bf16.mxu0 %v2748
        %2985 = vmatpush1.bf16.msra.mxu0 %v2747
        %2986 = vmatprep.subr.bf16.mxu0 %v2755
        %2987 = vmatpush1.bf16.msra.mxu0 %v2754
        %2988 = vmatprep.subr.bf16.mxu0 0
        %2989 = vmatpush1.bf16.msra.mxu0 0
        %2990 = vmatprep.subr.bf16.mxu0 0
        %2991 = vmatpush1.bf16.msra.mxu0 0
        %2992 = vmatprep.subr.bf16.mxu0 0
        %2993 = vmatpush1.bf16.msra.mxu0 0
        %2994 = vmatprep.subr.bf16.mxu0 0
        %2995 = vmatpush1.bf16.msra.mxu0 0
        %2996 = vmatprep.subr.bf16.mxu0 0
        %2997 = vmatpush1.bf16.msra.mxu0 0
        %2998 = vmatprep.subr.bf16.mxu0 0
        %2999 = vmatpush1.bf16.msra.mxu0 0
        %3000 = vmatprep.subr.bf16.mxu0 0
        %3001 = vmatpush1.bf16.msra.mxu0 0
        %3002 = vmatprep.subr.bf16.mxu0 0
        %3003 = vmatpush1.bf16.msra.mxu0 0
        %3004 = vmatprep.mubr.bf16.mxu0 0
        %3005 = vmatmul.mubr.bf16.gmra.mrb[0].mxu0 %v1835
        %v3006 = vpop.f32.mrb[0].mxu0
        %v3007 = vadd.f32 %v2964, %v3006
        %v3008 = vpop.f32.mrb[0].mxu0
        %v3009 = vadd.f32 %v2966, %v3008
        %v3010 = vpop.f32.mrb[0].mxu0
        %v3011 = vadd.f32 %v2968, %v3010
        %v3012 = vpop.f32.mrb[0].mxu0
        %v3013 = vadd.f32 %v2970, %v3012
        %3014 = vdwg.mxu0
        %3015 = vmatprep.subr.bf16.mxu0 %v2596
        %3016 = vmatpush1.bf16.msra.mxu0 %v2595
        %3017 = vmatprep.subr.bf16.mxu0 %v2603
        %3018 = vmatpush1.bf16.msra.mxu0 %v2602
        %3019 = vmatprep.subr.bf16.mxu0 %v2610
        %3020 = vmatpush1.bf16.msra.mxu0 %v2609
        %3021 = vmatprep.subr.bf16.mxu0 %v2617
        %3022 = vmatpush1.bf16.msra.mxu0 %v2616
        %3023 = vmatprep.subr.bf16.mxu0 %v2624
        %3024 = vmatpush1.bf16.msra.mxu0 %v2623
        %3025 = vmatprep.subr.bf16.mxu0 %v2631
        %3026 = vmatpush1.bf16.msra.mxu0 %v2630
        %3027 = vmatprep.subr.bf16.mxu0 %v2638
        %3028 = vmatpush1.bf16.msra.mxu0 %v2637
        %3029 = vmatprep.subr.bf16.mxu0 %v2645
        %3030 = vmatpush1.bf16.msra.mxu0 %v2644
        %3031 = vmatprep.subr.bf16.mxu0 %v2652
        %3032 = vmatpush1.bf16.msra.mxu0 %v2651
        %3033 = vmatprep.subr.bf16.mxu0 %v2659
        %3034 = vmatpush1.bf16.msra.mxu0 %v2658
        %3035 = vmatprep.subr.bf16.mxu0 %v2666
        %3036 = vmatpush1.bf16.msra.mxu0 %v2665
        %3037 = vmatprep.subr.bf16.mxu0 %v2673
        %3038 = vmatpush1.bf16.msra.mxu0 %v2672
        %3039 = vmatprep.subr.bf16.mxu0 %v2680
        %3040 = vmatpush1.bf16.msra.mxu0 %v2679
        %3041 = vmatprep.subr.bf16.mxu0 %v2687
        %3042 = vmatpush1.bf16.msra.mxu0 %v2686
        %3043 = vmatprep.subr.bf16.mxu0 %v2694
        %3044 = vmatpush1.bf16.msra.mxu0 %v2693
        %3045 = vmatprep.subr.bf16.mxu0 %v2701
        %3046 = vmatpush1.bf16.msra.mxu0 %v2700
        %3047 = vmatprep.mubr.bf16.mxu0 %v1834
        %3048 = vmatmul.mubr.bf16.gmra.mrb[0].mxu0 %v1833
        %v3049 = vpop.f32.mrb[0].mxu0
        %v3050 = vadd.f32 %v2041, %v3049
        %v3051 = vpop.f32.mrb[0].mxu0
        %v3052 = vadd.f32 %v2045, %v3051
        %v3053 = vpop.f32.mrb[0].mxu0
        %v3054 = vadd.f32 %v2041, %v3053
        %v3055 = vpop.f32.mrb[0].mxu0
        %v3056 = vadd.f32 %v2045, %v3055
        %3057 = vdwg.mxu0
        %3058 = vmatprep.subr.bf16.mxu0 %v2708
        %3059 = vmatpush1.bf16.msra.mxu0 %v2707
        %3060 = vmatprep.subr.bf16.mxu0 %v2715
        %3061 = vmatpush1.bf16.msra.mxu0 %v2714
        %3062 = vmatprep.subr.bf16.mxu0 %v2722
        %3063 = vmatpush1.bf16.msra.mxu0 %v2721
        %3064 = vmatprep.subr.bf16.mxu0 %v2729
        %3065 = vmatpush1.bf16.msra.mxu0 %v2728
        %3066 = vmatprep.subr.bf16.mxu0 %v2736
        %3067 = vmatpush1.bf16.msra.mxu0 %v2735
        %3068 = vmatprep.subr.bf16.mxu0 %v2743
        %3069 = vmatpush1.bf16.msra.mxu0 %v2742
        %3070 = vmatprep.subr.bf16.mxu0 %v2750
        %3071 = vmatpush1.bf16.msra.mxu0 %v2749
        %3072 = vmatprep.subr.bf16.mxu0 %v2757
        %3073 = vmatpush1.bf16.msra.mxu0 %v2756
        %3074 = vmatprep.subr.bf16.mxu0 0
        %3075 = vmatpush1.bf16.msra.mxu0 0
        %3076 = vmatprep.subr.bf16.mxu0 0
        %3077 = vmatpush1.bf16.msra.mxu0 0
        %3078 = vmatprep.subr.bf16.mxu0 0
        %3079 = vmatpush1.bf16.msra.mxu0 0
        %3080 = vmatprep.subr.bf16.mxu0 0
        %3081 = vmatpush1.bf16.msra.mxu0 0
        %3082 = vmatprep.subr.bf16.mxu0 0
        %3083 = vmatpush1.bf16.msra.mxu0 0
        %3084 = vmatprep.subr.bf16.mxu0 0
        %3085 = vmatpush1.bf16.msra.mxu0 0
        %3086 = vmatprep.subr.bf16.mxu0 0
        %3087 = vmatpush1.bf16.msra.mxu0 0
        %3088 = vmatprep.subr.bf16.mxu0 0
        %3089 = vmatpush1.bf16.msra.mxu0 0
        %3090 = vmatprep.mubr.bf16.mxu0 0
        %3091 = vmatmul.mubr.bf16.gmra.mrb[0].mxu0 %v1835
        %v3092 = vpop.f32.mrb[0].mxu0
        %v3093 = vadd.f32 %v3050, %v3092
        %v3094 = vpop.f32.mrb[0].mxu0
        %v3095 = vadd.f32 %v3052, %v3094
        %v3096 = vpop.f32.mrb[0].mxu0
        %v3097 = vadd.f32 %v3054, %v3096
        %v3098 = vpop.f32.mrb[0].mxu0
        %v3099 = vadd.f32 %v3056, %v3098
        %3100 = vdwg.mxu0
        %3101 = vmatprep.subr.bf16.mxu0 %v2598
        %3102 = vmatpush1.bf16.msra.mxu0 %v2597
        %3103 = vmatprep.subr.bf16.mxu0 %v2605
        %3104 = vmatpush1.bf16.msra.mxu0 %v2604
        %3105 = vmatprep.subr.bf16.mxu0 %v2612
        %3106 = vmatpush1.bf16.msra.mxu0 %v2611
        %3107 = vmatprep.subr.bf16.mxu0 %v2619
        %3108 = vmatpush1.bf16.msra.mxu0 %v2618
        %3109 = vmatprep.subr.bf16.mxu0 %v2626
        %3110 = vmatpush1.bf16.msra.mxu0 %v2625
        %3111 = vmatprep.subr.bf16.mxu0 %v2633
        %3112 = vmatpush1.bf16.msra.mxu0 %v2632
        %3113 = vmatprep.subr.bf16.mxu0 %v2640
        %3114 = vmatpush1.bf16.msra.mxu0 %v2639
        %3115 = vmatprep.subr.bf16.mxu0 %v2647
        %3116 = vmatpush1.bf16.msra.mxu0 %v2646
        %3117 = vmatprep.subr.bf16.mxu0 %v2654
        %3118 = vmatpush1.bf16.msra.mxu0 %v2653
        %3119 = vmatprep.subr.bf16.mxu0 %v2661
        %3120 = vmatpush1.bf16.msra.mxu0 %v2660
        %3121 = vmatprep.subr.bf16.mxu0 %v2668
        %3122 = vmatpush1.bf16.msra.mxu0 %v2667
        %3123 = vmatprep.subr.bf16.mxu0 %v2675
        %3124 = vmatpush1.bf16.msra.mxu0 %v2674
        %3125 = vmatprep.subr.bf16.mxu0 %v2682
        %3126 = vmatpush1.bf16.msra.mxu0 %v2681
        %3127 = vmatprep.subr.bf16.mxu0 %v2689
        %3128 = vmatpush1.bf16.msra.mxu0 %v2688
        %3129 = vmatprep.subr.bf16.mxu0 %v2696
        %3130 = vmatpush1.bf16.msra.mxu0 %v2695
        %3131 = vmatprep.subr.bf16.mxu0 %v2703
        %3132 = vmatpush1.bf16.msra.mxu0 %v2702
        %3133 = vmatprep.mubr.bf16.mxu0 %v1834
        %3134 = vmatmul.mubr.bf16.gmra.mrb[0].mxu0 %v1833
        %v3135 = vpop.f32.mrb[0].mxu0
        %v3136 = vadd.f32 %v2049, %v3135
        %v3137 = vpop.f32.mrb[0].mxu0
        %v3138 = vadd.f32 %v2053, %v3137
        %v3139 = vpop.f32.mrb[0].mxu0
        %v3140 = vadd.f32 %v2049, %v3139
        %v3141 = vpop.f32.mrb[0].mxu0
        %v3142 = vadd.f32 %v2053, %v3141
        %3143 = vdwg.mxu0
        %3144 = vmatprep.subr.bf16.mxu0 %v2710
        %3145 = vmatpush1.bf16.msra.mxu0 %v2709
        %3146 = vmatprep.subr.bf16.mxu0 %v2717
        %3147 = vmatpush1.bf16.msra.mxu0 %v2716
        %3148 = vmatprep.subr.bf16.mxu0 %v2724
        %3149 = vmatpush1.bf16.msra.mxu0 %v2723
        %3150 = vmatprep.subr.bf16.mxu0 %v2731
        %3151 = vmatpush1.bf16.msra.mxu0 %v2730
        %3152 = vmatprep.subr.bf16.mxu0 %v2738
        %3153 = vmatpush1.bf16.msra.mxu0 %v2737
        %3154 = vmatprep.subr.bf16.mxu0 %v2745
        %3155 = vmatpush1.bf16.msra.mxu0 %v2744
        %3156 = vmatprep.subr.bf16.mxu0 %v2752
        %3157 = vmatpush1.bf16.msra.mxu0 %v2751
        %3158 = vmatprep.subr.bf16.mxu0 %v2759
        %3159 = vmatpush1.bf16.msra.mxu0 %v2758
        %3160 = vmatprep.subr.bf16.mxu0 0
        %3161 = vmatpush1.bf16.msra.mxu0 0
        %3162 = vmatprep.subr.bf16.mxu0 0
        %3163 = vmatpush1.bf16.msra.mxu0 0
        %3164 = vmatprep.subr.bf16.mxu0 0
        %3165 = vmatpush1.bf16.msra.mxu0 0
        %3166 = vmatprep.subr.bf16.mxu0 0
        %3167 = vmatpush1.bf16.msra.mxu0 0
        %3168 = vmatprep.subr.bf16.mxu0 0
        %3169 = vmatpush1.bf16.msra.mxu0 0
        %3170 = vmatprep.subr.bf16.mxu0 0
        %3171 = vmatpush1.bf16.msra.mxu0 0
        %3172 = vmatprep.subr.bf16.mxu0 0
        %3173 = vmatpush1.bf16.msra.mxu0 0
        %3174 = vmatprep.subr.bf16.mxu0 0
        %3175 = vmatpush1.bf16.msra.mxu0 0
        %3176 = vmatprep.mubr.bf16.mxu0 0
        %3177 = vmatmul.mubr.bf16.gmra.mrb[0].mxu0 %v1835
        %v3178 = vpop.f32.mrb[0].mxu0
        %v3179 = vadd.f32 %v3136, %v3178
        %v3180 = vpop.f32.mrb[0].mxu0
        %v3181 = vadd.f32 %v3138, %v3180
        %v3182 = vpop.f32.mrb[0].mxu0
        %v3183 = vadd.f32 %v3140, %v3182
        %v3184 = vpop.f32.mrb[0].mxu0
        %v3185 = vadd.f32 %v3142, %v3184
        %3186 = vdwg.mxu0
        %3187 = vmatprep.subr.bf16.mxu0 0
        %3188 = vmatpush1.bf16.msra.mxu0 %v2599
        %3189 = vmatprep.subr.bf16.mxu0 0
        %3190 = vmatpush1.bf16.msra.mxu0 %v2606
        %3191 = vmatprep.subr.bf16.mxu0 0
        %3192 = vmatpush1.bf16.msra.mxu0 %v2613
        %3193 = vmatprep.subr.bf16.mxu0 0
        %3194 = vmatpush1.bf16.msra.mxu0 %v2620
        %3195 = vmatprep.subr.bf16.mxu0 0
        %3196 = vmatpush1.bf16.msra.mxu0 %v2627
        %3197 = vmatprep.subr.bf16.mxu0 0
        %3198 = vmatpush1.bf16.msra.mxu0 %v2634
        %3199 = vmatprep.subr.bf16.mxu0 0
        %3200 = vmatpush1.bf16.msra.mxu0 %v2641
        %3201 = vmatprep.subr.bf16.mxu0 0
        %3202 = vmatpush1.bf16.msra.mxu0 %v2648
        %3203 = vmatprep.subr.bf16.mxu0 0
        %3204 = vmatpush1.bf16.msra.mxu0 %v2655
        %3205 = vmatprep.subr.bf16.mxu0 0
        %3206 = vmatpush1.bf16.msra.mxu0 %v2662
        %3207 = vmatprep.subr.bf16.mxu0 0
        %3208 = vmatpush1.bf16.msra.mxu0 %v2669
        %3209 = vmatprep.subr.bf16.mxu0 0
        %3210 = vmatpush1.bf16.msra.mxu0 %v2676
        %3211 = vmatprep.subr.bf16.mxu0 0
        %3212 = vmatpush1.bf16.msra.mxu0 %v2683
        %3213 = vmatprep.subr.bf16.mxu0 0
        %3214 = vmatpush1.bf16.msra.mxu0 %v2690
        %3215 = vmatprep.subr.bf16.mxu0 0
        %3216 = vmatpush1.bf16.msra.mxu0 %v2697
        %3217 = vmatprep.subr.bf16.mxu0 0
        %3218 = vmatpush1.bf16.msra.mxu0 %v2704
        %3219 = vmatprep.mubr.bf16.mxu0 %v1834
        %3220 = vmatmul.mubr.bf16.gmra.mrb[0].mxu0 %v1833
        %v3221 = vpop.f32.mrb[0].mxu0
        %v3222 = vadd.f32 %v2057, %v3221
        %v3223 = vpop.f32.mrb[0].mxu0
        %v3224 = vpop.f32.mrb[0].mxu0
        %v3225 = vadd.f32 %v2057, %v3224
        %v3226 = vpop.f32.mrb[0].mxu0
        %3227 = vdwg.mxu0
        %3228 = vmatprep.subr.bf16.mxu0 0
        %3229 = vmatpush1.bf16.msra.mxu0 %v2711
        %3230 = vmatprep.subr.bf16.mxu0 0
        %3231 = vmatpush1.bf16.msra.mxu0 %v2718
        %3232 = vmatprep.subr.bf16.mxu0 0
        %3233 = vmatpush1.bf16.msra.mxu0 %v2725
        %3234 = vmatprep.subr.bf16.mxu0 0
        %3235 = vmatpush1.bf16.msra.mxu0 %v2732
        %3236 = vmatprep.subr.bf16.mxu0 0
        %3237 = vmatpush1.bf16.msra.mxu0 %v2739
        %3238 = vmatprep.subr.bf16.mxu0 0
        %3239 = vmatpush1.bf16.msra.mxu0 %v2746
        %3240 = vmatprep.subr.bf16.mxu0 0
        %3241 = vmatpush1.bf16.msra.mxu0 %v2753
        %3242 = vmatprep.subr.bf16.mxu0 0
        %3243 = vmatpush1.bf16.msra.mxu0 %v2760
        %3244 = vmatprep.subr.bf16.mxu0 0
        %3245 = vmatpush1.bf16.msra.mxu0 0
        %3246 = vmatprep.subr.bf16.mxu0 0
        %3247 = vmatpush1.bf16.msra.mxu0 0
        %3248 = vmatprep.subr.bf16.mxu0 0
        %3249 = vmatpush1.bf16.msra.mxu0 0
        %3250 = vmatprep.subr.bf16.mxu0 0
        %3251 = vmatpush1.bf16.msra.mxu0 0
        %3252 = vmatprep.subr.bf16.mxu0 0
        %3253 = vmatpush1.bf16.msra.mxu0 0
        %3254 = vmatprep.subr.bf16.mxu0 0
        %3255 = vmatpush1.bf16.msra.mxu0 0
        %3256 = vmatprep.subr.bf16.mxu0 0
        %3257 = vmatpush1.bf16.msra.mxu0 0
        %3258 = vmatprep.subr.bf16.mxu0 0
        %3259 = vmatpush1.bf16.msra.mxu0 0
        %3260 = vmatprep.mubr.bf16.mxu0 0
        %3261 = vmatmul.mubr.bf16.gmra.mrb[0].mxu0 %v1835
        %v3262 = vpop.f32.mrb[0].mxu0
        %v3263 = vadd.f32 %v3222, %v3262
        %v3264 = vpop.f32.mrb[0].mxu0
        %v3265 = vpop.f32.mrb[0].mxu0
        %v3266 = vadd.f32 %v3225, %v3265
        %v3267 = vpop.f32.mrb[0].mxu0
        %3268 = vdwg.mxu0
        %v3269 = vmul.f32 %v3007, 0.01
        %v3270 = vmul.f32 %v3009, 0.01
        %v3271 = vmul.f32 %v3093, 0.01
        %v3272 = vmul.f32 %v3095, 0.01
        %v3273 = vmul.f32 %v3179, 0.01
        %v3274 = vmul.f32 %v3181, 0.01
        %v3275 = vmul.f32 %v3263, 0.01
        %v3276 = vmul.f32 %v3011, 0.01
        %v3277 = vmul.f32 %v3013, 0.01
        %v3278 = vmul.f32 %v3097, 0.01
        %v3279 = vmul.f32 %v3099, 0.01
        %v3280 = vmul.f32 %v3183, 0.01
        %v3281 = vmul.f32 %v3185, 0.01
        %v3282 = vmul.f32 %v3266, 0.01
        %v3283 = vmax.f32 %v3007, %v3269
        %v3284 = vmax.f32 %v3009, %v3270
        %v3285 = vmax.f32 %v3093, %v3271
        %v3286 = vmax.f32 %v3095, %v3272
        %v3287 = vmax.f32 %v3179, %v3273
        %v3288 = vmax.f32 %v3181, %v3274
        %v3289 = vmax.f32 %v3263, %v3275
        %v3290 = vmax.f32 %v3011, %v3276
        %v3291 = vmax.f32 %v3013, %v3277
        %v3292 = vmax.f32 %v3097, %v3278
        %v3293 = vmax.f32 %v3099, %v3279
        %v3294 = vmax.f32 %v3183, %v3280
        %v3295 = vmax.f32 %v3185, %v3281
        %v3296 = vmax.f32 %v3266, %v3282
        %v3297 = vpack.c.bf16 %v3290, %v3283
        %v3298 = vpack.c.bf16 %v3291, %v3284
        %v3299 = vpack.c.bf16 %v3292, %v3285
        %v3300 = vpack.c.bf16 %v3293, %v3286
        %v3301 = vpack.c.bf16 %v3294, %v3287
        %v3302 = vpack.c.bf16 %v3295, %v3288
        %v3303 = vpack.c.bf16 %v3296, %v3289
        %v3304 = vld [vmem:[#allocation11] sm:$0xff]
        %v3305 = vld [vmem:[#allocation11 + $0x8] sm:$0xf]
        %v3306 = vld [vmem:[#allocation11 + $0xc] sm:$0xff]
        %v3307 = vld [vmem:[#allocation11 + $0x14] sm:$0xf]
        %v3308 = vld [vmem:[#allocation11 + $0x18] sm:$0xff]
        %v3309 = vld [vmem:[#allocation11 + $0x20] sm:$0xf]
        %v3310 = vld [vmem:[#allocation11 + $0x24] sm:$0xff]
        %v3311 = vld [vmem:[#allocation11 + $0x2c] sm:$0xf]
        %v3312 = vld [vmem:[#allocation11 + $0x30] sm:$0xff]
        %v3313 = vld [vmem:[#allocation11 + $0x38] sm:$0xf]
        %v3314 = vld [vmem:[#allocation11 + $0x3c] sm:$0xff]
        %v3315 = vld [vmem:[#allocation11 + $0x44] sm:$0xf]
        %v3316 = vld [vmem:[#allocation11 + $0x48] sm:$0xff]
        %v3317 = vld [vmem:[#allocation11 + $0x50] sm:$0xf]
        %v3318 = vld [vmem:[#allocation11 + $0x54] sm:$0xff]
        %v3319 = vld [vmem:[#allocation11 + $0x5c] sm:$0xf]
        %v3320 = vld [vmem:[#allocation11 + $0x60] sm:$0xff]
        %v3321 = vld [vmem:[#allocation11 + $0x68] sm:$0xf]
        %v3322 = vld [vmem:[#allocation11 + $0x6c] sm:$0xff]
        %v3323 = vld [vmem:[#allocation11 + $0x74] sm:$0xf]
        %v3324 = vld [vmem:[#allocation11 + $0x78] sm:$0xff]
        %v3325 = vld [vmem:[#allocation11 + $0x80] sm:$0xf]
        %v3326 = vld [vmem:[#allocation11 + $0x84] sm:$0xff]
        %v3327 = vld [vmem:[#allocation11 + $0x8c] sm:$0xf]
        %v3328 = vld [vmem:[#allocation11 + $0x90] sm:$0xff]
        %v3329 = vld [vmem:[#allocation11 + $0x98] sm:$0xf]
        %v3330 = vld [vmem:[#allocation11 + $0x9c] sm:$0xff]
        %v3331 = vld [vmem:[#allocation11 + $0xa4] sm:$0xf]
        %v3332 = vld [vmem:[#allocation11 + $0xa8] sm:$0xff]
        %v3333 = vld [vmem:[#allocation11 + $0xb0] sm:$0xf]
        %v3334 = vld [vmem:[#allocation11 + $0xb4] sm:$0xff]
        %v3335 = vld [vmem:[#allocation11 + $0xbc] sm:$0xf]
        %v3336 = vld [vmem:[#allocation11 + $0xc0] sm:$0xff]
        %v3337 = vld [vmem:[#allocation11 + $0xc8] sm:$0xf]
        %v3338 = vld [vmem:[#allocation11 + $0xcc] sm:$0xff]
        %v3339 = vld [vmem:[#allocation11 + $0xd4] sm:$0xf]
        %v3340 = vld [vmem:[#allocation11 + $0xd8] sm:$0xff]
        %v3341 = vld [vmem:[#allocation11 + $0xe0] sm:$0xf]
        %v3342 = vld [vmem:[#allocation11 + $0xe4] sm:$0xff]
        %v3343 = vld [vmem:[#allocation11 + $0xec] sm:$0xf]
        %v3344 = vld [vmem:[#allocation11 + $0xf0] sm:$0xff]
        %v3345 = vld [vmem:[#allocation11 + $0xf8] sm:$0xf]
        %v3346 = vld [vmem:[#allocation11 + $0xfc] sm:$0xff]
        %v3347 = vld [vmem:[#allocation11 + $0x104] sm:$0xf]
        %v3348 = vld [vmem:[#allocation11 + $0x108] sm:$0xff]
        %v3349 = vld [vmem:[#allocation11 + $0x110] sm:$0xf]
        %v3350 = vld [vmem:[#allocation11 + $0x114] sm:$0xff]
        %v3351 = vld [vmem:[#allocation11 + $0x11c] sm:$0xf]
        %v3352 = vld [vmem:[#allocation11 + $0x120] sm:$0xff]
        %v3353 = vld [vmem:[#allocation11 + $0x128] sm:$0xf]
        %v3354 = vld [vmem:[#allocation11 + $0x12c] sm:$0xff]
        %v3355 = vld [vmem:[#allocation11 + $0x134] sm:$0xf]
        %v3356 = vld [vmem:[#allocation11 + $0x138] sm:$0xff]
        %v3357 = vld [vmem:[#allocation11 + $0x140] sm:$0xf]
        %v3358 = vld [vmem:[#allocation11 + $0x144] sm:$0xff]
        %v3359 = vld [vmem:[#allocation11 + $0x14c] sm:$0xf]
        %v3360 = vld [vmem:[#allocation11 + $0x150] sm:$0xff]
        %v3361 = vld [vmem:[#allocation11 + $0x158] sm:$0xf]
        %v3362 = vld [vmem:[#allocation11 + $0x15c] sm:$0xff]
        %v3363 = vld [vmem:[#allocation11 + $0x164] sm:$0xf]
        %v3364 = vld [vmem:[#allocation11 + $0x168] sm:$0xff]
        %v3365 = vld [vmem:[#allocation11 + $0x170] sm:$0xf]
        %v3366 = vld [vmem:[#allocation11 + $0x174] sm:$0xff]
        %v3367 = vld [vmem:[#allocation11 + $0x17c] sm:$0xf]
        %v3368 = vld [vmem:[#allocation11 + $0x180] sm:$0xff]
        %v3369 = vld [vmem:[#allocation11 + $0x188] sm:$0xf]
        %v3370 = vld [vmem:[#allocation11 + $0x18c] sm:$0xff]
        %v3371 = vld [vmem:[#allocation11 + $0x194] sm:$0xf]
        %v3372 = vld [vmem:[#allocation11 + $0x198] sm:$0xff]
        %v3373 = vld [vmem:[#allocation11 + $0x1a0] sm:$0xf]
        %v3374 = vld [vmem:[#allocation11 + $0x1a4] sm:$0xff]
        %v3375 = vld [vmem:[#allocation11 + $0x1ac] sm:$0xf]
        %v3376 = vld [vmem:[#allocation11 + $0x1b0] sm:$0xff]
        %v3377 = vld [vmem:[#allocation11 + $0x1b8] sm:$0xf]
        %v3378 = vld [vmem:[#allocation11 + $0x1bc] sm:$0xff]
        %v3379 = vld [vmem:[#allocation11 + $0x1c4] sm:$0xf]
        %v3380 = vld [vmem:[#allocation11 + $0x1c8] sm:$0xff]
        %v3381 = vld [vmem:[#allocation11 + $0x1d0] sm:$0xf]
        %v3382 = vld [vmem:[#allocation11 + $0x1d4] sm:$0xff]
        %v3383 = vld [vmem:[#allocation11 + $0x1dc] sm:$0xf]
        %v3384 = vld [vmem:[#allocation11 + $0x1e0] sm:$0xff]
        %v3385 = vld [vmem:[#allocation11 + $0x1e8] sm:$0xf]
        %v3386 = vld [vmem:[#allocation11 + $0x1ec] sm:$0xff]
        %v3387 = vld [vmem:[#allocation11 + $0x1f4] sm:$0xf]
        %v3388 = vld [vmem:[#allocation11 + $0x1f8] sm:$0xff]
        %v3389 = vld [vmem:[#allocation11 + $0x200] sm:$0xf]
        %v3390 = vld [vmem:[#allocation11 + $0x204] sm:$0xff]
        %v3391 = vld [vmem:[#allocation11 + $0x20c] sm:$0xf]
        %v3392 = vld [vmem:[#allocation11 + $0x210] sm:$0xff]
        %v3393 = vld [vmem:[#allocation11 + $0x218] sm:$0xf]
        %v3394 = vld [vmem:[#allocation11 + $0x21c] sm:$0xff]
        %v3395 = vld [vmem:[#allocation11 + $0x224] sm:$0xf]
        %v3396 = vld [vmem:[#allocation11 + $0x228] sm:$0xff]
        %v3397 = vld [vmem:[#allocation11 + $0x230] sm:$0xf]
        %v3398 = vld [vmem:[#allocation11 + $0x234] sm:$0xff]
        %v3399 = vld [vmem:[#allocation11 + $0x23c] sm:$0xf]
        %v3400 = vld [vmem:[#allocation11 + $0x240] sm:$0xff]
        %v3401 = vld [vmem:[#allocation11 + $0x248] sm:$0xf]
        %v3402 = vld [vmem:[#allocation11 + $0x24c] sm:$0xff]
        %v3403 = vld [vmem:[#allocation11 + $0x254] sm:$0xf]
        %v3404 = vld [vmem:[#allocation11 + $0x258] sm:$0xff]
        %v3405 = vld [vmem:[#allocation11 + $0x260] sm:$0xf]
        %v3406 = vld [vmem:[#allocation11 + $0x264] sm:$0xff]
        %v3407 = vld [vmem:[#allocation11 + $0x26c] sm:$0xf]
        %v3408 = vld [vmem:[#allocation11 + $0x270] sm:$0xff]
        %v3409 = vld [vmem:[#allocation11 + $0x278] sm:$0xf]
        %v3410 = vld [vmem:[#allocation11 + $0x27c] sm:$0xff]
        %v3411 = vld [vmem:[#allocation11 + $0x284] sm:$0xf]
        %v3412 = vld [vmem:[#allocation11 + $0x288] sm:$0xff]
        %v3413 = vld [vmem:[#allocation11 + $0x290] sm:$0xf]
        %v3414 = vld [vmem:[#allocation11 + $0x294] sm:$0xff]
        %v3415 = vld [vmem:[#allocation11 + $0x29c] sm:$0xf]
        %v3416 = vld [vmem:[#allocation11 + $0x2a0] sm:$0xff]
        %v3417 = vld [vmem:[#allocation11 + $0x2a8] sm:$0xf]
        %v3418 = vld [vmem:[#allocation11 + $0x2ac] sm:$0xff]
        %v3419 = vld [vmem:[#allocation11 + $0x2b4] sm:$0xf]
        %v3420 = vld [vmem:[#allocation11 + $0x2b8] sm:$0xff]
        %v3421 = vld [vmem:[#allocation11 + $0x2c0] sm:$0xf]
        %v3422 = vld [vmem:[#allocation11 + $0x2c4] sm:$0xff]
        %v3423 = vld [vmem:[#allocation11 + $0x2cc] sm:$0xf]
        %v3424 = vld [vmem:[#allocation11 + $0x2d0] sm:$0xff]
        %v3425 = vld [vmem:[#allocation11 + $0x2d8] sm:$0xf]
        %v3426 = vld [vmem:[#allocation11 + $0x2dc] sm:$0xff]
        %v3427 = vld [vmem:[#allocation11 + $0x2e4] sm:$0xf]
        %v3428 = vld [vmem:[#allocation11 + $0x2e8] sm:$0xff]
        %v3429 = vld [vmem:[#allocation11 + $0x2f0] sm:$0xf]
        %v3430 = vld [vmem:[#allocation11 + $0x2f4] sm:$0xff]
        %v3431 = vld [vmem:[#allocation11 + $0x2fc] sm:$0xf]
        %v3432 = vld [vmem:[#allocation13] sm:$0x7]
        %v3434 = vlaneseq
        %v3435 = vshrl.u32 %v3434, 7
        %v3436 = vsub.s32 0, %v3435
        %v3437 = vrot.slane %v3432, %v3436
        %v3438 = vlaneseq
        %v3439 = vshrl.u32 %v3438, 7
        %v3440 = vsub.s32 1, %v3439
        %v3441 = vrot.slane %v3432, %v3440
        %v3442 = vlaneseq
        %v3443 = vshrl.u32 %v3442, 7
        %v3444 = vsub.s32 2, %v3443
        %v3445 = vrot.slane %v3432, %v3444
        %v3577 = vunpack.c.l.b16 %v3304
        %v3578 = vunpack.c.h.b16 %v3304
        %v3579 = vunpack.c.l.b16 %v3305
        %v3580 = vunpack.c.l.b16 %v3306
        %v3581 = vunpack.c.h.b16 %v3306
        %v3582 = vunpack.c.l.b16 %v3307
        %v3583 = vunpack.c.l.b16 %v3308
        %v3584 = vunpack.c.h.b16 %v3308
        %v3585 = vunpack.c.l.b16 %v3309
        %v3586 = vunpack.c.l.b16 %v3310
        %v3587 = vunpack.c.h.b16 %v3310
        %v3588 = vunpack.c.l.b16 %v3311
        %v3589 = vunpack.c.l.b16 %v3312
        %v3590 = vunpack.c.h.b16 %v3312
        %v3591 = vunpack.c.l.b16 %v3313
        %v3592 = vunpack.c.l.b16 %v3314
        %v3593 = vunpack.c.h.b16 %v3314
        %v3594 = vunpack.c.l.b16 %v3315
        %v3595 = vunpack.c.l.b16 %v3316
        %v3596 = vunpack.c.h.b16 %v3316
        %v3597 = vunpack.c.l.b16 %v3317
        %v3598 = vunpack.c.l.b16 %v3318
        %v3599 = vunpack.c.h.b16 %v3318
        %v3600 = vunpack.c.l.b16 %v3319
        %v3601 = vunpack.c.l.b16 %v3320
        %v3602 = vunpack.c.h.b16 %v3320
        %v3603 = vunpack.c.l.b16 %v3321
        %v3604 = vunpack.c.l.b16 %v3322
        %v3605 = vunpack.c.h.b16 %v3322
        %v3606 = vunpack.c.l.b16 %v3323
        %v3607 = vunpack.c.l.b16 %v3324
        %v3608 = vunpack.c.h.b16 %v3324
        %v3609 = vunpack.c.l.b16 %v3325
        %v3610 = vunpack.c.l.b16 %v3326
        %v3611 = vunpack.c.h.b16 %v3326
        %v3612 = vunpack.c.l.b16 %v3327
        %v3613 = vunpack.c.l.b16 %v3328
        %v3614 = vunpack.c.h.b16 %v3328
        %v3615 = vunpack.c.l.b16 %v3329
        %v3616 = vunpack.c.l.b16 %v3330
        %v3617 = vunpack.c.h.b16 %v3330
        %v3618 = vunpack.c.l.b16 %v3331
        %v3619 = vunpack.c.l.b16 %v3332
        %v3620 = vunpack.c.h.b16 %v3332
        %v3621 = vunpack.c.l.b16 %v3333
        %v3622 = vunpack.c.l.b16 %v3334
        %v3623 = vunpack.c.h.b16 %v3334
        %v3624 = vunpack.c.l.b16 %v3335
        %v3625 = vunpack.c.l.b16 %v3336
        %v3626 = vunpack.c.h.b16 %v3336
        %v3627 = vunpack.c.l.b16 %v3337
        %v3628 = vunpack.c.l.b16 %v3338
        %v3629 = vunpack.c.h.b16 %v3338
        %v3630 = vunpack.c.l.b16 %v3339
        %v3631 = vunpack.c.l.b16 %v3340
        %v3632 = vunpack.c.h.b16 %v3340
        %v3633 = vunpack.c.l.b16 %v3341
        %v3634 = vunpack.c.l.b16 %v3342
        %v3635 = vunpack.c.h.b16 %v3342
        %v3636 = vunpack.c.l.b16 %v3343
        %v3637 = vunpack.c.l.b16 %v3344
        %v3638 = vunpack.c.h.b16 %v3344
        %v3639 = vunpack.c.l.b16 %v3345
        %v3640 = vunpack.c.l.b16 %v3346
        %v3641 = vunpack.c.h.b16 %v3346
        %v3642 = vunpack.c.l.b16 %v3347
        %v3643 = vunpack.c.l.b16 %v3348
        %v3644 = vunpack.c.h.b16 %v3348
        %v3645 = vunpack.c.l.b16 %v3349
        %v3646 = vunpack.c.l.b16 %v3350
        %v3647 = vunpack.c.h.b16 %v3350
        %v3648 = vunpack.c.l.b16 %v3351
        %v3649 = vunpack.c.l.b16 %v3352
        %v3650 = vunpack.c.h.b16 %v3352
        %v3651 = vunpack.c.l.b16 %v3353
        %v3652 = vunpack.c.l.b16 %v3354
        %v3653 = vunpack.c.h.b16 %v3354
        %v3654 = vunpack.c.l.b16 %v3355
        %v3655 = vunpack.c.l.b16 %v3356
        %v3656 = vunpack.c.h.b16 %v3356
        %v3657 = vunpack.c.l.b16 %v3357
        %v3658 = vunpack.c.l.b16 %v3358
        %v3659 = vunpack.c.h.b16 %v3358
        %v3660 = vunpack.c.l.b16 %v3359
        %v3661 = vunpack.c.l.b16 %v3360
        %v3662 = vunpack.c.h.b16 %v3360
        %v3663 = vunpack.c.l.b16 %v3361
        %v3664 = vunpack.c.l.b16 %v3362
        %v3665 = vunpack.c.h.b16 %v3362
        %v3666 = vunpack.c.l.b16 %v3363
        %v3667 = vunpack.c.l.b16 %v3364
        %v3668 = vunpack.c.h.b16 %v3364
        %v3669 = vunpack.c.l.b16 %v3365
        %v3670 = vunpack.c.l.b16 %v3366
        %v3671 = vunpack.c.h.b16 %v3366
        %v3672 = vunpack.c.l.b16 %v3367
        %v3673 = vunpack.c.l.b16 %v3368
        %v3674 = vunpack.c.h.b16 %v3368
        %v3675 = vunpack.c.l.b16 %v3369
        %v3676 = vunpack.c.l.b16 %v3370
        %v3677 = vunpack.c.h.b16 %v3370
        %v3678 = vunpack.c.l.b16 %v3371
        %v3679 = vunpack.c.l.b16 %v3372
        %v3680 = vunpack.c.h.b16 %v3372
        %v3681 = vunpack.c.l.b16 %v3373
        %v3682 = vunpack.c.l.b16 %v3374
        %v3683 = vunpack.c.h.b16 %v3374
        %v3684 = vunpack.c.l.b16 %v3375
        %v3685 = vunpack.c.l.b16 %v3376
        %v3686 = vunpack.c.h.b16 %v3376
        %v3687 = vunpack.c.l.b16 %v3377
        %v3688 = vunpack.c.l.b16 %v3378
        %v3689 = vunpack.c.h.b16 %v3378
        %v3690 = vunpack.c.l.b16 %v3379
        %v3691 = vunpack.c.l.b16 %v3380
        %v3692 = vunpack.c.h.b16 %v3380
        %v3693 = vunpack.c.l.b16 %v3381
        %v3694 = vunpack.c.l.b16 %v3382
        %v3695 = vunpack.c.h.b16 %v3382
        %v3696 = vunpack.c.l.b16 %v3383
        %v3697 = vunpack.c.l.b16 %v3384
        %v3698 = vunpack.c.h.b16 %v3384
        %v3699 = vunpack.c.l.b16 %v3385
        %v3700 = vunpack.c.l.b16 %v3386
        %v3701 = vunpack.c.h.b16 %v3386
        %v3702 = vunpack.c.l.b16 %v3387
        %v3703 = vunpack.c.l.b16 %v3388
        %v3704 = vunpack.c.h.b16 %v3388
        %v3705 = vunpack.c.l.b16 %v3389
        %v3706 = vunpack.c.l.b16 %v3390
        %v3707 = vunpack.c.h.b16 %v3390
        %v3708 = vunpack.c.l.b16 %v3391
        %v3709 = vunpack.c.l.b16 %v3392
        %v3710 = vunpack.c.h.b16 %v3392
        %v3711 = vunpack.c.l.b16 %v3393
        %v3712 = vunpack.c.l.b16 %v3394
        %v3713 = vunpack.c.h.b16 %v3394
        %v3714 = vunpack.c.l.b16 %v3395
        %v3715 = vunpack.c.l.b16 %v3396
        %v3716 = vunpack.c.h.b16 %v3396
        %v3717 = vunpack.c.l.b16 %v3397
        %v3718 = vunpack.c.l.b16 %v3398
        %v3719 = vunpack.c.h.b16 %v3398
        %v3720 = vunpack.c.l.b16 %v3399
        %v3721 = vunpack.c.l.b16 %v3400
        %v3722 = vunpack.c.h.b16 %v3400
        %v3723 = vunpack.c.l.b16 %v3401
        %v3724 = vunpack.c.l.b16 %v3402
        %v3725 = vunpack.c.h.b16 %v3402
        %v3726 = vunpack.c.l.b16 %v3403
        %v3727 = vunpack.c.l.b16 %v3404
        %v3728 = vunpack.c.h.b16 %v3404
        %v3729 = vunpack.c.l.b16 %v3405
        %v3730 = vunpack.c.l.b16 %v3406
        %v3731 = vunpack.c.h.b16 %v3406
        %v3732 = vunpack.c.l.b16 %v3407
        %v3733 = vunpack.c.l.b16 %v3408
        %v3734 = vunpack.c.h.b16 %v3408
        %v3735 = vunpack.c.l.b16 %v3409
        %v3736 = vunpack.c.l.b16 %v3410
        %v3737 = vunpack.c.h.b16 %v3410
        %v3738 = vunpack.c.l.b16 %v3411
        %v3739 = vunpack.c.l.b16 %v3412
        %v3740 = vunpack.c.h.b16 %v3412
        %v3741 = vunpack.c.l.b16 %v3413
        %v3742 = vunpack.c.l.b16 %v3414
        %v3743 = vunpack.c.h.b16 %v3414
        %v3744 = vunpack.c.l.b16 %v3415
        %v3745 = vunpack.c.l.b16 %v3416
        %v3746 = vunpack.c.h.b16 %v3416
        %v3747 = vunpack.c.l.b16 %v3417
        %v3748 = vunpack.c.l.b16 %v3418
        %v3749 = vunpack.c.h.b16 %v3418
        %v3750 = vunpack.c.l.b16 %v3419
        %v3751 = vunpack.c.l.b16 %v3420
        %v3752 = vunpack.c.h.b16 %v3420
        %v3753 = vunpack.c.l.b16 %v3421
        %v3754 = vunpack.c.l.b16 %v3422
        %v3755 = vunpack.c.h.b16 %v3422
        %v3756 = vunpack.c.l.b16 %v3423
        %v3757 = vunpack.c.l.b16 %v3424
        %v3758 = vunpack.c.h.b16 %v3424
        %v3759 = vunpack.c.l.b16 %v3425
        %v3760 = vunpack.c.l.b16 %v3426
        %v3761 = vunpack.c.h.b16 %v3426
        %v3762 = vunpack.c.l.b16 %v3427
        %v3763 = vunpack.c.l.b16 %v3428
        %v3764 = vunpack.c.h.b16 %v3428
        %v3765 = vunpack.c.l.b16 %v3429
        %v3766 = vunpack.c.l.b16 %v3430
        %v3767 = vunpack.c.h.b16 %v3430
        %v3768 = vunpack.c.l.b16 %v3431
        %v3769 = vpack.c.b16 %v3580, %v3577
        %v3770 = vpack.c.b16 %v3581, %v3578
        %v3771 = vpack.c.b16 %v3582, %v3579
        %v3772 = vpack.c.b16 %v3586, %v3583
        %v3773 = vpack.c.b16 %v3587, %v3584
        %v3774 = vpack.c.b16 %v3588, %v3585
        %v3775 = vpack.c.b16 %v3592, %v3589
        %v3776 = vpack.c.b16 %v3593, %v3590
        %v3777 = vpack.c.b16 %v3594, %v3591
        %v3778 = vpack.c.b16 %v3598, %v3595
        %v3779 = vpack.c.b16 %v3599, %v3596
        %v3780 = vpack.c.b16 %v3600, %v3597
        %v3781 = vpack.c.b16 %v3604, %v3601
        %v3782 = vpack.c.b16 %v3605, %v3602
        %v3783 = vpack.c.b16 %v3606, %v3603
        %v3784 = vpack.c.b16 %v3610, %v3607
        %v3785 = vpack.c.b16 %v3611, %v3608
        %v3786 = vpack.c.b16 %v3612, %v3609
        %v3787 = vpack.c.b16 %v3616, %v3613
        %v3788 = vpack.c.b16 %v3617, %v3614
        %v3789 = vpack.c.b16 %v3618, %v3615
        %v3790 = vpack.c.b16 %v3622, %v3619
        %v3791 = vpack.c.b16 %v3623, %v3620
        %v3792 = vpack.c.b16 %v3624, %v3621
        %v3793 = vpack.c.b16 %v3628, %v3625
        %v3794 = vpack.c.b16 %v3629, %v3626
        %v3795 = vpack.c.b16 %v3630, %v3627
        %v3796 = vpack.c.b16 %v3634, %v3631
        %v3797 = vpack.c.b16 %v3635, %v3632
        %v3798 = vpack.c.b16 %v3636, %v3633
        %v3799 = vpack.c.b16 %v3640, %v3637
        %v3800 = vpack.c.b16 %v3641, %v3638
        %v3801 = vpack.c.b16 %v3642, %v3639
        %v3802 = vpack.c.b16 %v3646, %v3643
        %v3803 = vpack.c.b16 %v3647, %v3644
        %v3804 = vpack.c.b16 %v3648, %v3645
        %v3805 = vpack.c.b16 %v3652, %v3649
        %v3806 = vpack.c.b16 %v3653, %v3650
        %v3807 = vpack.c.b16 %v3654, %v3651
        %v3808 = vpack.c.b16 %v3658, %v3655
        %v3809 = vpack.c.b16 %v3659, %v3656
        %v3810 = vpack.c.b16 %v3660, %v3657
        %v3811 = vpack.c.b16 %v3664, %v3661
        %v3812 = vpack.c.b16 %v3665, %v3662
        %v3813 = vpack.c.b16 %v3666, %v3663
        %v3814 = vpack.c.b16 %v3670, %v3667
        %v3815 = vpack.c.b16 %v3671, %v3668
        %v3816 = vpack.c.b16 %v3672, %v3669
        %v3817 = vpack.c.b16 %v3676, %v3673
        %v3818 = vpack.c.b16 %v3677, %v3674
        %v3819 = vpack.c.b16 %v3678, %v3675
        %v3820 = vpack.c.b16 %v3682, %v3679
        %v3821 = vpack.c.b16 %v3683, %v3680
        %v3822 = vpack.c.b16 %v3684, %v3681
        %v3823 = vpack.c.b16 %v3688, %v3685
        %v3824 = vpack.c.b16 %v3689, %v3686
        %v3825 = vpack.c.b16 %v3690, %v3687
        %v3826 = vpack.c.b16 %v3694, %v3691
        %v3827 = vpack.c.b16 %v3695, %v3692
        %v3828 = vpack.c.b16 %v3696, %v3693
        %v3829 = vpack.c.b16 %v3700, %v3697
        %v3830 = vpack.c.b16 %v3701, %v3698
        %v3831 = vpack.c.b16 %v3702, %v3699
        %v3832 = vpack.c.b16 %v3706, %v3703
        %v3833 = vpack.c.b16 %v3707, %v3704
        %v3834 = vpack.c.b16 %v3708, %v3705
        %v3835 = vpack.c.b16 %v3712, %v3709
        %v3836 = vpack.c.b16 %v3713, %v3710
        %v3837 = vpack.c.b16 %v3714, %v3711
        %v3838 = vpack.c.b16 %v3718, %v3715
        %v3839 = vpack.c.b16 %v3719, %v3716
        %v3840 = vpack.c.b16 %v3720, %v3717
        %v3841 = vpack.c.b16 %v3724, %v3721
        %v3842 = vpack.c.b16 %v3725, %v3722
        %v3843 = vpack.c.b16 %v3726, %v3723
        %v3844 = vpack.c.b16 %v3730, %v3727
        %v3845 = vpack.c.b16 %v3731, %v3728
        %v3846 = vpack.c.b16 %v3732, %v3729
        %v3847 = vpack.c.b16 %v3736, %v3733
        %v3848 = vpack.c.b16 %v3737, %v3734
        %v3849 = vpack.c.b16 %v3738, %v3735
        %v3850 = vpack.c.b16 %v3742, %v3739
        %v3851 = vpack.c.b16 %v3743, %v3740
        %v3852 = vpack.c.b16 %v3744, %v3741
        %v3853 = vpack.c.b16 %v3748, %v3745
        %v3854 = vpack.c.b16 %v3749, %v3746
        %v3855 = vpack.c.b16 %v3750, %v3747
        %v3856 = vpack.c.b16 %v3754, %v3751
        %v3857 = vpack.c.b16 %v3755, %v3752
        %v3858 = vpack.c.b16 %v3756, %v3753
        %v3859 = vpack.c.b16 %v3760, %v3757
        %v3860 = vpack.c.b16 %v3761, %v3758
        %v3861 = vpack.c.b16 %v3762, %v3759
        %v3862 = vpack.c.b16 %v3766, %v3763
        %v3863 = vpack.c.b16 %v3767, %v3764
        %v3864 = vpack.c.b16 %v3768, %v3765
        %3961 = vmatprep.subr.bf16.mxu0 %v3770
        %3962 = vmatpush1.bf16.msra.mxu0 %v3769
        %3963 = vmatprep.subr.bf16.mxu0 %v3773
        %3964 = vmatpush1.bf16.msra.mxu0 %v3772
        %3965 = vmatprep.subr.bf16.mxu0 %v3776
        %3966 = vmatpush1.bf16.msra.mxu0 %v3775
        %3967 = vmatprep.subr.bf16.mxu0 %v3779
        %3968 = vmatpush1.bf16.msra.mxu0 %v3778
        %3969 = vmatprep.subr.bf16.mxu0 %v3782
        %3970 = vmatpush1.bf16.msra.mxu0 %v3781
        %3971 = vmatprep.subr.bf16.mxu0 %v3785
        %3972 = vmatpush1.bf16.msra.mxu0 %v3784
        %3973 = vmatprep.subr.bf16.mxu0 %v3788
        %3974 = vmatpush1.bf16.msra.mxu0 %v3787
        %3975 = vmatprep.subr.bf16.mxu0 %v3791
        %3976 = vmatpush1.bf16.msra.mxu0 %v3790
        %3977 = vmatprep.subr.bf16.mxu0 %v3794
        %3978 = vmatpush1.bf16.msra.mxu0 %v3793
        %3979 = vmatprep.subr.bf16.mxu0 %v3797
        %3980 = vmatpush1.bf16.msra.mxu0 %v3796
        %3981 = vmatprep.subr.bf16.mxu0 %v3800
        %3982 = vmatpush1.bf16.msra.mxu0 %v3799
        %3983 = vmatprep.subr.bf16.mxu0 %v3803
        %3984 = vmatpush1.bf16.msra.mxu0 %v3802
        %3985 = vmatprep.subr.bf16.mxu0 %v3806
        %3986 = vmatpush1.bf16.msra.mxu0 %v3805
        %3987 = vmatprep.subr.bf16.mxu0 %v3809
        %3988 = vmatpush1.bf16.msra.mxu0 %v3808
        %3989 = vmatprep.subr.bf16.mxu0 %v3812
        %3990 = vmatpush1.bf16.msra.mxu0 %v3811
        %3991 = vmatprep.subr.bf16.mxu0 %v3815
        %3992 = vmatpush1.bf16.msra.mxu0 %v3814
        %3993 = vmatprep.mubr.bf16.mxu0 %v3298
        %3994 = vmatmul.mubr.bf16.gmra.mrb[0].mxu0 %v3297
        %v3995 = vpop.f32.mrb[0].mxu0
        %v3996 = vadd.f32 %v3437, %v3995
        %v3997 = vpop.f32.mrb[0].mxu0
        %v3998 = vadd.f32 %v3441, %v3997
        %v3999 = vpop.f32.mrb[0].mxu0
        %v4000 = vadd.f32 %v3437, %v3999
        %v4001 = vpop.f32.mrb[0].mxu0
        %v4002 = vadd.f32 %v3441, %v4001
        %4003 = vdwg.mxu0
        %4004 = vmatprep.subr.bf16.mxu0 %v3818
        %4005 = vmatpush1.bf16.msra.mxu0 %v3817
        %4006 = vmatprep.subr.bf16.mxu0 %v3821
        %4007 = vmatpush1.bf16.msra.mxu0 %v3820
        %4008 = vmatprep.subr.bf16.mxu0 %v3824
        %4009 = vmatpush1.bf16.msra.mxu0 %v3823
        %4010 = vmatprep.subr.bf16.mxu0 %v3827
        %4011 = vmatpush1.bf16.msra.mxu0 %v3826
        %4012 = vmatprep.subr.bf16.mxu0 %v3830
        %4013 = vmatpush1.bf16.msra.mxu0 %v3829
        %4014 = vmatprep.subr.bf16.mxu0 %v3833
        %4015 = vmatpush1.bf16.msra.mxu0 %v3832
        %4016 = vmatprep.subr.bf16.mxu0 %v3836
        %4017 = vmatpush1.bf16.msra.mxu0 %v3835
        %4018 = vmatprep.subr.bf16.mxu0 %v3839
        %4019 = vmatpush1.bf16.msra.mxu0 %v3838
        %4020 = vmatprep.subr.bf16.mxu0 %v3842
        %4021 = vmatpush1.bf16.msra.mxu0 %v3841
        %4022 = vmatprep.subr.bf16.mxu0 %v3845
        %4023 = vmatpush1.bf16.msra.mxu0 %v3844
        %4024 = vmatprep.subr.bf16.mxu0 %v3848
        %4025 = vmatpush1.bf16.msra.mxu0 %v3847
        %4026 = vmatprep.subr.bf16.mxu0 %v3851
        %4027 = vmatpush1.bf16.msra.mxu0 %v3850
        %4028 = vmatprep.subr.bf16.mxu0 %v3854
        %4029 = vmatpush1.bf16.msra.mxu0 %v3853
        %4030 = vmatprep.subr.bf16.mxu0 %v3857
        %4031 = vmatpush1.bf16.msra.mxu0 %v3856
        %4032 = vmatprep.subr.bf16.mxu0 %v3860
        %4033 = vmatpush1.bf16.msra.mxu0 %v3859
        %4034 = vmatprep.subr.bf16.mxu0 %v3863
        %4035 = vmatpush1.bf16.msra.mxu0 %v3862
        %4036 = vmatprep.mubr.bf16.mxu0 %v3300
        %4037 = vmatmul.mubr.bf16.gmra.mrb[0].mxu0 %v3299
        %v4038 = vpop.f32.mrb[0].mxu0
        %v4039 = vadd.f32 %v3996, %v4038
        %v4040 = vpop.f32.mrb[0].mxu0
        %v4041 = vadd.f32 %v3998, %v4040
        %v4042 = vpop.f32.mrb[0].mxu0
        %v4043 = vadd.f32 %v4000, %v4042
        %v4044 = vpop.f32.mrb[0].mxu0
        %v4045 = vadd.f32 %v4002, %v4044
        %4046 = vdwg.mxu0
        %4047 = vmatprep.subr.bf16.mxu0 0
        %4048 = vmatpush1.bf16.msra.mxu0 %v3771
        %4049 = vmatprep.subr.bf16.mxu0 0
        %4050 = vmatpush1.bf16.msra.mxu0 %v3774
        %4051 = vmatprep.subr.bf16.mxu0 0
        %4052 = vmatpush1.bf16.msra.mxu0 %v3777
        %4053 = vmatprep.subr.bf16.mxu0 0
        %4054 = vmatpush1.bf16.msra.mxu0 %v3780
        %4055 = vmatprep.subr.bf16.mxu0 0
        %4056 = vmatpush1.bf16.msra.mxu0 %v3783
        %4057 = vmatprep.subr.bf16.mxu0 0
        %4058 = vmatpush1.bf16.msra.mxu0 %v3786
        %4059 = vmatprep.subr.bf16.mxu0 0
        %4060 = vmatpush1.bf16.msra.mxu0 %v3789
        %4061 = vmatprep.subr.bf16.mxu0 0
        %4062 = vmatpush1.bf16.msra.mxu0 %v3792
        %4063 = vmatprep.subr.bf16.mxu0 0
        %4064 = vmatpush1.bf16.msra.mxu0 %v3795
        %4065 = vmatprep.subr.bf16.mxu0 0
        %4066 = vmatpush1.bf16.msra.mxu0 %v3798
        %4067 = vmatprep.subr.bf16.mxu0 0
        %4068 = vmatpush1.bf16.msra.mxu0 %v3801
        %4069 = vmatprep.subr.bf16.mxu0 0
        %4070 = vmatpush1.bf16.msra.mxu0 %v3804
        %4071 = vmatprep.subr.bf16.mxu0 0
        %4072 = vmatpush1.bf16.msra.mxu0 %v3807
        %4073 = vmatprep.subr.bf16.mxu0 0
        %4074 = vmatpush1.bf16.msra.mxu0 %v3810
        %4075 = vmatprep.subr.bf16.mxu0 0
        %4076 = vmatpush1.bf16.msra.mxu0 %v3813
        %4077 = vmatprep.subr.bf16.mxu0 0
        %4078 = vmatpush1.bf16.msra.mxu0 %v3816
        %4079 = vmatprep.mubr.bf16.mxu0 %v3298
        %4080 = vmatmul.mubr.bf16.gmra.mrb[0].mxu0 %v3297
        %v4081 = vpop.f32.mrb[0].mxu0
        %v4082 = vadd.f32 %v3445, %v4081
        %v4083 = vpop.f32.mrb[0].mxu0
        %v4084 = vpop.f32.mrb[0].mxu0
        %v4085 = vadd.f32 %v3445, %v4084
        %v4086 = vpop.f32.mrb[0].mxu0
        %4087 = vdwg.mxu0
        %4088 = vmatprep.subr.bf16.mxu0 0
        %4089 = vmatpush1.bf16.msra.mxu0 %v3819
        %4090 = vmatprep.subr.bf16.mxu0 0
        %4091 = vmatpush1.bf16.msra.mxu0 %v3822
        %4092 = vmatprep.subr.bf16.mxu0 0
        %4093 = vmatpush1.bf16.msra.mxu0 %v3825
        %4094 = vmatprep.subr.bf16.mxu0 0
        %4095 = vmatpush1.bf16.msra.mxu0 %v3828
        %4096 = vmatprep.subr.bf16.mxu0 0
        %4097 = vmatpush1.bf16.msra.mxu0 %v3831
        %4098 = vmatprep.subr.bf16.mxu0 0
        %4099 = vmatpush1.bf16.msra.mxu0 %v3834
        %4100 = vmatprep.subr.bf16.mxu0 0
        %4101 = vmatpush1.bf16.msra.mxu0 %v3837
        %4102 = vmatprep.subr.bf16.mxu0 0
        %4103 = vmatpush1.bf16.msra.mxu0 %v3840
        %4104 = vmatprep.subr.bf16.mxu0 0
        %4105 = vmatpush1.bf16.msra.mxu0 %v3843
        %4106 = vmatprep.subr.bf16.mxu0 0
        %4107 = vmatpush1.bf16.msra.mxu0 %v3846
        %4108 = vmatprep.subr.bf16.mxu0 0
        %4109 = vmatpush1.bf16.msra.mxu0 %v3849
        %4110 = vmatprep.subr.bf16.mxu0 0
        %4111 = vmatpush1.bf16.msra.mxu0 %v3852
        %4112 = vmatprep.subr.bf16.mxu0 0
        %4113 = vmatpush1.bf16.msra.mxu0 %v3855
        %4114 = vmatprep.subr.bf16.mxu0 0
        %4115 = vmatpush1.bf16.msra.mxu0 %v3858
        %4116 = vmatprep.subr.bf16.mxu0 0
        %4117 = vmatpush1.bf16.msra.mxu0 %v3861
        %4118 = vmatprep.subr.bf16.mxu0 0
        %4119 = vmatpush1.bf16.msra.mxu0 %v3864
        %4120 = vmatprep.mubr.bf16.mxu0 %v3300
        %4121 = vmatmul.mubr.bf16.gmra.mrb[0].mxu0 %v3299
        %v4122 = vpop.f32.mrb[0].mxu0
        %v4123 = vadd.f32 %v4082, %v4122
        %v4124 = vpop.f32.mrb[0].mxu0
        %v4125 = vpop.f32.mrb[0].mxu0
        %v4126 = vadd.f32 %v4085, %v4125
        %v4127 = vpop.f32.mrb[0].mxu0
        %4128 = vdwg.mxu0
        %v4129 = vmul.f32 %v4039, 0.01
        %v4130 = vmul.f32 %v4041, 0.01
        %v4131 = vmul.f32 %v4123, 0.01
        %v4132 = vmul.f32 %v4043, 0.01
        %v4133 = vmul.f32 %v4045, 0.01
        %v4134 = vmul.f32 %v4126, 0.01
        %v4135 = vmax.f32 %v4039, %v4129
        %v4136 = vmax.f32 %v4041, %v4130
        %v4137 = vmax.f32 %v4123, %v4131
        %v4138 = vmax.f32 %v4043, %v4132
        %v4139 = vmax.f32 %v4045, %v4133
        %v4140 = vmax.f32 %v4126, %v4134
        %v4141 = vpack.c.bf16 %v4138, %v4135
        %v4142 = vpack.c.bf16 %v4139, %v4136
        %v4143 = vpack.c.bf16 %v4140, %v4137
        %s4144 = scalar_lea.vmem [#allocation11], 768
        %v4145 = vld [vmem:[%s4144] sm:$0xff]
        %v4146 = vld [vmem:[%s4144 + $0x8] sm:$0xf]
        %v4147 = vld [vmem:[%s4144 + $0xc] sm:$0xff]
        %v4148 = vld [vmem:[%s4144 + $0x14] sm:$0xf]
        %v4149 = vld [vmem:[%s4144 + $0x18] sm:$0xff]
        %v4150 = vld [vmem:[%s4144 + $0x20] sm:$0xf]
        %v4151 = vld [vmem:[%s4144 + $0x24] sm:$0xff]
        %v4152 = vld [vmem:[%s4144 + $0x2c] sm:$0xf]
        %v4153 = vld [vmem:[%s4144 + $0x30] sm:$0xff]
        %v4154 = vld [vmem:[%s4144 + $0x38] sm:$0xf]
        %v4155 = vld [vmem:[%s4144 + $0x3c] sm:$0xff]
        %v4156 = vld [vmem:[%s4144 + $0x44] sm:$0xf]
        %v4157 = vld [vmem:[%s4144 + $0x48] sm:$0xff]
        %v4158 = vld [vmem:[%s4144 + $0x50] sm:$0xf]
        %v4159 = vld [vmem:[%s4144 + $0x54] sm:$0xff]
        %v4160 = vld [vmem:[%s4144 + $0x5c] sm:$0xf]
        %v4161 = vld [vmem:[%s4144 + $0x60] sm:$0xff]
        %v4162 = vld [vmem:[%s4144 + $0x68] sm:$0xf]
        %v4163 = vld [vmem:[%s4144 + $0x6c] sm:$0xff]
        %v4164 = vld [vmem:[%s4144 + $0x74] sm:$0xf]
        %v4165 = vld [vmem:[%s4144 + $0x78] sm:$0xff]
        %v4166 = vld [vmem:[%s4144 + $0x80] sm:$0xf]
        %v4167 = vld [vmem:[%s4144 + $0x84] sm:$0xff]
        %v4168 = vld [vmem:[%s4144 + $0x8c] sm:$0xf]
        %v4169 = vld [vmem:[%s4144 + $0x90] sm:$0xff]
        %v4170 = vld [vmem:[%s4144 + $0x98] sm:$0xf]
        %v4171 = vld [vmem:[%s4144 + $0x9c] sm:$0xff]
        %v4172 = vld [vmem:[%s4144 + $0xa4] sm:$0xf]
        %v4173 = vld [vmem:[%s4144 + $0xa8] sm:$0xff]
        %v4174 = vld [vmem:[%s4144 + $0xb0] sm:$0xf]
        %v4175 = vld [vmem:[%s4144 + $0xb4] sm:$0xff]
        %v4176 = vld [vmem:[%s4144 + $0xbc] sm:$0xf]
        %v4177 = vld [vmem:[%s4144 + $0xc0] sm:$0xff]
        %v4178 = vld [vmem:[%s4144 + $0xc8] sm:$0xf]
        %v4179 = vld [vmem:[%s4144 + $0xcc] sm:$0xff]
        %v4180 = vld [vmem:[%s4144 + $0xd4] sm:$0xf]
        %v4181 = vld [vmem:[%s4144 + $0xd8] sm:$0xff]
        %v4182 = vld [vmem:[%s4144 + $0xe0] sm:$0xf]
        %v4183 = vld [vmem:[%s4144 + $0xe4] sm:$0xff]
        %v4184 = vld [vmem:[%s4144 + $0xec] sm:$0xf]
        %v4185 = vld [vmem:[%s4144 + $0xf0] sm:$0xff]
        %v4186 = vld [vmem:[%s4144 + $0xf8] sm:$0xf]
        %v4187 = vld [vmem:[%s4144 + $0xfc] sm:$0xff]
        %v4188 = vld [vmem:[%s4144 + $0x104] sm:$0xf]
        %v4189 = vld [vmem:[%s4144 + $0x108] sm:$0xff]
        %v4190 = vld [vmem:[%s4144 + $0x110] sm:$0xf]
        %v4191 = vld [vmem:[%s4144 + $0x114] sm:$0xff]
        %v4192 = vld [vmem:[%s4144 + $0x11c] sm:$0xf]
        %v4193 = vld [vmem:[%s4144 + $0x120] sm:$0xff]
        %v4194 = vld [vmem:[%s4144 + $0x128] sm:$0xf]
        %v4195 = vld [vmem:[%s4144 + $0x12c] sm:$0xff]
        %v4196 = vld [vmem:[%s4144 + $0x134] sm:$0xf]
        %v4197 = vld [vmem:[%s4144 + $0x138] sm:$0xff]
        %v4198 = vld [vmem:[%s4144 + $0x140] sm:$0xf]
        %v4199 = vld [vmem:[%s4144 + $0x144] sm:$0xff]
        %v4200 = vld [vmem:[%s4144 + $0x14c] sm:$0xf]
        %v4201 = vld [vmem:[%s4144 + $0x150] sm:$0xff]
        %v4202 = vld [vmem:[%s4144 + $0x158] sm:$0xf]
        %v4203 = vld [vmem:[%s4144 + $0x15c] sm:$0xff]
        %v4204 = vld [vmem:[%s4144 + $0x164] sm:$0xf]
        %v4205 = vld [vmem:[%s4144 + $0x168] sm:$0xff]
        %v4206 = vld [vmem:[%s4144 + $0x170] sm:$0xf]
        %v4207 = vld [vmem:[%s4144 + $0x174] sm:$0xff]
        %v4208 = vld [vmem:[%s4144 + $0x17c] sm:$0xf]
        %v4209 = vld [vmem:[%s4144 + $0x180] sm:$0xff]
        %v4210 = vld [vmem:[%s4144 + $0x188] sm:$0xf]
        %v4211 = vld [vmem:[%s4144 + $0x18c] sm:$0xff]
        %v4212 = vld [vmem:[%s4144 + $0x194] sm:$0xf]
        %v4213 = vld [vmem:[%s4144 + $0x198] sm:$0xff]
        %v4214 = vld [vmem:[%s4144 + $0x1a0] sm:$0xf]
        %v4215 = vld [vmem:[%s4144 + $0x1a4] sm:$0xff]
        %v4216 = vld [vmem:[%s4144 + $0x1ac] sm:$0xf]
        %v4217 = vld [vmem:[%s4144 + $0x1b0] sm:$0xff]
        %v4218 = vld [vmem:[%s4144 + $0x1b8] sm:$0xf]
        %v4219 = vld [vmem:[%s4144 + $0x1bc] sm:$0xff]
        %v4220 = vld [vmem:[%s4144 + $0x1c4] sm:$0xf]
        %v4221 = vld [vmem:[%s4144 + $0x1c8] sm:$0xff]
        %v4222 = vld [vmem:[%s4144 + $0x1d0] sm:$0xf]
        %v4223 = vld [vmem:[%s4144 + $0x1d4] sm:$0xff]
        %v4224 = vld [vmem:[%s4144 + $0x1dc] sm:$0xf]
        %v4225 = vld [vmem:[%s4144 + $0x1e0] sm:$0xff]
        %v4226 = vld [vmem:[%s4144 + $0x1e8] sm:$0xf]
        %v4227 = vld [vmem:[%s4144 + $0x1ec] sm:$0xff]
        %v4228 = vld [vmem:[%s4144 + $0x1f4] sm:$0xf]
        %v4229 = vld [vmem:[%s4144 + $0x1f8] sm:$0xff]
        %v4230 = vld [vmem:[%s4144 + $0x200] sm:$0xf]
        %v4231 = vld [vmem:[%s4144 + $0x204] sm:$0xff]
        %v4232 = vld [vmem:[%s4144 + $0x20c] sm:$0xf]
        %v4233 = vld [vmem:[%s4144 + $0x210] sm:$0xff]
        %v4234 = vld [vmem:[%s4144 + $0x218] sm:$0xf]
        %v4235 = vld [vmem:[%s4144 + $0x21c] sm:$0xff]
        %v4236 = vld [vmem:[%s4144 + $0x224] sm:$0xf]
        %v4237 = vld [vmem:[%s4144 + $0x228] sm:$0xff]
        %v4238 = vld [vmem:[%s4144 + $0x230] sm:$0xf]
        %v4239 = vld [vmem:[%s4144 + $0x234] sm:$0xff]
        %v4240 = vld [vmem:[%s4144 + $0x23c] sm:$0xf]
        %v4241 = vld [vmem:[%s4144 + $0x240] sm:$0xff]
        %v4242 = vld [vmem:[%s4144 + $0x248] sm:$0xf]
        %v4243 = vld [vmem:[%s4144 + $0x24c] sm:$0xff]
        %v4244 = vld [vmem:[%s4144 + $0x254] sm:$0xf]
        %v4245 = vld [vmem:[%s4144 + $0x258] sm:$0xff]
        %v4246 = vld [vmem:[%s4144 + $0x260] sm:$0xf]
        %v4247 = vld [vmem:[%s4144 + $0x264] sm:$0xff]
        %v4248 = vld [vmem:[%s4144 + $0x26c] sm:$0xf]
        %v4249 = vld [vmem:[%s4144 + $0x270] sm:$0xff]
        %v4250 = vld [vmem:[%s4144 + $0x278] sm:$0xf]
        %v4251 = vld [vmem:[%s4144 + $0x27c] sm:$0xff]
        %v4252 = vld [vmem:[%s4144 + $0x284] sm:$0xf]
        %v4253 = vld [vmem:[%s4144 + $0x288] sm:$0xff]
        %v4254 = vld [vmem:[%s4144 + $0x290] sm:$0xf]
        %v4255 = vld [vmem:[%s4144 + $0x294] sm:$0xff]
        %v4256 = vld [vmem:[%s4144 + $0x29c] sm:$0xf]
        %v4257 = vld [vmem:[%s4144 + $0x2a0] sm:$0xff]
        %v4258 = vld [vmem:[%s4144 + $0x2a8] sm:$0xf]
        %v4259 = vld [vmem:[%s4144 + $0x2ac] sm:$0xff]
        %v4260 = vld [vmem:[%s4144 + $0x2b4] sm:$0xf]
        %v4261 = vld [vmem:[%s4144 + $0x2b8] sm:$0xff]
        %v4262 = vld [vmem:[%s4144 + $0x2c0] sm:$0xf]
        %v4263 = vld [vmem:[%s4144 + $0x2c4] sm:$0xff]
        %v4264 = vld [vmem:[%s4144 + $0x2cc] sm:$0xf]
        %v4265 = vld [vmem:[%s4144 + $0x2d0] sm:$0xff]
        %v4266 = vld [vmem:[%s4144 + $0x2d8] sm:$0xf]
        %v4267 = vld [vmem:[%s4144 + $0x2dc] sm:$0xff]
        %v4268 = vld [vmem:[%s4144 + $0x2e4] sm:$0xf]
        %v4269 = vld [vmem:[%s4144 + $0x2e8] sm:$0xff]
        %v4270 = vld [vmem:[%s4144 + $0x2f0] sm:$0xf]
        %v4271 = vld [vmem:[%s4144 + $0x2f4] sm:$0xff]
        %v4272 = vld [vmem:[%s4144 + $0x2fc] sm:$0xf]
        %v4401 = vunpack.c.l.b16 %v4145
        %v4402 = vunpack.c.h.b16 %v4145
        %v4403 = vunpack.c.l.b16 %v4146
        %v4404 = vunpack.c.l.b16 %v4147
        %v4405 = vunpack.c.h.b16 %v4147
        %v4406 = vunpack.c.l.b16 %v4148
        %v4407 = vunpack.c.l.b16 %v4149
        %v4408 = vunpack.c.h.b16 %v4149
        %v4409 = vunpack.c.l.b16 %v4150
        %v4410 = vunpack.c.l.b16 %v4151
        %v4411 = vunpack.c.h.b16 %v4151
        %v4412 = vunpack.c.l.b16 %v4152
        %v4413 = vunpack.c.l.b16 %v4153
        %v4414 = vunpack.c.h.b16 %v4153
        %v4415 = vunpack.c.l.b16 %v4154
        %v4416 = vunpack.c.l.b16 %v4155
        %v4417 = vunpack.c.h.b16 %v4155
        %v4418 = vunpack.c.l.b16 %v4156
        %v4419 = vunpack.c.l.b16 %v4157
        %v4420 = vunpack.c.h.b16 %v4157
        %v4421 = vunpack.c.l.b16 %v4158
        %v4422 = vunpack.c.l.b16 %v4159
        %v4423 = vunpack.c.h.b16 %v4159
        %v4424 = vunpack.c.l.b16 %v4160
        %v4425 = vunpack.c.l.b16 %v4161
        %v4426 = vunpack.c.h.b16 %v4161
        %v4427 = vunpack.c.l.b16 %v4162
        %v4428 = vunpack.c.l.b16 %v4163
        %v4429 = vunpack.c.h.b16 %v4163
        %v4430 = vunpack.c.l.b16 %v4164
        %v4431 = vunpack.c.l.b16 %v4165
        %v4432 = vunpack.c.h.b16 %v4165
        %v4433 = vunpack.c.l.b16 %v4166
        %v4434 = vunpack.c.l.b16 %v4167
        %v4435 = vunpack.c.h.b16 %v4167
        %v4436 = vunpack.c.l.b16 %v4168
        %v4437 = vunpack.c.l.b16 %v4169
        %v4438 = vunpack.c.h.b16 %v4169
        %v4439 = vunpack.c.l.b16 %v4170
        %v4440 = vunpack.c.l.b16 %v4171
        %v4441 = vunpack.c.h.b16 %v4171
        %v4442 = vunpack.c.l.b16 %v4172
        %v4443 = vunpack.c.l.b16 %v4173
        %v4444 = vunpack.c.h.b16 %v4173
        %v4445 = vunpack.c.l.b16 %v4174
        %v4446 = vunpack.c.l.b16 %v4175
        %v4447 = vunpack.c.h.b16 %v4175
        %v4448 = vunpack.c.l.b16 %v4176
        %v4449 = vunpack.c.l.b16 %v4177
        %v4450 = vunpack.c.h.b16 %v4177
        %v4451 = vunpack.c.l.b16 %v4178
        %v4452 = vunpack.c.l.b16 %v4179
        %v4453 = vunpack.c.h.b16 %v4179
        %v4454 = vunpack.c.l.b16 %v4180
        %v4455 = vunpack.c.l.b16 %v4181
        %v4456 = vunpack.c.h.b16 %v4181
        %v4457 = vunpack.c.l.b16 %v4182
        %v4458 = vunpack.c.l.b16 %v4183
        %v4459 = vunpack.c.h.b16 %v4183
        %v4460 = vunpack.c.l.b16 %v4184
        %v4461 = vunpack.c.l.b16 %v4185
        %v4462 = vunpack.c.h.b16 %v4185
        %v4463 = vunpack.c.l.b16 %v4186
        %v4464 = vunpack.c.l.b16 %v4187
        %v4465 = vunpack.c.h.b16 %v4187
        %v4466 = vunpack.c.l.b16 %v4188
        %v4467 = vunpack.c.l.b16 %v4189
        %v4468 = vunpack.c.h.b16 %v4189
        %v4469 = vunpack.c.l.b16 %v4190
        %v4470 = vunpack.c.l.b16 %v4191
        %v4471 = vunpack.c.h.b16 %v4191
        %v4472 = vunpack.c.l.b16 %v4192
        %v4473 = vunpack.c.l.b16 %v4193
        %v4474 = vunpack.c.h.b16 %v4193
        %v4475 = vunpack.c.l.b16 %v4194
        %v4476 = vunpack.c.l.b16 %v4195
        %v4477 = vunpack.c.h.b16 %v4195
        %v4478 = vunpack.c.l.b16 %v4196
        %v4479 = vunpack.c.l.b16 %v4197
        %v4480 = vunpack.c.h.b16 %v4197
        %v4481 = vunpack.c.l.b16 %v4198
        %v4482 = vunpack.c.l.b16 %v4199
        %v4483 = vunpack.c.h.b16 %v4199
        %v4484 = vunpack.c.l.b16 %v4200
        %v4485 = vunpack.c.l.b16 %v4201
        %v4486 = vunpack.c.h.b16 %v4201
        %v4487 = vunpack.c.l.b16 %v4202
        %v4488 = vunpack.c.l.b16 %v4203
        %v4489 = vunpack.c.h.b16 %v4203
        %v4490 = vunpack.c.l.b16 %v4204
        %v4491 = vunpack.c.l.b16 %v4205
        %v4492 = vunpack.c.h.b16 %v4205
        %v4493 = vunpack.c.l.b16 %v4206
        %v4494 = vunpack.c.l.b16 %v4207
        %v4495 = vunpack.c.h.b16 %v4207
        %v4496 = vunpack.c.l.b16 %v4208
        %v4497 = vunpack.c.l.b16 %v4209
        %v4498 = vunpack.c.h.b16 %v4209
        %v4499 = vunpack.c.l.b16 %v4210
        %v4500 = vunpack.c.l.b16 %v4211
        %v4501 = vunpack.c.h.b16 %v4211
        %v4502 = vunpack.c.l.b16 %v4212
        %v4503 = vunpack.c.l.b16 %v4213
        %v4504 = vunpack.c.h.b16 %v4213
        %v4505 = vunpack.c.l.b16 %v4214
        %v4506 = vunpack.c.l.b16 %v4215
        %v4507 = vunpack.c.h.b16 %v4215
        %v4508 = vunpack.c.l.b16 %v4216
        %v4509 = vunpack.c.l.b16 %v4217
        %v4510 = vunpack.c.h.b16 %v4217
        %v4511 = vunpack.c.l.b16 %v4218
        %v4512 = vunpack.c.l.b16 %v4219
        %v4513 = vunpack.c.h.b16 %v4219
        %v4514 = vunpack.c.l.b16 %v4220
        %v4515 = vunpack.c.l.b16 %v4221
        %v4516 = vunpack.c.h.b16 %v4221
        %v4517 = vunpack.c.l.b16 %v4222
        %v4518 = vunpack.c.l.b16 %v4223
        %v4519 = vunpack.c.h.b16 %v4223
        %v4520 = vunpack.c.l.b16 %v4224
        %v4521 = vunpack.c.l.b16 %v4225
        %v4522 = vunpack.c.h.b16 %v4225
        %v4523 = vunpack.c.l.b16 %v4226
        %v4524 = vunpack.c.l.b16 %v4227
        %v4525 = vunpack.c.h.b16 %v4227
        %v4526 = vunpack.c.l.b16 %v4228
        %v4527 = vunpack.c.l.b16 %v4229
        %v4528 = vunpack.c.h.b16 %v4229
        %v4529 = vunpack.c.l.b16 %v4230
        %v4530 = vunpack.c.l.b16 %v4231
        %v4531 = vunpack.c.h.b16 %v4231
        %v4532 = vunpack.c.l.b16 %v4232
        %v4533 = vunpack.c.l.b16 %v4233
        %v4534 = vunpack.c.h.b16 %v4233
        %v4535 = vunpack.c.l.b16 %v4234
        %v4536 = vunpack.c.l.b16 %v4235
        %v4537 = vunpack.c.h.b16 %v4235
        %v4538 = vunpack.c.l.b16 %v4236
        %v4539 = vunpack.c.l.b16 %v4237
        %v4540 = vunpack.c.h.b16 %v4237
        %v4541 = vunpack.c.l.b16 %v4238
        %v4542 = vunpack.c.l.b16 %v4239
        %v4543 = vunpack.c.h.b16 %v4239
        %v4544 = vunpack.c.l.b16 %v4240
        %v4545 = vunpack.c.l.b16 %v4241
        %v4546 = vunpack.c.h.b16 %v4241
        %v4547 = vunpack.c.l.b16 %v4242
        %v4548 = vunpack.c.l.b16 %v4243
        %v4549 = vunpack.c.h.b16 %v4243
        %v4550 = vunpack.c.l.b16 %v4244
        %v4551 = vunpack.c.l.b16 %v4245
        %v4552 = vunpack.c.h.b16 %v4245
        %v4553 = vunpack.c.l.b16 %v4246
        %v4554 = vunpack.c.l.b16 %v4247
        %v4555 = vunpack.c.h.b16 %v4247
        %v4556 = vunpack.c.l.b16 %v4248
        %v4557 = vunpack.c.l.b16 %v4249
        %v4558 = vunpack.c.h.b16 %v4249
        %v4559 = vunpack.c.l.b16 %v4250
        %v4560 = vunpack.c.l.b16 %v4251
        %v4561 = vunpack.c.h.b16 %v4251
        %v4562 = vunpack.c.l.b16 %v4252
        %v4563 = vunpack.c.l.b16 %v4253
        %v4564 = vunpack.c.h.b16 %v4253
        %v4565 = vunpack.c.l.b16 %v4254
        %v4566 = vunpack.c.l.b16 %v4255
        %v4567 = vunpack.c.h.b16 %v4255
        %v4568 = vunpack.c.l.b16 %v4256
        %v4569 = vunpack.c.l.b16 %v4257
        %v4570 = vunpack.c.h.b16 %v4257
        %v4571 = vunpack.c.l.b16 %v4258
        %v4572 = vunpack.c.l.b16 %v4259
        %v4573 = vunpack.c.h.b16 %v4259
        %v4574 = vunpack.c.l.b16 %v4260
        %v4575 = vunpack.c.l.b16 %v4261
        %v4576 = vunpack.c.h.b16 %v4261
        %v4577 = vunpack.c.l.b16 %v4262
        %v4578 = vunpack.c.l.b16 %v4263
        %v4579 = vunpack.c.h.b16 %v4263
        %v4580 = vunpack.c.l.b16 %v4264
        %v4581 = vunpack.c.l.b16 %v4265
        %v4582 = vunpack.c.h.b16 %v4265
        %v4583 = vunpack.c.l.b16 %v4266
        %v4584 = vunpack.c.l.b16 %v4267
        %v4585 = vunpack.c.h.b16 %v4267
        %v4586 = vunpack.c.l.b16 %v4268
        %v4587 = vunpack.c.l.b16 %v4269
        %v4588 = vunpack.c.h.b16 %v4269
        %v4589 = vunpack.c.l.b16 %v4270
        %v4590 = vunpack.c.l.b16 %v4271
        %v4591 = vunpack.c.h.b16 %v4271
        %v4592 = vunpack.c.l.b16 %v4272
        %v4593 = vpack.c.b16 %v4404, %v4401
        %v4594 = vpack.c.b16 %v4405, %v4402
        %v4595 = vpack.c.b16 %v4406, %v4403
        %v4596 = vpack.c.b16 %v4410, %v4407
        %v4597 = vpack.c.b16 %v4411, %v4408
        %v4598 = vpack.c.b16 %v4412, %v4409
        %v4599 = vpack.c.b16 %v4416, %v4413
        %v4600 = vpack.c.b16 %v4417, %v4414
        %v4601 = vpack.c.b16 %v4418, %v4415
        %v4602 = vpack.c.b16 %v4422, %v4419
        %v4603 = vpack.c.b16 %v4423, %v4420
        %v4604 = vpack.c.b16 %v4424, %v4421
        %v4605 = vpack.c.b16 %v4428, %v4425
        %v4606 = vpack.c.b16 %v4429, %v4426
        %v4607 = vpack.c.b16 %v4430, %v4427
        %v4608 = vpack.c.b16 %v4434, %v4431
        %v4609 = vpack.c.b16 %v4435, %v4432
        %v4610 = vpack.c.b16 %v4436, %v4433
        %v4611 = vpack.c.b16 %v4440, %v4437
        %v4612 = vpack.c.b16 %v4441, %v4438
        %v4613 = vpack.c.b16 %v4442, %v4439
        %v4614 = vpack.c.b16 %v4446, %v4443
        %v4615 = vpack.c.b16 %v4447, %v4444
        %v4616 = vpack.c.b16 %v4448, %v4445
        %v4617 = vpack.c.b16 %v4452, %v4449
        %v4618 = vpack.c.b16 %v4453, %v4450
        %v4619 = vpack.c.b16 %v4454, %v4451
        %v4620 = vpack.c.b16 %v4458, %v4455
        %v4621 = vpack.c.b16 %v4459, %v4456
        %v4622 = vpack.c.b16 %v4460, %v4457
        %v4623 = vpack.c.b16 %v4464, %v4461
        %v4624 = vpack.c.b16 %v4465, %v4462
        %v4625 = vpack.c.b16 %v4466, %v4463
        %v4626 = vpack.c.b16 %v4470, %v4467
        %v4627 = vpack.c.b16 %v4471, %v4468
        %v4628 = vpack.c.b16 %v4472, %v4469
        %v4629 = vpack.c.b16 %v4476, %v4473
        %v4630 = vpack.c.b16 %v4477, %v4474
        %v4631 = vpack.c.b16 %v4478, %v4475
        %v4632 = vpack.c.b16 %v4482, %v4479
        %v4633 = vpack.c.b16 %v4483, %v4480
        %v4634 = vpack.c.b16 %v4484, %v4481
        %v4635 = vpack.c.b16 %v4488, %v4485
        %v4636 = vpack.c.b16 %v4489, %v4486
        %v4637 = vpack.c.b16 %v4490, %v4487
        %v4638 = vpack.c.b16 %v4494, %v4491
        %v4639 = vpack.c.b16 %v4495, %v4492
        %v4640 = vpack.c.b16 %v4496, %v4493
        %v4641 = vpack.c.b16 %v4500, %v4497
        %v4642 = vpack.c.b16 %v4501, %v4498
        %v4643 = vpack.c.b16 %v4502, %v4499
        %v4644 = vpack.c.b16 %v4506, %v4503
        %v4645 = vpack.c.b16 %v4507, %v4504
        %v4646 = vpack.c.b16 %v4508, %v4505
        %v4647 = vpack.c.b16 %v4512, %v4509
        %v4648 = vpack.c.b16 %v4513, %v4510
        %v4649 = vpack.c.b16 %v4514, %v4511
        %v4650 = vpack.c.b16 %v4518, %v4515
        %v4651 = vpack.c.b16 %v4519, %v4516
        %v4652 = vpack.c.b16 %v4520, %v4517
        %v4653 = vpack.c.b16 %v4524, %v4521
        %v4654 = vpack.c.b16 %v4525, %v4522
        %v4655 = vpack.c.b16 %v4526, %v4523
        %v4656 = vpack.c.b16 %v4530, %v4527
        %v4657 = vpack.c.b16 %v4531, %v4528
        %v4658 = vpack.c.b16 %v4532, %v4529
        %v4659 = vpack.c.b16 %v4536, %v4533
        %v4660 = vpack.c.b16 %v4537, %v4534
        %v4661 = vpack.c.b16 %v4538, %v4535
        %v4662 = vpack.c.b16 %v4542, %v4539
        %v4663 = vpack.c.b16 %v4543, %v4540
        %v4664 = vpack.c.b16 %v4544, %v4541
        %v4665 = vpack.c.b16 %v4548, %v4545
        %v4666 = vpack.c.b16 %v4549, %v4546
        %v4667 = vpack.c.b16 %v4550, %v4547
        %v4668 = vpack.c.b16 %v4554, %v4551
        %v4669 = vpack.c.b16 %v4555, %v4552
        %v4670 = vpack.c.b16 %v4556, %v4553
        %v4671 = vpack.c.b16 %v4560, %v4557
        %v4672 = vpack.c.b16 %v4561, %v4558
        %v4673 = vpack.c.b16 %v4562, %v4559
        %v4674 = vpack.c.b16 %v4566, %v4563
        %v4675 = vpack.c.b16 %v4567, %v4564
        %v4676 = vpack.c.b16 %v4568, %v4565
        %v4677 = vpack.c.b16 %v4572, %v4569
        %v4678 = vpack.c.b16 %v4573, %v4570
        %v4679 = vpack.c.b16 %v4574, %v4571
        %v4680 = vpack.c.b16 %v4578, %v4575
        %v4681 = vpack.c.b16 %v4579, %v4576
        %v4682 = vpack.c.b16 %v4580, %v4577
        %v4683 = vpack.c.b16 %v4584, %v4581
        %v4684 = vpack.c.b16 %v4585, %v4582
        %v4685 = vpack.c.b16 %v4586, %v4583
        %v4686 = vpack.c.b16 %v4590, %v4587
        %v4687 = vpack.c.b16 %v4591, %v4588
        %v4688 = vpack.c.b16 %v4592, %v4589
        %4785 = vmatprep.subr.bf16.mxu0 %v4594
        %4786 = vmatpush1.bf16.msra.mxu0 %v4593
        %4787 = vmatprep.subr.bf16.mxu0 %v4597
        %4788 = vmatpush1.bf16.msra.mxu0 %v4596
        %4789 = vmatprep.subr.bf16.mxu0 %v4600
        %4790 = vmatpush1.bf16.msra.mxu0 %v4599
        %4791 = vmatprep.subr.bf16.mxu0 %v4603
        %4792 = vmatpush1.bf16.msra.mxu0 %v4602
        %4793 = vmatprep.subr.bf16.mxu0 %v4606
        %4794 = vmatpush1.bf16.msra.mxu0 %v4605
        %4795 = vmatprep.subr.bf16.mxu0 %v4609
        %4796 = vmatpush1.bf16.msra.mxu0 %v4608
        %4797 = vmatprep.subr.bf16.mxu0 %v4612
        %4798 = vmatpush1.bf16.msra.mxu0 %v4611
        %4799 = vmatprep.subr.bf16.mxu0 %v4615
        %4800 = vmatpush1.bf16.msra.mxu0 %v4614
        %4801 = vmatprep.subr.bf16.mxu0 %v4618
        %4802 = vmatpush1.bf16.msra.mxu0 %v4617
        %4803 = vmatprep.subr.bf16.mxu0 %v4621
        %4804 = vmatpush1.bf16.msra.mxu0 %v4620
        %4805 = vmatprep.subr.bf16.mxu0 %v4624
        %4806 = vmatpush1.bf16.msra.mxu0 %v4623
        %4807 = vmatprep.subr.bf16.mxu0 %v4627
        %4808 = vmatpush1.bf16.msra.mxu0 %v4626
        %4809 = vmatprep.subr.bf16.mxu0 %v4630
        %4810 = vmatpush1.bf16.msra.mxu0 %v4629
        %4811 = vmatprep.subr.bf16.mxu0 %v4633
        %4812 = vmatpush1.bf16.msra.mxu0 %v4632
        %4813 = vmatprep.subr.bf16.mxu0 %v4636
        %4814 = vmatpush1.bf16.msra.mxu0 %v4635
        %4815 = vmatprep.subr.bf16.mxu0 %v4639
        %4816 = vmatpush1.bf16.msra.mxu0 %v4638
        %4817 = vmatprep.mubr.bf16.mxu0 %v3299
        %4818 = vmatmul.mubr.bf16.gmra.mrb[0].mxu0 %v3298
        %v4819 = vpop.f32.mrb[0].mxu0
        %v4820 = vadd.f32 %v3437, %v4819
        %v4821 = vpop.f32.mrb[0].mxu0
        %v4822 = vadd.f32 %v3441, %v4821
        %v4823 = vpop.f32.mrb[0].mxu0
        %v4824 = vadd.f32 %v3437, %v4823
        %v4825 = vpop.f32.mrb[0].mxu0
        %v4826 = vadd.f32 %v3441, %v4825
        %4827 = vdwg.mxu0
        %4828 = vmatprep.subr.bf16.mxu0 %v4642
        %4829 = vmatpush1.bf16.msra.mxu0 %v4641
        %4830 = vmatprep.subr.bf16.mxu0 %v4645
        %4831 = vmatpush1.bf16.msra.mxu0 %v4644
        %4832 = vmatprep.subr.bf16.mxu0 %v4648
        %4833 = vmatpush1.bf16.msra.mxu0 %v4647
        %4834 = vmatprep.subr.bf16.mxu0 %v4651
        %4835 = vmatpush1.bf16.msra.mxu0 %v4650
        %4836 = vmatprep.subr.bf16.mxu0 %v4654
        %4837 = vmatpush1.bf16.msra.mxu0 %v4653
        %4838 = vmatprep.subr.bf16.mxu0 %v4657
        %4839 = vmatpush1.bf16.msra.mxu0 %v4656
        %4840 = vmatprep.subr.bf16.mxu0 %v4660
        %4841 = vmatpush1.bf16.msra.mxu0 %v4659
        %4842 = vmatprep.subr.bf16.mxu0 %v4663
        %4843 = vmatpush1.bf16.msra.mxu0 %v4662
        %4844 = vmatprep.subr.bf16.mxu0 %v4666
        %4845 = vmatpush1.bf16.msra.mxu0 %v4665
        %4846 = vmatprep.subr.bf16.mxu0 %v4669
        %4847 = vmatpush1.bf16.msra.mxu0 %v4668
        %4848 = vmatprep.subr.bf16.mxu0 %v4672
        %4849 = vmatpush1.bf16.msra.mxu0 %v4671
        %4850 = vmatprep.subr.bf16.mxu0 %v4675
        %4851 = vmatpush1.bf16.msra.mxu0 %v4674
        %4852 = vmatprep.subr.bf16.mxu0 %v4678
        %4853 = vmatpush1.bf16.msra.mxu0 %v4677
        %4854 = vmatprep.subr.bf16.mxu0 %v4681
        %4855 = vmatpush1.bf16.msra.mxu0 %v4680
        %4856 = vmatprep.subr.bf16.mxu0 %v4684
        %4857 = vmatpush1.bf16.msra.mxu0 %v4683
        %4858 = vmatprep.subr.bf16.mxu0 %v4687
        %4859 = vmatpush1.bf16.msra.mxu0 %v4686
        %4860 = vmatprep.mubr.bf16.mxu0 %v3301
        %4861 = vmatmul.mubr.bf16.gmra.mrb[0].mxu0 %v3300
        %v4862 = vpop.f32.mrb[0].mxu0
        %v4863 = vadd.f32 %v4820, %v4862
        %v4864 = vpop.f32.mrb[0].mxu0
        %v4865 = vadd.f32 %v4822, %v4864
        %v4866 = vpop.f32.mrb[0].mxu0
        %v4867 = vadd.f32 %v4824, %v4866
        %v4868 = vpop.f32.mrb[0].mxu0
        %v4869 = vadd.f32 %v4826, %v4868
        %4870 = vdwg.mxu0
        %4871 = vmatprep.subr.bf16.mxu0 0
        %4872 = vmatpush1.bf16.msra.mxu0 %v4595
        %4873 = vmatprep.subr.bf16.mxu0 0
        %4874 = vmatpush1.bf16.msra.mxu0 %v4598
        %4875 = vmatprep.subr.bf16.mxu0 0
        %4876 = vmatpush1.bf16.msra.mxu0 %v4601
        %4877 = vmatprep.subr.bf16.mxu0 0
        %4878 = vmatpush1.bf16.msra.mxu0 %v4604
        %4879 = vmatprep.subr.bf16.mxu0 0
        %4880 = vmatpush1.bf16.msra.mxu0 %v4607
        %4881 = vmatprep.subr.bf16.mxu0 0
        %4882 = vmatpush1.bf16.msra.mxu0 %v4610
        %4883 = vmatprep.subr.bf16.mxu0 0
        %4884 = vmatpush1.bf16.msra.mxu0 %v4613
        %4885 = vmatprep.subr.bf16.mxu0 0
        %4886 = vmatpush1.bf16.msra.mxu0 %v4616
        %4887 = vmatprep.subr.bf16.mxu0 0
        %4888 = vmatpush1.bf16.msra.mxu0 %v4619
        %4889 = vmatprep.subr.bf16.mxu0 0
        %4890 = vmatpush1.bf16.msra.mxu0 %v4622
        %4891 = vmatprep.subr.bf16.mxu0 0
        %4892 = vmatpush1.bf16.msra.mxu0 %v4625
        %4893 = vmatprep.subr.bf16.mxu0 0
        %4894 = vmatpush1.bf16.msra.mxu0 %v4628
        %4895 = vmatprep.subr.bf16.mxu0 0
        %4896 = vmatpush1.bf16.msra.mxu0 %v4631
        %4897 = vmatprep.subr.bf16.mxu0 0
        %4898 = vmatpush1.bf16.msra.mxu0 %v4634
        %4899 = vmatprep.subr.bf16.mxu0 0
        %4900 = vmatpush1.bf16.msra.mxu0 %v4637
        %4901 = vmatprep.subr.bf16.mxu0 0
        %4902 = vmatpush1.bf16.msra.mxu0 %v4640
        %4903 = vmatprep.mubr.bf16.mxu0 %v3299
        %4904 = vmatmul.mubr.bf16.gmra.mrb[0].mxu0 %v3298
        %v4905 = vpop.f32.mrb[0].mxu0
        %v4906 = vadd.f32 %v3445, %v4905
        %v4907 = vpop.f32.mrb[0].mxu0
        %v4908 = vpop.f32.mrb[0].mxu0
        %v4909 = vadd.f32 %v3445, %v4908
        %v4910 = vpop.f32.mrb[0].mxu0
        %4911 = vdwg.mxu0
        %4912 = vmatprep.subr.bf16.mxu0 0
        %4913 = vmatpush1.bf16.msra.mxu0 %v4643
        %4914 = vmatprep.subr.bf16.mxu0 0
        %4915 = vmatpush1.bf16.msra.mxu0 %v4646
        %4916 = vmatprep.subr.bf16.mxu0 0
        %4917 = vmatpush1.bf16.msra.mxu0 %v4649
        %4918 = vmatprep.subr.bf16.mxu0 0
        %4919 = vmatpush1.bf16.msra.mxu0 %v4652
        %4920 = vmatprep.subr.bf16.mxu0 0
        %4921 = vmatpush1.bf16.msra.mxu0 %v4655
        %4922 = vmatprep.subr.bf16.mxu0 0
        %4923 = vmatpush1.bf16.msra.mxu0 %v4658
        %4924 = vmatprep.subr.bf16.mxu0 0
        %4925 = vmatpush1.bf16.msra.mxu0 %v4661
        %4926 = vmatprep.subr.bf16.mxu0 0
        %4927 = vmatpush1.bf16.msra.mxu0 %v4664
        %4928 = vmatprep.subr.bf16.mxu0 0
        %4929 = vmatpush1.bf16.msra.mxu0 %v4667
        %4930 = vmatprep.subr.bf16.mxu0 0
        %4931 = vmatpush1.bf16.msra.mxu0 %v4670
        %4932 = vmatprep.subr.bf16.mxu0 0
        %4933 = vmatpush1.bf16.msra.mxu0 %v4673
        %4934 = vmatprep.subr.bf16.mxu0 0
        %4935 = vmatpush1.bf16.msra.mxu0 %v4676
        %4936 = vmatprep.subr.bf16.mxu0 0
        %4937 = vmatpush1.bf16.msra.mxu0 %v4679
        %4938 = vmatprep.subr.bf16.mxu0 0
        %4939 = vmatpush1.bf16.msra.mxu0 %v4682
        %4940 = vmatprep.subr.bf16.mxu0 0
        %4941 = vmatpush1.bf16.msra.mxu0 %v4685
        %4942 = vmatprep.subr.bf16.mxu0 0
        %4943 = vmatpush1.bf16.msra.mxu0 %v4688
        %4944 = vmatprep.mubr.bf16.mxu0 %v3301
        %4945 = vmatmul.mubr.bf16.gmra.mrb[0].mxu0 %v3300
        %v4946 = vpop.f32.mrb[0].mxu0
        %v4947 = vadd.f32 %v4906, %v4946
        %v4948 = vpop.f32.mrb[0].mxu0
        %v4949 = vpop.f32.mrb[0].mxu0
        %v4950 = vadd.f32 %v4909, %v4949
        %v4951 = vpop.f32.mrb[0].mxu0
        %4952 = vdwg.mxu0
        %v4953 = vmul.f32 %v4863, 0.01
        %v4954 = vmul.f32 %v4865, 0.01
        %v4955 = vmul.f32 %v4947, 0.01
        %v4956 = vmul.f32 %v4867, 0.01
        %v4957 = vmul.f32 %v4869, 0.01
        %v4958 = vmul.f32 %v4950, 0.01
        %v4959 = vmax.f32 %v4863, %v4953
        %v4960 = vmax.f32 %v4865, %v4954
        %v4961 = vmax.f32 %v4947, %v4955
        %v4962 = vmax.f32 %v4867, %v4956
        %v4963 = vmax.f32 %v4869, %v4957
        %v4964 = vmax.f32 %v4950, %v4958
        %v4965 = vpack.c.bf16 %v4962, %v4959
        %v4966 = vpack.c.bf16 %v4963, %v4960
        %v4967 = vpack.c.bf16 %v4964, %v4961
        %s4968 = scalar_lea.vmem [#allocation11], 1536
        %v4969 = vld [vmem:[%s4968] sm:$0xff]
        %v4970 = vld [vmem:[%s4968 + $0x8] sm:$0xf]
        %v4971 = vld [vmem:[%s4968 + $0xc] sm:$0xff]
        %v4972 = vld [vmem:[%s4968 + $0x14] sm:$0xf]
        %v4973 = vld [vmem:[%s4968 + $0x18] sm:$0xff]
        %v4974 = vld [vmem:[%s4968 + $0x20] sm:$0xf]
        %v4975 = vld [vmem:[%s4968 + $0x24] sm:$0xff]
        %v4976 = vld [vmem:[%s4968 + $0x2c] sm:$0xf]
        %v4977 = vld [vmem:[%s4968 + $0x30] sm:$0xff]
        %v4978 = vld [vmem:[%s4968 + $0x38] sm:$0xf]
        %v4979 = vld [vmem:[%s4968 + $0x3c] sm:$0xff]
        %v4980 = vld [vmem:[%s4968 + $0x44] sm:$0xf]
        %v4981 = vld [vmem:[%s4968 + $0x48] sm:$0xff]
        %v4982 = vld [vmem:[%s4968 + $0x50] sm:$0xf]
        %v4983 = vld [vmem:[%s4968 + $0x54] sm:$0xff]
        %v4984 = vld [vmem:[%s4968 + $0x5c] sm:$0xf]
        %v4985 = vld [vmem:[%s4968 + $0x60] sm:$0xff]
        %v4986 = vld [vmem:[%s4968 + $0x68] sm:$0xf]
        %v4987 = vld [vmem:[%s4968 + $0x6c] sm:$0xff]
        %v4988 = vld [vmem:[%s4968 + $0x74] sm:$0xf]
        %v4989 = vld [vmem:[%s4968 + $0x78] sm:$0xff]
        %v4990 = vld [vmem:[%s4968 + $0x80] sm:$0xf]
        %v4991 = vld [vmem:[%s4968 + $0x84] sm:$0xff]
        %v4992 = vld [vmem:[%s4968 + $0x8c] sm:$0xf]
        %v4993 = vld [vmem:[%s4968 + $0x90] sm:$0xff]
        %v4994 = vld [vmem:[%s4968 + $0x98] sm:$0xf]
        %v4995 = vld [vmem:[%s4968 + $0x9c] sm:$0xff]
        %v4996 = vld [vmem:[%s4968 + $0xa4] sm:$0xf]
        %v4997 = vld [vmem:[%s4968 + $0xa8] sm:$0xff]
        %v4998 = vld [vmem:[%s4968 + $0xb0] sm:$0xf]
        %v4999 = vld [vmem:[%s4968 + $0xb4] sm:$0xff]
        %v5000 = vld [vmem:[%s4968 + $0xbc] sm:$0xf]
        %v5001 = vld [vmem:[%s4968 + $0xc0] sm:$0xff]
        %v5002 = vld [vmem:[%s4968 + $0xc8] sm:$0xf]
        %v5003 = vld [vmem:[%s4968 + $0xcc] sm:$0xff]
        %v5004 = vld [vmem:[%s4968 + $0xd4] sm:$0xf]
        %v5005 = vld [vmem:[%s4968 + $0xd8] sm:$0xff]
        %v5006 = vld [vmem:[%s4968 + $0xe0] sm:$0xf]
        %v5007 = vld [vmem:[%s4968 + $0xe4] sm:$0xff]
        %v5008 = vld [vmem:[%s4968 + $0xec] sm:$0xf]
        %v5009 = vld [vmem:[%s4968 + $0xf0] sm:$0xff]
        %v5010 = vld [vmem:[%s4968 + $0xf8] sm:$0xf]
        %v5011 = vld [vmem:[%s4968 + $0xfc] sm:$0xff]
        %v5012 = vld [vmem:[%s4968 + $0x104] sm:$0xf]
        %v5013 = vld [vmem:[%s4968 + $0x108] sm:$0xff]
        %v5014 = vld [vmem:[%s4968 + $0x110] sm:$0xf]
        %v5015 = vld [vmem:[%s4968 + $0x114] sm:$0xff]
        %v5016 = vld [vmem:[%s4968 + $0x11c] sm:$0xf]
        %v5017 = vld [vmem:[%s4968 + $0x120] sm:$0xff]
        %v5018 = vld [vmem:[%s4968 + $0x128] sm:$0xf]
        %v5019 = vld [vmem:[%s4968 + $0x12c] sm:$0xff]
        %v5020 = vld [vmem:[%s4968 + $0x134] sm:$0xf]
        %v5021 = vld [vmem:[%s4968 + $0x138] sm:$0xff]
        %v5022 = vld [vmem:[%s4968 + $0x140] sm:$0xf]
        %v5023 = vld [vmem:[%s4968 + $0x144] sm:$0xff]
        %v5024 = vld [vmem:[%s4968 + $0x14c] sm:$0xf]
        %v5025 = vld [vmem:[%s4968 + $0x150] sm:$0xff]
        %v5026 = vld [vmem:[%s4968 + $0x158] sm:$0xf]
        %v5027 = vld [vmem:[%s4968 + $0x15c] sm:$0xff]
        %v5028 = vld [vmem:[%s4968 + $0x164] sm:$0xf]
        %v5029 = vld [vmem:[%s4968 + $0x168] sm:$0xff]
        %v5030 = vld [vmem:[%s4968 + $0x170] sm:$0xf]
        %v5031 = vld [vmem:[%s4968 + $0x174] sm:$0xff]
        %v5032 = vld [vmem:[%s4968 + $0x17c] sm:$0xf]
        %v5033 = vld [vmem:[%s4968 + $0x180] sm:$0xff]
        %v5034 = vld [vmem:[%s4968 + $0x188] sm:$0xf]
        %v5035 = vld [vmem:[%s4968 + $0x18c] sm:$0xff]
        %v5036 = vld [vmem:[%s4968 + $0x194] sm:$0xf]
        %v5037 = vld [vmem:[%s4968 + $0x198] sm:$0xff]
        %v5038 = vld [vmem:[%s4968 + $0x1a0] sm:$0xf]
        %v5039 = vld [vmem:[%s4968 + $0x1a4] sm:$0xff]
        %v5040 = vld [vmem:[%s4968 + $0x1ac] sm:$0xf]
        %v5041 = vld [vmem:[%s4968 + $0x1b0] sm:$0xff]
        %v5042 = vld [vmem:[%s4968 + $0x1b8] sm:$0xf]
        %v5043 = vld [vmem:[%s4968 + $0x1bc] sm:$0xff]
        %v5044 = vld [vmem:[%s4968 + $0x1c4] sm:$0xf]
        %v5045 = vld [vmem:[%s4968 + $0x1c8] sm:$0xff]
        %v5046 = vld [vmem:[%s4968 + $0x1d0] sm:$0xf]
        %v5047 = vld [vmem:[%s4968 + $0x1d4] sm:$0xff]
        %v5048 = vld [vmem:[%s4968 + $0x1dc] sm:$0xf]
        %v5049 = vld [vmem:[%s4968 + $0x1e0] sm:$0xff]
        %v5050 = vld [vmem:[%s4968 + $0x1e8] sm:$0xf]
        %v5051 = vld [vmem:[%s4968 + $0x1ec] sm:$0xff]
        %v5052 = vld [vmem:[%s4968 + $0x1f4] sm:$0xf]
        %v5053 = vld [vmem:[%s4968 + $0x1f8] sm:$0xff]
        %v5054 = vld [vmem:[%s4968 + $0x200] sm:$0xf]
        %v5055 = vld [vmem:[%s4968 + $0x204] sm:$0xff]
        %v5056 = vld [vmem:[%s4968 + $0x20c] sm:$0xf]
        %v5057 = vld [vmem:[%s4968 + $0x210] sm:$0xff]
        %v5058 = vld [vmem:[%s4968 + $0x218] sm:$0xf]
        %v5059 = vld [vmem:[%s4968 + $0x21c] sm:$0xff]
        %v5060 = vld [vmem:[%s4968 + $0x224] sm:$0xf]
        %v5061 = vld [vmem:[%s4968 + $0x228] sm:$0xff]
        %v5062 = vld [vmem:[%s4968 + $0x230] sm:$0xf]
        %v5063 = vld [vmem:[%s4968 + $0x234] sm:$0xff]
        %v5064 = vld [vmem:[%s4968 + $0x23c] sm:$0xf]
        %v5065 = vld [vmem:[%s4968 + $0x240] sm:$0xff]
        %v5066 = vld [vmem:[%s4968 + $0x248] sm:$0xf]
        %v5067 = vld [vmem:[%s4968 + $0x24c] sm:$0xff]
        %v5068 = vld [vmem:[%s4968 + $0x254] sm:$0xf]
        %v5069 = vld [vmem:[%s4968 + $0x258] sm:$0xff]
        %v5070 = vld [vmem:[%s4968 + $0x260] sm:$0xf]
        %v5071 = vld [vmem:[%s4968 + $0x264] sm:$0xff]
        %v5072 = vld [vmem:[%s4968 + $0x26c] sm:$0xf]
        %v5073 = vld [vmem:[%s4968 + $0x270] sm:$0xff]
        %v5074 = vld [vmem:[%s4968 + $0x278] sm:$0xf]
        %v5075 = vld [vmem:[%s4968 + $0x27c] sm:$0xff]
        %v5076 = vld [vmem:[%s4968 + $0x284] sm:$0xf]
        %v5077 = vld [vmem:[%s4968 + $0x288] sm:$0xff]
        %v5078 = vld [vmem:[%s4968 + $0x290] sm:$0xf]
        %v5079 = vld [vmem:[%s4968 + $0x294] sm:$0xff]
        %v5080 = vld [vmem:[%s4968 + $0x29c] sm:$0xf]
        %v5081 = vld [vmem:[%s4968 + $0x2a0] sm:$0xff]
        %v5082 = vld [vmem:[%s4968 + $0x2a8] sm:$0xf]
        %v5083 = vld [vmem:[%s4968 + $0x2ac] sm:$0xff]
        %v5084 = vld [vmem:[%s4968 + $0x2b4] sm:$0xf]
        %v5085 = vld [vmem:[%s4968 + $0x2b8] sm:$0xff]
        %v5086 = vld [vmem:[%s4968 + $0x2c0] sm:$0xf]
        %v5087 = vld [vmem:[%s4968 + $0x2c4] sm:$0xff]
        %v5088 = vld [vmem:[%s4968 + $0x2cc] sm:$0xf]
        %v5089 = vld [vmem:[%s4968 + $0x2d0] sm:$0xff]
        %v5090 = vld [vmem:[%s4968 + $0x2d8] sm:$0xf]
        %v5091 = vld [vmem:[%s4968 + $0x2dc] sm:$0xff]
        %v5092 = vld [vmem:[%s4968 + $0x2e4] sm:$0xf]
        %v5093 = vld [vmem:[%s4968 + $0x2e8] sm:$0xff]
        %v5094 = vld [vmem:[%s4968 + $0x2f0] sm:$0xf]
        %v5095 = vld [vmem:[%s4968 + $0x2f4] sm:$0xff]
        %v5096 = vld [vmem:[%s4968 + $0x2fc] sm:$0xf]
        %v5225 = vunpack.c.l.b16 %v4969
        %v5226 = vunpack.c.h.b16 %v4969
        %v5227 = vunpack.c.l.b16 %v4970
        %v5228 = vunpack.c.l.b16 %v4971
        %v5229 = vunpack.c.h.b16 %v4971
        %v5230 = vunpack.c.l.b16 %v4972
        %v5231 = vunpack.c.l.b16 %v4973
        %v5232 = vunpack.c.h.b16 %v4973
        %v5233 = vunpack.c.l.b16 %v4974
        %v5234 = vunpack.c.l.b16 %v4975
        %v5235 = vunpack.c.h.b16 %v4975
        %v5236 = vunpack.c.l.b16 %v4976
        %v5237 = vunpack.c.l.b16 %v4977
        %v5238 = vunpack.c.h.b16 %v4977
        %v5239 = vunpack.c.l.b16 %v4978
        %v5240 = vunpack.c.l.b16 %v4979
        %v5241 = vunpack.c.h.b16 %v4979
        %v5242 = vunpack.c.l.b16 %v4980
        %v5243 = vunpack.c.l.b16 %v4981
        %v5244 = vunpack.c.h.b16 %v4981
        %v5245 = vunpack.c.l.b16 %v4982
        %v5246 = vunpack.c.l.b16 %v4983
        %v5247 = vunpack.c.h.b16 %v4983
        %v5248 = vunpack.c.l.b16 %v4984
        %v5249 = vunpack.c.l.b16 %v4985
        %v5250 = vunpack.c.h.b16 %v4985
        %v5251 = vunpack.c.l.b16 %v4986
        %v5252 = vunpack.c.l.b16 %v4987
        %v5253 = vunpack.c.h.b16 %v4987
        %v5254 = vunpack.c.l.b16 %v4988
        %v5255 = vunpack.c.l.b16 %v4989
        %v5256 = vunpack.c.h.b16 %v4989
        %v5257 = vunpack.c.l.b16 %v4990
        %v5258 = vunpack.c.l.b16 %v4991
        %v5259 = vunpack.c.h.b16 %v4991
        %v5260 = vunpack.c.l.b16 %v4992
        %v5261 = vunpack.c.l.b16 %v4993
        %v5262 = vunpack.c.h.b16 %v4993
        %v5263 = vunpack.c.l.b16 %v4994
        %v5264 = vunpack.c.l.b16 %v4995
        %v5265 = vunpack.c.h.b16 %v4995
        %v5266 = vunpack.c.l.b16 %v4996
        %v5267 = vunpack.c.l.b16 %v4997
        %v5268 = vunpack.c.h.b16 %v4997
        %v5269 = vunpack.c.l.b16 %v4998
        %v5270 = vunpack.c.l.b16 %v4999
        %v5271 = vunpack.c.h.b16 %v4999
        %v5272 = vunpack.c.l.b16 %v5000
        %v5273 = vunpack.c.l.b16 %v5001
        %v5274 = vunpack.c.h.b16 %v5001
        %v5275 = vunpack.c.l.b16 %v5002
        %v5276 = vunpack.c.l.b16 %v5003
        %v5277 = vunpack.c.h.b16 %v5003
        %v5278 = vunpack.c.l.b16 %v5004
        %v5279 = vunpack.c.l.b16 %v5005
        %v5280 = vunpack.c.h.b16 %v5005
        %v5281 = vunpack.c.l.b16 %v5006
        %v5282 = vunpack.c.l.b16 %v5007
        %v5283 = vunpack.c.h.b16 %v5007
        %v5284 = vunpack.c.l.b16 %v5008
        %v5285 = vunpack.c.l.b16 %v5009
        %v5286 = vunpack.c.h.b16 %v5009
        %v5287 = vunpack.c.l.b16 %v5010
        %v5288 = vunpack.c.l.b16 %v5011
        %v5289 = vunpack.c.h.b16 %v5011
        %v5290 = vunpack.c.l.b16 %v5012
        %v5291 = vunpack.c.l.b16 %v5013
        %v5292 = vunpack.c.h.b16 %v5013
        %v5293 = vunpack.c.l.b16 %v5014
        %v5294 = vunpack.c.l.b16 %v5015
        %v5295 = vunpack.c.h.b16 %v5015
        %v5296 = vunpack.c.l.b16 %v5016
        %v5297 = vunpack.c.l.b16 %v5017
        %v5298 = vunpack.c.h.b16 %v5017
        %v5299 = vunpack.c.l.b16 %v5018
        %v5300 = vunpack.c.l.b16 %v5019
        %v5301 = vunpack.c.h.b16 %v5019
        %v5302 = vunpack.c.l.b16 %v5020
        %v5303 = vunpack.c.l.b16 %v5021
        %v5304 = vunpack.c.h.b16 %v5021
        %v5305 = vunpack.c.l.b16 %v5022
        %v5306 = vunpack.c.l.b16 %v5023
        %v5307 = vunpack.c.h.b16 %v5023
        %v5308 = vunpack.c.l.b16 %v5024
        %v5309 = vunpack.c.l.b16 %v5025
        %v5310 = vunpack.c.h.b16 %v5025
        %v5311 = vunpack.c.l.b16 %v5026
        %v5312 = vunpack.c.l.b16 %v5027
        %v5313 = vunpack.c.h.b16 %v5027
        %v5314 = vunpack.c.l.b16 %v5028
        %v5315 = vunpack.c.l.b16 %v5029
        %v5316 = vunpack.c.h.b16 %v5029
        %v5317 = vunpack.c.l.b16 %v5030
        %v5318 = vunpack.c.l.b16 %v5031
        %v5319 = vunpack.c.h.b16 %v5031
        %v5320 = vunpack.c.l.b16 %v5032
        %v5321 = vunpack.c.l.b16 %v5033
        %v5322 = vunpack.c.h.b16 %v5033
        %v5323 = vunpack.c.l.b16 %v5034
        %v5324 = vunpack.c.l.b16 %v5035
        %v5325 = vunpack.c.h.b16 %v5035
        %v5326 = vunpack.c.l.b16 %v5036
        %v5327 = vunpack.c.l.b16 %v5037
        %v5328 = vunpack.c.h.b16 %v5037
        %v5329 = vunpack.c.l.b16 %v5038
        %v5330 = vunpack.c.l.b16 %v5039
        %v5331 = vunpack.c.h.b16 %v5039
        %v5332 = vunpack.c.l.b16 %v5040
        %v5333 = vunpack.c.l.b16 %v5041
        %v5334 = vunpack.c.h.b16 %v5041
        %v5335 = vunpack.c.l.b16 %v5042
        %v5336 = vunpack.c.l.b16 %v5043
        %v5337 = vunpack.c.h.b16 %v5043
        %v5338 = vunpack.c.l.b16 %v5044
        %v5339 = vunpack.c.l.b16 %v5045
        %v5340 = vunpack.c.h.b16 %v5045
        %v5341 = vunpack.c.l.b16 %v5046
        %v5342 = vunpack.c.l.b16 %v5047
        %v5343 = vunpack.c.h.b16 %v5047
        %v5344 = vunpack.c.l.b16 %v5048
        %v5345 = vunpack.c.l.b16 %v5049
        %v5346 = vunpack.c.h.b16 %v5049
        %v5347 = vunpack.c.l.b16 %v5050
        %v5348 = vunpack.c.l.b16 %v5051
        %v5349 = vunpack.c.h.b16 %v5051
        %v5350 = vunpack.c.l.b16 %v5052
        %v5351 = vunpack.c.l.b16 %v5053
        %v5352 = vunpack.c.h.b16 %v5053
        %v5353 = vunpack.c.l.b16 %v5054
        %v5354 = vunpack.c.l.b16 %v5055
        %v5355 = vunpack.c.h.b16 %v5055
        %v5356 = vunpack.c.l.b16 %v5056
        %v5357 = vunpack.c.l.b16 %v5057
        %v5358 = vunpack.c.h.b16 %v5057
        %v5359 = vunpack.c.l.b16 %v5058
        %v5360 = vunpack.c.l.b16 %v5059
        %v5361 = vunpack.c.h.b16 %v5059
        %v5362 = vunpack.c.l.b16 %v5060
        %v5363 = vunpack.c.l.b16 %v5061
        %v5364 = vunpack.c.h.b16 %v5061
        %v5365 = vunpack.c.l.b16 %v5062
        %v5366 = vunpack.c.l.b16 %v5063
        %v5367 = vunpack.c.h.b16 %v5063
        %v5368 = vunpack.c.l.b16 %v5064
        %v5369 = vunpack.c.l.b16 %v5065
        %v5370 = vunpack.c.h.b16 %v5065
        %v5371 = vunpack.c.l.b16 %v5066
        %v5372 = vunpack.c.l.b16 %v5067
        %v5373 = vunpack.c.h.b16 %v5067
        %v5374 = vunpack.c.l.b16 %v5068
        %v5375 = vunpack.c.l.b16 %v5069
        %v5376 = vunpack.c.h.b16 %v5069
        %v5377 = vunpack.c.l.b16 %v5070
        %v5378 = vunpack.c.l.b16 %v5071
        %v5379 = vunpack.c.h.b16 %v5071
        %v5380 = vunpack.c.l.b16 %v5072
        %v5381 = vunpack.c.l.b16 %v5073
        %v5382 = vunpack.c.h.b16 %v5073
        %v5383 = vunpack.c.l.b16 %v5074
        %v5384 = vunpack.c.l.b16 %v5075
        %v5385 = vunpack.c.h.b16 %v5075
        %v5386 = vunpack.c.l.b16 %v5076
        %v5387 = vunpack.c.l.b16 %v5077
        %v5388 = vunpack.c.h.b16 %v5077
        %v5389 = vunpack.c.l.b16 %v5078
        %v5390 = vunpack.c.l.b16 %v5079
        %v5391 = vunpack.c.h.b16 %v5079
        %v5392 = vunpack.c.l.b16 %v5080
        %v5393 = vunpack.c.l.b16 %v5081
        %v5394 = vunpack.c.h.b16 %v5081
        %v5395 = vunpack.c.l.b16 %v5082
        %v5396 = vunpack.c.l.b16 %v5083
        %v5397 = vunpack.c.h.b16 %v5083
        %v5398 = vunpack.c.l.b16 %v5084
        %v5399 = vunpack.c.l.b16 %v5085
        %v5400 = vunpack.c.h.b16 %v5085
        %v5401 = vunpack.c.l.b16 %v5086
        %v5402 = vunpack.c.l.b16 %v5087
        %v5403 = vunpack.c.h.b16 %v5087
        %v5404 = vunpack.c.l.b16 %v5088
        %v5405 = vunpack.c.l.b16 %v5089
        %v5406 = vunpack.c.h.b16 %v5089
        %v5407 = vunpack.c.l.b16 %v5090
        %v5408 = vunpack.c.l.b16 %v5091
        %v5409 = vunpack.c.h.b16 %v5091
        %v5410 = vunpack.c.l.b16 %v5092
        %v5411 = vunpack.c.l.b16 %v5093
        %v5412 = vunpack.c.h.b16 %v5093
        %v5413 = vunpack.c.l.b16 %v5094
        %v5414 = vunpack.c.l.b16 %v5095
        %v5415 = vunpack.c.h.b16 %v5095
        %v5416 = vunpack.c.l.b16 %v5096
        %v5417 = vpack.c.b16 %v5228, %v5225
        %v5418 = vpack.c.b16 %v5229, %v5226
        %v5419 = vpack.c.b16 %v5230, %v5227
        %v5420 = vpack.c.b16 %v5234, %v5231
        %v5421 = vpack.c.b16 %v5235, %v5232
        %v5422 = vpack.c.b16 %v5236, %v5233
        %v5423 = vpack.c.b16 %v5240, %v5237
        %v5424 = vpack.c.b16 %v5241, %v5238
        %v5425 = vpack.c.b16 %v5242, %v5239
        %v5426 = vpack.c.b16 %v5246, %v5243
        %v5427 = vpack.c.b16 %v5247, %v5244
        %v5428 = vpack.c.b16 %v5248, %v5245
        %v5429 = vpack.c.b16 %v5252, %v5249
        %v5430 = vpack.c.b16 %v5253, %v5250
        %v5431 = vpack.c.b16 %v5254, %v5251
        %v5432 = vpack.c.b16 %v5258, %v5255
        %v5433 = vpack.c.b16 %v5259, %v5256
        %v5434 = vpack.c.b16 %v5260, %v5257
        %v5435 = vpack.c.b16 %v5264, %v5261
        %v5436 = vpack.c.b16 %v5265, %v5262
        %v5437 = vpack.c.b16 %v5266, %v5263
        %v5438 = vpack.c.b16 %v5270, %v5267
        %v5439 = vpack.c.b16 %v5271, %v5268
        %v5440 = vpack.c.b16 %v5272, %v5269
        %v5441 = vpack.c.b16 %v5276, %v5273
        %v5442 = vpack.c.b16 %v5277, %v5274
        %v5443 = vpack.c.b16 %v5278, %v5275
        %v5444 = vpack.c.b16 %v5282, %v5279
        %v5445 = vpack.c.b16 %v5283, %v5280
        %v5446 = vpack.c.b16 %v5284, %v5281
        %v5447 = vpack.c.b16 %v5288, %v5285
        %v5448 = vpack.c.b16 %v5289, %v5286
        %v5449 = vpack.c.b16 %v5290, %v5287
        %v5450 = vpack.c.b16 %v5294, %v5291
        %v5451 = vpack.c.b16 %v5295, %v5292
        %v5452 = vpack.c.b16 %v5296, %v5293
        %v5453 = vpack.c.b16 %v5300, %v5297
        %v5454 = vpack.c.b16 %v5301, %v5298
        %v5455 = vpack.c.b16 %v5302, %v5299
        %v5456 = vpack.c.b16 %v5306, %v5303
        %v5457 = vpack.c.b16 %v5307, %v5304
        %v5458 = vpack.c.b16 %v5308, %v5305
        %v5459 = vpack.c.b16 %v5312, %v5309
        %v5460 = vpack.c.b16 %v5313, %v5310
        %v5461 = vpack.c.b16 %v5314, %v5311
        %v5462 = vpack.c.b16 %v5318, %v5315
        %v5463 = vpack.c.b16 %v5319, %v5316
        %v5464 = vpack.c.b16 %v5320, %v5317
        %v5465 = vpack.c.b16 %v5324, %v5321
        %v5466 = vpack.c.b16 %v5325, %v5322
        %v5467 = vpack.c.b16 %v5326, %v5323
        %v5468 = vpack.c.b16 %v5330, %v5327
        %v5469 = vpack.c.b16 %v5331, %v5328
        %v5470 = vpack.c.b16 %v5332, %v5329
        %v5471 = vpack.c.b16 %v5336, %v5333
        %v5472 = vpack.c.b16 %v5337, %v5334
        %v5473 = vpack.c.b16 %v5338, %v5335
        %v5474 = vpack.c.b16 %v5342, %v5339
        %v5475 = vpack.c.b16 %v5343, %v5340
        %v5476 = vpack.c.b16 %v5344, %v5341
        %v5477 = vpack.c.b16 %v5348, %v5345
        %v5478 = vpack.c.b16 %v5349, %v5346
        %v5479 = vpack.c.b16 %v5350, %v5347
        %v5480 = vpack.c.b16 %v5354, %v5351
        %v5481 = vpack.c.b16 %v5355, %v5352
        %v5482 = vpack.c.b16 %v5356, %v5353
        %v5483 = vpack.c.b16 %v5360, %v5357
        %v5484 = vpack.c.b16 %v5361, %v5358
        %v5485 = vpack.c.b16 %v5362, %v5359
        %v5486 = vpack.c.b16 %v5366, %v5363
        %v5487 = vpack.c.b16 %v5367, %v5364
        %v5488 = vpack.c.b16 %v5368, %v5365
        %v5489 = vpack.c.b16 %v5372, %v5369
        %v5490 = vpack.c.b16 %v5373, %v5370
        %v5491 = vpack.c.b16 %v5374, %v5371
        %v5492 = vpack.c.b16 %v5378, %v5375
        %v5493 = vpack.c.b16 %v5379, %v5376
        %v5494 = vpack.c.b16 %v5380, %v5377
        %v5495 = vpack.c.b16 %v5384, %v5381
        %v5496 = vpack.c.b16 %v5385, %v5382
        %v5497 = vpack.c.b16 %v5386, %v5383
        %v5498 = vpack.c.b16 %v5390, %v5387
        %v5499 = vpack.c.b16 %v5391, %v5388
        %v5500 = vpack.c.b16 %v5392, %v5389
        %v5501 = vpack.c.b16 %v5396, %v5393
        %v5502 = vpack.c.b16 %v5397, %v5394
        %v5503 = vpack.c.b16 %v5398, %v5395
        %v5504 = vpack.c.b16 %v5402, %v5399
        %v5505 = vpack.c.b16 %v5403, %v5400
        %v5506 = vpack.c.b16 %v5404, %v5401
        %v5507 = vpack.c.b16 %v5408, %v5405
        %v5508 = vpack.c.b16 %v5409, %v5406
        %v5509 = vpack.c.b16 %v5410, %v5407
        %v5510 = vpack.c.b16 %v5414, %v5411
        %v5511 = vpack.c.b16 %v5415, %v5412
        %v5512 = vpack.c.b16 %v5416, %v5413
        %5609 = vmatprep.subr.bf16.mxu0 %v5418
        %5610 = vmatpush1.bf16.msra.mxu0 %v5417
        %5611 = vmatprep.subr.bf16.mxu0 %v5421
        %5612 = vmatpush1.bf16.msra.mxu0 %v5420
        %5613 = vmatprep.subr.bf16.mxu0 %v5424
        %5614 = vmatpush1.bf16.msra.mxu0 %v5423
        %5615 = vmatprep.subr.bf16.mxu0 %v5427
        %5616 = vmatpush1.bf16.msra.mxu0 %v5426
        %5617 = vmatprep.subr.bf16.mxu0 %v5430
        %5618 = vmatpush1.bf16.msra.mxu0 %v5429
        %5619 = vmatprep.subr.bf16.mxu0 %v5433
        %5620 = vmatpush1.bf16.msra.mxu0 %v5432
        %5621 = vmatprep.subr.bf16.mxu0 %v5436
        %5622 = vmatpush1.bf16.msra.mxu0 %v5435
        %5623 = vmatprep.subr.bf16.mxu0 %v5439
        %5624 = vmatpush1.bf16.msra.mxu0 %v5438
        %5625 = vmatprep.subr.bf16.mxu0 %v5442
        %5626 = vmatpush1.bf16.msra.mxu0 %v5441
        %5627 = vmatprep.subr.bf16.mxu0 %v5445
        %5628 = vmatpush1.bf16.msra.mxu0 %v5444
        %5629 = vmatprep.subr.bf16.mxu0 %v5448
        %5630 = vmatpush1.bf16.msra.mxu0 %v5447
        %5631 = vmatprep.subr.bf16.mxu0 %v5451
        %5632 = vmatpush1.bf16.msra.mxu0 %v5450
        %5633 = vmatprep.subr.bf16.mxu0 %v5454
        %5634 = vmatpush1.bf16.msra.mxu0 %v5453
        %5635 = vmatprep.subr.bf16.mxu0 %v5457
        %5636 = vmatpush1.bf16.msra.mxu0 %v5456
        %5637 = vmatprep.subr.bf16.mxu0 %v5460
        %5638 = vmatpush1.bf16.msra.mxu0 %v5459
        %5639 = vmatprep.subr.bf16.mxu0 %v5463
        %5640 = vmatpush1.bf16.msra.mxu0 %v5462
        %5641 = vmatprep.mubr.bf16.mxu0 %v3300
        %5642 = vmatmul.mubr.bf16.gmra.mrb[0].mxu0 %v3299
        %v5643 = vpop.f32.mrb[0].mxu0
        %v5644 = vadd.f32 %v3437, %v5643
        %v5645 = vpop.f32.mrb[0].mxu0
        %v5646 = vadd.f32 %v3441, %v5645
        %v5647 = vpop.f32.mrb[0].mxu0
        %v5648 = vadd.f32 %v3437, %v5647
        %v5649 = vpop.f32.mrb[0].mxu0
        %v5650 = vadd.f32 %v3441, %v5649
        %5651 = vdwg.mxu0
        %5652 = vmatprep.subr.bf16.mxu0 %v5466
        %5653 = vmatpush1.bf16.msra.mxu0 %v5465
        %5654 = vmatprep.subr.bf16.mxu0 %v5469
        %5655 = vmatpush1.bf16.msra.mxu0 %v5468
        %5656 = vmatprep.subr.bf16.mxu0 %v5472
        %5657 = vmatpush1.bf16.msra.mxu0 %v5471
        %5658 = vmatprep.subr.bf16.mxu0 %v5475
        %5659 = vmatpush1.bf16.msra.mxu0 %v5474
        %5660 = vmatprep.subr.bf16.mxu0 %v5478
        %5661 = vmatpush1.bf16.msra.mxu0 %v5477
        %5662 = vmatprep.subr.bf16.mxu0 %v5481
        %5663 = vmatpush1.bf16.msra.mxu0 %v5480
        %5664 = vmatprep.subr.bf16.mxu0 %v5484
        %5665 = vmatpush1.bf16.msra.mxu0 %v5483
        %5666 = vmatprep.subr.bf16.mxu0 %v5487
        %5667 = vmatpush1.bf16.msra.mxu0 %v5486
        %5668 = vmatprep.subr.bf16.mxu0 %v5490
        %5669 = vmatpush1.bf16.msra.mxu0 %v5489
        %5670 = vmatprep.subr.bf16.mxu0 %v5493
        %5671 = vmatpush1.bf16.msra.mxu0 %v5492
        %5672 = vmatprep.subr.bf16.mxu0 %v5496
        %5673 = vmatpush1.bf16.msra.mxu0 %v5495
        %5674 = vmatprep.subr.bf16.mxu0 %v5499
        %5675 = vmatpush1.bf16.msra.mxu0 %v5498
        %5676 = vmatprep.subr.bf16.mxu0 %v5502
        %5677 = vmatpush1.bf16.msra.mxu0 %v5501
        %5678 = vmatprep.subr.bf16.mxu0 %v5505
        %5679 = vmatpush1.bf16.msra.mxu0 %v5504
        %5680 = vmatprep.subr.bf16.mxu0 %v5508
        %5681 = vmatpush1.bf16.msra.mxu0 %v5507
        %5682 = vmatprep.subr.bf16.mxu0 %v5511
        %5683 = vmatpush1.bf16.msra.mxu0 %v5510
        %5684 = vmatprep.mubr.bf16.mxu0 %v3302
        %5685 = vmatmul.mubr.bf16.gmra.mrb[0].mxu0 %v3301
        %v5686 = vpop.f32.mrb[0].mxu0
        %v5687 = vadd.f32 %v5644, %v5686
        %v5688 = vpop.f32.mrb[0].mxu0
        %v5689 = vadd.f32 %v5646, %v5688
        %v5690 = vpop.f32.mrb[0].mxu0
        %v5691 = vadd.f32 %v5648, %v5690
        %v5692 = vpop.f32.mrb[0].mxu0
        %v5693 = vadd.f32 %v5650, %v5692
        %5694 = vdwg.mxu0
        %5695 = vmatprep.subr.bf16.mxu0 0
        %5696 = vmatpush1.bf16.msra.mxu0 %v5419
        %5697 = vmatprep.subr.bf16.mxu0 0
        %5698 = vmatpush1.bf16.msra.mxu0 %v5422
        %5699 = vmatprep.subr.bf16.mxu0 0
        %5700 = vmatpush1.bf16.msra.mxu0 %v5425
        %5701 = vmatprep.subr.bf16.mxu0 0
        %5702 = vmatpush1.bf16.msra.mxu0 %v5428
        %5703 = vmatprep.subr.bf16.mxu0 0
        %5704 = vmatpush1.bf16.msra.mxu0 %v5431
        %5705 = vmatprep.subr.bf16.mxu0 0
        %5706 = vmatpush1.bf16.msra.mxu0 %v5434
        %5707 = vmatprep.subr.bf16.mxu0 0
        %5708 = vmatpush1.bf16.msra.mxu0 %v5437
        %5709 = vmatprep.subr.bf16.mxu0 0
        %5710 = vmatpush1.bf16.msra.mxu0 %v5440
        %5711 = vmatprep.subr.bf16.mxu0 0
        %5712 = vmatpush1.bf16.msra.mxu0 %v5443
        %5713 = vmatprep.subr.bf16.mxu0 0
        %5714 = vmatpush1.bf16.msra.mxu0 %v5446
        %5715 = vmatprep.subr.bf16.mxu0 0
        %5716 = vmatpush1.bf16.msra.mxu0 %v5449
        %5717 = vmatprep.subr.bf16.mxu0 0
        %5718 = vmatpush1.bf16.msra.mxu0 %v5452
        %5719 = vmatprep.subr.bf16.mxu0 0
        %5720 = vmatpush1.bf16.msra.mxu0 %v5455
        %5721 = vmatprep.subr.bf16.mxu0 0
        %5722 = vmatpush1.bf16.msra.mxu0 %v5458
        %5723 = vmatprep.subr.bf16.mxu0 0
        %5724 = vmatpush1.bf16.msra.mxu0 %v5461
        %5725 = vmatprep.subr.bf16.mxu0 0
        %5726 = vmatpush1.bf16.msra.mxu0 %v5464
        %5727 = vmatprep.mubr.bf16.mxu0 %v3300
        %5728 = vmatmul.mubr.bf16.gmra.mrb[0].mxu0 %v3299
        %v5729 = vpop.f32.mrb[0].mxu0
        %v5730 = vadd.f32 %v3445, %v5729
        %v5731 = vpop.f32.mrb[0].mxu0
        %v5732 = vpop.f32.mrb[0].mxu0
        %v5733 = vadd.f32 %v3445, %v5732
        %v5734 = vpop.f32.mrb[0].mxu0
        %5735 = vdwg.mxu0
        %5736 = vmatprep.subr.bf16.mxu0 0
        %5737 = vmatpush1.bf16.msra.mxu0 %v5467
        %5738 = vmatprep.subr.bf16.mxu0 0
        %5739 = vmatpush1.bf16.msra.mxu0 %v5470
        %5740 = vmatprep.subr.bf16.mxu0 0
        %5741 = vmatpush1.bf16.msra.mxu0 %v5473
        %5742 = vmatprep.subr.bf16.mxu0 0
        %5743 = vmatpush1.bf16.msra.mxu0 %v5476
        %5744 = vmatprep.subr.bf16.mxu0 0
        %5745 = vmatpush1.bf16.msra.mxu0 %v5479
        %5746 = vmatprep.subr.bf16.mxu0 0
        %5747 = vmatpush1.bf16.msra.mxu0 %v5482
        %5748 = vmatprep.subr.bf16.mxu0 0
        %5749 = vmatpush1.bf16.msra.mxu0 %v5485
        %5750 = vmatprep.subr.bf16.mxu0 0
        %5751 = vmatpush1.bf16.msra.mxu0 %v5488
        %5752 = vmatprep.subr.bf16.mxu0 0
        %5753 = vmatpush1.bf16.msra.mxu0 %v5491
        %5754 = vmatprep.subr.bf16.mxu0 0
        %5755 = vmatpush1.bf16.msra.mxu0 %v5494
        %5756 = vmatprep.subr.bf16.mxu0 0
        %5757 = vmatpush1.bf16.msra.mxu0 %v5497
        %5758 = vmatprep.subr.bf16.mxu0 0
        %5759 = vmatpush1.bf16.msra.mxu0 %v5500
        %5760 = vmatprep.subr.bf16.mxu0 0
        %5761 = vmatpush1.bf16.msra.mxu0 %v5503
        %5762 = vmatprep.subr.bf16.mxu0 0
        %5763 = vmatpush1.bf16.msra.mxu0 %v5506
        %5764 = vmatprep.subr.bf16.mxu0 0
        %5765 = vmatpush1.bf16.msra.mxu0 %v5509
        %5766 = vmatprep.subr.bf16.mxu0 0
        %5767 = vmatpush1.bf16.msra.mxu0 %v5512
        %5768 = vmatprep.mubr.bf16.mxu0 %v3302
        %5769 = vmatmul.mubr.bf16.gmra.mrb[0].mxu0 %v3301
        %v5770 = vpop.f32.mrb[0].mxu0
        %v5771 = vadd.f32 %v5730, %v5770
        %v5772 = vpop.f32.mrb[0].mxu0
        %v5773 = vpop.f32.mrb[0].mxu0
        %v5774 = vadd.f32 %v5733, %v5773
        %v5775 = vpop.f32.mrb[0].mxu0
        %5776 = vdwg.mxu0
        %v5777 = vmul.f32 %v5687, 0.01
        %v5778 = vmul.f32 %v5689, 0.01
        %v5779 = vmul.f32 %v5771, 0.01
        %v5780 = vmul.f32 %v5691, 0.01
        %v5781 = vmul.f32 %v5693, 0.01
        %v5782 = vmul.f32 %v5774, 0.01
        %v5783 = vmax.f32 %v5687, %v5777
        %v5784 = vmax.f32 %v5689, %v5778
        %v5785 = vmax.f32 %v5771, %v5779
        %v5786 = vmax.f32 %v5691, %v5780
        %v5787 = vmax.f32 %v5693, %v5781
        %v5788 = vmax.f32 %v5774, %v5782
        %v5789 = vpack.c.bf16 %v5786, %v5783
        %v5790 = vpack.c.bf16 %v5787, %v5784
        %v5791 = vpack.c.bf16 %v5788, %v5785
        %s5792 = scalar_lea.vmem [#allocation11], 2304
        %v5793 = vld [vmem:[%s5792] sm:$0xff]
        %v5794 = vld [vmem:[%s5792 + $0x8] sm:$0xf]
        %v5795 = vld [vmem:[%s5792 + $0xc] sm:$0xff]
        %v5796 = vld [vmem:[%s5792 + $0x14] sm:$0xf]
        %v5797 = vld [vmem:[%s5792 + $0x18] sm:$0xff]
        %v5798 = vld [vmem:[%s5792 + $0x20] sm:$0xf]
        %v5799 = vld [vmem:[%s5792 + $0x24] sm:$0xff]
        %v5800 = vld [vmem:[%s5792 + $0x2c] sm:$0xf]
        %v5801 = vld [vmem:[%s5792 + $0x30] sm:$0xff]
        %v5802 = vld [vmem:[%s5792 + $0x38] sm:$0xf]
        %v5803 = vld [vmem:[%s5792 + $0x3c] sm:$0xff]
        %v5804 = vld [vmem:[%s5792 + $0x44] sm:$0xf]
        %v5805 = vld [vmem:[%s5792 + $0x48] sm:$0xff]
        %v5806 = vld [vmem:[%s5792 + $0x50] sm:$0xf]
        %v5807 = vld [vmem:[%s5792 + $0x54] sm:$0xff]
        %v5808 = vld [vmem:[%s5792 + $0x5c] sm:$0xf]
        %v5809 = vld [vmem:[%s5792 + $0x60] sm:$0xff]
        %v5810 = vld [vmem:[%s5792 + $0x68] sm:$0xf]
        %v5811 = vld [vmem:[%s5792 + $0x6c] sm:$0xff]
        %v5812 = vld [vmem:[%s5792 + $0x74] sm:$0xf]
        %v5813 = vld [vmem:[%s5792 + $0x78] sm:$0xff]
        %v5814 = vld [vmem:[%s5792 + $0x80] sm:$0xf]
        %v5815 = vld [vmem:[%s5792 + $0x84] sm:$0xff]
        %v5816 = vld [vmem:[%s5792 + $0x8c] sm:$0xf]
        %v5817 = vld [vmem:[%s5792 + $0x90] sm:$0xff]
        %v5818 = vld [vmem:[%s5792 + $0x98] sm:$0xf]
        %v5819 = vld [vmem:[%s5792 + $0x9c] sm:$0xff]
        %v5820 = vld [vmem:[%s5792 + $0xa4] sm:$0xf]
        %v5821 = vld [vmem:[%s5792 + $0xa8] sm:$0xff]
        %v5822 = vld [vmem:[%s5792 + $0xb0] sm:$0xf]
        %v5823 = vld [vmem:[%s5792 + $0xb4] sm:$0xff]
        %v5824 = vld [vmem:[%s5792 + $0xbc] sm:$0xf]
        %v5825 = vld [vmem:[%s5792 + $0xc0] sm:$0xff]
        %v5826 = vld [vmem:[%s5792 + $0xc8] sm:$0xf]
        %v5827 = vld [vmem:[%s5792 + $0xcc] sm:$0xff]
        %v5828 = vld [vmem:[%s5792 + $0xd4] sm:$0xf]
        %v5829 = vld [vmem:[%s5792 + $0xd8] sm:$0xff]
        %v5830 = vld [vmem:[%s5792 + $0xe0] sm:$0xf]
        %v5831 = vld [vmem:[%s5792 + $0xe4] sm:$0xff]
        %v5832 = vld [vmem:[%s5792 + $0xec] sm:$0xf]
        %v5833 = vld [vmem:[%s5792 + $0xf0] sm:$0xff]
        %v5834 = vld [vmem:[%s5792 + $0xf8] sm:$0xf]
        %v5835 = vld [vmem:[%s5792 + $0xfc] sm:$0xff]
        %v5836 = vld [vmem:[%s5792 + $0x104] sm:$0xf]
        %v5837 = vld [vmem:[%s5792 + $0x108] sm:$0xff]
        %v5838 = vld [vmem:[%s5792 + $0x110] sm:$0xf]
        %v5839 = vld [vmem:[%s5792 + $0x114] sm:$0xff]
        %v5840 = vld [vmem:[%s5792 + $0x11c] sm:$0xf]
        %v5841 = vld [vmem:[%s5792 + $0x120] sm:$0xff]
        %v5842 = vld [vmem:[%s5792 + $0x128] sm:$0xf]
        %v5843 = vld [vmem:[%s5792 + $0x12c] sm:$0xff]
        %v5844 = vld [vmem:[%s5792 + $0x134] sm:$0xf]
        %v5845 = vld [vmem:[%s5792 + $0x138] sm:$0xff]
        %v5846 = vld [vmem:[%s5792 + $0x140] sm:$0xf]
        %v5847 = vld [vmem:[%s5792 + $0x144] sm:$0xff]
        %v5848 = vld [vmem:[%s5792 + $0x14c] sm:$0xf]
        %v5849 = vld [vmem:[%s5792 + $0x150] sm:$0xff]
        %v5850 = vld [vmem:[%s5792 + $0x158] sm:$0xf]
        %v5851 = vld [vmem:[%s5792 + $0x15c] sm:$0xff]
        %v5852 = vld [vmem:[%s5792 + $0x164] sm:$0xf]
        %v5853 = vld [vmem:[%s5792 + $0x168] sm:$0xff]
        %v5854 = vld [vmem:[%s5792 + $0x170] sm:$0xf]
        %v5855 = vld [vmem:[%s5792 + $0x174] sm:$0xff]
        %v5856 = vld [vmem:[%s5792 + $0x17c] sm:$0xf]
        %v5857 = vld [vmem:[%s5792 + $0x180] sm:$0xff]
        %v5858 = vld [vmem:[%s5792 + $0x188] sm:$0xf]
        %v5859 = vld [vmem:[%s5792 + $0x18c] sm:$0xff]
        %v5860 = vld [vmem:[%s5792 + $0x194] sm:$0xf]
        %v5861 = vld [vmem:[%s5792 + $0x198] sm:$0xff]
        %v5862 = vld [vmem:[%s5792 + $0x1a0] sm:$0xf]
        %v5863 = vld [vmem:[%s5792 + $0x1a4] sm:$0xff]
        %v5864 = vld [vmem:[%s5792 + $0x1ac] sm:$0xf]
        %v5865 = vld [vmem:[%s5792 + $0x1b0] sm:$0xff]
        %v5866 = vld [vmem:[%s5792 + $0x1b8] sm:$0xf]
        %v5867 = vld [vmem:[%s5792 + $0x1bc] sm:$0xff]
        %v5868 = vld [vmem:[%s5792 + $0x1c4] sm:$0xf]
        %v5869 = vld [vmem:[%s5792 + $0x1c8] sm:$0xff]
        %v5870 = vld [vmem:[%s5792 + $0x1d0] sm:$0xf]
        %v5871 = vld [vmem:[%s5792 + $0x1d4] sm:$0xff]
        %v5872 = vld [vmem:[%s5792 + $0x1dc] sm:$0xf]
        %v5873 = vld [vmem:[%s5792 + $0x1e0] sm:$0xff]
        %v5874 = vld [vmem:[%s5792 + $0x1e8] sm:$0xf]
        %v5875 = vld [vmem:[%s5792 + $0x1ec] sm:$0xff]
        %v5876 = vld [vmem:[%s5792 + $0x1f4] sm:$0xf]
        %v5877 = vld [vmem:[%s5792 + $0x1f8] sm:$0xff]
        %v5878 = vld [vmem:[%s5792 + $0x200] sm:$0xf]
        %v5879 = vld [vmem:[%s5792 + $0x204] sm:$0xff]
        %v5880 = vld [vmem:[%s5792 + $0x20c] sm:$0xf]
        %v5881 = vld [vmem:[%s5792 + $0x210] sm:$0xff]
        %v5882 = vld [vmem:[%s5792 + $0x218] sm:$0xf]
        %v5883 = vld [vmem:[%s5792 + $0x21c] sm:$0xff]
        %v5884 = vld [vmem:[%s5792 + $0x224] sm:$0xf]
        %v5885 = vld [vmem:[%s5792 + $0x228] sm:$0xff]
        %v5886 = vld [vmem:[%s5792 + $0x230] sm:$0xf]
        %v5887 = vld [vmem:[%s5792 + $0x234] sm:$0xff]
        %v5888 = vld [vmem:[%s5792 + $0x23c] sm:$0xf]
        %v5889 = vld [vmem:[%s5792 + $0x240] sm:$0xff]
        %v5890 = vld [vmem:[%s5792 + $0x248] sm:$0xf]
        %v5891 = vld [vmem:[%s5792 + $0x24c] sm:$0xff]
        %v5892 = vld [vmem:[%s5792 + $0x254] sm:$0xf]
        %v5893 = vld [vmem:[%s5792 + $0x258] sm:$0xff]
        %v5894 = vld [vmem:[%s5792 + $0x260] sm:$0xf]
        %v5895 = vld [vmem:[%s5792 + $0x264] sm:$0xff]
        %v5896 = vld [vmem:[%s5792 + $0x26c] sm:$0xf]
        %v5897 = vld [vmem:[%s5792 + $0x270] sm:$0xff]
        %v5898 = vld [vmem:[%s5792 + $0x278] sm:$0xf]
        %v5899 = vld [vmem:[%s5792 + $0x27c] sm:$0xff]
        %v5900 = vld [vmem:[%s5792 + $0x284] sm:$0xf]
        %v5901 = vld [vmem:[%s5792 + $0x288] sm:$0xff]
        %v5902 = vld [vmem:[%s5792 + $0x290] sm:$0xf]
        %v5903 = vld [vmem:[%s5792 + $0x294] sm:$0xff]
        %v5904 = vld [vmem:[%s5792 + $0x29c] sm:$0xf]
        %v5905 = vld [vmem:[%s5792 + $0x2a0] sm:$0xff]
        %v5906 = vld [vmem:[%s5792 + $0x2a8] sm:$0xf]
        %v5907 = vld [vmem:[%s5792 + $0x2ac] sm:$0xff]
        %v5908 = vld [vmem:[%s5792 + $0x2b4] sm:$0xf]
        %v5909 = vld [vmem:[%s5792 + $0x2b8] sm:$0xff]
        %v5910 = vld [vmem:[%s5792 + $0x2c0] sm:$0xf]
        %v5911 = vld [vmem:[%s5792 + $0x2c4] sm:$0xff]
        %v5912 = vld [vmem:[%s5792 + $0x2cc] sm:$0xf]
        %v5913 = vld [vmem:[%s5792 + $0x2d0] sm:$0xff]
        %v5914 = vld [vmem:[%s5792 + $0x2d8] sm:$0xf]
        %v5915 = vld [vmem:[%s5792 + $0x2dc] sm:$0xff]
        %v5916 = vld [vmem:[%s5792 + $0x2e4] sm:$0xf]
        %v5917 = vld [vmem:[%s5792 + $0x2e8] sm:$0xff]
        %v5918 = vld [vmem:[%s5792 + $0x2f0] sm:$0xf]
        %v5919 = vld [vmem:[%s5792 + $0x2f4] sm:$0xff]
        %v5920 = vld [vmem:[%s5792 + $0x2fc] sm:$0xf]
        %v6049 = vunpack.c.l.b16 %v5793
        %v6050 = vunpack.c.h.b16 %v5793
        %v6051 = vunpack.c.l.b16 %v5794
        %v6052 = vunpack.c.l.b16 %v5795
        %v6053 = vunpack.c.h.b16 %v5795
        %v6054 = vunpack.c.l.b16 %v5796
        %v6055 = vunpack.c.l.b16 %v5797
        %v6056 = vunpack.c.h.b16 %v5797
        %v6057 = vunpack.c.l.b16 %v5798
        %v6058 = vunpack.c.l.b16 %v5799
        %v6059 = vunpack.c.h.b16 %v5799
        %v6060 = vunpack.c.l.b16 %v5800
        %v6061 = vunpack.c.l.b16 %v5801
        %v6062 = vunpack.c.h.b16 %v5801
        %v6063 = vunpack.c.l.b16 %v5802
        %v6064 = vunpack.c.l.b16 %v5803
        %v6065 = vunpack.c.h.b16 %v5803
        %v6066 = vunpack.c.l.b16 %v5804
        %v6067 = vunpack.c.l.b16 %v5805
        %v6068 = vunpack.c.h.b16 %v5805
        %v6069 = vunpack.c.l.b16 %v5806
        %v6070 = vunpack.c.l.b16 %v5807
        %v6071 = vunpack.c.h.b16 %v5807
        %v6072 = vunpack.c.l.b16 %v5808
        %v6073 = vunpack.c.l.b16 %v5809
        %v6074 = vunpack.c.h.b16 %v5809
        %v6075 = vunpack.c.l.b16 %v5810
        %v6076 = vunpack.c.l.b16 %v5811
        %v6077 = vunpack.c.h.b16 %v5811
        %v6078 = vunpack.c.l.b16 %v5812
        %v6079 = vunpack.c.l.b16 %v5813
        %v6080 = vunpack.c.h.b16 %v5813
        %v6081 = vunpack.c.l.b16 %v5814
        %v6082 = vunpack.c.l.b16 %v5815
        %v6083 = vunpack.c.h.b16 %v5815
        %v6084 = vunpack.c.l.b16 %v5816
        %v6085 = vunpack.c.l.b16 %v5817
        %v6086 = vunpack.c.h.b16 %v5817
        %v6087 = vunpack.c.l.b16 %v5818
        %v6088 = vunpack.c.l.b16 %v5819
        %v6089 = vunpack.c.h.b16 %v5819
        %v6090 = vunpack.c.l.b16 %v5820
        %v6091 = vunpack.c.l.b16 %v5821
        %v6092 = vunpack.c.h.b16 %v5821
        %v6093 = vunpack.c.l.b16 %v5822
        %v6094 = vunpack.c.l.b16 %v5823
        %v6095 = vunpack.c.h.b16 %v5823
        %v6096 = vunpack.c.l.b16 %v5824
        %v6097 = vunpack.c.l.b16 %v5825
        %v6098 = vunpack.c.h.b16 %v5825
        %v6099 = vunpack.c.l.b16 %v5826
        %v6100 = vunpack.c.l.b16 %v5827
        %v6101 = vunpack.c.h.b16 %v5827
        %v6102 = vunpack.c.l.b16 %v5828
        %v6103 = vunpack.c.l.b16 %v5829
        %v6104 = vunpack.c.h.b16 %v5829
        %v6105 = vunpack.c.l.b16 %v5830
        %v6106 = vunpack.c.l.b16 %v5831
        %v6107 = vunpack.c.h.b16 %v5831
        %v6108 = vunpack.c.l.b16 %v5832
        %v6109 = vunpack.c.l.b16 %v5833
        %v6110 = vunpack.c.h.b16 %v5833
        %v6111 = vunpack.c.l.b16 %v5834
        %v6112 = vunpack.c.l.b16 %v5835
        %v6113 = vunpack.c.h.b16 %v5835
        %v6114 = vunpack.c.l.b16 %v5836
        %v6115 = vunpack.c.l.b16 %v5837
        %v6116 = vunpack.c.h.b16 %v5837
        %v6117 = vunpack.c.l.b16 %v5838
        %v6118 = vunpack.c.l.b16 %v5839
        %v6119 = vunpack.c.h.b16 %v5839
        %v6120 = vunpack.c.l.b16 %v5840
        %v6121 = vunpack.c.l.b16 %v5841
        %v6122 = vunpack.c.h.b16 %v5841
        %v6123 = vunpack.c.l.b16 %v5842
        %v6124 = vunpack.c.l.b16 %v5843
        %v6125 = vunpack.c.h.b16 %v5843
        %v6126 = vunpack.c.l.b16 %v5844
        %v6127 = vunpack.c.l.b16 %v5845
        %v6128 = vunpack.c.h.b16 %v5845
        %v6129 = vunpack.c.l.b16 %v5846
        %v6130 = vunpack.c.l.b16 %v5847
        %v6131 = vunpack.c.h.b16 %v5847
        %v6132 = vunpack.c.l.b16 %v5848
        %v6133 = vunpack.c.l.b16 %v5849
        %v6134 = vunpack.c.h.b16 %v5849
        %v6135 = vunpack.c.l.b16 %v5850
        %v6136 = vunpack.c.l.b16 %v5851
        %v6137 = vunpack.c.h.b16 %v5851
        %v6138 = vunpack.c.l.b16 %v5852
        %v6139 = vunpack.c.l.b16 %v5853
        %v6140 = vunpack.c.h.b16 %v5853
        %v6141 = vunpack.c.l.b16 %v5854
        %v6142 = vunpack.c.l.b16 %v5855
        %v6143 = vunpack.c.h.b16 %v5855
        %v6144 = vunpack.c.l.b16 %v5856
        %v6145 = vunpack.c.l.b16 %v5857
        %v6146 = vunpack.c.h.b16 %v5857
        %v6147 = vunpack.c.l.b16 %v5858
        %v6148 = vunpack.c.l.b16 %v5859
        %v6149 = vunpack.c.h.b16 %v5859
        %v6150 = vunpack.c.l.b16 %v5860
        %v6151 = vunpack.c.l.b16 %v5861
        %v6152 = vunpack.c.h.b16 %v5861
        %v6153 = vunpack.c.l.b16 %v5862
        %v6154 = vunpack.c.l.b16 %v5863
        %v6155 = vunpack.c.h.b16 %v5863
        %v6156 = vunpack.c.l.b16 %v5864
        %v6157 = vunpack.c.l.b16 %v5865
        %v6158 = vunpack.c.h.b16 %v5865
        %v6159 = vunpack.c.l.b16 %v5866
        %v6160 = vunpack.c.l.b16 %v5867
        %v6161 = vunpack.c.h.b16 %v5867
        %v6162 = vunpack.c.l.b16 %v5868
        %v6163 = vunpack.c.l.b16 %v5869
        %v6164 = vunpack.c.h.b16 %v5869
        %v6165 = vunpack.c.l.b16 %v5870
        %v6166 = vunpack.c.l.b16 %v5871
        %v6167 = vunpack.c.h.b16 %v5871
        %v6168 = vunpack.c.l.b16 %v5872
        %v6169 = vunpack.c.l.b16 %v5873
        %v6170 = vunpack.c.h.b16 %v5873
        %v6171 = vunpack.c.l.b16 %v5874
        %v6172 = vunpack.c.l.b16 %v5875
        %v6173 = vunpack.c.h.b16 %v5875
        %v6174 = vunpack.c.l.b16 %v5876
        %v6175 = vunpack.c.l.b16 %v5877
        %v6176 = vunpack.c.h.b16 %v5877
        %v6177 = vunpack.c.l.b16 %v5878
        %v6178 = vunpack.c.l.b16 %v5879
        %v6179 = vunpack.c.h.b16 %v5879
        %v6180 = vunpack.c.l.b16 %v5880
        %v6181 = vunpack.c.l.b16 %v5881
        %v6182 = vunpack.c.h.b16 %v5881
        %v6183 = vunpack.c.l.b16 %v5882
        %v6184 = vunpack.c.l.b16 %v5883
        %v6185 = vunpack.c.h.b16 %v5883
        %v6186 = vunpack.c.l.b16 %v5884
        %v6187 = vunpack.c.l.b16 %v5885
        %v6188 = vunpack.c.h.b16 %v5885
        %v6189 = vunpack.c.l.b16 %v5886
        %v6190 = vunpack.c.l.b16 %v5887
        %v6191 = vunpack.c.h.b16 %v5887
        %v6192 = vunpack.c.l.b16 %v5888
        %v6193 = vunpack.c.l.b16 %v5889
        %v6194 = vunpack.c.h.b16 %v5889
        %v6195 = vunpack.c.l.b16 %v5890
        %v6196 = vunpack.c.l.b16 %v5891
        %v6197 = vunpack.c.h.b16 %v5891
        %v6198 = vunpack.c.l.b16 %v5892
        %v6199 = vunpack.c.l.b16 %v5893
        %v6200 = vunpack.c.h.b16 %v5893
        %v6201 = vunpack.c.l.b16 %v5894
        %v6202 = vunpack.c.l.b16 %v5895
        %v6203 = vunpack.c.h.b16 %v5895
        %v6204 = vunpack.c.l.b16 %v5896
        %v6205 = vunpack.c.l.b16 %v5897
        %v6206 = vunpack.c.h.b16 %v5897
        %v6207 = vunpack.c.l.b16 %v5898
        %v6208 = vunpack.c.l.b16 %v5899
        %v6209 = vunpack.c.h.b16 %v5899
        %v6210 = vunpack.c.l.b16 %v5900
        %v6211 = vunpack.c.l.b16 %v5901
        %v6212 = vunpack.c.h.b16 %v5901
        %v6213 = vunpack.c.l.b16 %v5902
        %v6214 = vunpack.c.l.b16 %v5903
        %v6215 = vunpack.c.h.b16 %v5903
        %v6216 = vunpack.c.l.b16 %v5904
        %v6217 = vunpack.c.l.b16 %v5905
        %v6218 = vunpack.c.h.b16 %v5905
        %v6219 = vunpack.c.l.b16 %v5906
        %v6220 = vunpack.c.l.b16 %v5907
        %v6221 = vunpack.c.h.b16 %v5907
        %v6222 = vunpack.c.l.b16 %v5908
        %v6223 = vunpack.c.l.b16 %v5909
        %v6224 = vunpack.c.h.b16 %v5909
        %v6225 = vunpack.c.l.b16 %v5910
        %v6226 = vunpack.c.l.b16 %v5911
        %v6227 = vunpack.c.h.b16 %v5911
        %v6228 = vunpack.c.l.b16 %v5912
        %v6229 = vunpack.c.l.b16 %v5913
        %v6230 = vunpack.c.h.b16 %v5913
        %v6231 = vunpack.c.l.b16 %v5914
        %v6232 = vunpack.c.l.b16 %v5915
        %v6233 = vunpack.c.h.b16 %v5915
        %v6234 = vunpack.c.l.b16 %v5916
        %v6235 = vunpack.c.l.b16 %v5917
        %v6236 = vunpack.c.h.b16 %v5917
        %v6237 = vunpack.c.l.b16 %v5918
        %v6238 = vunpack.c.l.b16 %v5919
        %v6239 = vunpack.c.h.b16 %v5919
        %v6240 = vunpack.c.l.b16 %v5920
        %v6241 = vpack.c.b16 %v6052, %v6049
        %v6242 = vpack.c.b16 %v6053, %v6050
        %v6243 = vpack.c.b16 %v6054, %v6051
        %v6244 = vpack.c.b16 %v6058, %v6055
        %v6245 = vpack.c.b16 %v6059, %v6056
        %v6246 = vpack.c.b16 %v6060, %v6057
        %v6247 = vpack.c.b16 %v6064, %v6061
        %v6248 = vpack.c.b16 %v6065, %v6062
        %v6249 = vpack.c.b16 %v6066, %v6063
        %v6250 = vpack.c.b16 %v6070, %v6067
        %v6251 = vpack.c.b16 %v6071, %v6068
        %v6252 = vpack.c.b16 %v6072, %v6069
        %v6253 = vpack.c.b16 %v6076, %v6073
        %v6254 = vpack.c.b16 %v6077, %v6074
        %v6255 = vpack.c.b16 %v6078, %v6075
        %v6256 = vpack.c.b16 %v6082, %v6079
        %v6257 = vpack.c.b16 %v6083, %v6080
        %v6258 = vpack.c.b16 %v6084, %v6081
        %v6259 = vpack.c.b16 %v6088, %v6085
        %v6260 = vpack.c.b16 %v6089, %v6086
        %v6261 = vpack.c.b16 %v6090, %v6087
        %v6262 = vpack.c.b16 %v6094, %v6091
        %v6263 = vpack.c.b16 %v6095, %v6092
        %v6264 = vpack.c.b16 %v6096, %v6093
        %v6265 = vpack.c.b16 %v6100, %v6097
        %v6266 = vpack.c.b16 %v6101, %v6098
        %v6267 = vpack.c.b16 %v6102, %v6099
        %v6268 = vpack.c.b16 %v6106, %v6103
        %v6269 = vpack.c.b16 %v6107, %v6104
        %v6270 = vpack.c.b16 %v6108, %v6105
        %v6271 = vpack.c.b16 %v6112, %v6109
        %v6272 = vpack.c.b16 %v6113, %v6110
        %v6273 = vpack.c.b16 %v6114, %v6111
        %v6274 = vpack.c.b16 %v6118, %v6115
        %v6275 = vpack.c.b16 %v6119, %v6116
        %v6276 = vpack.c.b16 %v6120, %v6117
        %v6277 = vpack.c.b16 %v6124, %v6121
        %v6278 = vpack.c.b16 %v6125, %v6122
        %v6279 = vpack.c.b16 %v6126, %v6123
        %v6280 = vpack.c.b16 %v6130, %v6127
        %v6281 = vpack.c.b16 %v6131, %v6128
        %v6282 = vpack.c.b16 %v6132, %v6129
        %v6283 = vpack.c.b16 %v6136, %v6133
        %v6284 = vpack.c.b16 %v6137, %v6134
        %v6285 = vpack.c.b16 %v6138, %v6135
        %v6286 = vpack.c.b16 %v6142, %v6139
        %v6287 = vpack.c.b16 %v6143, %v6140
        %v6288 = vpack.c.b16 %v6144, %v6141
        %v6289 = vpack.c.b16 %v6148, %v6145
        %v6290 = vpack.c.b16 %v6149, %v6146
        %v6291 = vpack.c.b16 %v6150, %v6147
        %v6292 = vpack.c.b16 %v6154, %v6151
        %v6293 = vpack.c.b16 %v6155, %v6152
        %v6294 = vpack.c.b16 %v6156, %v6153
        %v6295 = vpack.c.b16 %v6160, %v6157
        %v6296 = vpack.c.b16 %v6161, %v6158
        %v6297 = vpack.c.b16 %v6162, %v6159
        %v6298 = vpack.c.b16 %v6166, %v6163
        %v6299 = vpack.c.b16 %v6167, %v6164
        %v6300 = vpack.c.b16 %v6168, %v6165
        %v6301 = vpack.c.b16 %v6172, %v6169
        %v6302 = vpack.c.b16 %v6173, %v6170
        %v6303 = vpack.c.b16 %v6174, %v6171
        %v6304 = vpack.c.b16 %v6178, %v6175
        %v6305 = vpack.c.b16 %v6179, %v6176
        %v6306 = vpack.c.b16 %v6180, %v6177
        %v6307 = vpack.c.b16 %v6184, %v6181
        %v6308 = vpack.c.b16 %v6185, %v6182
        %v6309 = vpack.c.b16 %v6186, %v6183
        %v6310 = vpack.c.b16 %v6190, %v6187
        %v6311 = vpack.c.b16 %v6191, %v6188
        %v6312 = vpack.c.b16 %v6192, %v6189
        %v6313 = vpack.c.b16 %v6196, %v6193
        %v6314 = vpack.c.b16 %v6197, %v6194
        %v6315 = vpack.c.b16 %v6198, %v6195
        %v6316 = vpack.c.b16 %v6202, %v6199
        %v6317 = vpack.c.b16 %v6203, %v6200
        %v6318 = vpack.c.b16 %v6204, %v6201
        %v6319 = vpack.c.b16 %v6208, %v6205
        %v6320 = vpack.c.b16 %v6209, %v6206
        %v6321 = vpack.c.b16 %v6210, %v6207
        %v6322 = vpack.c.b16 %v6214, %v6211
        %v6323 = vpack.c.b16 %v6215, %v6212
        %v6324 = vpack.c.b16 %v6216, %v6213
        %v6325 = vpack.c.b16 %v6220, %v6217
        %v6326 = vpack.c.b16 %v6221, %v6218
        %v6327 = vpack.c.b16 %v6222, %v6219
        %v6328 = vpack.c.b16 %v6226, %v6223
        %v6329 = vpack.c.b16 %v6227, %v6224
        %v6330 = vpack.c.b16 %v6228, %v6225
        %v6331 = vpack.c.b16 %v6232, %v6229
        %v6332 = vpack.c.b16 %v6233, %v6230
        %v6333 = vpack.c.b16 %v6234, %v6231
        %v6334 = vpack.c.b16 %v6238, %v6235
        %v6335 = vpack.c.b16 %v6239, %v6236
        %v6336 = vpack.c.b16 %v6240, %v6237
        %6433 = vmatprep.subr.bf16.mxu0 %v6242
        %6434 = vmatpush1.bf16.msra.mxu0 %v6241
        %6435 = vmatprep.subr.bf16.mxu0 %v6245
        %6436 = vmatpush1.bf16.msra.mxu0 %v6244
        %6437 = vmatprep.subr.bf16.mxu0 %v6248
        %6438 = vmatpush1.bf16.msra.mxu0 %v6247
        %6439 = vmatprep.subr.bf16.mxu0 %v6251
        %6440 = vmatpush1.bf16.msra.mxu0 %v6250
        %6441 = vmatprep.subr.bf16.mxu0 %v6254
        %6442 = vmatpush1.bf16.msra.mxu0 %v6253
        %6443 = vmatprep.subr.bf16.mxu0 %v6257
        %6444 = vmatpush1.bf16.msra.mxu0 %v6256
        %6445 = vmatprep.subr.bf16.mxu0 %v6260
        %6446 = vmatpush1.bf16.msra.mxu0 %v6259
        %6447 = vmatprep.subr.bf16.mxu0 %v6263
        %6448 = vmatpush1.bf16.msra.mxu0 %v6262
        %6449 = vmatprep.subr.bf16.mxu0 %v6266
        %6450 = vmatpush1.bf16.msra.mxu0 %v6265
        %6451 = vmatprep.subr.bf16.mxu0 %v6269
        %6452 = vmatpush1.bf16.msra.mxu0 %v6268
        %6453 = vmatprep.subr.bf16.mxu0 %v6272
        %6454 = vmatpush1.bf16.msra.mxu0 %v6271
        %6455 = vmatprep.subr.bf16.mxu0 %v6275
        %6456 = vmatpush1.bf16.msra.mxu0 %v6274
        %6457 = vmatprep.subr.bf16.mxu0 %v6278
        %6458 = vmatpush1.bf16.msra.mxu0 %v6277
        %6459 = vmatprep.subr.bf16.mxu0 %v6281
        %6460 = vmatpush1.bf16.msra.mxu0 %v6280
        %6461 = vmatprep.subr.bf16.mxu0 %v6284
        %6462 = vmatpush1.bf16.msra.mxu0 %v6283
        %6463 = vmatprep.subr.bf16.mxu0 %v6287
        %6464 = vmatpush1.bf16.msra.mxu0 %v6286
        %6465 = vmatprep.mubr.bf16.mxu0 %v3301
        %6466 = vmatmul.mubr.bf16.gmra.mrb[0].mxu0 %v3300
        %v6467 = vpop.f32.mrb[0].mxu0
        %v6468 = vadd.f32 %v3437, %v6467
        %v6469 = vpop.f32.mrb[0].mxu0
        %v6470 = vadd.f32 %v3441, %v6469
        %v6471 = vpop.f32.mrb[0].mxu0
        %v6472 = vadd.f32 %v3437, %v6471
        %v6473 = vpop.f32.mrb[0].mxu0
        %v6474 = vadd.f32 %v3441, %v6473
        %6475 = vdwg.mxu0
        %6476 = vmatprep.subr.bf16.mxu0 %v6290
        %6477 = vmatpush1.bf16.msra.mxu0 %v6289
        %6478 = vmatprep.subr.bf16.mxu0 %v6293
        %6479 = vmatpush1.bf16.msra.mxu0 %v6292
        %6480 = vmatprep.subr.bf16.mxu0 %v6296
        %6481 = vmatpush1.bf16.msra.mxu0 %v6295
        %6482 = vmatprep.subr.bf16.mxu0 %v6299
        %6483 = vmatpush1.bf16.msra.mxu0 %v6298
        %6484 = vmatprep.subr.bf16.mxu0 %v6302
        %6485 = vmatpush1.bf16.msra.mxu0 %v6301
        %6486 = vmatprep.subr.bf16.mxu0 %v6305
        %6487 = vmatpush1.bf16.msra.mxu0 %v6304
        %6488 = vmatprep.subr.bf16.mxu0 %v6308
        %6489 = vmatpush1.bf16.msra.mxu0 %v6307
        %6490 = vmatprep.subr.bf16.mxu0 %v6311
        %6491 = vmatpush1.bf16.msra.mxu0 %v6310
        %6492 = vmatprep.subr.bf16.mxu0 %v6314
        %6493 = vmatpush1.bf16.msra.mxu0 %v6313
        %6494 = vmatprep.subr.bf16.mxu0 %v6317
        %6495 = vmatpush1.bf16.msra.mxu0 %v6316
        %6496 = vmatprep.subr.bf16.mxu0 %v6320
        %6497 = vmatpush1.bf16.msra.mxu0 %v6319
        %6498 = vmatprep.subr.bf16.mxu0 %v6323
        %6499 = vmatpush1.bf16.msra.mxu0 %v6322
        %6500 = vmatprep.subr.bf16.mxu0 %v6326
        %6501 = vmatpush1.bf16.msra.mxu0 %v6325
        %6502 = vmatprep.subr.bf16.mxu0 %v6329
        %6503 = vmatpush1.bf16.msra.mxu0 %v6328
        %6504 = vmatprep.subr.bf16.mxu0 %v6332
        %6505 = vmatpush1.bf16.msra.mxu0 %v6331
        %6506 = vmatprep.subr.bf16.mxu0 %v6335
        %6507 = vmatpush1.bf16.msra.mxu0 %v6334
        %6508 = vmatprep.mubr.bf16.mxu0 %v3303
        %6509 = vmatmul.mubr.bf16.gmra.mrb[0].mxu0 %v3302
        %v6510 = vpop.f32.mrb[0].mxu0
        %v6511 = vadd.f32 %v6468, %v6510
        %v6512 = vpop.f32.mrb[0].mxu0
        %v6513 = vadd.f32 %v6470, %v6512
        %v6514 = vpop.f32.mrb[0].mxu0
        %v6515 = vadd.f32 %v6472, %v6514
        %v6516 = vpop.f32.mrb[0].mxu0
        %v6517 = vadd.f32 %v6474, %v6516
        %6518 = vdwg.mxu0
        %6519 = vmatprep.subr.bf16.mxu0 0
        %6520 = vmatpush1.bf16.msra.mxu0 %v6243
        %6521 = vmatprep.subr.bf16.mxu0 0
        %6522 = vmatpush1.bf16.msra.mxu0 %v6246
        %6523 = vmatprep.subr.bf16.mxu0 0
        %6524 = vmatpush1.bf16.msra.mxu0 %v6249
        %6525 = vmatprep.subr.bf16.mxu0 0
        %6526 = vmatpush1.bf16.msra.mxu0 %v6252
        %6527 = vmatprep.subr.bf16.mxu0 0
        %6528 = vmatpush1.bf16.msra.mxu0 %v6255
        %6529 = vmatprep.subr.bf16.mxu0 0
        %6530 = vmatpush1.bf16.msra.mxu0 %v6258
        %6531 = vmatprep.subr.bf16.mxu0 0
        %6532 = vmatpush1.bf16.msra.mxu0 %v6261
        %6533 = vmatprep.subr.bf16.mxu0 0
        %6534 = vmatpush1.bf16.msra.mxu0 %v6264
        %6535 = vmatprep.subr.bf16.mxu0 0
        %6536 = vmatpush1.bf16.msra.mxu0 %v6267
        %6537 = vmatprep.subr.bf16.mxu0 0
        %6538 = vmatpush1.bf16.msra.mxu0 %v6270
        %6539 = vmatprep.subr.bf16.mxu0 0
        %6540 = vmatpush1.bf16.msra.mxu0 %v6273
        %6541 = vmatprep.subr.bf16.mxu0 0
        %6542 = vmatpush1.bf16.msra.mxu0 %v6276
        %6543 = vmatprep.subr.bf16.mxu0 0
        %6544 = vmatpush1.bf16.msra.mxu0 %v6279
        %6545 = vmatprep.subr.bf16.mxu0 0
        %6546 = vmatpush1.bf16.msra.mxu0 %v6282
        %6547 = vmatprep.subr.bf16.mxu0 0
        %6548 = vmatpush1.bf16.msra.mxu0 %v6285
        %6549 = vmatprep.subr.bf16.mxu0 0
        %6550 = vmatpush1.bf16.msra.mxu0 %v6288
        %6551 = vmatprep.mubr.bf16.mxu0 %v3301
        %6552 = vmatmul.mubr.bf16.gmra.mrb[0].mxu0 %v3300
        %v6553 = vpop.f32.mrb[0].mxu0
        %v6554 = vadd.f32 %v3445, %v6553
        %v6555 = vpop.f32.mrb[0].mxu0
        %v6556 = vpop.f32.mrb[0].mxu0
        %v6557 = vadd.f32 %v3445, %v6556
        %v6558 = vpop.f32.mrb[0].mxu0
        %6559 = vdwg.mxu0
        %6560 = vmatprep.subr.bf16.mxu0 0
        %6561 = vmatpush1.bf16.msra.mxu0 %v6291
        %6562 = vmatprep.subr.bf16.mxu0 0
        %6563 = vmatpush1.bf16.msra.mxu0 %v6294
        %6564 = vmatprep.subr.bf16.mxu0 0
        %6565 = vmatpush1.bf16.msra.mxu0 %v6297
        %6566 = vmatprep.subr.bf16.mxu0 0
        %6567 = vmatpush1.bf16.msra.mxu0 %v6300
        %6568 = vmatprep.subr.bf16.mxu0 0
        %6569 = vmatpush1.bf16.msra.mxu0 %v6303
        %6570 = vmatprep.subr.bf16.mxu0 0
        %6571 = vmatpush1.bf16.msra.mxu0 %v6306
        %6572 = vmatprep.subr.bf16.mxu0 0
        %6573 = vmatpush1.bf16.msra.mxu0 %v6309
        %6574 = vmatprep.subr.bf16.mxu0 0
        %6575 = vmatpush1.bf16.msra.mxu0 %v6312
        %6576 = vmatprep.subr.bf16.mxu0 0
        %6577 = vmatpush1.bf16.msra.mxu0 %v6315
        %6578 = vmatprep.subr.bf16.mxu0 0
        %6579 = vmatpush1.bf16.msra.mxu0 %v6318
        %6580 = vmatprep.subr.bf16.mxu0 0
        %6581 = vmatpush1.bf16.msra.mxu0 %v6321
        %6582 = vmatprep.subr.bf16.mxu0 0
        %6583 = vmatpush1.bf16.msra.mxu0 %v6324
        %6584 = vmatprep.subr.bf16.mxu0 0
        %6585 = vmatpush1.bf16.msra.mxu0 %v6327
        %6586 = vmatprep.subr.bf16.mxu0 0
        %6587 = vmatpush1.bf16.msra.mxu0 %v6330
        %6588 = vmatprep.subr.bf16.mxu0 0
        %6589 = vmatpush1.bf16.msra.mxu0 %v6333
        %6590 = vmatprep.subr.bf16.mxu0 0
        %6591 = vmatpush1.bf16.msra.mxu0 %v6336
        %6592 = vmatprep.mubr.bf16.mxu0 %v3303
        %6593 = vmatmul.mubr.bf16.gmra.mrb[0].mxu0 %v3302
        %v6594 = vpop.f32.mrb[0].mxu0
        %v6595 = vadd.f32 %v6554, %v6594
        %v6596 = vpop.f32.mrb[0].mxu0
        %v6597 = vpop.f32.mrb[0].mxu0
        %v6598 = vadd.f32 %v6557, %v6597
        %v6599 = vpop.f32.mrb[0].mxu0
        %6600 = vdwg.mxu0
        %v6601 = vmul.f32 %v6511, 0.01
        %v6602 = vmul.f32 %v6513, 0.01
        %v6603 = vmul.f32 %v6595, 0.01
        %v6604 = vmul.f32 %v6515, 0.01
        %v6605 = vmul.f32 %v6517, 0.01
        %v6606 = vmul.f32 %v6598, 0.01
        %v6607 = vmax.f32 %v6511, %v6601
        %v6608 = vmax.f32 %v6513, %v6602
        %v6609 = vmax.f32 %v6595, %v6603
        %v6610 = vmax.f32 %v6515, %v6604
        %v6611 = vmax.f32 %v6517, %v6605
        %v6612 = vmax.f32 %v6598, %v6606
        %v6613 = vpack.c.bf16 %v6610, %v6607
        %v6614 = vpack.c.bf16 %v6611, %v6608
        %v6615 = vpack.c.bf16 %v6612, %v6609
        %v6616 = vld [vmem:[#allocation14] sm:$0xf]
        %v6617 = vld [vmem:[#allocation14 + $0x4] sm:$0xf]
        %v6618 = vld [vmem:[#allocation14 + $0x8] sm:$0xf]
        %v6619 = vld [vmem:[#allocation14 + $0xc] sm:$0xf]
        %v6620 = vld [vmem:[#allocation14 + $0x10] sm:$0xf]
        %v6621 = vld [vmem:[#allocation14 + $0x14] sm:$0xf]
        %v6622 = vld [vmem:[#allocation14 + $0x18] sm:$0xf]
        %v6623 = vld [vmem:[#allocation14 + $0x1c] sm:$0xf]
        %v6624 = vld [vmem:[#allocation14 + $0x20] sm:$0xf]
        %v6625 = vld [vmem:[#allocation14 + $0x24] sm:$0xf]
        %v6626 = vld [vmem:[#allocation14 + $0x28] sm:$0xf]
        %v6627 = vld [vmem:[#allocation14 + $0x2c] sm:$0xf]
        %v6628 = vld [vmem:[#allocation14 + $0x30] sm:$0xf]
        %v6629 = vld [vmem:[#allocation14 + $0x34] sm:$0xf]
        %v6630 = vld [vmem:[#allocation14 + $0x38] sm:$0xf]
        %v6631 = vld [vmem:[#allocation14 + $0x3c] sm:$0xf]
        %v6632 = vld [vmem:[#allocation14 + $0x40] sm:$0xf]
        %v6633 = vld [vmem:[#allocation14 + $0x44] sm:$0xf]
        %v6634 = vld [vmem:[#allocation14 + $0x48] sm:$0xf]
        %v6635 = vld [vmem:[#allocation14 + $0x4c] sm:$0xf]
        %v6636 = vld [vmem:[#allocation14 + $0x50] sm:$0xf]
        %v6637 = vld [vmem:[#allocation14 + $0x54] sm:$0xf]
        %v6638 = vld [vmem:[#allocation14 + $0x58] sm:$0xf]
        %v6639 = vld [vmem:[#allocation14 + $0x5c] sm:$0xf]
        %v6640 = vld [vmem:[#allocation14 + $0x60] sm:$0xf]
        %v6641 = vld [vmem:[#allocation14 + $0x64] sm:$0xf]
        %v6642 = vld [vmem:[#allocation14 + $0x68] sm:$0xf]
        %v6643 = vld [vmem:[#allocation14 + $0x6c] sm:$0xf]
        %v6644 = vld [vmem:[#allocation14 + $0x70] sm:$0xf]
        %v6645 = vld [vmem:[#allocation14 + $0x74] sm:$0xf]
        %v6646 = vld [vmem:[#allocation14 + $0x78] sm:$0xf]
        %v6647 = vld [vmem:[#allocation14 + $0x7c] sm:$0xf]
        %v6648 = vld [vmem:[#allocation14 + $0x80] sm:$0xf]
        %v6649 = vld [vmem:[#allocation14 + $0x84] sm:$0xf]
        %v6650 = vld [vmem:[#allocation14 + $0x88] sm:$0xf]
        %v6651 = vld [vmem:[#allocation14 + $0x8c] sm:$0xf]
        %v6652 = vld [vmem:[#allocation14 + $0x90] sm:$0xf]
        %v6653 = vld [vmem:[#allocation14 + $0x94] sm:$0xf]
        %v6654 = vld [vmem:[#allocation14 + $0x98] sm:$0xf]
        %v6655 = vld [vmem:[#allocation14 + $0x9c] sm:$0xf]
        %v6656 = vld [vmem:[#allocation14 + $0xa0] sm:$0xf]
        %v6657 = vld [vmem:[#allocation14 + $0xa4] sm:$0xf]
        %v6658 = vld [vmem:[#allocation14 + $0xa8] sm:$0xf]
        %v6659 = vld [vmem:[#allocation14 + $0xac] sm:$0xf]
        %v6660 = vld [vmem:[#allocation14 + $0xb0] sm:$0xf]
        %v6661 = vld [vmem:[#allocation14 + $0xb4] sm:$0xf]
        %v6662 = vld [vmem:[#allocation14 + $0xb8] sm:$0xf]
        %v6663 = vld [vmem:[#allocation14 + $0xbc] sm:$0xf]
        %v6664 = vld [vmem:[#allocation14 + $0xc0] sm:$0xf]
        %v6665 = vld [vmem:[#allocation14 + $0xc4] sm:$0xf]
        %v6666 = vld [vmem:[#allocation14 + $0xc8] sm:$0xf]
        %v6667 = vld [vmem:[#allocation14 + $0xcc] sm:$0xf]
        %v6668 = vld [vmem:[#allocation14 + $0xd0] sm:$0xf]
        %v6669 = vld [vmem:[#allocation14 + $0xd4] sm:$0xf]
        %v6670 = vld [vmem:[#allocation14 + $0xd8] sm:$0xf]
        %v6671 = vld [vmem:[#allocation14 + $0xdc] sm:$0xf]
        %v6672 = vld [vmem:[#allocation14 + $0xe0] sm:$0xf]
        %v6673 = vld [vmem:[#allocation14 + $0xe4] sm:$0xf]
        %v6674 = vld [vmem:[#allocation14 + $0xe8] sm:$0xf]
        %v6675 = vld [vmem:[#allocation14 + $0xec] sm:$0xf]
        %v6676 = vld [vmem:[#allocation14 + $0xf0] sm:$0xf]
        %v6677 = vld [vmem:[#allocation14 + $0xf4] sm:$0xf]
        %v6678 = vld [vmem:[#allocation14 + $0xf8] sm:$0xf]
        %v6679 = vld [vmem:[#allocation14 + $0xfc] sm:$0xf]
        %v6680 = vld [vmem:[#allocation14 + $0x100] sm:$0xf]
        %v6681 = vld [vmem:[#allocation14 + $0x104] sm:$0xf]
        %v6682 = vld [vmem:[#allocation14 + $0x108] sm:$0xf]
        %v6683 = vld [vmem:[#allocation14 + $0x10c] sm:$0xf]
        %v6684 = vld [vmem:[#allocation14 + $0x110] sm:$0xf]
        %v6685 = vld [vmem:[#allocation14 + $0x114] sm:$0xf]
        %v6686 = vld [vmem:[#allocation14 + $0x118] sm:$0xf]
        %v6687 = vld [vmem:[#allocation14 + $0x11c] sm:$0xf]
        %v6688 = vld [vmem:[#allocation14 + $0x120] sm:$0xf]
        %v6689 = vld [vmem:[#allocation14 + $0x124] sm:$0xf]
        %v6690 = vld [vmem:[#allocation14 + $0x128] sm:$0xf]
        %v6691 = vld [vmem:[#allocation14 + $0x12c] sm:$0xf]
        %v6692 = vld [vmem:[#allocation14 + $0x130] sm:$0xf]
        %v6693 = vld [vmem:[#allocation14 + $0x134] sm:$0xf]
        %v6694 = vld [vmem:[#allocation14 + $0x138] sm:$0xf]
        %v6695 = vld [vmem:[#allocation14 + $0x13c] sm:$0xf]
        %v6696 = vld [vmem:[#allocation14 + $0x140] sm:$0xf]
        %v6697 = vld [vmem:[#allocation14 + $0x144] sm:$0xf]
        %v6698 = vld [vmem:[#allocation14 + $0x148] sm:$0xf]
        %v6699 = vld [vmem:[#allocation14 + $0x14c] sm:$0xf]
        %v6700 = vld [vmem:[#allocation14 + $0x150] sm:$0xf]
        %v6701 = vld [vmem:[#allocation14 + $0x154] sm:$0xf]
        %v6702 = vld [vmem:[#allocation14 + $0x158] sm:$0xf]
        %v6703 = vld [vmem:[#allocation14 + $0x15c] sm:$0xf]
        %v6704 = vld [vmem:[#allocation14 + $0x160] sm:$0xf]
        %v6705 = vld [vmem:[#allocation14 + $0x164] sm:$0xf]
        %v6706 = vld [vmem:[#allocation14 + $0x168] sm:$0xf]
        %v6707 = vld [vmem:[#allocation14 + $0x16c] sm:$0xf]
        %v6708 = vld [vmem:[#allocation14 + $0x170] sm:$0xf]
        %v6709 = vld [vmem:[#allocation14 + $0x174] sm:$0xf]
        %v6710 = vld [vmem:[#allocation14 + $0x178] sm:$0xf]
        %v6711 = vld [vmem:[#allocation14 + $0x17c] sm:$0xf]
        %v6712 = vld [vmem:[#allocation14 + $0x180] sm:$0xf]
        %v6713 = vld [vmem:[#allocation14 + $0x184] sm:$0xf]
        %v6714 = vld [vmem:[#allocation14 + $0x188] sm:$0xf]
        %v6715 = vld [vmem:[#allocation14 + $0x18c] sm:$0xf]
        %v6716 = vld [vmem:[#allocation14 + $0x190] sm:$0xf]
        %v6717 = vld [vmem:[#allocation14 + $0x194] sm:$0xf]
        %v6718 = vld [vmem:[#allocation14 + $0x198] sm:$0xf]
        %v6719 = vld [vmem:[#allocation14 + $0x19c] sm:$0xf]
        %v6720 = vld [vmem:[#allocation14 + $0x1a0] sm:$0xf]
        %v6721 = vld [vmem:[#allocation14 + $0x1a4] sm:$0xf]
        %v6722 = vld [vmem:[#allocation14 + $0x1a8] sm:$0xf]
        %v6723 = vld [vmem:[#allocation14 + $0x1ac] sm:$0xf]
        %v6724 = vld [vmem:[#allocation14 + $0x1b0] sm:$0xf]
        %v6725 = vld [vmem:[#allocation14 + $0x1b4] sm:$0xf]
        %v6726 = vld [vmem:[#allocation14 + $0x1b8] sm:$0xf]
        %v6727 = vld [vmem:[#allocation14 + $0x1bc] sm:$0xf]
        %v6728 = vld [vmem:[#allocation14 + $0x1c0] sm:$0xf]
        %v6729 = vld [vmem:[#allocation14 + $0x1c4] sm:$0xf]
        %v6730 = vld [vmem:[#allocation14 + $0x1c8] sm:$0xf]
        %v6731 = vld [vmem:[#allocation14 + $0x1cc] sm:$0xf]
        %v6732 = vld [vmem:[#allocation14 + $0x1d0] sm:$0xf]
        %v6733 = vld [vmem:[#allocation14 + $0x1d4] sm:$0xf]
        %v6734 = vld [vmem:[#allocation14 + $0x1d8] sm:$0xf]
        %v6735 = vld [vmem:[#allocation14 + $0x1dc] sm:$0xf]
        %v6736 = vld [vmem:[#allocation14 + $0x1e0] sm:$0xf]
        %v6737 = vld [vmem:[#allocation14 + $0x1e4] sm:$0xf]
        %v6738 = vld [vmem:[#allocation14 + $0x1e8] sm:$0xf]
        %v6739 = vld [vmem:[#allocation14 + $0x1ec] sm:$0xf]
        %v6740 = vld [vmem:[#allocation14 + $0x1f0] sm:$0xf]
        %v6741 = vld [vmem:[#allocation14 + $0x1f4] sm:$0xf]
        %v6742 = vld [vmem:[#allocation14 + $0x1f8] sm:$0xf]
        %v6743 = vld [vmem:[#allocation14 + $0x1fc] sm:$0xf]
        %v6744 = vld [vmem:[#allocation14 + $0x200] sm:$0xf]
        %v6745 = vld [vmem:[#allocation14 + $0x204] sm:$0xf]
        %v6746 = vld [vmem:[#allocation14 + $0x208] sm:$0xf]
        %v6747 = vld [vmem:[#allocation14 + $0x20c] sm:$0xf]
        %v6748 = vld [vmem:[#allocation14 + $0x210] sm:$0xf]
        %v6749 = vld [vmem:[#allocation14 + $0x214] sm:$0xf]
        %v6750 = vld [vmem:[#allocation14 + $0x218] sm:$0xf]
        %v6751 = vld [vmem:[#allocation14 + $0x21c] sm:$0xf]
        %v6752 = vld [vmem:[#allocation14 + $0x220] sm:$0xf]
        %v6753 = vld [vmem:[#allocation14 + $0x224] sm:$0xf]
        %v6754 = vld [vmem:[#allocation14 + $0x228] sm:$0xf]
        %v6755 = vld [vmem:[#allocation14 + $0x22c] sm:$0xf]
        %v6756 = vld [vmem:[#allocation14 + $0x230] sm:$0xf]
        %v6757 = vld [vmem:[#allocation14 + $0x234] sm:$0xf]
        %v6758 = vld [vmem:[#allocation14 + $0x238] sm:$0xf]
        %v6759 = vld [vmem:[#allocation14 + $0x23c] sm:$0xf]
        %v6760 = vld [vmem:[#allocation14 + $0x240] sm:$0xf]
        %v6761 = vld [vmem:[#allocation14 + $0x244] sm:$0xf]
        %v6762 = vld [vmem:[#allocation14 + $0x248] sm:$0xf]
        %v6763 = vld [vmem:[#allocation14 + $0x24c] sm:$0xf]
        %v6764 = vld [vmem:[#allocation14 + $0x250] sm:$0xf]
        %v6765 = vld [vmem:[#allocation14 + $0x254] sm:$0xf]
        %v6766 = vld [vmem:[#allocation14 + $0x258] sm:$0xf]
        %v6767 = vld [vmem:[#allocation14 + $0x25c] sm:$0xf]
        %v6768 = vld [vmem:[#allocation14 + $0x260] sm:$0xf]
        %v6769 = vld [vmem:[#allocation14 + $0x264] sm:$0xf]
        %v6770 = vld [vmem:[#allocation14 + $0x268] sm:$0xf]
        %v6771 = vld [vmem:[#allocation14 + $0x26c] sm:$0xf]
        %v6772 = vld [vmem:[#allocation14 + $0x270] sm:$0xf]
        %v6773 = vld [vmem:[#allocation14 + $0x274] sm:$0xf]
        %v6774 = vld [vmem:[#allocation14 + $0x278] sm:$0xf]
        %v6775 = vld [vmem:[#allocation14 + $0x27c] sm:$0xf]
        %v6776 = vld [vmem:[#allocation14 + $0x280] sm:$0xf]
        %v6777 = vld [vmem:[#allocation14 + $0x284] sm:$0xf]
        %v6778 = vld [vmem:[#allocation14 + $0x288] sm:$0xf]
        %v6779 = vld [vmem:[#allocation14 + $0x28c] sm:$0xf]
        %v6780 = vld [vmem:[#allocation14 + $0x290] sm:$0xf]
        %v6781 = vld [vmem:[#allocation14 + $0x294] sm:$0xf]
        %v6782 = vld [vmem:[#allocation14 + $0x298] sm:$0xf]
        %v6783 = vld [vmem:[#allocation14 + $0x29c] sm:$0xf]
        %v6784 = vld [vmem:[#allocation14 + $0x2a0] sm:$0xf]
        %v6785 = vld [vmem:[#allocation14 + $0x2a4] sm:$0xf]
        %v6786 = vld [vmem:[#allocation14 + $0x2a8] sm:$0xf]
        %v6787 = vld [vmem:[#allocation14 + $0x2ac] sm:$0xf]
        %v6788 = vld [vmem:[#allocation14 + $0x2b0] sm:$0xf]
        %v6789 = vld [vmem:[#allocation14 + $0x2b4] sm:$0xf]
        %v6790 = vld [vmem:[#allocation14 + $0x2b8] sm:$0xf]
        %v6791 = vld [vmem:[#allocation14 + $0x2bc] sm:$0xf]
        %v6792 = vld [vmem:[#allocation14 + $0x2c0] sm:$0xf]
        %v6793 = vld [vmem:[#allocation14 + $0x2c4] sm:$0xf]
        %v6794 = vld [vmem:[#allocation14 + $0x2c8] sm:$0xf]
        %v6795 = vld [vmem:[#allocation14 + $0x2cc] sm:$0xf]
        %v6796 = vld [vmem:[#allocation14 + $0x2d0] sm:$0xf]
        %v6797 = vld [vmem:[#allocation14 + $0x2d4] sm:$0xf]
        %v6798 = vld [vmem:[#allocation14 + $0x2d8] sm:$0xf]
        %v6799 = vld [vmem:[#allocation14 + $0x2dc] sm:$0xf]
        %v6800 = vld [vmem:[#allocation14 + $0x2e0] sm:$0xf]
        %v6801 = vld [vmem:[#allocation14 + $0x2e4] sm:$0xf]
        %v6802 = vld [vmem:[#allocation14 + $0x2e8] sm:$0xf]
        %v6803 = vld [vmem:[#allocation14 + $0x2ec] sm:$0xf]
        %v6804 = vld [vmem:[#allocation14 + $0x2f0] sm:$0xf]
        %v6805 = vld [vmem:[#allocation14 + $0x2f4] sm:$0xf]
        %v6806 = vld [vmem:[#allocation14 + $0x2f8] sm:$0xf]
        %v6807 = vld [vmem:[#allocation14 + $0x2fc] sm:$0xf]
        %v6808 = vld [vmem:[#allocation16] sm:$0x1]
        %v6810 = vlaneseq
        %v6811 = vshrl.u32 %v6810, 7
        %v6812 = vsub.s32 0, %v6811
        %v6813 = vrot.slane %v6808, %v6812
        %v7007 = vunpack.c.l.b16 %v6616
        %v7008 = vunpack.c.l.b16 %v6617
        %v7009 = vunpack.c.l.b16 %v6618
        %v7010 = vunpack.c.l.b16 %v6619
        %v7011 = vunpack.c.l.b16 %v6620
        %v7012 = vunpack.c.l.b16 %v6621
        %v7013 = vunpack.c.l.b16 %v6622
        %v7014 = vunpack.c.l.b16 %v6623
        %v7015 = vunpack.c.l.b16 %v6624
        %v7016 = vunpack.c.l.b16 %v6625
        %v7017 = vunpack.c.l.b16 %v6626
        %v7018 = vunpack.c.l.b16 %v6627
        %v7019 = vunpack.c.l.b16 %v6628
        %v7020 = vunpack.c.l.b16 %v6629
        %v7021 = vunpack.c.l.b16 %v6630
        %v7022 = vunpack.c.l.b16 %v6631
        %v7023 = vunpack.c.l.b16 %v6632
        %v7024 = vunpack.c.l.b16 %v6633
        %v7025 = vunpack.c.l.b16 %v6634
        %v7026 = vunpack.c.l.b16 %v6635
        %v7027 = vunpack.c.l.b16 %v6636
        %v7028 = vunpack.c.l.b16 %v6637
        %v7029 = vunpack.c.l.b16 %v6638
        %v7030 = vunpack.c.l.b16 %v6639
        %v7031 = vunpack.c.l.b16 %v6640
        %v7032 = vunpack.c.l.b16 %v6641
        %v7033 = vunpack.c.l.b16 %v6642
        %v7034 = vunpack.c.l.b16 %v6643
        %v7035 = vunpack.c.l.b16 %v6644
        %v7036 = vunpack.c.l.b16 %v6645
        %v7037 = vunpack.c.l.b16 %v6646
        %v7038 = vunpack.c.l.b16 %v6647
        %v7039 = vunpack.c.l.b16 %v6648
        %v7040 = vunpack.c.l.b16 %v6649
        %v7041 = vunpack.c.l.b16 %v6650
        %v7042 = vunpack.c.l.b16 %v6651
        %v7043 = vunpack.c.l.b16 %v6652
        %v7044 = vunpack.c.l.b16 %v6653
        %v7045 = vunpack.c.l.b16 %v6654
        %v7046 = vunpack.c.l.b16 %v6655
        %v7047 = vunpack.c.l.b16 %v6656
        %v7048 = vunpack.c.l.b16 %v6657
        %v7049 = vunpack.c.l.b16 %v6658
        %v7050 = vunpack.c.l.b16 %v6659
        %v7051 = vunpack.c.l.b16 %v6660
        %v7052 = vunpack.c.l.b16 %v6661
        %v7053 = vunpack.c.l.b16 %v6662
        %v7054 = vunpack.c.l.b16 %v6663
        %v7055 = vunpack.c.l.b16 %v6664
        %v7056 = vunpack.c.l.b16 %v6665
        %v7057 = vunpack.c.l.b16 %v6666
        %v7058 = vunpack.c.l.b16 %v6667
        %v7059 = vunpack.c.l.b16 %v6668
        %v7060 = vunpack.c.l.b16 %v6669
        %v7061 = vunpack.c.l.b16 %v6670
        %v7062 = vunpack.c.l.b16 %v6671
        %v7063 = vunpack.c.l.b16 %v6672
        %v7064 = vunpack.c.l.b16 %v6673
        %v7065 = vunpack.c.l.b16 %v6674
        %v7066 = vunpack.c.l.b16 %v6675
        %v7067 = vunpack.c.l.b16 %v6676
        %v7068 = vunpack.c.l.b16 %v6677
        %v7069 = vunpack.c.l.b16 %v6678
        %v7070 = vunpack.c.l.b16 %v6679
        %v7071 = vunpack.c.l.b16 %v6680
        %v7072 = vunpack.c.l.b16 %v6681
        %v7073 = vunpack.c.l.b16 %v6682
        %v7074 = vunpack.c.l.b16 %v6683
        %v7075 = vunpack.c.l.b16 %v6684
        %v7076 = vunpack.c.l.b16 %v6685
        %v7077 = vunpack.c.l.b16 %v6686
        %v7078 = vunpack.c.l.b16 %v6687
        %v7079 = vunpack.c.l.b16 %v6688
        %v7080 = vunpack.c.l.b16 %v6689
        %v7081 = vunpack.c.l.b16 %v6690
        %v7082 = vunpack.c.l.b16 %v6691
        %v7083 = vunpack.c.l.b16 %v6692
        %v7084 = vunpack.c.l.b16 %v6693
        %v7085 = vunpack.c.l.b16 %v6694
        %v7086 = vunpack.c.l.b16 %v6695
        %v7087 = vunpack.c.l.b16 %v6696
        %v7088 = vunpack.c.l.b16 %v6697
        %v7089 = vunpack.c.l.b16 %v6698
        %v7090 = vunpack.c.l.b16 %v6699
        %v7091 = vunpack.c.l.b16 %v6700
        %v7092 = vunpack.c.l.b16 %v6701
        %v7093 = vunpack.c.l.b16 %v6702
        %v7094 = vunpack.c.l.b16 %v6703
        %v7095 = vunpack.c.l.b16 %v6704
        %v7096 = vunpack.c.l.b16 %v6705
        %v7097 = vunpack.c.l.b16 %v6706
        %v7098 = vunpack.c.l.b16 %v6707
        %v7099 = vunpack.c.l.b16 %v6708
        %v7100 = vunpack.c.l.b16 %v6709
        %v7101 = vunpack.c.l.b16 %v6710
        %v7102 = vunpack.c.l.b16 %v6711
        %v7103 = vunpack.c.l.b16 %v6712
        %v7104 = vunpack.c.l.b16 %v6713
        %v7105 = vunpack.c.l.b16 %v6714
        %v7106 = vunpack.c.l.b16 %v6715
        %v7107 = vunpack.c.l.b16 %v6716
        %v7108 = vunpack.c.l.b16 %v6717
        %v7109 = vunpack.c.l.b16 %v6718
        %v7110 = vunpack.c.l.b16 %v6719
        %v7111 = vunpack.c.l.b16 %v6720
        %v7112 = vunpack.c.l.b16 %v6721
        %v7113 = vunpack.c.l.b16 %v6722
        %v7114 = vunpack.c.l.b16 %v6723
        %v7115 = vunpack.c.l.b16 %v6724
        %v7116 = vunpack.c.l.b16 %v6725
        %v7117 = vunpack.c.l.b16 %v6726
        %v7118 = vunpack.c.l.b16 %v6727
        %v7119 = vunpack.c.l.b16 %v6728
        %v7120 = vunpack.c.l.b16 %v6729
        %v7121 = vunpack.c.l.b16 %v6730
        %v7122 = vunpack.c.l.b16 %v6731
        %v7123 = vunpack.c.l.b16 %v6732
        %v7124 = vunpack.c.l.b16 %v6733
        %v7125 = vunpack.c.l.b16 %v6734
        %v7126 = vunpack.c.l.b16 %v6735
        %v7127 = vunpack.c.l.b16 %v6736
        %v7128 = vunpack.c.l.b16 %v6737
        %v7129 = vunpack.c.l.b16 %v6738
        %v7130 = vunpack.c.l.b16 %v6739
        %v7131 = vunpack.c.l.b16 %v6740
        %v7132 = vunpack.c.l.b16 %v6741
        %v7133 = vunpack.c.l.b16 %v6742
        %v7134 = vunpack.c.l.b16 %v6743
        %v7135 = vunpack.c.l.b16 %v6744
        %v7136 = vunpack.c.l.b16 %v6745
        %v7137 = vunpack.c.l.b16 %v6746
        %v7138 = vunpack.c.l.b16 %v6747
        %v7139 = vunpack.c.l.b16 %v6748
        %v7140 = vunpack.c.l.b16 %v6749
        %v7141 = vunpack.c.l.b16 %v6750
        %v7142 = vunpack.c.l.b16 %v6751
        %v7143 = vunpack.c.l.b16 %v6752
        %v7144 = vunpack.c.l.b16 %v6753
        %v7145 = vunpack.c.l.b16 %v6754
        %v7146 = vunpack.c.l.b16 %v6755
        %v7147 = vunpack.c.l.b16 %v6756
        %v7148 = vunpack.c.l.b16 %v6757
        %v7149 = vunpack.c.l.b16 %v6758
        %v7150 = vunpack.c.l.b16 %v6759
        %v7151 = vunpack.c.l.b16 %v6760
        %v7152 = vunpack.c.l.b16 %v6761
        %v7153 = vunpack.c.l.b16 %v6762
        %v7154 = vunpack.c.l.b16 %v6763
        %v7155 = vunpack.c.l.b16 %v6764
        %v7156 = vunpack.c.l.b16 %v6765
        %v7157 = vunpack.c.l.b16 %v6766
        %v7158 = vunpack.c.l.b16 %v6767
        %v7159 = vunpack.c.l.b16 %v6768
        %v7160 = vunpack.c.l.b16 %v6769
        %v7161 = vunpack.c.l.b16 %v6770
        %v7162 = vunpack.c.l.b16 %v6771
        %v7163 = vunpack.c.l.b16 %v6772
        %v7164 = vunpack.c.l.b16 %v6773
        %v7165 = vunpack.c.l.b16 %v6774
        %v7166 = vunpack.c.l.b16 %v6775
        %v7167 = vunpack.c.l.b16 %v6776
        %v7168 = vunpack.c.l.b16 %v6777
        %v7169 = vunpack.c.l.b16 %v6778
        %v7170 = vunpack.c.l.b16 %v6779
        %v7171 = vunpack.c.l.b16 %v6780
        %v7172 = vunpack.c.l.b16 %v6781
        %v7173 = vunpack.c.l.b16 %v6782
        %v7174 = vunpack.c.l.b16 %v6783
        %v7175 = vunpack.c.l.b16 %v6784
        %v7176 = vunpack.c.l.b16 %v6785
        %v7177 = vunpack.c.l.b16 %v6786
        %v7178 = vunpack.c.l.b16 %v6787
        %v7179 = vunpack.c.l.b16 %v6788
        %v7180 = vunpack.c.l.b16 %v6789
        %v7181 = vunpack.c.l.b16 %v6790
        %v7182 = vunpack.c.l.b16 %v6791
        %v7183 = vunpack.c.l.b16 %v6792
        %v7184 = vunpack.c.l.b16 %v6793
        %v7185 = vunpack.c.l.b16 %v6794
        %v7186 = vunpack.c.l.b16 %v6795
        %v7187 = vunpack.c.l.b16 %v6796
        %v7188 = vunpack.c.l.b16 %v6797
        %v7189 = vunpack.c.l.b16 %v6798
        %v7190 = vunpack.c.l.b16 %v6799
        %v7191 = vunpack.c.l.b16 %v6800
        %v7192 = vunpack.c.l.b16 %v6801
        %v7193 = vunpack.c.l.b16 %v6802
        %v7194 = vunpack.c.l.b16 %v6803
        %v7195 = vunpack.c.l.b16 %v6804
        %v7196 = vunpack.c.l.b16 %v6805
        %v7197 = vunpack.c.l.b16 %v6806
        %v7198 = vunpack.c.l.b16 %v6807
        %v7199 = vpack.c.b16 %v7008, %v7007
        %v7200 = vpack.c.b16 %v7010, %v7009
        %v7201 = vpack.c.b16 %v7012, %v7011
        %v7202 = vpack.c.b16 %v7014, %v7013
        %v7203 = vpack.c.b16 %v7016, %v7015
        %v7204 = vpack.c.b16 %v7018, %v7017
        %v7205 = vpack.c.b16 %v7020, %v7019
        %v7206 = vpack.c.b16 %v7022, %v7021
        %v7207 = vpack.c.b16 %v7024, %v7023
        %v7208 = vpack.c.b16 %v7026, %v7025
        %v7209 = vpack.c.b16 %v7028, %v7027
        %v7210 = vpack.c.b16 %v7030, %v7029
        %v7211 = vpack.c.b16 %v7032, %v7031
        %v7212 = vpack.c.b16 %v7034, %v7033
        %v7213 = vpack.c.b16 %v7036, %v7035
        %v7214 = vpack.c.b16 %v7038, %v7037
        %v7215 = vpack.c.b16 %v7040, %v7039
        %v7216 = vpack.c.b16 %v7042, %v7041
        %v7217 = vpack.c.b16 %v7044, %v7043
        %v7218 = vpack.c.b16 %v7046, %v7045
        %v7219 = vpack.c.b16 %v7048, %v7047
        %v7220 = vpack.c.b16 %v7050, %v7049
        %v7221 = vpack.c.b16 %v7052, %v7051
        %v7222 = vpack.c.b16 %v7054, %v7053
        %v7223 = vpack.c.b16 %v7056, %v7055
        %v7224 = vpack.c.b16 %v7058, %v7057
        %v7225 = vpack.c.b16 %v7060, %v7059
        %v7226 = vpack.c.b16 %v7062, %v7061
        %v7227 = vpack.c.b16 %v7064, %v7063
        %v7228 = vpack.c.b16 %v7066, %v7065
        %v7229 = vpack.c.b16 %v7068, %v7067
        %v7230 = vpack.c.b16 %v7070, %v7069
        %v7231 = vpack.c.b16 %v7072, %v7071
        %v7232 = vpack.c.b16 %v7074, %v7073
        %v7233 = vpack.c.b16 %v7076, %v7075
        %v7234 = vpack.c.b16 %v7078, %v7077
        %v7235 = vpack.c.b16 %v7080, %v7079
        %v7236 = vpack.c.b16 %v7082, %v7081
        %v7237 = vpack.c.b16 %v7084, %v7083
        %v7238 = vpack.c.b16 %v7086, %v7085
        %v7239 = vpack.c.b16 %v7088, %v7087
        %v7240 = vpack.c.b16 %v7090, %v7089
        %v7241 = vpack.c.b16 %v7092, %v7091
        %v7242 = vpack.c.b16 %v7094, %v7093
        %v7243 = vpack.c.b16 %v7096, %v7095
        %v7244 = vpack.c.b16 %v7098, %v7097
        %v7245 = vpack.c.b16 %v7100, %v7099
        %v7246 = vpack.c.b16 %v7102, %v7101
        %v7247 = vpack.c.b16 %v7104, %v7103
        %v7248 = vpack.c.b16 %v7106, %v7105
        %v7249 = vpack.c.b16 %v7108, %v7107
        %v7250 = vpack.c.b16 %v7110, %v7109
        %v7251 = vpack.c.b16 %v7112, %v7111
        %v7252 = vpack.c.b16 %v7114, %v7113
        %v7253 = vpack.c.b16 %v7116, %v7115
        %v7254 = vpack.c.b16 %v7118, %v7117
        %v7255 = vpack.c.b16 %v7120, %v7119
        %v7256 = vpack.c.b16 %v7122, %v7121
        %v7257 = vpack.c.b16 %v7124, %v7123
        %v7258 = vpack.c.b16 %v7126, %v7125
        %v7259 = vpack.c.b16 %v7128, %v7127
        %v7260 = vpack.c.b16 %v7130, %v7129
        %v7261 = vpack.c.b16 %v7132, %v7131
        %v7262 = vpack.c.b16 %v7134, %v7133
        %v7263 = vpack.c.b16 %v7136, %v7135
        %v7264 = vpack.c.b16 %v7138, %v7137
        %v7265 = vpack.c.b16 %v7140, %v7139
        %v7266 = vpack.c.b16 %v7142, %v7141
        %v7267 = vpack.c.b16 %v7144, %v7143
        %v7268 = vpack.c.b16 %v7146, %v7145
        %v7269 = vpack.c.b16 %v7148, %v7147
        %v7270 = vpack.c.b16 %v7150, %v7149
        %v7271 = vpack.c.b16 %v7152, %v7151
        %v7272 = vpack.c.b16 %v7154, %v7153
        %v7273 = vpack.c.b16 %v7156, %v7155
        %v7274 = vpack.c.b16 %v7158, %v7157
        %v7275 = vpack.c.b16 %v7160, %v7159
        %v7276 = vpack.c.b16 %v7162, %v7161
        %v7277 = vpack.c.b16 %v7164, %v7163
        %v7278 = vpack.c.b16 %v7166, %v7165
        %v7279 = vpack.c.b16 %v7168, %v7167
        %v7280 = vpack.c.b16 %v7170, %v7169
        %v7281 = vpack.c.b16 %v7172, %v7171
        %v7282 = vpack.c.b16 %v7174, %v7173
        %v7283 = vpack.c.b16 %v7176, %v7175
        %v7284 = vpack.c.b16 %v7178, %v7177
        %v7285 = vpack.c.b16 %v7180, %v7179
        %v7286 = vpack.c.b16 %v7182, %v7181
        %v7287 = vpack.c.b16 %v7184, %v7183
        %v7288 = vpack.c.b16 %v7186, %v7185
        %v7289 = vpack.c.b16 %v7188, %v7187
        %v7290 = vpack.c.b16 %v7190, %v7189
        %v7291 = vpack.c.b16 %v7192, %v7191
        %v7292 = vpack.c.b16 %v7194, %v7193
        %v7293 = vpack.c.b16 %v7196, %v7195
        %v7294 = vpack.c.b16 %v7198, %v7197
        %7391 = vmatprep.subr.bf16.mxu0 0
        %7392 = vmatpush1.bf16.msra.mxu0 %v7199
        %7393 = vmatprep.subr.bf16.mxu0 0
        %7394 = vmatpush1.bf16.msra.mxu0 %v7200
        %7395 = vmatprep.subr.bf16.mxu0 0
        %7396 = vmatpush1.bf16.msra.mxu0 %v7201
        %7397 = vmatprep.subr.bf16.mxu0 0
        %7398 = vmatpush1.bf16.msra.mxu0 %v7202
        %7399 = vmatprep.subr.bf16.mxu0 0
        %7400 = vmatpush1.bf16.msra.mxu0 %v7203
        %7401 = vmatprep.subr.bf16.mxu0 0
        %7402 = vmatpush1.bf16.msra.mxu0 %v7204
        %7403 = vmatprep.subr.bf16.mxu0 0
        %7404 = vmatpush1.bf16.msra.mxu0 %v7205
        %7405 = vmatprep.subr.bf16.mxu0 0
        %7406 = vmatpush1.bf16.msra.mxu0 %v7206
        %7407 = vmatprep.subr.bf16.mxu0 0
        %7408 = vmatpush1.bf16.msra.mxu0 %v7207
        %7409 = vmatprep.subr.bf16.mxu0 0
        %7410 = vmatpush1.bf16.msra.mxu0 %v7208
        %7411 = vmatprep.subr.bf16.mxu0 0
        %7412 = vmatpush1.bf16.msra.mxu0 %v7209
        %7413 = vmatprep.subr.bf16.mxu0 0
        %7414 = vmatpush1.bf16.msra.mxu0 %v7210
        %7415 = vmatprep.subr.bf16.mxu0 0
        %7416 = vmatpush1.bf16.msra.mxu0 %v7211
        %7417 = vmatprep.subr.bf16.mxu0 0
        %7418 = vmatpush1.bf16.msra.mxu0 %v7212
        %7419 = vmatprep.subr.bf16.mxu0 0
        %7420 = vmatpush1.bf16.msra.mxu0 %v7213
        %7421 = vmatprep.subr.bf16.mxu0 0
        %7422 = vmatpush1.bf16.msra.mxu0 %v7214
        %7423 = vmatprep.mubr.bf16.mxu0 %v4142
        %7424 = vmatmul.mubr.bf16.gmra.mrb[0].mxu0 %v4141
        %v7425 = vpop.f32.mrb[0].mxu0
        %v7426 = vadd.f32 %v6813, %v7425
        %v7427 = vpop.f32.mrb[0].mxu0
        %v7428 = vpop.f32.mrb[0].mxu0
        %v7429 = vadd.f32 %v6813, %v7428
        %v7430 = vpop.f32.mrb[0].mxu0
        %7431 = vdwg.mxu0
        %7432 = vmatprep.subr.bf16.mxu0 0
        %7433 = vmatpush1.bf16.msra.mxu0 %v7215
        %7434 = vmatprep.subr.bf16.mxu0 0
        %7435 = vmatpush1.bf16.msra.mxu0 %v7216
        %7436 = vmatprep.subr.bf16.mxu0 0
        %7437 = vmatpush1.bf16.msra.mxu0 %v7217
        %7438 = vmatprep.subr.bf16.mxu0 0
        %7439 = vmatpush1.bf16.msra.mxu0 %v7218
        %7440 = vmatprep.subr.bf16.mxu0 0
        %7441 = vmatpush1.bf16.msra.mxu0 %v7219
        %7442 = vmatprep.subr.bf16.mxu0 0
        %7443 = vmatpush1.bf16.msra.mxu0 %v7220
        %7444 = vmatprep.subr.bf16.mxu0 0
        %7445 = vmatpush1.bf16.msra.mxu0 %v7221
        %7446 = vmatprep.subr.bf16.mxu0 0
        %7447 = vmatpush1.bf16.msra.mxu0 %v7222
        %7448 = vmatprep.subr.bf16.mxu0 0
        %7449 = vmatpush1.bf16.msra.mxu0 %v7223
        %7450 = vmatprep.subr.bf16.mxu0 0
        %7451 = vmatpush1.bf16.msra.mxu0 %v7224
        %7452 = vmatprep.subr.bf16.mxu0 0
        %7453 = vmatpush1.bf16.msra.mxu0 %v7225
        %7454 = vmatprep.subr.bf16.mxu0 0
        %7455 = vmatpush1.bf16.msra.mxu0 %v7226
        %7456 = vmatprep.subr.bf16.mxu0 0
        %7457 = vmatpush1.bf16.msra.mxu0 %v7227
        %7458 = vmatprep.subr.bf16.mxu0 0
        %7459 = vmatpush1.bf16.msra.mxu0 %v7228
        %7460 = vmatprep.subr.bf16.mxu0 0
        %7461 = vmatpush1.bf16.msra.mxu0 %v7229
        %7462 = vmatprep.subr.bf16.mxu0 0
        %7463 = vmatpush1.bf16.msra.mxu0 %v7230
        %7464 = vmatprep.mubr.bf16.mxu0 %v4965
        %7465 = vmatmul.mubr.bf16.gmra.mrb[0].mxu0 %v4143
        %v7466 = vpop.f32.mrb[0].mxu0
        %v7467 = vadd.f32 %v7426, %v7466
        %v7468 = vpop.f32.mrb[0].mxu0
        %v7469 = vpop.f32.mrb[0].mxu0
        %v7470 = vadd.f32 %v7429, %v7469
        %v7471 = vpop.f32.mrb[0].mxu0
        %7472 = vdwg.mxu0
        %7473 = vmatprep.subr.bf16.mxu0 0
        %7474 = vmatpush1.bf16.msra.mxu0 %v7231
        %7475 = vmatprep.subr.bf16.mxu0 0
        %7476 = vmatpush1.bf16.msra.mxu0 %v7232
        %7477 = vmatprep.subr.bf16.mxu0 0
        %7478 = vmatpush1.bf16.msra.mxu0 %v7233
        %7479 = vmatprep.subr.bf16.mxu0 0
        %7480 = vmatpush1.bf16.msra.mxu0 %v7234
        %7481 = vmatprep.subr.bf16.mxu0 0
        %7482 = vmatpush1.bf16.msra.mxu0 %v7235
        %7483 = vmatprep.subr.bf16.mxu0 0
        %7484 = vmatpush1.bf16.msra.mxu0 %v7236
        %7485 = vmatprep.subr.bf16.mxu0 0
        %7486 = vmatpush1.bf16.msra.mxu0 %v7237
        %7487 = vmatprep.subr.bf16.mxu0 0
        %7488 = vmatpush1.bf16.msra.mxu0 %v7238
        %7489 = vmatprep.subr.bf16.mxu0 0
        %7490 = vmatpush1.bf16.msra.mxu0 %v7239
        %7491 = vmatprep.subr.bf16.mxu0 0
        %7492 = vmatpush1.bf16.msra.mxu0 %v7240
        %7493 = vmatprep.subr.bf16.mxu0 0
        %7494 = vmatpush1.bf16.msra.mxu0 %v7241
        %7495 = vmatprep.subr.bf16.mxu0 0
        %7496 = vmatpush1.bf16.msra.mxu0 %v7242
        %7497 = vmatprep.subr.bf16.mxu0 0
        %7498 = vmatpush1.bf16.msra.mxu0 %v7243
        %7499 = vmatprep.subr.bf16.mxu0 0
        %7500 = vmatpush1.bf16.msra.mxu0 %v7244
        %7501 = vmatprep.subr.bf16.mxu0 0
        %7502 = vmatpush1.bf16.msra.mxu0 %v7245
        %7503 = vmatprep.subr.bf16.mxu0 0
        %7504 = vmatpush1.bf16.msra.mxu0 %v7246
        %7505 = vmatprep.mubr.bf16.mxu0 %v4967
        %7506 = vmatmul.mubr.bf16.gmra.mrb[0].mxu0 %v4966
        %v7507 = vpop.f32.mrb[0].mxu0
        %v7508 = vadd.f32 %v7467, %v7507
        %v7509 = vpop.f32.mrb[0].mxu0
        %v7510 = vpop.f32.mrb[0].mxu0
        %v7511 = vadd.f32 %v7470, %v7510
        %v7512 = vpop.f32.mrb[0].mxu0
        %7513 = vdwg.mxu0
        %7514 = vmatprep.subr.bf16.mxu0 0
        %7515 = vmatpush1.bf16.msra.mxu0 %v7247
        %7516 = vmatprep.subr.bf16.mxu0 0
        %7517 = vmatpush1.bf16.msra.mxu0 %v7248
        %7518 = vmatprep.subr.bf16.mxu0 0
        %7519 = vmatpush1.bf16.msra.mxu0 %v7249
        %7520 = vmatprep.subr.bf16.mxu0 0
        %7521 = vmatpush1.bf16.msra.mxu0 %v7250
        %7522 = vmatprep.subr.bf16.mxu0 0
        %7523 = vmatpush1.bf16.msra.mxu0 %v7251
        %7524 = vmatprep.subr.bf16.mxu0 0
        %7525 = vmatpush1.bf16.msra.mxu0 %v7252
        %7526 = vmatprep.subr.bf16.mxu0 0
        %7527 = vmatpush1.bf16.msra.mxu0 %v7253
        %7528 = vmatprep.subr.bf16.mxu0 0
        %7529 = vmatpush1.bf16.msra.mxu0 %v7254
        %7530 = vmatprep.subr.bf16.mxu0 0
        %7531 = vmatpush1.bf16.msra.mxu0 %v7255
        %7532 = vmatprep.subr.bf16.mxu0 0
        %7533 = vmatpush1.bf16.msra.mxu0 %v7256
        %7534 = vmatprep.subr.bf16.mxu0 0
        %7535 = vmatpush1.bf16.msra.mxu0 %v7257
        %7536 = vmatprep.subr.bf16.mxu0 0
        %7537 = vmatpush1.bf16.msra.mxu0 %v7258
        %7538 = vmatprep.subr.bf16.mxu0 0
        %7539 = vmatpush1.bf16.msra.mxu0 %v7259
        %7540 = vmatprep.subr.bf16.mxu0 0
        %7541 = vmatpush1.bf16.msra.mxu0 %v7260
        %7542 = vmatprep.subr.bf16.mxu0 0
        %7543 = vmatpush1.bf16.msra.mxu0 %v7261
        %7544 = vmatprep.subr.bf16.mxu0 0
        %7545 = vmatpush1.bf16.msra.mxu0 %v7262
        %7546 = vmatprep.mubr.bf16.mxu0 %v5790
        %7547 = vmatmul.mubr.bf16.gmra.mrb[0].mxu0 %v5789
        %v7548 = vpop.f32.mrb[0].mxu0
        %v7549 = vadd.f32 %v7508, %v7548
        %v7550 = vpop.f32.mrb[0].mxu0
        %v7551 = vpop.f32.mrb[0].mxu0
        %v7552 = vadd.f32 %v7511, %v7551
        %v7553 = vpop.f32.mrb[0].mxu0
        %7554 = vdwg.mxu0
        %7555 = vmatprep.subr.bf16.mxu0 0
        %7556 = vmatpush1.bf16.msra.mxu0 %v7263
        %7557 = vmatprep.subr.bf16.mxu0 0
        %7558 = vmatpush1.bf16.msra.mxu0 %v7264
        %7559 = vmatprep.subr.bf16.mxu0 0
        %7560 = vmatpush1.bf16.msra.mxu0 %v7265
        %7561 = vmatprep.subr.bf16.mxu0 0
        %7562 = vmatpush1.bf16.msra.mxu0 %v7266
        %7563 = vmatprep.subr.bf16.mxu0 0
        %7564 = vmatpush1.bf16.msra.mxu0 %v7267
        %7565 = vmatprep.subr.bf16.mxu0 0
        %7566 = vmatpush1.bf16.msra.mxu0 %v7268
        %7567 = vmatprep.subr.bf16.mxu0 0
        %7568 = vmatpush1.bf16.msra.mxu0 %v7269
        %7569 = vmatprep.subr.bf16.mxu0 0
        %7570 = vmatpush1.bf16.msra.mxu0 %v7270
        %7571 = vmatprep.subr.bf16.mxu0 0
        %7572 = vmatpush1.bf16.msra.mxu0 %v7271
        %7573 = vmatprep.subr.bf16.mxu0 0
        %7574 = vmatpush1.bf16.msra.mxu0 %v7272
        %7575 = vmatprep.subr.bf16.mxu0 0
        %7576 = vmatpush1.bf16.msra.mxu0 %v7273
        %7577 = vmatprep.subr.bf16.mxu0 0
        %7578 = vmatpush1.bf16.msra.mxu0 %v7274
        %7579 = vmatprep.subr.bf16.mxu0 0
        %7580 = vmatpush1.bf16.msra.mxu0 %v7275
        %7581 = vmatprep.subr.bf16.mxu0 0
        %7582 = vmatpush1.bf16.msra.mxu0 %v7276
        %7583 = vmatprep.subr.bf16.mxu0 0
        %7584 = vmatpush1.bf16.msra.mxu0 %v7277
        %7585 = vmatprep.subr.bf16.mxu0 0
        %7586 = vmatpush1.bf16.msra.mxu0 %v7278
        %7587 = vmatprep.mubr.bf16.mxu0 %v6613
        %7588 = vmatmul.mubr.bf16.gmra.mrb[0].mxu0 %v5791
        %v7589 = vpop.f32.mrb[0].mxu0
        %v7590 = vadd.f32 %v7549, %v7589
        %v7591 = vpop.f32.mrb[0].mxu0
        %v7592 = vpop.f32.mrb[0].mxu0
        %v7593 = vadd.f32 %v7552, %v7592
        %v7594 = vpop.f32.mrb[0].mxu0
        %7595 = vdwg.mxu0
        %7596 = vmatprep.subr.bf16.mxu0 0
        %7597 = vmatpush1.bf16.msra.mxu0 %v7279
        %7598 = vmatprep.subr.bf16.mxu0 0
        %7599 = vmatpush1.bf16.msra.mxu0 %v7280
        %7600 = vmatprep.subr.bf16.mxu0 0
        %7601 = vmatpush1.bf16.msra.mxu0 %v7281
        %7602 = vmatprep.subr.bf16.mxu0 0
        %7603 = vmatpush1.bf16.msra.mxu0 %v7282
        %7604 = vmatprep.subr.bf16.mxu0 0
        %7605 = vmatpush1.bf16.msra.mxu0 %v7283
        %7606 = vmatprep.subr.bf16.mxu0 0
        %7607 = vmatpush1.bf16.msra.mxu0 %v7284
        %7608 = vmatprep.subr.bf16.mxu0 0
        %7609 = vmatpush1.bf16.msra.mxu0 %v7285
        %7610 = vmatprep.subr.bf16.mxu0 0
        %7611 = vmatpush1.bf16.msra.mxu0 %v7286
        %7612 = vmatprep.subr.bf16.mxu0 0
        %7613 = vmatpush1.bf16.msra.mxu0 %v7287
        %7614 = vmatprep.subr.bf16.mxu0 0
        %7615 = vmatpush1.bf16.msra.mxu0 %v7288
        %7616 = vmatprep.subr.bf16.mxu0 0
        %7617 = vmatpush1.bf16.msra.mxu0 %v7289
        %7618 = vmatprep.subr.bf16.mxu0 0
        %7619 = vmatpush1.bf16.msra.mxu0 %v7290
        %7620 = vmatprep.subr.bf16.mxu0 0
        %7621 = vmatpush1.bf16.msra.mxu0 %v7291
        %7622 = vmatprep.subr.bf16.mxu0 0
        %7623 = vmatpush1.bf16.msra.mxu0 %v7292
        %7624 = vmatprep.subr.bf16.mxu0 0
        %7625 = vmatpush1.bf16.msra.mxu0 %v7293
        %7626 = vmatprep.subr.bf16.mxu0 0
        %7627 = vmatpush1.bf16.msra.mxu0 %v7294
        %7628 = vmatprep.mubr.bf16.mxu0 %v6615
        %7629 = vmatmul.mubr.bf16.gmra.mrb[0].mxu0 %v6614
        %v7630 = vpop.f32.mrb[0].mxu0
        %v7631 = vadd.f32 %v7590, %v7630
        %v7632 = vpop.f32.mrb[0].mxu0
        %v7633 = vpop.f32.mrb[0].mxu0
        %v7634 = vadd.f32 %v7593, %v7633
        %v7635 = vpop.f32.mrb[0].mxu0
        %7636 = vdwg.mxu0
        %7637 = vst [vmem:[%s459] sm:$0xff] %v7631
        %7638 = vst [vmem:[%s459 + $0x8] sm:$0xff] %v7634
        %s7639 = sand.u32 %s232, 1
        %s7640 = scalar_lea.sflag [#allocation4], %s7639
        %s7641 = sand.u32 %s232, 1
        %s7642 = smul.addr %s7641, 16
        %s7643 = scalar_lea.vmem [#allocation17], %s7642
        // Predicated region
        $region93: #{tpu_custom_call.1} parent=55 // pred_check
          %p7644 = pneg %p242
        $region94: #{tpu_custom_call.1} parent=55 // pred_check_branch
          %7646 = sbr.rel (%p7644) target = $region96
        $region95: #{tpu_custom_call.1} parent=55 // pred_region
          %s7647 = smul.u32 2, %s30
          %s7649 = ssub.s32 256, 256
          %7650 = vsyncadd %s7640, %s7649
          %s7651 = smul.addr %s7647, 128
          %s7652 = scalar_lea.hbm %s9, %s7651
          %s7653 = sshll.u32 %s7643, 4
          %s7654 = int_to_ptr.vmem [resolvable:$true] %s7653
          %7659 = dma.vmem_to_hbm [thread:$0]  %s7654, 256, %s7652, %s7640, 128, 128, 8
        $region96: #{tpu_custom_call.1} parent=55 // pred_fallthru
          _
      $region56: #{tpu_custom_call.1} parent=5 // pred_fallthru
        _
      %p7660 = scmp.le.s32.totalorder 2, %s25
      // Predicated region
      $region97: #{tpu_custom_call.1} parent=5 // pred_check
        %p7661 = pneg %p7660
      $region98: #{tpu_custom_call.1} parent=5 // pred_check_branch
        %7663 = sbr.rel (%p7661) target = $region100
      $region99: #{tpu_custom_call.1} parent=5 // pred_region
        %s7664 = ssub.s32 %s25, 2
        // Predicated region
        $region101: #{tpu_custom_call.1} parent=99 // pred_check
          %p7665 = pneg %p248
        $region102: #{tpu_custom_call.1} parent=99 // pred_check_branch
          %7667 = sbr.rel (%p7665) target = $region104
        $region103: #{tpu_custom_call.1} parent=99 // pred_region
          %s7668 = sand.u32 %s233, 1
          %s7669 = scalar_lea.sflag [#allocation4], %s7668
          %s7670 = sand.u32 %s233, 1
          %s7671 = smul.addr %s7670, 16
          %s7672 = scalar_lea.vmem [#allocation17], %s7671
          %7673 = dma.done %s7669, 256
        $region104: #{tpu_custom_call.1} parent=99 // pred_fallthru
          _
      $region100: #{tpu_custom_call.1} parent=5 // pred_fallthru
        _
    $region6: #{tpu_custom_call.1} parent=1 // loop_footer
      %s29 = sadd.s32 1, %s25
    $region7: #{tpu_custom_call.1} parent=1 // loop_footer_branch
      %24 = sbr.rel target = $region3
    $region8: #{tpu_custom_call.1} parent=1 // loop_exit
      _
    %7674 = vsyncpa [#allocation3], 1
    %s7675 = scalar_lea.sflag [#allocation3], 1
    %7676 = vsyncpa %s7675, 1
    %7677 = vsyncpa [#allocation6], 1
    %7678 = vsyncpa [#allocation9], 1
    %7679 = vsyncpa [#allocation12], 1
    %7680 = vsyncpa [#allocation15], 1
    %7681 = vsyncpa [#allocation4], 1
    %s7682 = scalar_lea.sflag [#allocation4], 1
    %7683 = vsyncpa %s7682, 1

</llo_original>
